<compile_context>
chip_gen: v7x
topology: tpu7x:2x2x1
jax: 0.10.0
libtpu: 0.0.40
codegen_flags: <defaults>
</compile_context>

<pallas_src>
import functools

import jax
import jax.numpy as jnp
from jax.experimental import pallas as pl
from jax.experimental.pallas import tpu as pltpu


# --------------------------------------------------------------------------- #
# Kernel
# --------------------------------------------------------------------------- #
def basic_block_kernel(x_ref, t1_ref, t2_ref, ab_ref, fc1w_ref, fc2w_ref,
                       o_ref, pad_ref, *, W, C, R, slope):
    """One batch tile (B_t images) per grid step; every tensor is lane-dense.

    x_ref   : (B_t, H, W*C)   f32   input rows (residual is re-read from here)
    t1/t2   : (3, W*C, W*C)   bf16  block-Toeplitz conv weights (one per dy)
    ab_ref  : (6, W*C)        f32   [s1,b1,s2,b2] tiled rows + fc1_b, fc2_b
    fc1w/fc2w : (C,R)/(R,C)   f32   SE 1x1-conv weights
    o_ref   : (B_t, H, W*C)   f32   output rows
    pad_ref : (B_t, H+2, W*C) bf16  H-padded activation scratch
    """
    B, H, WC = x_ref.shape
    M = B * H

    # Zero only the top/bottom padding rows (dense full-lane stores).  The
    # W-direction padding lives inside the Toeplitz weights, and the interior is
    # fully rewritten before each conv, so this is all the init needed.  Done
    # every grid step -> safe with the "parallel" batch axis (per-core scratch).
    zrow = jnp.zeros((B, 1, WC), pad_ref.dtype)
    pad_ref[:, 0:1, :] = zrow
    pad_ref[:, H + 1:H + 2, :] = zrow

    def conv3x3(t_ref):
        # sum_dy  pad[dy:dy+H] @ T[dy] -- LHS is a sublane slice of the
        # lane-dense pad buffer (no im2col, no relayouts); f32 accumulation.
        acc = jnp.dot(pad_ref[:, 0:H, :].reshape(M, WC), t_ref[0],
                      preferred_element_type=jnp.float32)
        for dy in (1, 2):
            acc = acc + jnp.dot(pad_ref[:, dy:dy + H, :].reshape(M, WC),
                                t_ref[dy], preferred_element_type=jnp.float32)
        return acc                                             # (M, W*C) f32

    # conv1 + folded BN1 + leaky_relu(0.001)   (lane-dense elementwise chain)
    pad_ref[:, 1:H + 1, :] = x_ref[...].astype(jnp.bfloat16)
    y = conv3x3(t1_ref)
    y = y * ab_ref[0:1, :] + ab_ref[1:2, :]
    y = jnp.where(y > 0, y, slope * y)

    # conv2 + folded BN2 (identity activation)
    pad_ref[:, 1:H + 1, :] = y.reshape(B, H, WC).astype(jnp.bfloat16)
    y = conv3x3(t2_ref)
    y = y * ab_ref[2:3, :] + ab_ref[3:4, :]

    # SE: global average pool -> fc1 -> relu -> fc2 -> sigmoid, batched over the
    # whole tile (one (B_t,C)@(C,R) and one (B_t,R)@(R,C) matmul).
    row_sum = jnp.sum(y.reshape(B, H, WC), axis=1)             # (B, W*C)
    pooled = row_sum[:, 0:C]
    for w in range(1, W):                                      # fold the W groups
        pooled = pooled + row_sum[:, w * C:(w + 1) * C]
    pooled = pooled * (1.0 / (H * W))                          # (B, C)

    fc1_b = ab_ref[4:5, 0:R]
    fc2_b = ab_ref[5:6, 0:C]
    h = jnp.dot(pooled, fc1w_ref[...], preferred_element_type=jnp.float32) + fc1_b
    h = jnp.maximum(h, 0.0)
    se = jax.nn.sigmoid(
        jnp.dot(h, fc2w_ref[...], preferred_element_type=jnp.float32) + fc2_b)
    se_row = jnp.concatenate([se] * W, axis=-1)                # (B, W*C)

    # SE channel scale + identity residual + final relu (all lane-dense).
    out = y.reshape(B, H, WC) * se_row[:, None, :] + x_ref[...]
    o_ref[...] = jnp.maximum(out, 0.0)


# --------------------------------------------------------------------------- #
# Wrapper
# --------------------------------------------------------------------------- #
def make_toeplitz(w_hwio, W):
    """(3,3,Ci,Co) HWIO conv weights -> (3, W*Ci, W*Co) block-Toeplitz matrices.

    T[dy][(w+dx-1)*Ci+ci, w*Co+co] = w[dy,dx,ci,co]; out-of-range dx entries stay
    zero, which implements the W-direction 'same' padding."""
    KH, KW, Ci, Co = w_hwio.shape
    mats = []
    for dy in range(KH):
        t = jnp.zeros((W * Ci, W * Co), w_hwio.dtype)
        for dx in range(KW):
            band = jnp.eye(W, k=1 - dx, dtype=w_hwio.dtype)   # band[w',w]=1 iff w'=w+dx-1
            t = t + jnp.kron(band, w_hwio[dy, dx])
        mats.append(t)
    return jnp.stack(mats, axis=0)


def _pick_batch_tile(N, H):
    # Keep >= 2 grid steps when possible (v7x megacore: the "parallel" batch axis
    # shards across the 2 TensorCores) and cap the matmul M = B_t*H at ~64 rows
    # to bound f32 accumulator vreg pressure.
    bt = max(1, min(N // 2, max(1, 64 // H))) if N >= 2 else 1
    while N % bt:
        bt -= 1
    return bt


def basic_block_forward(x, p, *, batch_tile=None):
    N, H, W, C = x.shape
    WC = W * C
    R = p["fc1_w"].shape[1]
    assert WC % 128 == 0, "W*C must be a multiple of 128 for the lane-dense layout"
    assert WC >= R and WC >= C

    bt = _pick_batch_tile(N, H) if batch_tile is None else batch_tile
    assert N % bt == 0
    grid_n = N // bt

    # Conv weights -> bf16 block-Toeplitz (3, W*C, W*C) per conv (built once).
    t1 = make_toeplitz(p["w1_hwio"], W).astype(jnp.bfloat16)
    t2 = make_toeplitz(p["w2_hwio"], W).astype(jnp.bfloat16)

    # Pack the six tiny per-channel parameter rows into one (6, W*C) slab:
    # rows 0-3: BN scale/bias tiled across W; row 4: fc1 bias; row 5: fc2 bias.
    def pad_to_wc(v):
        r = jnp.zeros((1, WC), jnp.float32)
        return r.at[:, :v.shape[1]].set(v.astype(jnp.float32))

    ab = jnp.concatenate(
        [jnp.tile(p["s1"], (1, W)), jnp.tile(p["b1"], (1, W)),
         jnp.tile(p["s2"], (1, W)), jnp.tile(p["b2"], (1, W)),
         pad_to_wc(p["fc1_b"]), pad_to_wc(p["fc2_b"])], axis=0)

    # NHWC -> lane-dense rows (free: last two dims are already contiguous).
    x_rows = x.reshape(N, H, WC)

    out = pl.pallas_call(
        functools.partial(basic_block_kernel, W=W, C=C, R=R, slope=0.001),
        out_shape=jax.ShapeDtypeStruct((N, H, WC), jnp.float32),
        grid=(grid_n,),
        in_specs=[
            pl.BlockSpec((bt, H, WC), lambda n: (n, 0, 0)),     # x rows
            pl.BlockSpec((3, WC, WC), lambda n: (0, 0, 0)),     # conv1 Toeplitz
            pl.BlockSpec((3, WC, WC), lambda n: (0, 0, 0)),     # conv2 Toeplitz
            pl.BlockSpec((6, WC), lambda n: (0, 0)),            # packed BN/bias rows
            pl.BlockSpec((C, R), lambda n: (0, 0)),             # fc1_w
            pl.BlockSpec((R, C), lambda n: (0, 0)),             # fc2_w
        ],
        out_specs=pl.BlockSpec((bt, H, WC), lambda n: (n, 0, 0)),
        scratch_shapes=[pltpu.VMEM((bt, H + 2, WC), jnp.bfloat16)],
        compiler_params=pltpu.CompilerParams(
            dimension_semantics=("parallel",)),
    )(x_rows, t1, t2, ab, p["fc1_w"], p["fc2_w"])

    return out.reshape(N, H, W, C)


# ----------------------- plain-JAX reference (for checking) ----------------- #
def ref_forward(x, p, *, match_bf16=True):
    """Reference.  With match_bf16=True the conv inputs/weights are rounded to
    bf16 (exactly what the kernel feeds the MXU, still f32-accumulated), so the
    tight comparison isolates kernel correctness from the intended bf16 cast."""
    f32 = jnp.float32
    q = (lambda a: a.astype(jnp.bfloat16).astype(f32)) if match_bf16 else (lambda a: a)

    def conv(inp, w_hwio):
        return jax.lax.conv_general_dilated(
            q(inp), q(w_hwio), window_strides=(1, 1), padding=((1, 1), (1, 1)),
            dimension_numbers=("NHWC", "HWIO", "NHWC"),
            preferred_element_type=f32)

    y = conv(x, p["w1_hwio"]) * p["s1"] + p["b1"]
    y = jnp.where(y > 0, y, 0.001 * y)
    y = conv(y, p["w2_hwio"]) * p["s2"] + p["b2"]
    pooled = jnp.mean(y, axis=(1, 2), keepdims=True)                     # (N,1,1,C)
    h = jnp.maximum(jnp.einsum("nijc,cr->nijr", pooled, p["fc1_w"]) + p["fc1_b"], 0.0)
    s = jax.nn.sigmoid(jnp.einsum("nijr,rc->nijc", h, p["fc2_w"]) + p["fc2_b"])
    return jnp.maximum(y * s + x, 0.0)


# --------------------------------- setup / main ----------------------------- #
def make_params(key, C, R, eps=1e-5):
    ks = jax.random.split(key, 12)
    # conv weights in PyTorch layout (Cout, Cin, 3, 3) -> HWIO.
    w1_oihw = jax.random.normal(ks[0], (C, C, 3, 3), jnp.float32) * 0.1
    w2_oihw = jax.random.normal(ks[1], (C, C, 3, 3), jnp.float32) * 0.1
    w1_hwio = jnp.transpose(w1_oihw, (2, 3, 1, 0))            # (3,3,Cin,Cout)
    w2_hwio = jnp.transpose(w2_oihw, (2, 3, 1, 0))

    def fold_bn(gk, bk, mk, vk):
        gamma = 0.5 + jax.random.uniform(gk, (C,), jnp.float32)
        beta = jax.random.normal(bk, (C,), jnp.float32) * 0.1
        mean = jax.random.normal(mk, (C,), jnp.float32) * 0.1
        var = 0.5 + jax.random.uniform(vk, (C,), jnp.float32)
        scale = gamma / jnp.sqrt(var + eps)
        bias = beta - mean * scale
        return scale.reshape(1, C), bias.reshape(1, C)

    s1, b1 = fold_bn(ks[2], ks[3], ks[4], ks[5])
    s2, b2 = fold_bn(ks[6], ks[7], ks[8], ks[9])

    fc1_w = jax.random.normal(ks[10], (C, R), jnp.float32) * 0.1   # 1x1-conv fc1
    fc2_w = jax.random.normal(ks[11], (R, C), jnp.float32) * 0.1   # 1x1-conv fc2
    fc1_b = jnp.linspace(-0.1, 0.1, R, dtype=jnp.float32).reshape(1, R)
    fc2_b = jnp.linspace(-0.1, 0.1, C, dtype=jnp.float32).reshape(1, C)

    return dict(w1_hwio=w1_hwio, w2_hwio=w2_hwio,
                s1=s1, b1=b1, s2=s2, b2=b2,
                fc1_w=fc1_w, fc1_b=fc1_b, fc2_w=fc2_w, fc2_b=fc2_b)


if __name__ == "__main__":
    # Shapes consistent with BasicBlock(inplanes=planes, stride=1, use_se=True).
    # N=4 so the batch-tiled grid has 2 steps of B_t=2 images each.
    N, H, W, C = 4, 16, 16, 32
    R = max(C // 4, 64)  # reduce_layer_planes

    key = jax.random.PRNGKey(0)
    kx, kp = jax.random.split(key)
    x = jax.random.normal(kx, (N, H, W, C), jnp.float32)   # NHWC (PyTorch: NCHW)
    params = make_params(kp, C, R)

    out = jax.block_until_ready(basic_block_forward(x, params))

    # Tight check vs. a reference that matches the kernel's bf16 matmul inputs
    # (f32 accumulation), plus a loose sanity check vs. the exact-f32 module.
    ref_q = jax.block_until_ready(ref_forward(x, params, match_bf16=True))
    ref_f = jax.block_until_ready(ref_forward(x, params, match_bf16=False))
    assert jnp.allclose(out, ref_q, rtol=1e-2, atol=1e-2), (
        float(jnp.max(jnp.abs(out - ref_q))))
    assert jnp.allclose(out, ref_f, rtol=2e-1, atol=2e-1), (
        float(jnp.max(jnp.abs(out - ref_f))))

    print("KERNEL_OK")
</pallas_src>

<mosaic_0001>
module attributes {stable_mosaic.version = 11 : i64} {
  func.func @basic_block_kernel(%arg0: i32, %arg1: memref<2x16x512xf32, #tpu.memory_space<vmem>>, %arg2: memref<3x512x512xbf16, #tpu.memory_space<vmem>>, %arg3: memref<3x512x512xbf16, #tpu.memory_space<vmem>>, %arg4: memref<6x512xf32, #tpu.memory_space<vmem>>, %arg5: memref<32x64xf32, #tpu.memory_space<vmem>>, %arg6: memref<64x32xf32, #tpu.memory_space<vmem>>, %arg7: memref<2x16x512xf32, #tpu.memory_space<vmem>>, %arg8: memref<2x18x512xbf16, #tpu.memory_space<vmem>>) attributes {dimension_semantics = [#tpu.dimension_semantics<parallel>], iteration_bounds = array<i64: 2>, scalar_prefetch = 0 : i64, scratch_operands = 1 : i64, tpu.core_type = #tpu.core_type<tc>, window_params = [{transform_indices = @transform_0, window_bounds = array<i64: 2, 16, 512>}, {pipeline_mode = #tpu.pipeline_mode<synchronous>, transform_indices = @transform_1, window_bounds = array<i64: 3, 512, 512>}, {pipeline_mode = #tpu.pipeline_mode<synchronous>, transform_indices = @transform_2, window_bounds = array<i64: 3, 512, 512>}, {pipeline_mode = #tpu.pipeline_mode<synchronous>, transform_indices = @transform_3, window_bounds = array<i64: 6, 512>}, {pipeline_mode = #tpu.pipeline_mode<synchronous>, transform_indices = @transform_4, window_bounds = array<i64: 32, 64>}, {pipeline_mode = #tpu.pipeline_mode<synchronous>, transform_indices = @transform_5, window_bounds = array<i64: 64, 32>}, {transform_indices = @transform_6, window_bounds = array<i64: 2, 16, 512>}]} {
    %cst = arith.constant 0.000000e+00 : bf16
    %0 = vector.broadcast %cst : bf16 to vector<2x1x512xbf16>
    %c0 = arith.constant 0 : index
    %c0_0 = arith.constant 0 : index
    %c0_1 = arith.constant 0 : index
    %1 = vector.load %arg8[%c0, %c0_0, %c0_1] : memref<2x18x512xbf16, #tpu.memory_space<vmem>>, vector<2x1x512xbf16>
    tpu.vector_store %arg8[%c0, %c0_0, %c0_1], %0 {strides = array<i32>} : memref<2x18x512xbf16, #tpu.memory_space<vmem>>, vector<2x1x512xbf16>,
    %c0_2 = arith.constant 0 : index
    %c17 = arith.constant 17 : index
    %c0_3 = arith.constant 0 : index
    %2 = vector.load %arg8[%c0_2, %c17, %c0_3] : memref<2x18x512xbf16, #tpu.memory_space<vmem>>, vector<2x1x512xbf16>
    tpu.vector_store %arg8[%c0_2, %c17, %c0_3], %0 {strides = array<i32>} : memref<2x18x512xbf16, #tpu.memory_space<vmem>>, vector<2x1x512xbf16>,
    %c0_4 = arith.constant 0 : index
    %c0_5 = arith.constant 0 : index
    %c0_6 = arith.constant 0 : index
    %3 = vector.load %arg1[%c0_4, %c0_5, %c0_6] : memref<2x16x512xf32, #tpu.memory_space<vmem>>, vector<2x16x512xf32>
    %4 = arith.truncf %3 : vector<2x16x512xf32> to vector<2x16x512xbf16>
    %c0_7 = arith.constant 0 : index
    %c1 = arith.constant 1 : index
    %c0_8 = arith.constant 0 : index
    %5 = vector.load %arg8[%c0_7, %c1, %c0_8] : memref<2x18x512xbf16, #tpu.memory_space<vmem>>, vector<2x16x512xbf16>
    tpu.vector_store %arg8[%c0_7, %c1, %c0_8], %4 {strides = array<i32>} : memref<2x18x512xbf16, #tpu.memory_space<vmem>>, vector<2x16x512xbf16>,
    %c0_9 = arith.constant 0 : index
    %c0_10 = arith.constant 0 : index
    %c0_11 = arith.constant 0 : index
    %6 = vector.load %arg8[%c0_9, %c0_10, %c0_11] : memref<2x18x512xbf16, #tpu.memory_space<vmem>>, vector<2x16x512xbf16>
    %7 = vector.shape_cast %6 : vector<2x16x512xbf16> to vector<32x512xbf16>
    %c0_12 = arith.constant 0 : index
    %c0_13 = arith.constant 0 : index
    %c0_14 = arith.constant 0 : index
    %8 = vector.load %arg2[%c0_12, %c0_13, %c0_14] : memref<3x512x512xbf16, #tpu.memory_space<vmem>>, vector<1x512x512xbf16>
    %9 = vector.shape_cast %8 : vector<1x512x512xbf16> to vector<512x512xbf16>
    %cst_15 = arith.constant dense<0.000000e+00> : vector<32x512xf32>
    %10 = tpu.matmul %7, %9, %cst_15 {dimension_numbers = #tpu.dot_dimension_numbers<[1], [0], [0], [1], [0, 0, 1, 1], [], []>} : vector<32x512xbf16>, vector<512x512xbf16>, vector<32x512xf32> -> vector<32x512xf32>
    %c0_16 = arith.constant 0 : index
    %c1_17 = arith.constant 1 : index
    %c0_18 = arith.constant 0 : index
    %11 = vector.load %arg8[%c0_16, %c1_17, %c0_18] : memref<2x18x512xbf16, #tpu.memory_space<vmem>>, vector<2x16x512xbf16>
    %12 = vector.shape_cast %11 : vector<2x16x512xbf16> to vector<32x512xbf16>
    %c1_19 = arith.constant 1 : index
    %c0_20 = arith.constant 0 : index
    %c0_21 = arith.constant 0 : index
    %13 = vector.load %arg2[%c1_19, %c0_20, %c0_21] : memref<3x512x512xbf16, #tpu.memory_space<vmem>>, vector<1x512x512xbf16>
    %14 = vector.shape_cast %13 : vector<1x512x512xbf16> to vector<512x512xbf16>
    %cst_22 = arith.constant dense<0.000000e+00> : vector<32x512xf32>
    %15 = tpu.matmul %12, %14, %cst_22 {dimension_numbers = #tpu.dot_dimension_numbers<[1], [0], [0], [1], [0, 0, 1, 1], [], []>} : vector<32x512xbf16>, vector<512x512xbf16>, vector<32x512xf32> -> vector<32x512xf32>
    %16 = arith.addf %10, %15 : vector<32x512xf32>
    %c0_23 = arith.constant 0 : index
    %c2 = arith.constant 2 : index
    %c0_24 = arith.constant 0 : index
    %17 = vector.load %arg8[%c0_23, %c2, %c0_24] : memref<2x18x512xbf16, #tpu.memory_space<vmem>>, vector<2x16x512xbf16>
    %18 = vector.shape_cast %17 : vector<2x16x512xbf16> to vector<32x512xbf16>
    %c2_25 = arith.constant 2 : index
    %c0_26 = arith.constant 0 : index
    %c0_27 = arith.constant 0 : index
    %19 = vector.load %arg2[%c2_25, %c0_26, %c0_27] : memref<3x512x512xbf16, #tpu.memory_space<vmem>>, vector<1x512x512xbf16>
    %20 = vector.shape_cast %19 : vector<1x512x512xbf16> to vector<512x512xbf16>
    %cst_28 = arith.constant dense<0.000000e+00> : vector<32x512xf32>
    %21 = tpu.matmul %18, %20, %cst_28 {dimension_numbers = #tpu.dot_dimension_numbers<[1], [0], [0], [1], [0, 0, 1, 1], [], []>} : vector<32x512xbf16>, vector<512x512xbf16>, vector<32x512xf32> -> vector<32x512xf32>
    %22 = arith.addf %16, %21 : vector<32x512xf32>
    %c0_29 = arith.constant 0 : index
    %c0_30 = arith.constant 0 : index
    %23 = vector.load %arg4[%c0_29, %c0_30] : memref<6x512xf32, #tpu.memory_space<vmem>>, vector<1x512xf32>
    %24 = vector.broadcast %23 : vector<1x512xf32> to vector<32x512xf32>
    %25 = arith.mulf %22, %24 : vector<32x512xf32>
    %c1_31 = arith.constant 1 : index
    %c0_32 = arith.constant 0 : index
    %26 = vector.load %arg4[%c1_31, %c0_32] : memref<6x512xf32, #tpu.memory_space<vmem>>, vector<1x512xf32>
    %27 = vector.broadcast %26 : vector<1x512xf32> to vector<32x512xf32>
    %28 = arith.addf %25, %27 : vector<32x512xf32>
    %cst_33 = arith.constant 0.000000e+00 : f32
    %29 = vector.broadcast %cst_33 : f32 to vector<32x512xf32>
    %30 = arith.cmpf ogt, %28, %29 : vector<32x512xf32>
    %cst_34 = arith.constant 1.000000e-03 : f32
    %31 = vector.broadcast %cst_34 : f32 to vector<32x512xf32>
    %32 = arith.mulf %31, %28 : vector<32x512xf32>
    %33 = arith.select %30, %28, %32 : vector<32x512xi1>, vector<32x512xf32>
    %34 = vector.shape_cast %33 : vector<32x512xf32> to vector<2x16x512xf32>
    %35 = arith.truncf %34 : vector<2x16x512xf32> to vector<2x16x512xbf16>
    %c0_35 = arith.constant 0 : index
    %c1_36 = arith.constant 1 : index
    %c0_37 = arith.constant 0 : index
    %36 = vector.load %arg8[%c0_35, %c1_36, %c0_37] : memref<2x18x512xbf16, #tpu.memory_space<vmem>>, vector<2x16x512xbf16>
    tpu.vector_store %arg8[%c0_35, %c1_36, %c0_37], %35 {strides = array<i32>} : memref<2x18x512xbf16, #tpu.memory_space<vmem>>, vector<2x16x512xbf16>,
    %c0_38 = arith.constant 0 : index
    %c0_39 = arith.constant 0 : index
    %c0_40 = arith.constant 0 : index
    %37 = vector.load %arg8[%c0_38, %c0_39, %c0_40] : memref<2x18x512xbf16, #tpu.memory_space<vmem>>, vector<2x16x512xbf16>
    %38 = vector.shape_cast %37 : vector<2x16x512xbf16> to vector<32x512xbf16>
    %c0_41 = arith.constant 0 : index
    %c0_42 = arith.constant 0 : index
    %c0_43 = arith.constant 0 : index
    %39 = vector.load %arg3[%c0_41, %c0_42, %c0_43] : memref<3x512x512xbf16, #tpu.memory_space<vmem>>, vector<1x512x512xbf16>
    %40 = vector.shape_cast %39 : vector<1x512x512xbf16> to vector<512x512xbf16>
    %cst_44 = arith.constant dense<0.000000e+00> : vector<32x512xf32>
    %41 = tpu.matmul %38, %40, %cst_44 {dimension_numbers = #tpu.dot_dimension_numbers<[1], [0], [0], [1], [0, 0, 1, 1], [], []>} : vector<32x512xbf16>, vector<512x512xbf16>, vector<32x512xf32> -> vector<32x512xf32>
    %c0_45 = arith.constant 0 : index
    %c1_46 = arith.constant 1 : index
    %c0_47 = arith.constant 0 : index
    %42 = vector.load %arg8[%c0_45, %c1_46, %c0_47] : memref<2x18x512xbf16, #tpu.memory_space<vmem>>, vector<2x16x512xbf16>
    %43 = vector.shape_cast %42 : vector<2x16x512xbf16> to vector<32x512xbf16>
    %c1_48 = arith.constant 1 : index
    %c0_49 = arith.constant 0 : index
    %c0_50 = arith.constant 0 : index
    %44 = vector.load %arg3[%c1_48, %c0_49, %c0_50] : memref<3x512x512xbf16, #tpu.memory_space<vmem>>, vector<1x512x512xbf16>
    %45 = vector.shape_cast %44 : vector<1x512x512xbf16> to vector<512x512xbf16>
    %cst_51 = arith.constant dense<0.000000e+00> : vector<32x512xf32>
    %46 = tpu.matmul %43, %45, %cst_51 {dimension_numbers = #tpu.dot_dimension_numbers<[1], [0], [0], [1], [0, 0, 1, 1], [], []>} : vector<32x512xbf16>, vector<512x512xbf16>, vector<32x512xf32> -> vector<32x512xf32>
    %47 = arith.addf %41, %46 : vector<32x512xf32>
    %c0_52 = arith.constant 0 : index
    %c2_53 = arith.constant 2 : index
    %c0_54 = arith.constant 0 : index
    %48 = vector.load %arg8[%c0_52, %c2_53, %c0_54] : memref<2x18x512xbf16, #tpu.memory_space<vmem>>, vector<2x16x512xbf16>
    %49 = vector.shape_cast %48 : vector<2x16x512xbf16> to vector<32x512xbf16>
    %c2_55 = arith.constant 2 : index
    %c0_56 = arith.constant 0 : index
    %c0_57 = arith.constant 0 : index
    %50 = vector.load %arg3[%c2_55, %c0_56, %c0_57] : memref<3x512x512xbf16, #tpu.memory_space<vmem>>, vector<1x512x512xbf16>
    %51 = vector.shape_cast %50 : vector<1x512x512xbf16> to vector<512x512xbf16>
    %cst_58 = arith.constant dense<0.000000e+00> : vector<32x512xf32>
    %52 = tpu.matmul %49, %51, %cst_58 {dimension_numbers = #tpu.dot_dimension_numbers<[1], [0], [0], [1], [0, 0, 1, 1], [], []>} : vector<32x512xbf16>, vector<512x512xbf16>, vector<32x512xf32> -> vector<32x512xf32>
    %53 = arith.addf %47, %52 : vector<32x512xf32>
    %c2_59 = arith.constant 2 : index
    %c0_60 = arith.constant 0 : index
    %54 = vector.load %arg4[%c2_59, %c0_60] : memref<6x512xf32, #tpu.memory_space<vmem>>, vector<1x512xf32>
    %55 = vector.broadcast %54 : vector<1x512xf32> to vector<32x512xf32>
    %56 = arith.mulf %53, %55 : vector<32x512xf32>
    %c3 = arith.constant 3 : index
    %c0_61 = arith.constant 0 : index
    %57 = vector.load %arg4[%c3, %c0_61] : memref<6x512xf32, #tpu.memory_space<vmem>>, vector<1x512xf32>
    %58 = vector.broadcast %57 : vector<1x512xf32> to vector<32x512xf32>
    %59 = arith.addf %56, %58 : vector<32x512xf32>
    %60 = vector.shape_cast %59 : vector<32x512xf32> to vector<2x16x512xf32>
    %cst_62 = arith.constant dense<0.000000e+00> : vector<2x512xf32>
    %61 = vector.multi_reduction <add>, %60, %cst_62 [1] : vector<2x16x512xf32> to vector<2x512xf32>
    %62 = vector.extract_strided_slice %61 {offsets = [0, 0], sizes = [2, 32], strides = [1, 1]} : vector<2x512xf32> to vector<2x32xf32>
    %63 = vector.extract_strided_slice %61 {offsets = [0, 32], sizes = [2, 32], strides = [1, 1]} : vector<2x512xf32> to vector<2x32xf32>
    %64 = arith.addf %62, %63 : vector<2x32xf32>
    %65 = vector.extract_strided_slice %61 {offsets = [0, 64], sizes = [2, 32], strides = [1, 1]} : vector<2x512xf32> to vector<2x32xf32>
    %66 = arith.addf %64, %65 : vector<2x32xf32>
    %67 = vector.extract_strided_slice %61 {offsets = [0, 96], sizes = [2, 32], strides = [1, 1]} : vector<2x512xf32> to vector<2x32xf32>
    %68 = arith.addf %66, %67 : vector<2x32xf32>
    %69 = vector.extract_strided_slice %61 {offsets = [0, 128], sizes = [2, 32], strides = [1, 1]} : vector<2x512xf32> to vector<2x32xf32>
    %70 = arith.addf %68, %69 : vector<2x32xf32>
    %71 = vector.extract_strided_slice %61 {offsets = [0, 160], sizes = [2, 32], strides = [1, 1]} : vector<2x512xf32> to vector<2x32xf32>
    %72 = arith.addf %70, %71 : vector<2x32xf32>
    %73 = vector.extract_strided_slice %61 {offsets = [0, 192], sizes = [2, 32], strides = [1, 1]} : vector<2x512xf32> to vector<2x32xf32>
    %74 = arith.addf %72, %73 : vector<2x32xf32>
    %75 = vector.extract_strided_slice %61 {offsets = [0, 224], sizes = [2, 32], strides = [1, 1]} : vector<2x512xf32> to vector<2x32xf32>
    %76 = arith.addf %74, %75 : vector<2x32xf32>
    %77 = vector.extract_strided_slice %61 {offsets = [0, 256], sizes = [2, 32], strides = [1, 1]} : vector<2x512xf32> to vector<2x32xf32>
    %78 = arith.addf %76, %77 : vector<2x32xf32>
    %79 = vector.extract_strided_slice %61 {offsets = [0, 288], sizes = [2, 32], strides = [1, 1]} : vector<2x512xf32> to vector<2x32xf32>
    %80 = arith.addf %78, %79 : vector<2x32xf32>
    %81 = vector.extract_strided_slice %61 {offsets = [0, 320], sizes = [2, 32], strides = [1, 1]} : vector<2x512xf32> to vector<2x32xf32>
    %82 = arith.addf %80, %81 : vector<2x32xf32>
    %83 = vector.extract_strided_slice %61 {offsets = [0, 352], sizes = [2, 32], strides = [1, 1]} : vector<2x512xf32> to vector<2x32xf32>
    %84 = arith.addf %82, %83 : vector<2x32xf32>
    %85 = vector.extract_strided_slice %61 {offsets = [0, 384], sizes = [2, 32], strides = [1, 1]} : vector<2x512xf32> to vector<2x32xf32>
    %86 = arith.addf %84, %85 : vector<2x32xf32>
    %87 = vector.extract_strided_slice %61 {offsets = [0, 416], sizes = [2, 32], strides = [1, 1]} : vector<2x512xf32> to vector<2x32xf32>
    %88 = arith.addf %86, %87 : vector<2x32xf32>
    %89 = vector.extract_strided_slice %61 {offsets = [0, 448], sizes = [2, 32], strides = [1, 1]} : vector<2x512xf32> to vector<2x32xf32>
    %90 = arith.addf %88, %89 : vector<2x32xf32>
    %91 = vector.extract_strided_slice %61 {offsets = [0, 480], sizes = [2, 32], strides = [1, 1]} : vector<2x512xf32> to vector<2x32xf32>
    %92 = arith.addf %90, %91 : vector<2x32xf32>
    %cst_63 = arith.constant 3.906250e-03 : f32
    %93 = vector.broadcast %cst_63 : f32 to vector<2x32xf32>
    %94 = arith.mulf %92, %93 : vector<2x32xf32>
    %c4 = arith.constant 4 : index
    %c0_64 = arith.constant 0 : index
    %95 = vector.load %arg4[%c4, %c0_64] : memref<6x512xf32, #tpu.memory_space<vmem>>, vector<1x64xf32>
    %c5 = arith.constant 5 : index
    %c0_65 = arith.constant 0 : index
    %96 = vector.load %arg4[%c5, %c0_65] : memref<6x512xf32, #tpu.memory_space<vmem>>, vector<1x32xf32>
    %c0_66 = arith.constant 0 : index
    %c0_67 = arith.constant 0 : index
    %97 = vector.load %arg5[%c0_66, %c0_67] : memref<32x64xf32, #tpu.memory_space<vmem>>, vector<32x64xf32>
    %cst_68 = arith.constant dense<0.000000e+00> : vector<2x64xf32>
    %98 = tpu.matmul %94, %97, %cst_68 {dimension_numbers = #tpu.dot_dimension_numbers<[1], [0], [0], [1], [0, 0, 1, 1], [], []>} : vector<2x32xf32>, vector<32x64xf32>, vector<2x64xf32> -> vector<2x64xf32>
    %99 = vector.broadcast %95 : vector<1x64xf32> to vector<2x64xf32>
    %100 = arith.addf %98, %99 : vector<2x64xf32>
    %cst_69 = arith.constant 0.000000e+00 : f32
    %101 = vector.broadcast %cst_69 : f32 to vector<2x64xf32>
    %102 = arith.maximumf %100, %101 : vector<2x64xf32>
    %c0_70 = arith.constant 0 : index
    %c0_71 = arith.constant 0 : index
    %103 = vector.load %arg6[%c0_70, %c0_71] : memref<64x32xf32, #tpu.memory_space<vmem>>, vector<64x32xf32>
    %cst_72 = arith.constant dense<0.000000e+00> : vector<2x32xf32>
    %104 = tpu.matmul %102, %103, %cst_72 {dimension_numbers = #tpu.dot_dimension_numbers<[1], [0], [0], [1], [0, 0, 1, 1], [], []>} : vector<2x64xf32>, vector<64x32xf32>, vector<2x32xf32> -> vector<2x32xf32>
    %105 = vector.broadcast %96 : vector<1x32xf32> to vector<2x32xf32>
    %106 = arith.addf %104, %105 : vector<2x32xf32>
    %107 = arith.negf %106 : vector<2x32xf32>
    %108 = math.exp %107 : vector<2x32xf32>
    %cst_73 = arith.constant 1.000000e+00 : f32
    %109 = vector.broadcast %cst_73 : f32 to vector<2x32xf32>
    %110 = arith.addf %109, %108 : vector<2x32xf32>
    %111 = arith.divf %109, %110 : vector<2x32xf32>
    %112 = tpu.concatenate %111, %111, %111, %111, %111, %111, %111, %111, %111, %111, %111, %111, %111, %111, %111, %111 in 1 : vector<2x32xf32>, vector<2x32xf32>, vector<2x32xf32>, vector<2x32xf32>, vector<2x32xf32>, vector<2x32xf32>, vector<2x32xf32>, vector<2x32xf32>, vector<2x32xf32>, vector<2x32xf32>, vector<2x32xf32>, vector<2x32xf32>, vector<2x32xf32>, vector<2x32xf32>, vector<2x32xf32>, vector<2x32xf32> -> vector<2x512xf32>
    %113 = vector.shape_cast %59 : vector<32x512xf32> to vector<2x16x512xf32>
    %114 = vector.shape_cast %112 : vector<2x512xf32> to vector<2x1x512xf32>
    %115 = vector.broadcast %114 : vector<2x1x512xf32> to vector<2x16x512xf32>
    %116 = arith.mulf %113, %115 : vector<2x16x512xf32>
    %c0_74 = arith.constant 0 : index
    %c0_75 = arith.constant 0 : index
    %c0_76 = arith.constant 0 : index
    %117 = vector.load %arg1[%c0_74, %c0_75, %c0_76] : memref<2x16x512xf32, #tpu.memory_space<vmem>>, vector<2x16x512xf32>
    %118 = arith.addf %116, %117 : vector<2x16x512xf32>
    %cst_77 = arith.constant 0.000000e+00 : f32
    %119 = vector.broadcast %cst_77 : f32 to vector<2x16x512xf32>
    %120 = arith.maximumf %118, %119 : vector<2x16x512xf32>
    %c0_78 = arith.constant 0 : index
    %c0_79 = arith.constant 0 : index
    %c0_80 = arith.constant 0 : index
    %121 = vector.load %arg7[%c0_78, %c0_79, %c0_80] : memref<2x16x512xf32, #tpu.memory_space<vmem>>, vector<2x16x512xf32>
    tpu.vector_store %arg7[%c0_78, %c0_79, %c0_80], %120 {strides = array<i32>} : memref<2x16x512xf32, #tpu.memory_space<vmem>>, vector<2x16x512xf32>,
    return
  }
  func.func @transform_0(%arg0: i32) -> (i32, i32, i32) {
    %c0_i32 = arith.constant 0 : i32
    %c0_i32_0 = arith.constant 0 : i32
    %c0_i32_1 = arith.constant 0 : i32
    return %arg0, %c0_i32, %c0_i32_0 : i32, i32, i32
  }
  func.func @transform_1(%arg0: i32) -> (i32, i32, i32) {
    %c0_i32 = arith.constant 0 : i32
    %c0_i32_0 = arith.constant 0 : i32
    %c0_i32_1 = arith.constant 0 : i32
    %c0_i32_2 = arith.constant 0 : i32
    return %c0_i32, %c0_i32_0, %c0_i32_1 : i32, i32, i32
  }
  func.func @transform_2(%arg0: i32) -> (i32, i32, i32) {
    %c0_i32 = arith.constant 0 : i32
    %c0_i32_0 = arith.constant 0 : i32
    %c0_i32_1 = arith.constant 0 : i32
    %c0_i32_2 = arith.constant 0 : i32
    return %c0_i32, %c0_i32_0, %c0_i32_1 : i32, i32, i32
  }
  func.func @transform_3(%arg0: i32) -> (i32, i32) {
    %c0_i32 = arith.constant 0 : i32
    %c0_i32_0 = arith.constant 0 : i32
    %c0_i32_1 = arith.constant 0 : i32
    return %c0_i32, %c0_i32_0 : i32, i32
  }
  func.func @transform_4(%arg0: i32) -> (i32, i32) {
    %c0_i32 = arith.constant 0 : i32
    %c0_i32_0 = arith.constant 0 : i32
    %c0_i32_1 = arith.constant 0 : i32
    return %c0_i32, %c0_i32_0 : i32, i32
  }
  func.func @transform_5(%arg0: i32) -> (i32, i32) {
    %c0_i32 = arith.constant 0 : i32
    %c0_i32_0 = arith.constant 0 : i32
    %c0_i32_1 = arith.constant 0 : i32
    return %c0_i32, %c0_i32_0 : i32, i32
  }
  func.func @transform_6(%arg0: i32) -> (i32, i32, i32) {
    %c0_i32 = arith.constant 0 : i32
    %c0_i32_0 = arith.constant 0 : i32
    %c0_i32_1 = arith.constant 0 : i32
    return %arg0, %c0_i32, %c0_i32_0 : i32, i32, i32
  }
}

</mosaic_0001>

<llo_original>
// kernel: tpu_custom_call.1
$region0: #{tpu_custom_call.1}
  #allocation0 [shape = 'u32[]', space=smem, size = 0x4, offset = 0x4, fixed_abs, tag = 'smem constant byte address 0x4 - core index']
  #allocation1 [shape = 'u32[144,128]{1,0:T(1,128)}', space=vmem, size = 0x12000, scoped, tag = 'internal scratch']
  #allocation2 [shape = 'bf16[2,18,512]{2,1,0:T(8,128)(2,1)}', space=vmem, size = 0xc000, scoped, tag = 'scratch operand']
  %s0 = inlined_call_operand.hbm [shape: f32[4,16,512], index: 0, kind: input, shape index: {}]
  %s1 = inlined_call_operand.hbm [shape: bf16[3,512,512], index: 1, kind: input, shape index: {}]
  %s2 = inlined_call_operand.hbm [shape: bf16[3,512,512], index: 2, kind: input, shape index: {}]
  %s3 = inlined_call_operand.hbm [shape: f32[6,512], index: 3, kind: input, shape index: {}]
  %s4 = inlined_call_operand.hbm [shape: f32[32,64], index: 4, kind: input, shape index: {}]
  %s5 = inlined_call_operand.vmem [shape: f32[64,32], index: 5, kind: input, shape index: {}]
  %s6 = inlined_call_operand.hbm [shape: f32[4,16,512], index: 6, kind: output, shape index: {}]
  %s7 = sld [smem:[#allocation0]]
  $region77: #{tpu_custom_call.1} parent=0
    _
  %s9 = ssub.s32 1, %s7
  %s10 = scalar_select 0, %s9, %s7
  $region1: #{tpu_custom_call.1} parent=0
    #allocation3 [shape = 'u8[131072]{0}', space=vmem, size = 0x20000, scoped, tag = 'input window, operand 0']
    #allocation4 [shape = 's32[2]{0}', space=sflag, size = 0x8, scoped, tag = 'scoped memory for tpu_custom_call.1']
    #allocation5 [shape = 's32[2]{0}', space=sflag, size = 0x8, scoped, tag = 'scoped memory for tpu_custom_call.1']
    #allocation6 [shape = 'u8[1572864]{0}', space=vmem, size = 0x180000, scoped, tag = 'input window, operand 1, single buffered']
    #allocation7 [shape = 's32[1]{0}', space=sflag, size = 0x4, scoped, tag = 'scoped memory for tpu_custom_call.1']
    #allocation8 [shape = 'u8[1572864]{0}', space=vmem, size = 0x180000, scoped, tag = 'input window, operand 2, single buffered']
    #allocation9 [shape = 'u8[16384]{0}', space=vmem, size = 0x4000, scoped, tag = 'input window, operand 3, single buffered']
    #allocation10 [shape = 's32[1]{0}', space=sflag, size = 0x4, scoped, tag = 'scoped memory for tpu_custom_call.1']
    #allocation11 [shape = 'u8[16384]{0}', space=vmem, size = 0x4000, scoped, tag = 'input window, operand 4, single buffered']
    #allocation12 [shape = 'u8[131072]{0}', space=vmem, size = 0x20000, scoped, tag = 'output window, operand 0']
    %11 = vsyncpa [#allocation4], 0
    %s12 = scalar_lea.sflag [#allocation4], 1
    %13 = vsyncpa %s12, 0
    %14 = vsyncpa [#allocation7], 0
    %15 = vsyncpa [#allocation10], 0
    %16 = vsyncpa [#allocation5], 0
    %s17 = scalar_lea.sflag [#allocation5], 1
    %18 = vsyncpa %s17, 0
    loop: start=0, step=1, limit=4
    $region2: #{tpu_custom_call.1} parent=1 // loop_pre_header
      _
    $region3: #{tpu_custom_call.1} parent=1 // loop_header
      %s20 = sphi 0, %s24
      %p21 = scmp.ge.s32.totalorder %s20, 4
      %s30 = sphi 0, %s32
      %s33 = sphi 0, %s30
      %s34 = sphi 0, %s33
      %s50 = sphi 0, %s34
      %s54 = sphi 0, %s54
      %s56 = sphi 0, %s54
      %s57 = sphi 0, %s56
      %s71 = sphi 0, %s57
      %s75 = sphi 0, %s75
      %s77 = sphi 0, %s75
      %s78 = sphi 0, %s77
      %s92 = sphi 0, %s78
      %s96 = sphi 0, %s96
      %s98 = sphi 0, %s96
      %s99 = sphi 0, %s98
      %s113 = sphi 0, %s99
      %s117 = sphi 0, %s117
      %s119 = sphi 0, %s117
      %s120 = sphi 0, %s119
      %s134 = sphi 0, %s120
      %s138 = sphi 0, %s138
      %s140 = sphi 0, %s138
      %s141 = sphi 0, %s140
      %s155 = sphi 0, %s141
      %s161 = sphi 0, %s163
      %s164 = sphi 0, %s161
      %s165 = sphi 0, %s164
      %s181 = sphi 0, %s165
    $region4: #{tpu_custom_call.1} parent=1 // loop_header_branch
      %23 = sbr.rel (%p21) target = $region8
    $region5: #{tpu_custom_call.1} parent=1 // loop_body
      %s25 = ssub.s32 %s20, 1
      %s26 = ssub.s32 %s20, 2
      %s27 = sadd.s32 %s20, 1
      %s28 = ssub.s32 %s20, %s27
      %p29 = scmp.eq.s32.totalorder %s28, 0
      %s31 = sadd.s32 %s30, 1
      %s32 = scalar_select %p29, %s30, %s31
      %p35 = pneg %p29
      %p36 = scmp.eq.s32.totalorder %s20, 1
      %p37 = por %p35, %p36
      %p38 = scmp.ne.s32.totalorder %s30, %s33
      %p39 = scmp.eq.s32.totalorder %s20, 0
      %p40 = por %p38, %p39
      %p41 = scmp.ne.s32.totalorder %s30, %s33
      %p42 = scmp.eq.s32.totalorder %s25, 1
      %p43 = por %p41, %p42
      %p44 = scmp.ne.s32.totalorder %s33, %s34
      %p45 = scmp.eq.s32.totalorder %s25, 0
      %p46 = por %p44, %p45
      %p47 = scmp.ne.s32.totalorder %s33, %s34
      %p48 = scmp.eq.s32.totalorder %s26, 1
      %p49 = por %p47, %p48
      %p51 = scmp.ne.s32.totalorder %s34, %s50
      %p52 = scmp.eq.s32.totalorder %s26, 0
      %p53 = por %p51, %p52
      %s55 = sadd.s32 %s54, 1
      %p58 = scmp.eq.s32.totalorder %s20, 1
      %p59 = scmp.ne.s32.totalorder %s54, %s56
      %p60 = scmp.eq.s32.totalorder %s20, 0
      %p61 = por %p59, %p60
      %p62 = scmp.ne.s32.totalorder %s54, %s56
      %p63 = scmp.eq.s32.totalorder %s25, 1
      %p64 = por %p62, %p63
      %p65 = scmp.ne.s32.totalorder %s56, %s57
      %p66 = scmp.eq.s32.totalorder %s25, 0
      %p67 = por %p65, %p66
      %p68 = scmp.ne.s32.totalorder %s56, %s57
      %p69 = scmp.eq.s32.totalorder %s26, 1
      %p70 = por %p68, %p69
      %p72 = scmp.ne.s32.totalorder %s57, %s71
      %p73 = scmp.eq.s32.totalorder %s26, 0
      %p74 = por %p72, %p73
      %s76 = sadd.s32 %s75, 1
      %p79 = scmp.eq.s32.totalorder %s20, 1
      %p80 = scmp.ne.s32.totalorder %s75, %s77
      %p81 = scmp.eq.s32.totalorder %s20, 0
      %p82 = por %p80, %p81
      %p83 = scmp.ne.s32.totalorder %s75, %s77
      %p84 = scmp.eq.s32.totalorder %s25, 1
      %p85 = por %p83, %p84
      %p86 = scmp.ne.s32.totalorder %s77, %s78
      %p87 = scmp.eq.s32.totalorder %s25, 0
      %p88 = por %p86, %p87
      %p89 = scmp.ne.s32.totalorder %s77, %s78
      %p90 = scmp.eq.s32.totalorder %s26, 1
      %p91 = por %p89, %p90
      %p93 = scmp.ne.s32.totalorder %s78, %s92
      %p94 = scmp.eq.s32.totalorder %s26, 0
      %p95 = por %p93, %p94
      %s97 = sadd.s32 %s96, 1
      %p100 = scmp.eq.s32.totalorder %s20, 1
      %p101 = scmp.ne.s32.totalorder %s96, %s98
      %p102 = scmp.eq.s32.totalorder %s20, 0
      %p103 = por %p101, %p102
      %p104 = scmp.ne.s32.totalorder %s96, %s98
      %p105 = scmp.eq.s32.totalorder %s25, 1
      %p106 = por %p104, %p105
      %p107 = scmp.ne.s32.totalorder %s98, %s99
      %p108 = scmp.eq.s32.totalorder %s25, 0
      %p109 = por %p107, %p108
      %p110 = scmp.ne.s32.totalorder %s98, %s99
      %p111 = scmp.eq.s32.totalorder %s26, 1
      %p112 = por %p110, %p111
      %p114 = scmp.ne.s32.totalorder %s99, %s113
      %p115 = scmp.eq.s32.totalorder %s26, 0
      %p116 = por %p114, %p115
      %s118 = sadd.s32 %s117, 1
      %p121 = scmp.eq.s32.totalorder %s20, 1
      %p122 = scmp.ne.s32.totalorder %s117, %s119
      %p123 = scmp.eq.s32.totalorder %s20, 0
      %p124 = por %p122, %p123
      %p125 = scmp.ne.s32.totalorder %s117, %s119
      %p126 = scmp.eq.s32.totalorder %s25, 1
      %p127 = por %p125, %p126
      %p128 = scmp.ne.s32.totalorder %s119, %s120
      %p129 = scmp.eq.s32.totalorder %s25, 0
      %p130 = por %p128, %p129
      %p131 = scmp.ne.s32.totalorder %s119, %s120
      %p132 = scmp.eq.s32.totalorder %s26, 1
      %p133 = por %p131, %p132
      %p135 = scmp.ne.s32.totalorder %s120, %s134
      %p136 = scmp.eq.s32.totalorder %s26, 0
      %p137 = por %p135, %p136
      %s139 = sadd.s32 %s138, 1
      %p142 = scmp.eq.s32.totalorder %s20, 1
      %p143 = scmp.ne.s32.totalorder %s138, %s140
      %p144 = scmp.eq.s32.totalorder %s20, 0
      %p145 = por %p143, %p144
      %p146 = scmp.ne.s32.totalorder %s138, %s140
      %p147 = scmp.eq.s32.totalorder %s25, 1
      %p148 = por %p146, %p147
      %p149 = scmp.ne.s32.totalorder %s140, %s141
      %p150 = scmp.eq.s32.totalorder %s25, 0
      %p151 = por %p149, %p150
      %p152 = scmp.ne.s32.totalorder %s140, %s141
      %p153 = scmp.eq.s32.totalorder %s26, 1
      %p154 = por %p152, %p153
      %p156 = scmp.ne.s32.totalorder %s141, %s155
      %p157 = scmp.eq.s32.totalorder %s26, 0
      %p158 = por %p156, %p157
      %s159 = ssub.s32 %s20, %s27
      %p160 = scmp.eq.s32.totalorder %s159, 0
      %s162 = sadd.s32 %s161, 1
      %s163 = scalar_select %p160, %s161, %s162
      %p166 = pneg %p160
      %p167 = scmp.eq.s32.totalorder %s20, 1
      %p168 = por %p166, %p167
      %p169 = scmp.ne.s32.totalorder %s161, %s164
      %p170 = scmp.eq.s32.totalorder %s20, 0
      %p171 = por %p169, %p170
      %p172 = scmp.ne.s32.totalorder %s161, %s164
      %p173 = scmp.eq.s32.totalorder %s25, 1
      %p174 = por %p172, %p173
      %p175 = scmp.ne.s32.totalorder %s164, %s165
      %p176 = scmp.eq.s32.totalorder %s25, 0
      %p177 = por %p175, %p176
      %p178 = scmp.ne.s32.totalorder %s164, %s165
      %p179 = scmp.eq.s32.totalorder %s26, 1
      %p180 = por %p178, %p179
      %p182 = scmp.ne.s32.totalorder %s165, %s181
      %p183 = scmp.eq.s32.totalorder %s26, 0
      %p184 = por %p182, %p183
      %p185 = scmp.le.s32.totalorder 1, %s20
      %p186 = scmp.lt.s32.totalorder %s20, 3
      %p187 = pnand %p185, %p186
      %p188 = pneg %p187
      // Predicated region
      $region9: #{tpu_custom_call.1} parent=5 // pred_check
        _
      $region10: #{tpu_custom_call.1} parent=5 // pred_check_branch
        %190 = sbr.rel (%p187) target = $region12
      $region11: #{tpu_custom_call.1} parent=5 // pred_region
        %s191 = ssub.s32 %s20, 1
        // Predicated region
        $region13: #{tpu_custom_call.1} parent=11 // pred_check
          %p192 = pneg %p67
        $region14: #{tpu_custom_call.1} parent=11 // pred_check_branch
          %194 = sbr.rel (%p192) target = $region16
        $region15: #{tpu_custom_call.1} parent=11 // pred_region
          %s196 = ssub.s32 49152, 49152
          %197 = vsyncadd [#allocation7], %s196
          %s198 = sshll.u32 [#allocation6], 4
          %s199 = int_to_ptr.vmem [resolvable:$true] %s198
          %204 = dma.hbm_to_vmem [thread:$0]  %s1, 49152, %s199, [#allocation7], 256, 256, 16
        $region16: #{tpu_custom_call.1} parent=11 // pred_fallthru
          _
        // Predicated region
        $region17: #{tpu_custom_call.1} parent=11 // pred_check
          %p205 = pneg %p88
        $region18: #{tpu_custom_call.1} parent=11 // pred_check_branch
          %207 = sbr.rel (%p205) target = $region20
        $region19: #{tpu_custom_call.1} parent=11 // pred_region
          %s209 = ssub.s32 49152, 49152
          %210 = vsyncadd [#allocation7], %s209
          %s211 = sshll.u32 [#allocation8], 4
          %s212 = int_to_ptr.vmem [resolvable:$true] %s211
          %217 = dma.hbm_to_vmem [thread:$0]  %s2, 49152, %s212, [#allocation7], 256, 256, 16
        $region20: #{tpu_custom_call.1} parent=11 // pred_fallthru
          _
        // Predicated region
        $region21: #{tpu_custom_call.1} parent=11 // pred_check
          %p218 = pneg %p109
        $region22: #{tpu_custom_call.1} parent=11 // pred_check_branch
          %220 = sbr.rel (%p218) target = $region24
        $region23: #{tpu_custom_call.1} parent=11 // pred_region
          %s222 = ssub.s32 512, 512
          %223 = vsyncadd [#allocation10], %s222
          %s225 = sshll.u32 [#allocation9], 4
          %s226 = int_to_ptr.vmem [resolvable:$true] %s225
          %228 = dma.hbm_to_vmem [thread:$0]  %s3, 512, %s226, [#allocation10]
        $region24: #{tpu_custom_call.1} parent=11 // pred_fallthru
          _
        // Predicated region
        $region25: #{tpu_custom_call.1} parent=11 // pred_check
          %p229 = pneg %p130
        $region26: #{tpu_custom_call.1} parent=11 // pred_check_branch
          %231 = sbr.rel (%p229) target = $region28
        $region27: #{tpu_custom_call.1} parent=11 // pred_region
          %s233 = ssub.s32 512, 512
          %234 = vsyncadd [#allocation10], %s233
          %s235 = sshll.u32 [#allocation11], 4
          %s236 = int_to_ptr.vmem [resolvable:$true] %s235
          %241 = dma.hbm_to_vmem [thread:$0]  %s4, 512, %s236, [#allocation10], 128, 128, 8
        $region28: #{tpu_custom_call.1} parent=11 // pred_fallthru
          _
        // Predicated region
        $region29: #{tpu_custom_call.1} parent=11 // pred_check
          %p242 = pneg %p151
        $region30: #{tpu_custom_call.1} parent=11 // pred_check_branch
          %244 = sbr.rel (%p242) target = $region32
        $region31: #{tpu_custom_call.1} parent=11 // pred_region
          _
        $region32: #{tpu_custom_call.1} parent=11 // pred_fallthru
          _
      $region12: #{tpu_custom_call.1} parent=5 // pred_fallthru
        _
      %p245 = scmp.lt.s32.totalorder %s20, 2
      // Predicated region
      $region33: #{tpu_custom_call.1} parent=5 // pred_check
        %p246 = pneg %p245
      $region34: #{tpu_custom_call.1} parent=5 // pred_check_branch
        %248 = sbr.rel (%p246) target = $region36
      $region35: #{tpu_custom_call.1} parent=5 // pred_region
        // Predicated region
        $region37: #{tpu_custom_call.1} parent=35 // pred_check
          %p249 = pneg %p40
        $region38: #{tpu_custom_call.1} parent=35 // pred_check_branch
          %251 = sbr.rel (%p249) target = $region40
        $region39: #{tpu_custom_call.1} parent=35 // pred_region
          %s252 = sand.u32 %s30, 1
          %s253 = scalar_lea.sflag [#allocation4], %s252
          %s254 = sand.u32 %s30, 1
          %s255 = smul.addr %s254, 128
          %s256 = scalar_lea.vmem [#allocation3], %s255
          %s257 = smul.u32 2, %s20
          %s259 = ssub.s32 2048, 2048
          %260 = vsyncadd %s253, %s259
          %s261 = smul.addr %s257, 8
          %s262 = smul.addr %s261, 128
          %s263 = scalar_lea.hbm %s0, %s262
          %s264 = sshll.u32 %s256, 4
          %s265 = int_to_ptr.vmem [resolvable:$true] %s264
          %270 = dma.hbm_to_vmem [thread:$0]  %s263, 2048, %s265, %s253, 512, 512, 32
        $region40: #{tpu_custom_call.1} parent=35 // pred_fallthru
          _
      $region36: #{tpu_custom_call.1} parent=5 // pred_fallthru
        _
      %p271 = scmp.le.s32.totalorder 1, %s20
      %p272 = scmp.lt.s32.totalorder %s20, 3
      %p273 = pnand %p271, %p272
      %p274 = pneg %p273
      // Predicated region
      $region41: #{tpu_custom_call.1} parent=5 // pred_check
        _
      $region42: #{tpu_custom_call.1} parent=5 // pred_check_branch
        %276 = sbr.rel (%p273) target = $region44
      $region43: #{tpu_custom_call.1} parent=5 // pred_region
        %s277 = ssub.s32 %s20, 1
        %s278 = sand.u32 %s33, 1
        %s279 = scalar_lea.sflag [#allocation4], %s278
        %s280 = sand.u32 %s33, 1
        %s281 = smul.addr %s280, 128
        %s282 = scalar_lea.vmem [#allocation3], %s281
        // Predicated region
        $region45: #{tpu_custom_call.1} parent=43 // pred_check
          %p283 = pneg %p46
        $region46: #{tpu_custom_call.1} parent=43 // pred_check_branch
          %285 = sbr.rel (%p283) target = $region48
        $region47: #{tpu_custom_call.1} parent=43 // pred_region
          %286 = dma.done %s279, 2048
        $region48: #{tpu_custom_call.1} parent=43 // pred_fallthru
          _
        // Predicated region
        $region49: #{tpu_custom_call.1} parent=43 // pred_check
          %p287 = pneg %p67
        $region50: #{tpu_custom_call.1} parent=43 // pred_check_branch
          %289 = sbr.rel (%p287) target = $region52
        $region51: #{tpu_custom_call.1} parent=43 // pred_region
          %290 = dma.done [#allocation7], 49152
        $region52: #{tpu_custom_call.1} parent=43 // pred_fallthru
          _
        // Predicated region
        $region53: #{tpu_custom_call.1} parent=43 // pred_check
          %p291 = pneg %p88
        $region54: #{tpu_custom_call.1} parent=43 // pred_check_branch
          %293 = sbr.rel (%p291) target = $region56
        $region55: #{tpu_custom_call.1} parent=43 // pred_region
          %294 = dma.done [#allocation7], 49152
        $region56: #{tpu_custom_call.1} parent=43 // pred_fallthru
          _
        // Predicated region
        $region57: #{tpu_custom_call.1} parent=43 // pred_check
          %p295 = pneg %p109
        $region58: #{tpu_custom_call.1} parent=43 // pred_check_branch
          %297 = sbr.rel (%p295) target = $region60
        $region59: #{tpu_custom_call.1} parent=43 // pred_region
          %298 = dma.done [#allocation10], 512
        $region60: #{tpu_custom_call.1} parent=43 // pred_fallthru
          _
        // Predicated region
        $region61: #{tpu_custom_call.1} parent=43 // pred_check
          %p299 = pneg %p130
        $region62: #{tpu_custom_call.1} parent=43 // pred_check_branch
          %301 = sbr.rel (%p299) target = $region64
        $region63: #{tpu_custom_call.1} parent=43 // pred_region
          %302 = dma.done [#allocation10], 512
        $region64: #{tpu_custom_call.1} parent=43 // pred_fallthru
          _
        %s303 = sand.u32 %s33, 1
        %s304 = scalar_lea.sflag [#allocation4], %s303
        %s305 = sand.u32 %s33, 1
        %s306 = smul.addr %s305, 128
        %s307 = scalar_lea.vmem [#allocation3], %s306
        %p308 = pneg %p46
        %p309 = pneg %p43
        %p310 = pneg %p67
        %p311 = pneg %p64
        %p312 = pneg %p88
        %p313 = pneg %p85
        %p314 = pneg %p109
        %p315 = pneg %p106
        %p316 = pneg %p130
        %p317 = pneg %p127
        %p318 = pneg %p151
        %p319 = pneg %p148
        %p320 = pneg %p177
        %p321 = pneg %p174
        %s322 = sand.u32 %s164, 1
        %s323 = scalar_lea.sflag [#allocation5], %s322
        %s324 = sand.u32 %s164, 1
        %s325 = smul.addr %s324, 128
        %s326 = scalar_lea.vmem [#allocation12], %s325
        %s327 = smul.u32 2, %s25
        %s328 = smul.u32 2, %s25
        %vm330 = vcmask 1040384
        %vm331 = vsmask.f32 256
        %vm332 = vmand %vm330, %vm331
        %vm333 = vcmask 1044484
        %vm334 = vsmask.f32 4352
        %vm335 = vmand %vm333, %vm334
        %vm336 = vmor %vm335, %vm332
        %v337 = vld [vmem:[#allocation2] sm:$0x11]
        %v338 = vsel %vm336, 0, %v337
        %339 = vst [vmem:[#allocation2] sm:$0x11] %v338
        %v340 = vld [vmem:[#allocation2 + $0x8] sm:$0x11]
        %v341 = vsel %vm336, 0, %v340
        %342 = vst [vmem:[#allocation2 + $0x8] sm:$0x11] %v341
        %v343 = vld [vmem:[#allocation2 + $0x30] sm:$0x11]
        %v344 = vsel %vm336, 0, %v343
        %345 = vst [vmem:[#allocation2 + $0x30] sm:$0x11] %v344
        %v346 = vld [vmem:[#allocation2 + $0x38] sm:$0x11]
        %v347 = vsel %vm336, 0, %v346
        %348 = vst [vmem:[#allocation2 + $0x38] sm:$0x11] %v347
        %vm349 = vsmask.f32 7938
        %vm350 = vmand %vm330, %vm349
        %vm351 = vsmask.f32 7954
        %vm352 = vmand %vm333, %vm351
        %vm353 = vmor %vm352, %vm350
        %v354 = vld [vmem:[#allocation2 + $0x20] sm:$0x11]
        %v355 = vsel %vm353, 0, %v354
        %356 = vst [vmem:[#allocation2 + $0x20] sm:$0x11] %v355
        %v357 = vld [vmem:[#allocation2 + $0x28] sm:$0x11]
        %v358 = vsel %vm353, 0, %v357
        %359 = vst [vmem:[#allocation2 + $0x28] sm:$0x11] %v358
        %v360 = vld [vmem:[#allocation2 + $0x50] sm:$0x11]
        %v361 = vsel %vm353, 0, %v360
        %362 = vst [vmem:[#allocation2 + $0x50] sm:$0x11] %v361
        %v363 = vld [vmem:[#allocation2 + $0x58] sm:$0x11]
        %v364 = vsel %vm353, 0, %v363
        %365 = vst [vmem:[#allocation2 + $0x58] sm:$0x11] %v364
        %v366 = vld [vmem:[%s282] sm:$0xff]
        %v367 = vld [vmem:[%s282 + $0x8] sm:$0xff]
        %v368 = vld [vmem:[%s282 + $0x10] sm:$0xff]
        %v369 = vld [vmem:[%s282 + $0x18] sm:$0xff]
        %v370 = vld [vmem:[%s282 + $0x20] sm:$0xff]
        %v371 = vld [vmem:[%s282 + $0x28] sm:$0xff]
        %v372 = vld [vmem:[%s282 + $0x30] sm:$0xff]
        %v373 = vld [vmem:[%s282 + $0x38] sm:$0xff]
        %v374 = vld [vmem:[%s282 + $0x40] sm:$0xff]
        %v375 = vld [vmem:[%s282 + $0x48] sm:$0xff]
        %v376 = vld [vmem:[%s282 + $0x50] sm:$0xff]
        %v377 = vld [vmem:[%s282 + $0x58] sm:$0xff]
        %v378 = vld [vmem:[%s282 + $0x60] sm:$0xff]
        %v379 = vld [vmem:[%s282 + $0x68] sm:$0xff]
        %v380 = vld [vmem:[%s282 + $0x70] sm:$0xff]
        %v381 = vld [vmem:[%s282 + $0x78] sm:$0xff]
        %v382 = vpack.c.bf16 %v370, %v366
        %v383 = vpack.c.bf16 %v371, %v367
        %v384 = vpack.c.bf16 %v372, %v368
        %v385 = vpack.c.bf16 %v373, %v369
        %v386 = vpack.c.bf16 %v378, %v374
        %v387 = vpack.c.bf16 %v379, %v375
        %v388 = vpack.c.bf16 %v380, %v376
        %v389 = vpack.c.bf16 %v381, %v377
        %v398 = vunpack.c.l.b16 %v382
        %v399 = vunpack.c.l.b16 %v383
        %v400 = vunpack.c.l.b16 %v384
        %v401 = vunpack.c.l.b16 %v385
        %v402 = vunpack.c.h.b16 %v382
        %v403 = vunpack.c.h.b16 %v383
        %v404 = vunpack.c.h.b16 %v384
        %v405 = vunpack.c.h.b16 %v385
        %v406 = vunpack.c.l.b16 %v386
        %v407 = vunpack.c.l.b16 %v387
        %v408 = vunpack.c.l.b16 %v388
        %v409 = vunpack.c.l.b16 %v389
        %v410 = vunpack.c.h.b16 %v386
        %v411 = vunpack.c.h.b16 %v387
        %v412 = vunpack.c.h.b16 %v388
        %v413 = vunpack.c.h.b16 %v389
        %v414 = vpack.c.b16 %v399, %v398
        %v415 = vpack.c.b16 %v401, %v400
        %v416 = vpack.c.b16 %v403, %v402
        %v417 = vpack.c.b16 %v405, %v404
        %v418 = vpack.c.b16 %v407, %v406
        %v419 = vpack.c.b16 %v409, %v408
        %v420 = vpack.c.b16 %v411, %v410
        %v421 = vpack.c.b16 %v413, %v412
        %vm422 = vsmask.f32 4368
        %vm423 = vmor %vm331, %vm422
        %v425 = vshrl.u32 %v414, 16
        %v427 = vrot.slane %v425, 7
        %v428 = vshll.u32 %v414, 16
        %v430 = vor.u32 %v427, %v428
        %v432 = vshrl.u32 %v415, 16
        %v434 = vrot.slane %v432, 7
        %v435 = vshll.u32 %v415, 16
        %v437 = vor.u32 %v434, %v435
        %v438 = vrot.slane %v427, 4
        %v440 = vshrl.u32 %v416, 16
        %v442 = vrot.slane %v440, 7
        %v443 = vshll.u32 %v416, 16
        %v445 = vor.u32 %v442, %v443
        %v446 = vsel %vm423, %v438, %v445
        %v447 = vrot.slane %v434, 4
        %v449 = vshrl.u32 %v417, 16
        %v451 = vrot.slane %v449, 7
        %v452 = vshll.u32 %v417, 16
        %v454 = vor.u32 %v451, %v452
        %v455 = vsel %vm423, %v447, %v454
        %v456 = vrot.slane %v442, 4
        %v457 = vrot.slane %v451, 4
        %v459 = vshrl.u32 %v418, 16
        %v461 = vrot.slane %v459, 7
        %v462 = vshll.u32 %v418, 16
        %v464 = vor.u32 %v461, %v462
        %v466 = vshrl.u32 %v419, 16
        %v468 = vrot.slane %v466, 7
        %v469 = vshll.u32 %v419, 16
        %v471 = vor.u32 %v468, %v469
        %v472 = vrot.slane %v461, 4
        %v474 = vshrl.u32 %v420, 16
        %v476 = vrot.slane %v474, 7
        %v477 = vshll.u32 %v420, 16
        %v479 = vor.u32 %v476, %v477
        %v480 = vsel %vm423, %v472, %v479
        %v481 = vrot.slane %v468, 4
        %v483 = vshrl.u32 %v421, 16
        %v485 = vrot.slane %v483, 7
        %v486 = vshll.u32 %v421, 16
        %v488 = vor.u32 %v485, %v486
        %v489 = vsel %vm423, %v481, %v488
        %v490 = vrot.slane %v476, 4
        %v491 = vrot.slane %v485, 4
        %vm504 = vcmask 1043456
        %vm505 = vmand %vm504, %vm349
        %vm506 = vcmask 1047556
        %vm507 = vmand %vm506, %vm351
        %vm508 = vmor %vm507, %vm505
        %v509 = vld [vmem:[#allocation2] sm:$0xff]
        %v510 = vsel %vm508, %v430, %v509
        %511 = vst [vmem:[#allocation2] sm:$0xff] %v510
        %v512 = vld [vmem:[#allocation2 + $0x8] sm:$0xff]
        %v513 = vsel %vm508, %v437, %v512
        %514 = vst [vmem:[#allocation2 + $0x8] sm:$0xff] %v513
        %515 = vst [vmem:[#allocation2 + $0x10] sm:$0xff] %v446
        %516 = vst [vmem:[#allocation2 + $0x18] sm:$0xff] %v455
        %v517 = vld [vmem:[#allocation2 + $0x20] sm:$0x11]
        %v518 = vsel %vm336, %v456, %v517
        %519 = vst [vmem:[#allocation2 + $0x20] sm:$0x11] %v518
        %v520 = vld [vmem:[#allocation2 + $0x28] sm:$0x11]
        %v521 = vsel %vm336, %v457, %v520
        %522 = vst [vmem:[#allocation2 + $0x28] sm:$0x11] %v521
        %v523 = vld [vmem:[#allocation2 + $0x30] sm:$0xff]
        %v524 = vsel %vm508, %v464, %v523
        %525 = vst [vmem:[#allocation2 + $0x30] sm:$0xff] %v524
        %v526 = vld [vmem:[#allocation2 + $0x38] sm:$0xff]
        %v527 = vsel %vm508, %v471, %v526
        %528 = vst [vmem:[#allocation2 + $0x38] sm:$0xff] %v527
        %529 = vst [vmem:[#allocation2 + $0x40] sm:$0xff] %v480
        %530 = vst [vmem:[#allocation2 + $0x48] sm:$0xff] %v489
        %v531 = vld [vmem:[#allocation2 + $0x50] sm:$0x11]
        %v532 = vsel %vm336, %v490, %v531
        %533 = vst [vmem:[#allocation2 + $0x50] sm:$0x11] %v532
        %v534 = vld [vmem:[#allocation2 + $0x58] sm:$0x11]
        %v535 = vsel %vm336, %v491, %v534
        %536 = vst [vmem:[#allocation2 + $0x58] sm:$0x11] %v535
        %v537 = vld [vmem:[#allocation2] sm:$0xff]
        %v538 = vld [vmem:[#allocation2 + $0x8] sm:$0xff]
        %v539 = vld [vmem:[#allocation2 + $0x10] sm:$0xff]
        %v540 = vld [vmem:[#allocation2 + $0x18] sm:$0xff]
        %v541 = vld [vmem:[#allocation2 + $0x30] sm:$0xff]
        %v542 = vld [vmem:[#allocation2 + $0x38] sm:$0xff]
        %v543 = vld [vmem:[#allocation2 + $0x40] sm:$0xff]
        %v544 = vld [vmem:[#allocation2 + $0x48] sm:$0xff]
        %v545 = vld [vmem:[#allocation6] sm:$0xff]
        %v546 = vld [vmem:[#allocation6 + $0x8] sm:$0xff]
        %v547 = vld [vmem:[#allocation6 + $0x10] sm:$0xff]
        %v548 = vld [vmem:[#allocation6 + $0x18] sm:$0xff]
        %v549 = vld [vmem:[#allocation6 + $0x20] sm:$0xff]
        %v550 = vld [vmem:[#allocation6 + $0x28] sm:$0xff]
        %v551 = vld [vmem:[#allocation6 + $0x30] sm:$0xff]
        %v552 = vld [vmem:[#allocation6 + $0x38] sm:$0xff]
        %v553 = vld [vmem:[#allocation6 + $0x40] sm:$0xff]
        %v554 = vld [vmem:[#allocation6 + $0x48] sm:$0xff]
        %v555 = vld [vmem:[#allocation6 + $0x50] sm:$0xff]
        %v556 = vld [vmem:[#allocation6 + $0x58] sm:$0xff]
        %v557 = vld [vmem:[#allocation6 + $0x60] sm:$0xff]
        %v558 = vld [vmem:[#allocation6 + $0x68] sm:$0xff]
        %v559 = vld [vmem:[#allocation6 + $0x70] sm:$0xff]
        %v560 = vld [vmem:[#allocation6 + $0x78] sm:$0xff]
        %v561 = vld [vmem:[#allocation6 + $0x80] sm:$0xff]
        %v562 = vld [vmem:[#allocation6 + $0x88] sm:$0xff]
        %v563 = vld [vmem:[#allocation6 + $0x90] sm:$0xff]
        %v564 = vld [vmem:[#allocation6 + $0x98] sm:$0xff]
        %v565 = vld [vmem:[#allocation6 + $0xa0] sm:$0xff]
        %v566 = vld [vmem:[#allocation6 + $0xa8] sm:$0xff]
        %v567 = vld [vmem:[#allocation6 + $0xb0] sm:$0xff]
        %v568 = vld [vmem:[#allocation6 + $0xb8] sm:$0xff]
        %v569 = vld [vmem:[#allocation6 + $0xc0] sm:$0xff]
        %v570 = vld [vmem:[#allocation6 + $0xc8] sm:$0xff]
        %v571 = vld [vmem:[#allocation6 + $0xd0] sm:$0xff]
        %v572 = vld [vmem:[#allocation6 + $0xd8] sm:$0xff]
        %v573 = vld [vmem:[#allocation6 + $0xe0] sm:$0xff]
        %v574 = vld [vmem:[#allocation6 + $0xe8] sm:$0xff]
        %v575 = vld [vmem:[#allocation6 + $0xf0] sm:$0xff]
        %v576 = vld [vmem:[#allocation6 + $0xf8] sm:$0xff]
        %v577 = vld [vmem:[#allocation6 + $0x100] sm:$0xff]
        %v578 = vld [vmem:[#allocation6 + $0x108] sm:$0xff]
        %v579 = vld [vmem:[#allocation6 + $0x110] sm:$0xff]
        %v580 = vld [vmem:[#allocation6 + $0x118] sm:$0xff]
        %v581 = vld [vmem:[#allocation6 + $0x120] sm:$0xff]
        %v582 = vld [vmem:[#allocation6 + $0x128] sm:$0xff]
        %v583 = vld [vmem:[#allocation6 + $0x130] sm:$0xff]
        %v584 = vld [vmem:[#allocation6 + $0x138] sm:$0xff]
        %v585 = vld [vmem:[#allocation6 + $0x140] sm:$0xff]
        %v586 = vld [vmem:[#allocation6 + $0x148] sm:$0xff]
        %v587 = vld [vmem:[#allocation6 + $0x150] sm:$0xff]
        %v588 = vld [vmem:[#allocation6 + $0x158] sm:$0xff]
        %v589 = vld [vmem:[#allocation6 + $0x160] sm:$0xff]
        %v590 = vld [vmem:[#allocation6 + $0x168] sm:$0xff]
        %v591 = vld [vmem:[#allocation6 + $0x170] sm:$0xff]
        %v592 = vld [vmem:[#allocation6 + $0x178] sm:$0xff]
        %v593 = vld [vmem:[#allocation6 + $0x180] sm:$0xff]
        %v594 = vld [vmem:[#allocation6 + $0x188] sm:$0xff]
        %v595 = vld [vmem:[#allocation6 + $0x190] sm:$0xff]
        %v596 = vld [vmem:[#allocation6 + $0x198] sm:$0xff]
        %v597 = vld [vmem:[#allocation6 + $0x1a0] sm:$0xff]
        %v598 = vld [vmem:[#allocation6 + $0x1a8] sm:$0xff]
        %v599 = vld [vmem:[#allocation6 + $0x1b0] sm:$0xff]
        %v600 = vld [vmem:[#allocation6 + $0x1b8] sm:$0xff]
        %v601 = vld [vmem:[#allocation6 + $0x1c0] sm:$0xff]
        %v602 = vld [vmem:[#allocation6 + $0x1c8] sm:$0xff]
        %v603 = vld [vmem:[#allocation6 + $0x1d0] sm:$0xff]
        %v604 = vld [vmem:[#allocation6 + $0x1d8] sm:$0xff]
        %v605 = vld [vmem:[#allocation6 + $0x1e0] sm:$0xff]
        %v606 = vld [vmem:[#allocation6 + $0x1e8] sm:$0xff]
        %v607 = vld [vmem:[#allocation6 + $0x1f0] sm:$0xff]
        %v608 = vld [vmem:[#allocation6 + $0x1f8] sm:$0xff]
        %v609 = vld [vmem:[#allocation6 + $0x200] sm:$0xff]
        %v610 = vld [vmem:[#allocation6 + $0x208] sm:$0xff]
        %v611 = vld [vmem:[#allocation6 + $0x210] sm:$0xff]
        %v612 = vld [vmem:[#allocation6 + $0x218] sm:$0xff]
        %v613 = vld [vmem:[#allocation6 + $0x220] sm:$0xff]
        %v614 = vld [vmem:[#allocation6 + $0x228] sm:$0xff]
        %v615 = vld [vmem:[#allocation6 + $0x230] sm:$0xff]
        %v616 = vld [vmem:[#allocation6 + $0x238] sm:$0xff]
        %v617 = vld [vmem:[#allocation6 + $0x240] sm:$0xff]
        %v618 = vld [vmem:[#allocation6 + $0x248] sm:$0xff]
        %v619 = vld [vmem:[#allocation6 + $0x250] sm:$0xff]
        %v620 = vld [vmem:[#allocation6 + $0x258] sm:$0xff]
        %v621 = vld [vmem:[#allocation6 + $0x260] sm:$0xff]
        %v622 = vld [vmem:[#allocation6 + $0x268] sm:$0xff]
        %v623 = vld [vmem:[#allocation6 + $0x270] sm:$0xff]
        %v624 = vld [vmem:[#allocation6 + $0x278] sm:$0xff]
        %v625 = vld [vmem:[#allocation6 + $0x280] sm:$0xff]
        %v626 = vld [vmem:[#allocation6 + $0x288] sm:$0xff]
        %v627 = vld [vmem:[#allocation6 + $0x290] sm:$0xff]
        %v628 = vld [vmem:[#allocation6 + $0x298] sm:$0xff]
        %v629 = vld [vmem:[#allocation6 + $0x2a0] sm:$0xff]
        %v630 = vld [vmem:[#allocation6 + $0x2a8] sm:$0xff]
        %v631 = vld [vmem:[#allocation6 + $0x2b0] sm:$0xff]
        %v632 = vld [vmem:[#allocation6 + $0x2b8] sm:$0xff]
        %v633 = vld [vmem:[#allocation6 + $0x2c0] sm:$0xff]
        %v634 = vld [vmem:[#allocation6 + $0x2c8] sm:$0xff]
        %v635 = vld [vmem:[#allocation6 + $0x2d0] sm:$0xff]
        %v636 = vld [vmem:[#allocation6 + $0x2d8] sm:$0xff]
        %v637 = vld [vmem:[#allocation6 + $0x2e0] sm:$0xff]
        %v638 = vld [vmem:[#allocation6 + $0x2e8] sm:$0xff]
        %v639 = vld [vmem:[#allocation6 + $0x2f0] sm:$0xff]
        %v640 = vld [vmem:[#allocation6 + $0x2f8] sm:$0xff]
        %v641 = vld [vmem:[#allocation6 + $0x300] sm:$0xff]
        %v642 = vld [vmem:[#allocation6 + $0x308] sm:$0xff]
        %v643 = vld [vmem:[#allocation6 + $0x310] sm:$0xff]
        %v644 = vld [vmem:[#allocation6 + $0x318] sm:$0xff]
        %v645 = vld [vmem:[#allocation6 + $0x320] sm:$0xff]
        %v646 = vld [vmem:[#allocation6 + $0x328] sm:$0xff]
        %v647 = vld [vmem:[#allocation6 + $0x330] sm:$0xff]
        %v648 = vld [vmem:[#allocation6 + $0x338] sm:$0xff]
        %v649 = vld [vmem:[#allocation6 + $0x340] sm:$0xff]
        %v650 = vld [vmem:[#allocation6 + $0x348] sm:$0xff]
        %v651 = vld [vmem:[#allocation6 + $0x350] sm:$0xff]
        %v652 = vld [vmem:[#allocation6 + $0x358] sm:$0xff]
        %v653 = vld [vmem:[#allocation6 + $0x360] sm:$0xff]
        %v654 = vld [vmem:[#allocation6 + $0x368] sm:$0xff]
        %v655 = vld [vmem:[#allocation6 + $0x370] sm:$0xff]
        %v656 = vld [vmem:[#allocation6 + $0x378] sm:$0xff]
        %v657 = vld [vmem:[#allocation6 + $0x380] sm:$0xff]
        %v658 = vld [vmem:[#allocation6 + $0x388] sm:$0xff]
        %v659 = vld [vmem:[#allocation6 + $0x390] sm:$0xff]
        %v660 = vld [vmem:[#allocation6 + $0x398] sm:$0xff]
        %v661 = vld [vmem:[#allocation6 + $0x3a0] sm:$0xff]
        %v662 = vld [vmem:[#allocation6 + $0x3a8] sm:$0xff]
        %v663 = vld [vmem:[#allocation6 + $0x3b0] sm:$0xff]
        %v664 = vld [vmem:[#allocation6 + $0x3b8] sm:$0xff]
        %v665 = vld [vmem:[#allocation6 + $0x3c0] sm:$0xff]
        %v666 = vld [vmem:[#allocation6 + $0x3c8] sm:$0xff]
        %v667 = vld [vmem:[#allocation6 + $0x3d0] sm:$0xff]
        %v668 = vld [vmem:[#allocation6 + $0x3d8] sm:$0xff]
        %v669 = vld [vmem:[#allocation6 + $0x3e0] sm:$0xff]
        %v670 = vld [vmem:[#allocation6 + $0x3e8] sm:$0xff]
        %v671 = vld [vmem:[#allocation6 + $0x3f0] sm:$0xff]
        %v672 = vld [vmem:[#allocation6 + $0x3f8] sm:$0xff]
        %v673 = vld [vmem:[#allocation2 + $0x20] sm:$0x11]
        %v674 = vld [vmem:[#allocation2 + $0x28] sm:$0x11]
        %v675 = vld [vmem:[#allocation2 + $0x50] sm:$0x11]
        %v676 = vld [vmem:[#allocation2 + $0x58] sm:$0x11]
        %vm677 = vsmask.f32 3328
        %vm678 = vsmask.f32 7440
        %vm679 = vmor %vm677, %vm678
        %v681 = vshrl.u32 %v537, 16
        %v683 = vrot.slane %v681, 4
        %v684 = vshll.u32 %v537, 16
        %v686 = vrot.slane %v684, 5
        %v687 = vor.u32 %v683, %v686
        %v688 = vrot.slane %v687, 4
        %v690 = vshll.u32 %v539, 16
        %v692 = vrot.slane %v690, 5
        %v693 = vsel %vm679, %v688, %v692
        %v695 = vshrl.u32 %v538, 16
        %v697 = vrot.slane %v695, 4
        %v698 = vshll.u32 %v538, 16
        %v700 = vrot.slane %v698, 5
        %v701 = vor.u32 %v697, %v700
        %v702 = vrot.slane %v701, 4
        %v704 = vshll.u32 %v540, 16
        %v706 = vrot.slane %v704, 5
        %v707 = vsel %vm679, %v702, %v706
        %v708 = vshrl.u32 %v539, 16
        %v710 = vrot.slane %v708, 4
        %v711 = vor.u32 %v710, %v692
        %v712 = vrot.slane %v711, 4
        %v714 = vshll.u32 %v673, 16
        %v716 = vrot.slane %v714, 5
        %v717 = vsel %vm679, %v712, %v716
        %v718 = vshrl.u32 %v540, 16
        %v720 = vrot.slane %v718, 4
        %v721 = vor.u32 %v720, %v706
        %v722 = vrot.slane %v721, 4
        %v724 = vshll.u32 %v674, 16
        %v726 = vrot.slane %v724, 5
        %v727 = vsel %vm679, %v722, %v726
        %v729 = vshrl.u32 %v541, 16
        %v731 = vrot.slane %v729, 4
        %v732 = vshll.u32 %v541, 16
        %v734 = vrot.slane %v732, 5
        %v735 = vor.u32 %v731, %v734
        %v736 = vrot.slane %v735, 4
        %v738 = vshll.u32 %v543, 16
        %v740 = vrot.slane %v738, 5
        %v741 = vsel %vm679, %v736, %v740
        %v743 = vshrl.u32 %v542, 16
        %v745 = vrot.slane %v743, 4
        %v746 = vshll.u32 %v542, 16
        %v748 = vrot.slane %v746, 5
        %v749 = vor.u32 %v745, %v748
        %v750 = vrot.slane %v749, 4
        %v752 = vshll.u32 %v544, 16
        %v754 = vrot.slane %v752, 5
        %v755 = vsel %vm679, %v750, %v754
        %v756 = vshrl.u32 %v543, 16
        %v758 = vrot.slane %v756, 4
        %v759 = vor.u32 %v758, %v740
        %v760 = vrot.slane %v759, 4
        %v762 = vshll.u32 %v675, 16
        %v764 = vrot.slane %v762, 5
        %v765 = vsel %vm679, %v760, %v764
        %v766 = vshrl.u32 %v544, 16
        %v768 = vrot.slane %v766, 4
        %v769 = vor.u32 %v768, %v754
        %v770 = vrot.slane %v769, 4
        %v772 = vshll.u32 %v676, 16
        %v774 = vrot.slane %v772, 5
        %v775 = vsel %vm679, %v770, %v774
        %s776 = scalar_lea.vmem [#allocation6], 1024
        %v777 = vld [vmem:[%s776] sm:$0xff]
        %v778 = vld [vmem:[%s776 + $0x8] sm:$0xff]
        %v779 = vld [vmem:[%s776 + $0x10] sm:$0xff]
        %v780 = vld [vmem:[%s776 + $0x18] sm:$0xff]
        %v781 = vld [vmem:[%s776 + $0x20] sm:$0xff]
        %v782 = vld [vmem:[%s776 + $0x28] sm:$0xff]
        %v783 = vld [vmem:[%s776 + $0x30] sm:$0xff]
        %v784 = vld [vmem:[%s776 + $0x38] sm:$0xff]
        %v785 = vld [vmem:[%s776 + $0x40] sm:$0xff]
        %v786 = vld [vmem:[%s776 + $0x48] sm:$0xff]
        %v787 = vld [vmem:[%s776 + $0x50] sm:$0xff]
        %v788 = vld [vmem:[%s776 + $0x58] sm:$0xff]
        %v789 = vld [vmem:[%s776 + $0x60] sm:$0xff]
        %v790 = vld [vmem:[%s776 + $0x68] sm:$0xff]
        %v791 = vld [vmem:[%s776 + $0x70] sm:$0xff]
        %v792 = vld [vmem:[%s776 + $0x78] sm:$0xff]
        %v793 = vld [vmem:[%s776 + $0x80] sm:$0xff]
        %v794 = vld [vmem:[%s776 + $0x88] sm:$0xff]
        %v795 = vld [vmem:[%s776 + $0x90] sm:$0xff]
        %v796 = vld [vmem:[%s776 + $0x98] sm:$0xff]
        %v797 = vld [vmem:[%s776 + $0xa0] sm:$0xff]
        %v798 = vld [vmem:[%s776 + $0xa8] sm:$0xff]
        %v799 = vld [vmem:[%s776 + $0xb0] sm:$0xff]
        %v800 = vld [vmem:[%s776 + $0xb8] sm:$0xff]
        %v801 = vld [vmem:[%s776 + $0xc0] sm:$0xff]
        %v802 = vld [vmem:[%s776 + $0xc8] sm:$0xff]
        %v803 = vld [vmem:[%s776 + $0xd0] sm:$0xff]
        %v804 = vld [vmem:[%s776 + $0xd8] sm:$0xff]
        %v805 = vld [vmem:[%s776 + $0xe0] sm:$0xff]
        %v806 = vld [vmem:[%s776 + $0xe8] sm:$0xff]
        %v807 = vld [vmem:[%s776 + $0xf0] sm:$0xff]
        %v808 = vld [vmem:[%s776 + $0xf8] sm:$0xff]
        %v809 = vld [vmem:[%s776 + $0x100] sm:$0xff]
        %v810 = vld [vmem:[%s776 + $0x108] sm:$0xff]
        %v811 = vld [vmem:[%s776 + $0x110] sm:$0xff]
        %v812 = vld [vmem:[%s776 + $0x118] sm:$0xff]
        %v813 = vld [vmem:[%s776 + $0x120] sm:$0xff]
        %v814 = vld [vmem:[%s776 + $0x128] sm:$0xff]
        %v815 = vld [vmem:[%s776 + $0x130] sm:$0xff]
        %v816 = vld [vmem:[%s776 + $0x138] sm:$0xff]
        %v817 = vld [vmem:[%s776 + $0x140] sm:$0xff]
        %v818 = vld [vmem:[%s776 + $0x148] sm:$0xff]
        %v819 = vld [vmem:[%s776 + $0x150] sm:$0xff]
        %v820 = vld [vmem:[%s776 + $0x158] sm:$0xff]
        %v821 = vld [vmem:[%s776 + $0x160] sm:$0xff]
        %v822 = vld [vmem:[%s776 + $0x168] sm:$0xff]
        %v823 = vld [vmem:[%s776 + $0x170] sm:$0xff]
        %v824 = vld [vmem:[%s776 + $0x178] sm:$0xff]
        %v825 = vld [vmem:[%s776 + $0x180] sm:$0xff]
        %v826 = vld [vmem:[%s776 + $0x188] sm:$0xff]
        %v827 = vld [vmem:[%s776 + $0x190] sm:$0xff]
        %v828 = vld [vmem:[%s776 + $0x198] sm:$0xff]
        %v829 = vld [vmem:[%s776 + $0x1a0] sm:$0xff]
        %v830 = vld [vmem:[%s776 + $0x1a8] sm:$0xff]
        %v831 = vld [vmem:[%s776 + $0x1b0] sm:$0xff]
        %v832 = vld [vmem:[%s776 + $0x1b8] sm:$0xff]
        %v833 = vld [vmem:[%s776 + $0x1c0] sm:$0xff]
        %v834 = vld [vmem:[%s776 + $0x1c8] sm:$0xff]
        %v835 = vld [vmem:[%s776 + $0x1d0] sm:$0xff]
        %v836 = vld [vmem:[%s776 + $0x1d8] sm:$0xff]
        %v837 = vld [vmem:[%s776 + $0x1e0] sm:$0xff]
        %v838 = vld [vmem:[%s776 + $0x1e8] sm:$0xff]
        %v839 = vld [vmem:[%s776 + $0x1f0] sm:$0xff]
        %v840 = vld [vmem:[%s776 + $0x1f8] sm:$0xff]
        %v841 = vld [vmem:[%s776 + $0x200] sm:$0xff]
        %v842 = vld [vmem:[%s776 + $0x208] sm:$0xff]
        %v843 = vld [vmem:[%s776 + $0x210] sm:$0xff]
        %v844 = vld [vmem:[%s776 + $0x218] sm:$0xff]
        %v845 = vld [vmem:[%s776 + $0x220] sm:$0xff]
        %v846 = vld [vmem:[%s776 + $0x228] sm:$0xff]
        %v847 = vld [vmem:[%s776 + $0x230] sm:$0xff]
        %v848 = vld [vmem:[%s776 + $0x238] sm:$0xff]
        %v849 = vld [vmem:[%s776 + $0x240] sm:$0xff]
        %v850 = vld [vmem:[%s776 + $0x248] sm:$0xff]
        %v851 = vld [vmem:[%s776 + $0x250] sm:$0xff]
        %v852 = vld [vmem:[%s776 + $0x258] sm:$0xff]
        %v853 = vld [vmem:[%s776 + $0x260] sm:$0xff]
        %v854 = vld [vmem:[%s776 + $0x268] sm:$0xff]
        %v855 = vld [vmem:[%s776 + $0x270] sm:$0xff]
        %v856 = vld [vmem:[%s776 + $0x278] sm:$0xff]
        %v857 = vld [vmem:[%s776 + $0x280] sm:$0xff]
        %v858 = vld [vmem:[%s776 + $0x288] sm:$0xff]
        %v859 = vld [vmem:[%s776 + $0x290] sm:$0xff]
        %v860 = vld [vmem:[%s776 + $0x298] sm:$0xff]
        %v861 = vld [vmem:[%s776 + $0x2a0] sm:$0xff]
        %v862 = vld [vmem:[%s776 + $0x2a8] sm:$0xff]
        %v863 = vld [vmem:[%s776 + $0x2b0] sm:$0xff]
        %v864 = vld [vmem:[%s776 + $0x2b8] sm:$0xff]
        %v865 = vld [vmem:[%s776 + $0x2c0] sm:$0xff]
        %v866 = vld [vmem:[%s776 + $0x2c8] sm:$0xff]
        %v867 = vld [vmem:[%s776 + $0x2d0] sm:$0xff]
        %v868 = vld [vmem:[%s776 + $0x2d8] sm:$0xff]
        %v869 = vld [vmem:[%s776 + $0x2e0] sm:$0xff]
        %v870 = vld [vmem:[%s776 + $0x2e8] sm:$0xff]
        %v871 = vld [vmem:[%s776 + $0x2f0] sm:$0xff]
        %v872 = vld [vmem:[%s776 + $0x2f8] sm:$0xff]
        %v873 = vld [vmem:[%s776 + $0x300] sm:$0xff]
        %v874 = vld [vmem:[%s776 + $0x308] sm:$0xff]
        %v875 = vld [vmem:[%s776 + $0x310] sm:$0xff]
        %v876 = vld [vmem:[%s776 + $0x318] sm:$0xff]
        %v877 = vld [vmem:[%s776 + $0x320] sm:$0xff]
        %v878 = vld [vmem:[%s776 + $0x328] sm:$0xff]
        %v879 = vld [vmem:[%s776 + $0x330] sm:$0xff]
        %v880 = vld [vmem:[%s776 + $0x338] sm:$0xff]
        %v881 = vld [vmem:[%s776 + $0x340] sm:$0xff]
        %v882 = vld [vmem:[%s776 + $0x348] sm:$0xff]
        %v883 = vld [vmem:[%s776 + $0x350] sm:$0xff]
        %v884 = vld [vmem:[%s776 + $0x358] sm:$0xff]
        %v885 = vld [vmem:[%s776 + $0x360] sm:$0xff]
        %v886 = vld [vmem:[%s776 + $0x368] sm:$0xff]
        %v887 = vld [vmem:[%s776 + $0x370] sm:$0xff]
        %v888 = vld [vmem:[%s776 + $0x378] sm:$0xff]
        %v889 = vld [vmem:[%s776 + $0x380] sm:$0xff]
        %v890 = vld [vmem:[%s776 + $0x388] sm:$0xff]
        %v891 = vld [vmem:[%s776 + $0x390] sm:$0xff]
        %v892 = vld [vmem:[%s776 + $0x398] sm:$0xff]
        %v893 = vld [vmem:[%s776 + $0x3a0] sm:$0xff]
        %v894 = vld [vmem:[%s776 + $0x3a8] sm:$0xff]
        %v895 = vld [vmem:[%s776 + $0x3b0] sm:$0xff]
        %v896 = vld [vmem:[%s776 + $0x3b8] sm:$0xff]
        %v897 = vld [vmem:[%s776 + $0x3c0] sm:$0xff]
        %v898 = vld [vmem:[%s776 + $0x3c8] sm:$0xff]
        %v899 = vld [vmem:[%s776 + $0x3d0] sm:$0xff]
        %v900 = vld [vmem:[%s776 + $0x3d8] sm:$0xff]
        %v901 = vld [vmem:[%s776 + $0x3e0] sm:$0xff]
        %v902 = vld [vmem:[%s776 + $0x3e8] sm:$0xff]
        %v903 = vld [vmem:[%s776 + $0x3f0] sm:$0xff]
        %v904 = vld [vmem:[%s776 + $0x3f8] sm:$0xff]
        %v905 = vunpack.c.l.b16 %v693
        %v906 = vunpack.c.h.b16 %v693
        %v907 = vunpack.c.l.b16 %v707
        %v908 = vunpack.c.h.b16 %v707
        %v909 = vunpack.c.l.b16 %v717
        %v910 = vunpack.c.h.b16 %v717
        %v911 = vunpack.c.l.b16 %v727
        %v912 = vunpack.c.h.b16 %v727
        %v913 = vunpack.c.l.b16 %v741
        %v914 = vunpack.c.h.b16 %v741
        %v915 = vunpack.c.l.b16 %v755
        %v916 = vunpack.c.h.b16 %v755
        %v917 = vunpack.c.l.b16 %v765
        %v918 = vunpack.c.h.b16 %v765
        %v919 = vunpack.c.l.b16 %v775
        %v920 = vunpack.c.h.b16 %v775
        %v921 = vpack.c.b16 %v909, %v905
        %v922 = vpack.c.b16 %v910, %v906
        %v923 = vpack.c.b16 %v911, %v907
        %v924 = vpack.c.b16 %v912, %v908
        %v925 = vpack.c.b16 %v917, %v913
        %v926 = vpack.c.b16 %v918, %v914
        %v927 = vpack.c.b16 %v919, %v915
        %v928 = vpack.c.b16 %v920, %v916
        %v1065 = vunpack.c.l.b16 %v777
        %v1066 = vunpack.c.h.b16 %v777
        %v1067 = vunpack.c.l.b16 %v778
        %v1068 = vunpack.c.h.b16 %v778
        %v1069 = vunpack.c.l.b16 %v779
        %v1070 = vunpack.c.h.b16 %v779
        %v1071 = vunpack.c.l.b16 %v780
        %v1072 = vunpack.c.h.b16 %v780
        %v1073 = vunpack.c.l.b16 %v781
        %v1074 = vunpack.c.h.b16 %v781
        %v1075 = vunpack.c.l.b16 %v782
        %v1076 = vunpack.c.h.b16 %v782
        %v1077 = vunpack.c.l.b16 %v783
        %v1078 = vunpack.c.h.b16 %v783
        %v1079 = vunpack.c.l.b16 %v784
        %v1080 = vunpack.c.h.b16 %v784
        %v1081 = vunpack.c.l.b16 %v785
        %v1082 = vunpack.c.h.b16 %v785
        %v1083 = vunpack.c.l.b16 %v786
        %v1084 = vunpack.c.h.b16 %v786
        %v1085 = vunpack.c.l.b16 %v787
        %v1086 = vunpack.c.h.b16 %v787
        %v1087 = vunpack.c.l.b16 %v788
        %v1088 = vunpack.c.h.b16 %v788
        %v1089 = vunpack.c.l.b16 %v789
        %v1090 = vunpack.c.h.b16 %v789
        %v1091 = vunpack.c.l.b16 %v790
        %v1092 = vunpack.c.h.b16 %v790
        %v1093 = vunpack.c.l.b16 %v791
        %v1094 = vunpack.c.h.b16 %v791
        %v1095 = vunpack.c.l.b16 %v792
        %v1096 = vunpack.c.h.b16 %v792
        %v1097 = vunpack.c.l.b16 %v793
        %v1098 = vunpack.c.h.b16 %v793
        %v1099 = vunpack.c.l.b16 %v794
        %v1100 = vunpack.c.h.b16 %v794
        %v1101 = vunpack.c.l.b16 %v795
        %v1102 = vunpack.c.h.b16 %v795
        %v1103 = vunpack.c.l.b16 %v796
        %v1104 = vunpack.c.h.b16 %v796
        %v1105 = vunpack.c.l.b16 %v797
        %v1106 = vunpack.c.h.b16 %v797
        %v1107 = vunpack.c.l.b16 %v798
        %v1108 = vunpack.c.h.b16 %v798
        %v1109 = vunpack.c.l.b16 %v799
        %v1110 = vunpack.c.h.b16 %v799
        %v1111 = vunpack.c.l.b16 %v800
        %v1112 = vunpack.c.h.b16 %v800
        %v1113 = vunpack.c.l.b16 %v801
        %v1114 = vunpack.c.h.b16 %v801
        %v1115 = vunpack.c.l.b16 %v802
        %v1116 = vunpack.c.h.b16 %v802
        %v1117 = vunpack.c.l.b16 %v803
        %v1118 = vunpack.c.h.b16 %v803
        %v1119 = vunpack.c.l.b16 %v804
        %v1120 = vunpack.c.h.b16 %v804
        %v1121 = vunpack.c.l.b16 %v805
        %v1122 = vunpack.c.h.b16 %v805
        %v1123 = vunpack.c.l.b16 %v806
        %v1124 = vunpack.c.h.b16 %v806
        %v1125 = vunpack.c.l.b16 %v807
        %v1126 = vunpack.c.h.b16 %v807
        %v1127 = vunpack.c.l.b16 %v808
        %v1128 = vunpack.c.h.b16 %v808
        %v1129 = vunpack.c.l.b16 %v809
        %v1130 = vunpack.c.h.b16 %v809
        %v1131 = vunpack.c.l.b16 %v810
        %v1132 = vunpack.c.h.b16 %v810
        %v1133 = vunpack.c.l.b16 %v811
        %v1134 = vunpack.c.h.b16 %v811
        %v1135 = vunpack.c.l.b16 %v812
        %v1136 = vunpack.c.h.b16 %v812
        %v1137 = vunpack.c.l.b16 %v813
        %v1138 = vunpack.c.h.b16 %v813
        %v1139 = vunpack.c.l.b16 %v814
        %v1140 = vunpack.c.h.b16 %v814
        %v1141 = vunpack.c.l.b16 %v815
        %v1142 = vunpack.c.h.b16 %v815
        %v1143 = vunpack.c.l.b16 %v816
        %v1144 = vunpack.c.h.b16 %v816
        %v1145 = vunpack.c.l.b16 %v817
        %v1146 = vunpack.c.h.b16 %v817
        %v1147 = vunpack.c.l.b16 %v818
        %v1148 = vunpack.c.h.b16 %v818
        %v1149 = vunpack.c.l.b16 %v819
        %v1150 = vunpack.c.h.b16 %v819
        %v1151 = vunpack.c.l.b16 %v820
        %v1152 = vunpack.c.h.b16 %v820
        %v1153 = vunpack.c.l.b16 %v821
        %v1154 = vunpack.c.h.b16 %v821
        %v1155 = vunpack.c.l.b16 %v822
        %v1156 = vunpack.c.h.b16 %v822
        %v1157 = vunpack.c.l.b16 %v823
        %v1158 = vunpack.c.h.b16 %v823
        %v1159 = vunpack.c.l.b16 %v824
        %v1160 = vunpack.c.h.b16 %v824
        %v1161 = vunpack.c.l.b16 %v825
        %v1162 = vunpack.c.h.b16 %v825
        %v1163 = vunpack.c.l.b16 %v826
        %v1164 = vunpack.c.h.b16 %v826
        %v1165 = vunpack.c.l.b16 %v827
        %v1166 = vunpack.c.h.b16 %v827
        %v1167 = vunpack.c.l.b16 %v828
        %v1168 = vunpack.c.h.b16 %v828
        %v1169 = vunpack.c.l.b16 %v829
        %v1170 = vunpack.c.h.b16 %v829
        %v1171 = vunpack.c.l.b16 %v830
        %v1172 = vunpack.c.h.b16 %v830
        %v1173 = vunpack.c.l.b16 %v831
        %v1174 = vunpack.c.h.b16 %v831
        %v1175 = vunpack.c.l.b16 %v832
        %v1176 = vunpack.c.h.b16 %v832
        %v1177 = vunpack.c.l.b16 %v833
        %v1178 = vunpack.c.h.b16 %v833
        %v1179 = vunpack.c.l.b16 %v834
        %v1180 = vunpack.c.h.b16 %v834
        %v1181 = vunpack.c.l.b16 %v835
        %v1182 = vunpack.c.h.b16 %v835
        %v1183 = vunpack.c.l.b16 %v836
        %v1184 = vunpack.c.h.b16 %v836
        %v1185 = vunpack.c.l.b16 %v837
        %v1186 = vunpack.c.h.b16 %v837
        %v1187 = vunpack.c.l.b16 %v838
        %v1188 = vunpack.c.h.b16 %v838
        %v1189 = vunpack.c.l.b16 %v839
        %v1190 = vunpack.c.h.b16 %v839
        %v1191 = vunpack.c.l.b16 %v840
        %v1192 = vunpack.c.h.b16 %v840
        %v1193 = vunpack.c.l.b16 %v841
        %v1194 = vunpack.c.h.b16 %v841
        %v1195 = vunpack.c.l.b16 %v842
        %v1196 = vunpack.c.h.b16 %v842
        %v1197 = vunpack.c.l.b16 %v843
        %v1198 = vunpack.c.h.b16 %v843
        %v1199 = vunpack.c.l.b16 %v844
        %v1200 = vunpack.c.h.b16 %v844
        %v1201 = vunpack.c.l.b16 %v845
        %v1202 = vunpack.c.h.b16 %v845
        %v1203 = vunpack.c.l.b16 %v846
        %v1204 = vunpack.c.h.b16 %v846
        %v1205 = vunpack.c.l.b16 %v847
        %v1206 = vunpack.c.h.b16 %v847
        %v1207 = vunpack.c.l.b16 %v848
        %v1208 = vunpack.c.h.b16 %v848
        %v1209 = vunpack.c.l.b16 %v849
        %v1210 = vunpack.c.h.b16 %v849
        %v1211 = vunpack.c.l.b16 %v850
        %v1212 = vunpack.c.h.b16 %v850
        %v1213 = vunpack.c.l.b16 %v851
        %v1214 = vunpack.c.h.b16 %v851
        %v1215 = vunpack.c.l.b16 %v852
        %v1216 = vunpack.c.h.b16 %v852
        %v1217 = vunpack.c.l.b16 %v853
        %v1218 = vunpack.c.h.b16 %v853
        %v1219 = vunpack.c.l.b16 %v854
        %v1220 = vunpack.c.h.b16 %v854
        %v1221 = vunpack.c.l.b16 %v855
        %v1222 = vunpack.c.h.b16 %v855
        %v1223 = vunpack.c.l.b16 %v856
        %v1224 = vunpack.c.h.b16 %v856
        %v1225 = vunpack.c.l.b16 %v857
        %v1226 = vunpack.c.h.b16 %v857
        %v1227 = vunpack.c.l.b16 %v858
        %v1228 = vunpack.c.h.b16 %v858
        %v1229 = vunpack.c.l.b16 %v859
        %v1230 = vunpack.c.h.b16 %v859
        %v1231 = vunpack.c.l.b16 %v860
        %v1232 = vunpack.c.h.b16 %v860
        %v1233 = vunpack.c.l.b16 %v861
        %v1234 = vunpack.c.h.b16 %v861
        %v1235 = vunpack.c.l.b16 %v862
        %v1236 = vunpack.c.h.b16 %v862
        %v1237 = vunpack.c.l.b16 %v863
        %v1238 = vunpack.c.h.b16 %v863
        %v1239 = vunpack.c.l.b16 %v864
        %v1240 = vunpack.c.h.b16 %v864
        %v1241 = vunpack.c.l.b16 %v865
        %v1242 = vunpack.c.h.b16 %v865
        %v1243 = vunpack.c.l.b16 %v866
        %v1244 = vunpack.c.h.b16 %v866
        %v1245 = vunpack.c.l.b16 %v867
        %v1246 = vunpack.c.h.b16 %v867
        %v1247 = vunpack.c.l.b16 %v868
        %v1248 = vunpack.c.h.b16 %v868
        %v1249 = vunpack.c.l.b16 %v869
        %v1250 = vunpack.c.h.b16 %v869
        %v1251 = vunpack.c.l.b16 %v870
        %v1252 = vunpack.c.h.b16 %v870
        %v1253 = vunpack.c.l.b16 %v871
        %v1254 = vunpack.c.h.b16 %v871
        %v1255 = vunpack.c.l.b16 %v872
        %v1256 = vunpack.c.h.b16 %v872
        %v1257 = vunpack.c.l.b16 %v873
        %v1258 = vunpack.c.h.b16 %v873
        %v1259 = vunpack.c.l.b16 %v874
        %v1260 = vunpack.c.h.b16 %v874
        %v1261 = vunpack.c.l.b16 %v875
        %v1262 = vunpack.c.h.b16 %v875
        %v1263 = vunpack.c.l.b16 %v876
        %v1264 = vunpack.c.h.b16 %v876
        %v1265 = vunpack.c.l.b16 %v877
        %v1266 = vunpack.c.h.b16 %v877
        %v1267 = vunpack.c.l.b16 %v878
        %v1268 = vunpack.c.h.b16 %v878
        %v1269 = vunpack.c.l.b16 %v879
        %v1270 = vunpack.c.h.b16 %v879
        %v1271 = vunpack.c.l.b16 %v880
        %v1272 = vunpack.c.h.b16 %v880
        %v1273 = vunpack.c.l.b16 %v881
        %v1274 = vunpack.c.h.b16 %v881
        %v1275 = vunpack.c.l.b16 %v882
        %v1276 = vunpack.c.h.b16 %v882
        %v1277 = vunpack.c.l.b16 %v883
        %v1278 = vunpack.c.h.b16 %v883
        %v1279 = vunpack.c.l.b16 %v884
        %v1280 = vunpack.c.h.b16 %v884
        %v1281 = vunpack.c.l.b16 %v885
        %v1282 = vunpack.c.h.b16 %v885
        %v1283 = vunpack.c.l.b16 %v886
        %v1284 = vunpack.c.h.b16 %v886
        %v1285 = vunpack.c.l.b16 %v887
        %v1286 = vunpack.c.h.b16 %v887
        %v1287 = vunpack.c.l.b16 %v888
        %v1288 = vunpack.c.h.b16 %v888
        %v1289 = vunpack.c.l.b16 %v889
        %v1290 = vunpack.c.h.b16 %v889
        %v1291 = vunpack.c.l.b16 %v890
        %v1292 = vunpack.c.h.b16 %v890
        %v1293 = vunpack.c.l.b16 %v891
        %v1294 = vunpack.c.h.b16 %v891
        %v1295 = vunpack.c.l.b16 %v892
        %v1296 = vunpack.c.h.b16 %v892
        %v1297 = vunpack.c.l.b16 %v893
        %v1298 = vunpack.c.h.b16 %v893
        %v1299 = vunpack.c.l.b16 %v894
        %v1300 = vunpack.c.h.b16 %v894
        %v1301 = vunpack.c.l.b16 %v895
        %v1302 = vunpack.c.h.b16 %v895
        %v1303 = vunpack.c.l.b16 %v896
        %v1304 = vunpack.c.h.b16 %v896
        %v1305 = vunpack.c.l.b16 %v897
        %v1306 = vunpack.c.h.b16 %v897
        %v1307 = vunpack.c.l.b16 %v898
        %v1308 = vunpack.c.h.b16 %v898
        %v1309 = vunpack.c.l.b16 %v899
        %v1310 = vunpack.c.h.b16 %v899
        %v1311 = vunpack.c.l.b16 %v900
        %v1312 = vunpack.c.h.b16 %v900
        %v1313 = vunpack.c.l.b16 %v901
        %v1314 = vunpack.c.h.b16 %v901
        %v1315 = vunpack.c.l.b16 %v902
        %v1316 = vunpack.c.h.b16 %v902
        %v1317 = vunpack.c.l.b16 %v903
        %v1318 = vunpack.c.h.b16 %v903
        %v1319 = vunpack.c.l.b16 %v904
        %v1320 = vunpack.c.h.b16 %v904
        %v1321 = vpack.c.b16 %v1069, %v1065
        %v1322 = vpack.c.b16 %v1070, %v1066
        %v1323 = vpack.c.b16 %v1071, %v1067
        %v1324 = vpack.c.b16 %v1072, %v1068
        %v1325 = vpack.c.b16 %v1077, %v1073
        %v1326 = vpack.c.b16 %v1078, %v1074
        %v1327 = vpack.c.b16 %v1079, %v1075
        %v1328 = vpack.c.b16 %v1080, %v1076
        %v1329 = vpack.c.b16 %v1085, %v1081
        %v1330 = vpack.c.b16 %v1086, %v1082
        %v1331 = vpack.c.b16 %v1087, %v1083
        %v1332 = vpack.c.b16 %v1088, %v1084
        %v1333 = vpack.c.b16 %v1093, %v1089
        %v1334 = vpack.c.b16 %v1094, %v1090
        %v1335 = vpack.c.b16 %v1095, %v1091
        %v1336 = vpack.c.b16 %v1096, %v1092
        %v1337 = vpack.c.b16 %v1101, %v1097
        %v1338 = vpack.c.b16 %v1102, %v1098
        %v1339 = vpack.c.b16 %v1103, %v1099
        %v1340 = vpack.c.b16 %v1104, %v1100
        %v1341 = vpack.c.b16 %v1109, %v1105
        %v1342 = vpack.c.b16 %v1110, %v1106
        %v1343 = vpack.c.b16 %v1111, %v1107
        %v1344 = vpack.c.b16 %v1112, %v1108
        %v1345 = vpack.c.b16 %v1117, %v1113
        %v1346 = vpack.c.b16 %v1118, %v1114
        %v1347 = vpack.c.b16 %v1119, %v1115
        %v1348 = vpack.c.b16 %v1120, %v1116
        %v1349 = vpack.c.b16 %v1125, %v1121
        %v1350 = vpack.c.b16 %v1126, %v1122
        %v1351 = vpack.c.b16 %v1127, %v1123
        %v1352 = vpack.c.b16 %v1128, %v1124
        %v1353 = vpack.c.b16 %v1133, %v1129
        %v1354 = vpack.c.b16 %v1134, %v1130
        %v1355 = vpack.c.b16 %v1135, %v1131
        %v1356 = vpack.c.b16 %v1136, %v1132
        %v1357 = vpack.c.b16 %v1141, %v1137
        %v1358 = vpack.c.b16 %v1142, %v1138
        %v1359 = vpack.c.b16 %v1143, %v1139
        %v1360 = vpack.c.b16 %v1144, %v1140
        %v1361 = vpack.c.b16 %v1149, %v1145
        %v1362 = vpack.c.b16 %v1150, %v1146
        %v1363 = vpack.c.b16 %v1151, %v1147
        %v1364 = vpack.c.b16 %v1152, %v1148
        %v1365 = vpack.c.b16 %v1157, %v1153
        %v1366 = vpack.c.b16 %v1158, %v1154
        %v1367 = vpack.c.b16 %v1159, %v1155
        %v1368 = vpack.c.b16 %v1160, %v1156
        %v1369 = vpack.c.b16 %v1165, %v1161
        %v1370 = vpack.c.b16 %v1166, %v1162
        %v1371 = vpack.c.b16 %v1167, %v1163
        %v1372 = vpack.c.b16 %v1168, %v1164
        %v1373 = vpack.c.b16 %v1173, %v1169
        %v1374 = vpack.c.b16 %v1174, %v1170
        %v1375 = vpack.c.b16 %v1175, %v1171
        %v1376 = vpack.c.b16 %v1176, %v1172
        %v1377 = vpack.c.b16 %v1181, %v1177
        %v1378 = vpack.c.b16 %v1182, %v1178
        %v1379 = vpack.c.b16 %v1183, %v1179
        %v1380 = vpack.c.b16 %v1184, %v1180
        %v1381 = vpack.c.b16 %v1189, %v1185
        %v1382 = vpack.c.b16 %v1190, %v1186
        %v1383 = vpack.c.b16 %v1191, %v1187
        %v1384 = vpack.c.b16 %v1192, %v1188
        %v1385 = vpack.c.b16 %v1197, %v1193
        %v1386 = vpack.c.b16 %v1198, %v1194
        %v1387 = vpack.c.b16 %v1199, %v1195
        %v1388 = vpack.c.b16 %v1200, %v1196
        %v1389 = vpack.c.b16 %v1205, %v1201
        %v1390 = vpack.c.b16 %v1206, %v1202
        %v1391 = vpack.c.b16 %v1207, %v1203
        %v1392 = vpack.c.b16 %v1208, %v1204
        %v1393 = vpack.c.b16 %v1213, %v1209
        %v1394 = vpack.c.b16 %v1214, %v1210
        %v1395 = vpack.c.b16 %v1215, %v1211
        %v1396 = vpack.c.b16 %v1216, %v1212
        %v1397 = vpack.c.b16 %v1221, %v1217
        %v1398 = vpack.c.b16 %v1222, %v1218
        %v1399 = vpack.c.b16 %v1223, %v1219
        %v1400 = vpack.c.b16 %v1224, %v1220
        %v1401 = vpack.c.b16 %v1229, %v1225
        %v1402 = vpack.c.b16 %v1230, %v1226
        %v1403 = vpack.c.b16 %v1231, %v1227
        %v1404 = vpack.c.b16 %v1232, %v1228
        %v1405 = vpack.c.b16 %v1237, %v1233
        %v1406 = vpack.c.b16 %v1238, %v1234
        %v1407 = vpack.c.b16 %v1239, %v1235
        %v1408 = vpack.c.b16 %v1240, %v1236
        %v1409 = vpack.c.b16 %v1245, %v1241
        %v1410 = vpack.c.b16 %v1246, %v1242
        %v1411 = vpack.c.b16 %v1247, %v1243
        %v1412 = vpack.c.b16 %v1248, %v1244
        %v1413 = vpack.c.b16 %v1253, %v1249
        %v1414 = vpack.c.b16 %v1254, %v1250
        %v1415 = vpack.c.b16 %v1255, %v1251
        %v1416 = vpack.c.b16 %v1256, %v1252
        %v1417 = vpack.c.b16 %v1261, %v1257
        %v1418 = vpack.c.b16 %v1262, %v1258
        %v1419 = vpack.c.b16 %v1263, %v1259
        %v1420 = vpack.c.b16 %v1264, %v1260
        %v1421 = vpack.c.b16 %v1269, %v1265
        %v1422 = vpack.c.b16 %v1270, %v1266
        %v1423 = vpack.c.b16 %v1271, %v1267
        %v1424 = vpack.c.b16 %v1272, %v1268
        %v1425 = vpack.c.b16 %v1277, %v1273
        %v1426 = vpack.c.b16 %v1278, %v1274
        %v1427 = vpack.c.b16 %v1279, %v1275
        %v1428 = vpack.c.b16 %v1280, %v1276
        %v1429 = vpack.c.b16 %v1285, %v1281
        %v1430 = vpack.c.b16 %v1286, %v1282
        %v1431 = vpack.c.b16 %v1287, %v1283
        %v1432 = vpack.c.b16 %v1288, %v1284
        %v1433 = vpack.c.b16 %v1293, %v1289
        %v1434 = vpack.c.b16 %v1294, %v1290
        %v1435 = vpack.c.b16 %v1295, %v1291
        %v1436 = vpack.c.b16 %v1296, %v1292
        %v1437 = vpack.c.b16 %v1301, %v1297
        %v1438 = vpack.c.b16 %v1302, %v1298
        %v1439 = vpack.c.b16 %v1303, %v1299
        %v1440 = vpack.c.b16 %v1304, %v1300
        %v1441 = vpack.c.b16 %v1309, %v1305
        %v1442 = vpack.c.b16 %v1310, %v1306
        %v1443 = vpack.c.b16 %v1311, %v1307
        %v1444 = vpack.c.b16 %v1312, %v1308
        %v1445 = vpack.c.b16 %v1317, %v1313
        %v1446 = vpack.c.b16 %v1318, %v1314
        %v1447 = vpack.c.b16 %v1319, %v1315
        %v1448 = vpack.c.b16 %v1320, %v1316
        %1577 = vmatprep.subr.bf16.mxu0 %v1322
        %1578 = vmatpush1.bf16.msra.mxu0 %v1321
        %1579 = vmatprep.subr.bf16.mxu0 %v1326
        %1580 = vmatpush1.bf16.msra.mxu0 %v1325
        %1581 = vmatprep.subr.bf16.mxu0 %v1330
        %1582 = vmatpush1.bf16.msra.mxu0 %v1329
        %1583 = vmatprep.subr.bf16.mxu0 %v1334
        %1584 = vmatpush1.bf16.msra.mxu0 %v1333
        %1585 = vmatprep.subr.bf16.mxu0 %v1338
        %1586 = vmatpush1.bf16.msra.mxu0 %v1337
        %1587 = vmatprep.subr.bf16.mxu0 %v1342
        %1588 = vmatpush1.bf16.msra.mxu0 %v1341
        %1589 = vmatprep.subr.bf16.mxu0 %v1346
        %1590 = vmatpush1.bf16.msra.mxu0 %v1345
        %1591 = vmatprep.subr.bf16.mxu0 %v1350
        %1592 = vmatpush1.bf16.msra.mxu0 %v1349
        %1593 = vmatprep.subr.bf16.mxu0 %v1354
        %1594 = vmatpush1.bf16.msra.mxu0 %v1353
        %1595 = vmatprep.subr.bf16.mxu0 %v1358
        %1596 = vmatpush1.bf16.msra.mxu0 %v1357
        %1597 = vmatprep.subr.bf16.mxu0 %v1362
        %1598 = vmatpush1.bf16.msra.mxu0 %v1361
        %1599 = vmatprep.subr.bf16.mxu0 %v1366
        %1600 = vmatpush1.bf16.msra.mxu0 %v1365
        %1601 = vmatprep.subr.bf16.mxu0 %v1370
        %1602 = vmatpush1.bf16.msra.mxu0 %v1369
        %1603 = vmatprep.subr.bf16.mxu0 %v1374
        %1604 = vmatpush1.bf16.msra.mxu0 %v1373
        %1605 = vmatprep.subr.bf16.mxu0 %v1378
        %1606 = vmatpush1.bf16.msra.mxu0 %v1377
        %1607 = vmatprep.subr.bf16.mxu0 %v1382
        %1608 = vmatpush1.bf16.msra.mxu0 %v1381
        %1609 = vmatprep.mubr.bf16.mxu0 %v922
        %1610 = vmatmul.mubr.bf16.gmra.mrb[0].mxu0 %v921
        %v1611 = vpop.f32.mrb[0].mxu0
        %v1612 = vadd.f32 0.0, %v1611
        %v1613 = vpop.f32.mrb[0].mxu0
        %v1614 = vadd.f32 0.0, %v1613
        %v1615 = vpop.f32.mrb[0].mxu0
        %v1616 = vadd.f32 0.0, %v1615
        %v1617 = vpop.f32.mrb[0].mxu0
        %v1618 = vadd.f32 0.0, %v1617
        %1619 = vmatprep.mubr.bf16.mxu0 %v926
        %1620 = vmatmul.mubr.bf16.gmra.mrb[0].mxu0 %v925
        %v1621 = vpop.f32.mrb[0].mxu0
        %v1622 = vadd.f32 0.0, %v1621
        %v1623 = vpop.f32.mrb[0].mxu0
        %v1624 = vadd.f32 0.0, %v1623
        %v1625 = vpop.f32.mrb[0].mxu0
        %v1626 = vadd.f32 0.0, %v1625
        %v1627 = vpop.f32.mrb[0].mxu0
        %v1628 = vadd.f32 0.0, %v1627
        %1629 = vdwg.mxu0
        %1630 = vmatprep.subr.bf16.mxu0 %v1386
        %1631 = vmatpush1.bf16.msra.mxu0 %v1385
        %1632 = vmatprep.subr.bf16.mxu0 %v1390
        %1633 = vmatpush1.bf16.msra.mxu0 %v1389
        %1634 = vmatprep.subr.bf16.mxu0 %v1394
        %1635 = vmatpush1.bf16.msra.mxu0 %v1393
        %1636 = vmatprep.subr.bf16.mxu0 %v1398
        %1637 = vmatpush1.bf16.msra.mxu0 %v1397
        %1638 = vmatprep.subr.bf16.mxu0 %v1402
        %1639 = vmatpush1.bf16.msra.mxu0 %v1401
        %1640 = vmatprep.subr.bf16.mxu0 %v1406
        %1641 = vmatpush1.bf16.msra.mxu0 %v1405
        %1642 = vmatprep.subr.bf16.mxu0 %v1410
        %1643 = vmatpush1.bf16.msra.mxu0 %v1409
        %1644 = vmatprep.subr.bf16.mxu0 %v1414
        %1645 = vmatpush1.bf16.msra.mxu0 %v1413
        %1646 = vmatprep.subr.bf16.mxu0 %v1418
        %1647 = vmatpush1.bf16.msra.mxu0 %v1417
        %1648 = vmatprep.subr.bf16.mxu0 %v1422
        %1649 = vmatpush1.bf16.msra.mxu0 %v1421
        %1650 = vmatprep.subr.bf16.mxu0 %v1426
        %1651 = vmatpush1.bf16.msra.mxu0 %v1425
        %1652 = vmatprep.subr.bf16.mxu0 %v1430
        %1653 = vmatpush1.bf16.msra.mxu0 %v1429
        %1654 = vmatprep.subr.bf16.mxu0 %v1434
        %1655 = vmatpush1.bf16.msra.mxu0 %v1433
        %1656 = vmatprep.subr.bf16.mxu0 %v1438
        %1657 = vmatpush1.bf16.msra.mxu0 %v1437
        %1658 = vmatprep.subr.bf16.mxu0 %v1442
        %1659 = vmatpush1.bf16.msra.mxu0 %v1441
        %1660 = vmatprep.subr.bf16.mxu0 %v1446
        %1661 = vmatpush1.bf16.msra.mxu0 %v1445
        %1662 = vmatprep.mubr.bf16.mxu0 %v924
        %1663 = vmatmul.mubr.bf16.gmra.mrb[0].mxu0 %v923
        %v1664 = vpop.f32.mrb[0].mxu0
        %v1665 = vadd.f32 %v1612, %v1664
        %v1666 = vpop.f32.mrb[0].mxu0
        %v1667 = vadd.f32 %v1614, %v1666
        %v1668 = vpop.f32.mrb[0].mxu0
        %v1669 = vadd.f32 %v1616, %v1668
        %v1670 = vpop.f32.mrb[0].mxu0
        %v1671 = vadd.f32 %v1618, %v1670
        %1672 = vmatprep.mubr.bf16.mxu0 %v928
        %1673 = vmatmul.mubr.bf16.gmra.mrb[0].mxu0 %v927
        %v1674 = vpop.f32.mrb[0].mxu0
        %v1675 = vadd.f32 %v1622, %v1674
        %v1676 = vpop.f32.mrb[0].mxu0
        %v1677 = vadd.f32 %v1624, %v1676
        %v1678 = vpop.f32.mrb[0].mxu0
        %v1679 = vadd.f32 %v1626, %v1678
        %v1680 = vpop.f32.mrb[0].mxu0
        %v1681 = vadd.f32 %v1628, %v1680
        %1682 = vdwg.mxu0
        %1683 = vmatprep.subr.bf16.mxu0 %v1324
        %1684 = vmatpush1.bf16.msra.mxu0 %v1323
        %1685 = vmatprep.subr.bf16.mxu0 %v1328
        %1686 = vmatpush1.bf16.msra.mxu0 %v1327
        %1687 = vmatprep.subr.bf16.mxu0 %v1332
        %1688 = vmatpush1.bf16.msra.mxu0 %v1331
        %1689 = vmatprep.subr.bf16.mxu0 %v1336
        %1690 = vmatpush1.bf16.msra.mxu0 %v1335
        %1691 = vmatprep.subr.bf16.mxu0 %v1340
        %1692 = vmatpush1.bf16.msra.mxu0 %v1339
        %1693 = vmatprep.subr.bf16.mxu0 %v1344
        %1694 = vmatpush1.bf16.msra.mxu0 %v1343
        %1695 = vmatprep.subr.bf16.mxu0 %v1348
        %1696 = vmatpush1.bf16.msra.mxu0 %v1347
        %1697 = vmatprep.subr.bf16.mxu0 %v1352
        %1698 = vmatpush1.bf16.msra.mxu0 %v1351
        %1699 = vmatprep.subr.bf16.mxu0 %v1356
        %1700 = vmatpush1.bf16.msra.mxu0 %v1355
        %1701 = vmatprep.subr.bf16.mxu0 %v1360
        %1702 = vmatpush1.bf16.msra.mxu0 %v1359
        %1703 = vmatprep.subr.bf16.mxu0 %v1364
        %1704 = vmatpush1.bf16.msra.mxu0 %v1363
        %1705 = vmatprep.subr.bf16.mxu0 %v1368
        %1706 = vmatpush1.bf16.msra.mxu0 %v1367
        %1707 = vmatprep.subr.bf16.mxu0 %v1372
        %1708 = vmatpush1.bf16.msra.mxu0 %v1371
        %1709 = vmatprep.subr.bf16.mxu0 %v1376
        %1710 = vmatpush1.bf16.msra.mxu0 %v1375
        %1711 = vmatprep.subr.bf16.mxu0 %v1380
        %1712 = vmatpush1.bf16.msra.mxu0 %v1379
        %1713 = vmatprep.subr.bf16.mxu0 %v1384
        %1714 = vmatpush1.bf16.msra.mxu0 %v1383
        %1715 = vmatprep.mubr.bf16.mxu0 %v922
        %1716 = vmatmul.mubr.bf16.gmra.mrb[0].mxu0 %v921
        %v1717 = vpop.f32.mrb[0].mxu0
        %v1718 = vadd.f32 0.0, %v1717
        %v1719 = vpop.f32.mrb[0].mxu0
        %v1720 = vadd.f32 0.0, %v1719
        %v1721 = vpop.f32.mrb[0].mxu0
        %v1722 = vadd.f32 0.0, %v1721
        %v1723 = vpop.f32.mrb[0].mxu0
        %v1724 = vadd.f32 0.0, %v1723
        %1725 = vmatprep.mubr.bf16.mxu0 %v926
        %1726 = vmatmul.mubr.bf16.gmra.mrb[0].mxu0 %v925
        %v1727 = vpop.f32.mrb[0].mxu0
        %v1728 = vadd.f32 0.0, %v1727
        %v1729 = vpop.f32.mrb[0].mxu0
        %v1730 = vadd.f32 0.0, %v1729
        %v1731 = vpop.f32.mrb[0].mxu0
        %v1732 = vadd.f32 0.0, %v1731
        %v1733 = vpop.f32.mrb[0].mxu0
        %v1734 = vadd.f32 0.0, %v1733
        %1735 = vdwg.mxu0
        %1736 = vmatprep.subr.bf16.mxu0 %v1388
        %1737 = vmatpush1.bf16.msra.mxu0 %v1387
        %1738 = vmatprep.subr.bf16.mxu0 %v1392
        %1739 = vmatpush1.bf16.msra.mxu0 %v1391
        %1740 = vmatprep.subr.bf16.mxu0 %v1396
        %1741 = vmatpush1.bf16.msra.mxu0 %v1395
        %1742 = vmatprep.subr.bf16.mxu0 %v1400
        %1743 = vmatpush1.bf16.msra.mxu0 %v1399
        %1744 = vmatprep.subr.bf16.mxu0 %v1404
        %1745 = vmatpush1.bf16.msra.mxu0 %v1403
        %1746 = vmatprep.subr.bf16.mxu0 %v1408
        %1747 = vmatpush1.bf16.msra.mxu0 %v1407
        %1748 = vmatprep.subr.bf16.mxu0 %v1412
        %1749 = vmatpush1.bf16.msra.mxu0 %v1411
        %1750 = vmatprep.subr.bf16.mxu0 %v1416
        %1751 = vmatpush1.bf16.msra.mxu0 %v1415
        %1752 = vmatprep.subr.bf16.mxu0 %v1420
        %1753 = vmatpush1.bf16.msra.mxu0 %v1419
        %1754 = vmatprep.subr.bf16.mxu0 %v1424
        %1755 = vmatpush1.bf16.msra.mxu0 %v1423
        %1756 = vmatprep.subr.bf16.mxu0 %v1428
        %1757 = vmatpush1.bf16.msra.mxu0 %v1427
        %1758 = vmatprep.subr.bf16.mxu0 %v1432
        %1759 = vmatpush1.bf16.msra.mxu0 %v1431
        %1760 = vmatprep.subr.bf16.mxu0 %v1436
        %1761 = vmatpush1.bf16.msra.mxu0 %v1435
        %1762 = vmatprep.subr.bf16.mxu0 %v1440
        %1763 = vmatpush1.bf16.msra.mxu0 %v1439
        %1764 = vmatprep.subr.bf16.mxu0 %v1444
        %1765 = vmatpush1.bf16.msra.mxu0 %v1443
        %1766 = vmatprep.subr.bf16.mxu0 %v1448
        %1767 = vmatpush1.bf16.msra.mxu0 %v1447
        %1768 = vmatprep.mubr.bf16.mxu0 %v924
        %1769 = vmatmul.mubr.bf16.gmra.mrb[0].mxu0 %v923
        %v1770 = vpop.f32.mrb[0].mxu0
        %v1771 = vadd.f32 %v1718, %v1770
        %v1772 = vpop.f32.mrb[0].mxu0
        %v1773 = vadd.f32 %v1720, %v1772
        %v1774 = vpop.f32.mrb[0].mxu0
        %v1775 = vadd.f32 %v1722, %v1774
        %v1776 = vpop.f32.mrb[0].mxu0
        %v1777 = vadd.f32 %v1724, %v1776
        %1778 = vmatprep.mubr.bf16.mxu0 %v928
        %1779 = vmatmul.mubr.bf16.gmra.mrb[0].mxu0 %v927
        %v1780 = vpop.f32.mrb[0].mxu0
        %v1781 = vadd.f32 %v1728, %v1780
        %v1782 = vpop.f32.mrb[0].mxu0
        %v1783 = vadd.f32 %v1730, %v1782
        %v1784 = vpop.f32.mrb[0].mxu0
        %v1785 = vadd.f32 %v1732, %v1784
        %v1786 = vpop.f32.mrb[0].mxu0
        %v1787 = vadd.f32 %v1734, %v1786
        %1788 = vdwg.mxu0
        %v1797 = vunpack.c.l.b16 %v537
        %v1798 = vunpack.c.h.b16 %v537
        %v1799 = vunpack.c.l.b16 %v538
        %v1800 = vunpack.c.h.b16 %v538
        %v1801 = vunpack.c.l.b16 %v539
        %v1802 = vunpack.c.h.b16 %v539
        %v1803 = vunpack.c.l.b16 %v540
        %v1804 = vunpack.c.h.b16 %v540
        %v1805 = vunpack.c.l.b16 %v541
        %v1806 = vunpack.c.h.b16 %v541
        %v1807 = vunpack.c.l.b16 %v542
        %v1808 = vunpack.c.h.b16 %v542
        %v1809 = vunpack.c.l.b16 %v543
        %v1810 = vunpack.c.h.b16 %v543
        %v1811 = vunpack.c.l.b16 %v544
        %v1812 = vunpack.c.h.b16 %v544
        %v1813 = vpack.c.b16 %v1801, %v1797
        %v1814 = vpack.c.b16 %v1802, %v1798
        %v1815 = vpack.c.b16 %v1803, %v1799
        %v1816 = vpack.c.b16 %v1804, %v1800
        %v1817 = vpack.c.b16 %v1809, %v1805
        %v1818 = vpack.c.b16 %v1810, %v1806
        %v1819 = vpack.c.b16 %v1811, %v1807
        %v1820 = vpack.c.b16 %v1812, %v1808
        %v1957 = vunpack.c.l.b16 %v545
        %v1958 = vunpack.c.h.b16 %v545
        %v1959 = vunpack.c.l.b16 %v546
        %v1960 = vunpack.c.h.b16 %v546
        %v1961 = vunpack.c.l.b16 %v547
        %v1962 = vunpack.c.h.b16 %v547
        %v1963 = vunpack.c.l.b16 %v548
        %v1964 = vunpack.c.h.b16 %v548
        %v1965 = vunpack.c.l.b16 %v549
        %v1966 = vunpack.c.h.b16 %v549
        %v1967 = vunpack.c.l.b16 %v550
        %v1968 = vunpack.c.h.b16 %v550
        %v1969 = vunpack.c.l.b16 %v551
        %v1970 = vunpack.c.h.b16 %v551
        %v1971 = vunpack.c.l.b16 %v552
        %v1972 = vunpack.c.h.b16 %v552
        %v1973 = vunpack.c.l.b16 %v553
        %v1974 = vunpack.c.h.b16 %v553
        %v1975 = vunpack.c.l.b16 %v554
        %v1976 = vunpack.c.h.b16 %v554
        %v1977 = vunpack.c.l.b16 %v555
        %v1978 = vunpack.c.h.b16 %v555
        %v1979 = vunpack.c.l.b16 %v556
        %v1980 = vunpack.c.h.b16 %v556
        %v1981 = vunpack.c.l.b16 %v557
        %v1982 = vunpack.c.h.b16 %v557
        %v1983 = vunpack.c.l.b16 %v558
        %v1984 = vunpack.c.h.b16 %v558
        %v1985 = vunpack.c.l.b16 %v559
        %v1986 = vunpack.c.h.b16 %v559
        %v1987 = vunpack.c.l.b16 %v560
        %v1988 = vunpack.c.h.b16 %v560
        %v1989 = vunpack.c.l.b16 %v561
        %v1990 = vunpack.c.h.b16 %v561
        %v1991 = vunpack.c.l.b16 %v562
        %v1992 = vunpack.c.h.b16 %v562
        %v1993 = vunpack.c.l.b16 %v563
        %v1994 = vunpack.c.h.b16 %v563
        %v1995 = vunpack.c.l.b16 %v564
        %v1996 = vunpack.c.h.b16 %v564
        %v1997 = vunpack.c.l.b16 %v565
        %v1998 = vunpack.c.h.b16 %v565
        %v1999 = vunpack.c.l.b16 %v566
        %v2000 = vunpack.c.h.b16 %v566
        %v2001 = vunpack.c.l.b16 %v567
        %v2002 = vunpack.c.h.b16 %v567
        %v2003 = vunpack.c.l.b16 %v568
        %v2004 = vunpack.c.h.b16 %v568
        %v2005 = vunpack.c.l.b16 %v569
        %v2006 = vunpack.c.h.b16 %v569
        %v2007 = vunpack.c.l.b16 %v570
        %v2008 = vunpack.c.h.b16 %v570
        %v2009 = vunpack.c.l.b16 %v571
        %v2010 = vunpack.c.h.b16 %v571
        %v2011 = vunpack.c.l.b16 %v572
        %v2012 = vunpack.c.h.b16 %v572
        %v2013 = vunpack.c.l.b16 %v573
        %v2014 = vunpack.c.h.b16 %v573
        %v2015 = vunpack.c.l.b16 %v574
        %v2016 = vunpack.c.h.b16 %v574
        %v2017 = vunpack.c.l.b16 %v575
        %v2018 = vunpack.c.h.b16 %v575
        %v2019 = vunpack.c.l.b16 %v576
        %v2020 = vunpack.c.h.b16 %v576
        %v2021 = vunpack.c.l.b16 %v577
        %v2022 = vunpack.c.h.b16 %v577
        %v2023 = vunpack.c.l.b16 %v578
        %v2024 = vunpack.c.h.b16 %v578
        %v2025 = vunpack.c.l.b16 %v579
        %v2026 = vunpack.c.h.b16 %v579
        %v2027 = vunpack.c.l.b16 %v580
        %v2028 = vunpack.c.h.b16 %v580
        %v2029 = vunpack.c.l.b16 %v581
        %v2030 = vunpack.c.h.b16 %v581
        %v2031 = vunpack.c.l.b16 %v582
        %v2032 = vunpack.c.h.b16 %v582
        %v2033 = vunpack.c.l.b16 %v583
        %v2034 = vunpack.c.h.b16 %v583
        %v2035 = vunpack.c.l.b16 %v584
        %v2036 = vunpack.c.h.b16 %v584
        %v2037 = vunpack.c.l.b16 %v585
        %v2038 = vunpack.c.h.b16 %v585
        %v2039 = vunpack.c.l.b16 %v586
        %v2040 = vunpack.c.h.b16 %v586
        %v2041 = vunpack.c.l.b16 %v587
        %v2042 = vunpack.c.h.b16 %v587
        %v2043 = vunpack.c.l.b16 %v588
        %v2044 = vunpack.c.h.b16 %v588
        %v2045 = vunpack.c.l.b16 %v589
        %v2046 = vunpack.c.h.b16 %v589
        %v2047 = vunpack.c.l.b16 %v590
        %v2048 = vunpack.c.h.b16 %v590
        %v2049 = vunpack.c.l.b16 %v591
        %v2050 = vunpack.c.h.b16 %v591
        %v2051 = vunpack.c.l.b16 %v592
        %v2052 = vunpack.c.h.b16 %v592
        %v2053 = vunpack.c.l.b16 %v593
        %v2054 = vunpack.c.h.b16 %v593
        %v2055 = vunpack.c.l.b16 %v594
        %v2056 = vunpack.c.h.b16 %v594
        %v2057 = vunpack.c.l.b16 %v595
        %v2058 = vunpack.c.h.b16 %v595
        %v2059 = vunpack.c.l.b16 %v596
        %v2060 = vunpack.c.h.b16 %v596
        %v2061 = vunpack.c.l.b16 %v597
        %v2062 = vunpack.c.h.b16 %v597
        %v2063 = vunpack.c.l.b16 %v598
        %v2064 = vunpack.c.h.b16 %v598
        %v2065 = vunpack.c.l.b16 %v599
        %v2066 = vunpack.c.h.b16 %v599
        %v2067 = vunpack.c.l.b16 %v600
        %v2068 = vunpack.c.h.b16 %v600
        %v2069 = vunpack.c.l.b16 %v601
        %v2070 = vunpack.c.h.b16 %v601
        %v2071 = vunpack.c.l.b16 %v602
        %v2072 = vunpack.c.h.b16 %v602
        %v2073 = vunpack.c.l.b16 %v603
        %v2074 = vunpack.c.h.b16 %v603
        %v2075 = vunpack.c.l.b16 %v604
        %v2076 = vunpack.c.h.b16 %v604
        %v2077 = vunpack.c.l.b16 %v605
        %v2078 = vunpack.c.h.b16 %v605
        %v2079 = vunpack.c.l.b16 %v606
        %v2080 = vunpack.c.h.b16 %v606
        %v2081 = vunpack.c.l.b16 %v607
        %v2082 = vunpack.c.h.b16 %v607
        %v2083 = vunpack.c.l.b16 %v608
        %v2084 = vunpack.c.h.b16 %v608
        %v2085 = vunpack.c.l.b16 %v609
        %v2086 = vunpack.c.h.b16 %v609
        %v2087 = vunpack.c.l.b16 %v610
        %v2088 = vunpack.c.h.b16 %v610
        %v2089 = vunpack.c.l.b16 %v611
        %v2090 = vunpack.c.h.b16 %v611
        %v2091 = vunpack.c.l.b16 %v612
        %v2092 = vunpack.c.h.b16 %v612
        %v2093 = vunpack.c.l.b16 %v613
        %v2094 = vunpack.c.h.b16 %v613
        %v2095 = vunpack.c.l.b16 %v614
        %v2096 = vunpack.c.h.b16 %v614
        %v2097 = vunpack.c.l.b16 %v615
        %v2098 = vunpack.c.h.b16 %v615
        %v2099 = vunpack.c.l.b16 %v616
        %v2100 = vunpack.c.h.b16 %v616
        %v2101 = vunpack.c.l.b16 %v617
        %v2102 = vunpack.c.h.b16 %v617
        %v2103 = vunpack.c.l.b16 %v618
        %v2104 = vunpack.c.h.b16 %v618
        %v2105 = vunpack.c.l.b16 %v619
        %v2106 = vunpack.c.h.b16 %v619
        %v2107 = vunpack.c.l.b16 %v620
        %v2108 = vunpack.c.h.b16 %v620
        %v2109 = vunpack.c.l.b16 %v621
        %v2110 = vunpack.c.h.b16 %v621
        %v2111 = vunpack.c.l.b16 %v622
        %v2112 = vunpack.c.h.b16 %v622
        %v2113 = vunpack.c.l.b16 %v623
        %v2114 = vunpack.c.h.b16 %v623
        %v2115 = vunpack.c.l.b16 %v624
        %v2116 = vunpack.c.h.b16 %v624
        %v2117 = vunpack.c.l.b16 %v625
        %v2118 = vunpack.c.h.b16 %v625
        %v2119 = vunpack.c.l.b16 %v626
        %v2120 = vunpack.c.h.b16 %v626
        %v2121 = vunpack.c.l.b16 %v627
        %v2122 = vunpack.c.h.b16 %v627
        %v2123 = vunpack.c.l.b16 %v628
        %v2124 = vunpack.c.h.b16 %v628
        %v2125 = vunpack.c.l.b16 %v629
        %v2126 = vunpack.c.h.b16 %v629
        %v2127 = vunpack.c.l.b16 %v630
        %v2128 = vunpack.c.h.b16 %v630
        %v2129 = vunpack.c.l.b16 %v631
        %v2130 = vunpack.c.h.b16 %v631
        %v2131 = vunpack.c.l.b16 %v632
        %v2132 = vunpack.c.h.b16 %v632
        %v2133 = vunpack.c.l.b16 %v633
        %v2134 = vunpack.c.h.b16 %v633
        %v2135 = vunpack.c.l.b16 %v634
        %v2136 = vunpack.c.h.b16 %v634
        %v2137 = vunpack.c.l.b16 %v635
        %v2138 = vunpack.c.h.b16 %v635
        %v2139 = vunpack.c.l.b16 %v636
        %v2140 = vunpack.c.h.b16 %v636
        %v2141 = vunpack.c.l.b16 %v637
        %v2142 = vunpack.c.h.b16 %v637
        %v2143 = vunpack.c.l.b16 %v638
        %v2144 = vunpack.c.h.b16 %v638
        %v2145 = vunpack.c.l.b16 %v639
        %v2146 = vunpack.c.h.b16 %v639
        %v2147 = vunpack.c.l.b16 %v640
        %v2148 = vunpack.c.h.b16 %v640
        %v2149 = vunpack.c.l.b16 %v641
        %v2150 = vunpack.c.h.b16 %v641
        %v2151 = vunpack.c.l.b16 %v642
        %v2152 = vunpack.c.h.b16 %v642
        %v2153 = vunpack.c.l.b16 %v643
        %v2154 = vunpack.c.h.b16 %v643
        %v2155 = vunpack.c.l.b16 %v644
        %v2156 = vunpack.c.h.b16 %v644
        %v2157 = vunpack.c.l.b16 %v645
        %v2158 = vunpack.c.h.b16 %v645
        %v2159 = vunpack.c.l.b16 %v646
        %v2160 = vunpack.c.h.b16 %v646
        %v2161 = vunpack.c.l.b16 %v647
        %v2162 = vunpack.c.h.b16 %v647
        %v2163 = vunpack.c.l.b16 %v648
        %v2164 = vunpack.c.h.b16 %v648
        %v2165 = vunpack.c.l.b16 %v649
        %v2166 = vunpack.c.h.b16 %v649
        %v2167 = vunpack.c.l.b16 %v650
        %v2168 = vunpack.c.h.b16 %v650
        %v2169 = vunpack.c.l.b16 %v651
        %v2170 = vunpack.c.h.b16 %v651
        %v2171 = vunpack.c.l.b16 %v652
        %v2172 = vunpack.c.h.b16 %v652
        %v2173 = vunpack.c.l.b16 %v653
        %v2174 = vunpack.c.h.b16 %v653
        %v2175 = vunpack.c.l.b16 %v654
        %v2176 = vunpack.c.h.b16 %v654
        %v2177 = vunpack.c.l.b16 %v655
        %v2178 = vunpack.c.h.b16 %v655
        %v2179 = vunpack.c.l.b16 %v656
        %v2180 = vunpack.c.h.b16 %v656
        %v2181 = vunpack.c.l.b16 %v657
        %v2182 = vunpack.c.h.b16 %v657
        %v2183 = vunpack.c.l.b16 %v658
        %v2184 = vunpack.c.h.b16 %v658
        %v2185 = vunpack.c.l.b16 %v659
        %v2186 = vunpack.c.h.b16 %v659
        %v2187 = vunpack.c.l.b16 %v660
        %v2188 = vunpack.c.h.b16 %v660
        %v2189 = vunpack.c.l.b16 %v661
        %v2190 = vunpack.c.h.b16 %v661
        %v2191 = vunpack.c.l.b16 %v662
        %v2192 = vunpack.c.h.b16 %v662
        %v2193 = vunpack.c.l.b16 %v663
        %v2194 = vunpack.c.h.b16 %v663
        %v2195 = vunpack.c.l.b16 %v664
        %v2196 = vunpack.c.h.b16 %v664
        %v2197 = vunpack.c.l.b16 %v665
        %v2198 = vunpack.c.h.b16 %v665
        %v2199 = vunpack.c.l.b16 %v666
        %v2200 = vunpack.c.h.b16 %v666
        %v2201 = vunpack.c.l.b16 %v667
        %v2202 = vunpack.c.h.b16 %v667
        %v2203 = vunpack.c.l.b16 %v668
        %v2204 = vunpack.c.h.b16 %v668
        %v2205 = vunpack.c.l.b16 %v669
        %v2206 = vunpack.c.h.b16 %v669
        %v2207 = vunpack.c.l.b16 %v670
        %v2208 = vunpack.c.h.b16 %v670
        %v2209 = vunpack.c.l.b16 %v671
        %v2210 = vunpack.c.h.b16 %v671
        %v2211 = vunpack.c.l.b16 %v672
        %v2212 = vunpack.c.h.b16 %v672
        %v2213 = vpack.c.b16 %v1961, %v1957
        %v2214 = vpack.c.b16 %v1962, %v1958
        %v2215 = vpack.c.b16 %v1963, %v1959
        %v2216 = vpack.c.b16 %v1964, %v1960
        %v2217 = vpack.c.b16 %v1969, %v1965
        %v2218 = vpack.c.b16 %v1970, %v1966
        %v2219 = vpack.c.b16 %v1971, %v1967
        %v2220 = vpack.c.b16 %v1972, %v1968
        %v2221 = vpack.c.b16 %v1977, %v1973
        %v2222 = vpack.c.b16 %v1978, %v1974
        %v2223 = vpack.c.b16 %v1979, %v1975
        %v2224 = vpack.c.b16 %v1980, %v1976
        %v2225 = vpack.c.b16 %v1985, %v1981
        %v2226 = vpack.c.b16 %v1986, %v1982
        %v2227 = vpack.c.b16 %v1987, %v1983
        %v2228 = vpack.c.b16 %v1988, %v1984
        %v2229 = vpack.c.b16 %v1993, %v1989
        %v2230 = vpack.c.b16 %v1994, %v1990
        %v2231 = vpack.c.b16 %v1995, %v1991
        %v2232 = vpack.c.b16 %v1996, %v1992
        %v2233 = vpack.c.b16 %v2001, %v1997
        %v2234 = vpack.c.b16 %v2002, %v1998
        %v2235 = vpack.c.b16 %v2003, %v1999
        %v2236 = vpack.c.b16 %v2004, %v2000
        %v2237 = vpack.c.b16 %v2009, %v2005
        %v2238 = vpack.c.b16 %v2010, %v2006
        %v2239 = vpack.c.b16 %v2011, %v2007
        %v2240 = vpack.c.b16 %v2012, %v2008
        %v2241 = vpack.c.b16 %v2017, %v2013
        %v2242 = vpack.c.b16 %v2018, %v2014
        %v2243 = vpack.c.b16 %v2019, %v2015
        %v2244 = vpack.c.b16 %v2020, %v2016
        %v2245 = vpack.c.b16 %v2025, %v2021
        %v2246 = vpack.c.b16 %v2026, %v2022
        %v2247 = vpack.c.b16 %v2027, %v2023
        %v2248 = vpack.c.b16 %v2028, %v2024
        %v2249 = vpack.c.b16 %v2033, %v2029
        %v2250 = vpack.c.b16 %v2034, %v2030
        %v2251 = vpack.c.b16 %v2035, %v2031
        %v2252 = vpack.c.b16 %v2036, %v2032
        %v2253 = vpack.c.b16 %v2041, %v2037
        %v2254 = vpack.c.b16 %v2042, %v2038
        %v2255 = vpack.c.b16 %v2043, %v2039
        %v2256 = vpack.c.b16 %v2044, %v2040
        %v2257 = vpack.c.b16 %v2049, %v2045
        %v2258 = vpack.c.b16 %v2050, %v2046
        %v2259 = vpack.c.b16 %v2051, %v2047
        %v2260 = vpack.c.b16 %v2052, %v2048
        %v2261 = vpack.c.b16 %v2057, %v2053
        %v2262 = vpack.c.b16 %v2058, %v2054
        %v2263 = vpack.c.b16 %v2059, %v2055
        %v2264 = vpack.c.b16 %v2060, %v2056
        %v2265 = vpack.c.b16 %v2065, %v2061
        %v2266 = vpack.c.b16 %v2066, %v2062
        %v2267 = vpack.c.b16 %v2067, %v2063
        %v2268 = vpack.c.b16 %v2068, %v2064
        %v2269 = vpack.c.b16 %v2073, %v2069
        %v2270 = vpack.c.b16 %v2074, %v2070
        %v2271 = vpack.c.b16 %v2075, %v2071
        %v2272 = vpack.c.b16 %v2076, %v2072
        %v2273 = vpack.c.b16 %v2081, %v2077
        %v2274 = vpack.c.b16 %v2082, %v2078
        %v2275 = vpack.c.b16 %v2083, %v2079
        %v2276 = vpack.c.b16 %v2084, %v2080
        %v2277 = vpack.c.b16 %v2089, %v2085
        %v2278 = vpack.c.b16 %v2090, %v2086
        %v2279 = vpack.c.b16 %v2091, %v2087
        %v2280 = vpack.c.b16 %v2092, %v2088
        %v2281 = vpack.c.b16 %v2097, %v2093
        %v2282 = vpack.c.b16 %v2098, %v2094
        %v2283 = vpack.c.b16 %v2099, %v2095
        %v2284 = vpack.c.b16 %v2100, %v2096
        %v2285 = vpack.c.b16 %v2105, %v2101
        %v2286 = vpack.c.b16 %v2106, %v2102
        %v2287 = vpack.c.b16 %v2107, %v2103
        %v2288 = vpack.c.b16 %v2108, %v2104
        %v2289 = vpack.c.b16 %v2113, %v2109
        %v2290 = vpack.c.b16 %v2114, %v2110
        %v2291 = vpack.c.b16 %v2115, %v2111
        %v2292 = vpack.c.b16 %v2116, %v2112
        %v2293 = vpack.c.b16 %v2121, %v2117
        %v2294 = vpack.c.b16 %v2122, %v2118
        %v2295 = vpack.c.b16 %v2123, %v2119
        %v2296 = vpack.c.b16 %v2124, %v2120
        %v2297 = vpack.c.b16 %v2129, %v2125
        %v2298 = vpack.c.b16 %v2130, %v2126
        %v2299 = vpack.c.b16 %v2131, %v2127
        %v2300 = vpack.c.b16 %v2132, %v2128
        %v2301 = vpack.c.b16 %v2137, %v2133
        %v2302 = vpack.c.b16 %v2138, %v2134
        %v2303 = vpack.c.b16 %v2139, %v2135
        %v2304 = vpack.c.b16 %v2140, %v2136
        %v2305 = vpack.c.b16 %v2145, %v2141
        %v2306 = vpack.c.b16 %v2146, %v2142
        %v2307 = vpack.c.b16 %v2147, %v2143
        %v2308 = vpack.c.b16 %v2148, %v2144
        %v2309 = vpack.c.b16 %v2153, %v2149
        %v2310 = vpack.c.b16 %v2154, %v2150
        %v2311 = vpack.c.b16 %v2155, %v2151
        %v2312 = vpack.c.b16 %v2156, %v2152
        %v2313 = vpack.c.b16 %v2161, %v2157
        %v2314 = vpack.c.b16 %v2162, %v2158
        %v2315 = vpack.c.b16 %v2163, %v2159
        %v2316 = vpack.c.b16 %v2164, %v2160
        %v2317 = vpack.c.b16 %v2169, %v2165
        %v2318 = vpack.c.b16 %v2170, %v2166
        %v2319 = vpack.c.b16 %v2171, %v2167
        %v2320 = vpack.c.b16 %v2172, %v2168
        %v2321 = vpack.c.b16 %v2177, %v2173
        %v2322 = vpack.c.b16 %v2178, %v2174
        %v2323 = vpack.c.b16 %v2179, %v2175
        %v2324 = vpack.c.b16 %v2180, %v2176
        %v2325 = vpack.c.b16 %v2185, %v2181
        %v2326 = vpack.c.b16 %v2186, %v2182
        %v2327 = vpack.c.b16 %v2187, %v2183
        %v2328 = vpack.c.b16 %v2188, %v2184
        %v2329 = vpack.c.b16 %v2193, %v2189
        %v2330 = vpack.c.b16 %v2194, %v2190
        %v2331 = vpack.c.b16 %v2195, %v2191
        %v2332 = vpack.c.b16 %v2196, %v2192
        %v2333 = vpack.c.b16 %v2201, %v2197
        %v2334 = vpack.c.b16 %v2202, %v2198
        %v2335 = vpack.c.b16 %v2203, %v2199
        %v2336 = vpack.c.b16 %v2204, %v2200
        %v2337 = vpack.c.b16 %v2209, %v2205
        %v2338 = vpack.c.b16 %v2210, %v2206
        %v2339 = vpack.c.b16 %v2211, %v2207
        %v2340 = vpack.c.b16 %v2212, %v2208
        %2469 = vmatprep.subr.bf16.mxu0 %v2214
        %2470 = vmatpush1.bf16.msra.mxu0 %v2213
        %2471 = vmatprep.subr.bf16.mxu0 %v2218
        %2472 = vmatpush1.bf16.msra.mxu0 %v2217
        %2473 = vmatprep.subr.bf16.mxu0 %v2222
        %2474 = vmatpush1.bf16.msra.mxu0 %v2221
        %2475 = vmatprep.subr.bf16.mxu0 %v2226
        %2476 = vmatpush1.bf16.msra.mxu0 %v2225
        %2477 = vmatprep.subr.bf16.mxu0 %v2230
        %2478 = vmatpush1.bf16.msra.mxu0 %v2229
        %2479 = vmatprep.subr.bf16.mxu0 %v2234
        %2480 = vmatpush1.bf16.msra.mxu0 %v2233
        %2481 = vmatprep.subr.bf16.mxu0 %v2238
        %2482 = vmatpush1.bf16.msra.mxu0 %v2237
        %2483 = vmatprep.subr.bf16.mxu0 %v2242
        %2484 = vmatpush1.bf16.msra.mxu0 %v2241
        %2485 = vmatprep.subr.bf16.mxu0 %v2246
        %2486 = vmatpush1.bf16.msra.mxu0 %v2245
        %2487 = vmatprep.subr.bf16.mxu0 %v2250
        %2488 = vmatpush1.bf16.msra.mxu0 %v2249
        %2489 = vmatprep.subr.bf16.mxu0 %v2254
        %2490 = vmatpush1.bf16.msra.mxu0 %v2253
        %2491 = vmatprep.subr.bf16.mxu0 %v2258
        %2492 = vmatpush1.bf16.msra.mxu0 %v2257
        %2493 = vmatprep.subr.bf16.mxu0 %v2262
        %2494 = vmatpush1.bf16.msra.mxu0 %v2261
        %2495 = vmatprep.subr.bf16.mxu0 %v2266
        %2496 = vmatpush1.bf16.msra.mxu0 %v2265
        %2497 = vmatprep.subr.bf16.mxu0 %v2270
        %2498 = vmatpush1.bf16.msra.mxu0 %v2269
        %2499 = vmatprep.subr.bf16.mxu0 %v2274
        %2500 = vmatpush1.bf16.msra.mxu0 %v2273
        %2501 = vmatprep.mubr.bf16.mxu0 %v1814
        %2502 = vmatmul.mubr.bf16.gmra.mrb[0].mxu0 %v1813
        %v2503 = vpop.f32.mrb[0].mxu0
        %v2504 = vadd.f32 %v1665, %v2503
        %v2505 = vpop.f32.mrb[0].mxu0
        %v2506 = vadd.f32 %v1667, %v2505
        %v2507 = vpop.f32.mrb[0].mxu0
        %v2508 = vadd.f32 %v1669, %v2507
        %v2509 = vpop.f32.mrb[0].mxu0
        %v2510 = vadd.f32 %v1671, %v2509
        %2511 = vmatprep.mubr.bf16.mxu0 %v1818
        %2512 = vmatmul.mubr.bf16.gmra.mrb[0].mxu0 %v1817
        %v2513 = vpop.f32.mrb[0].mxu0
        %v2514 = vadd.f32 %v1675, %v2513
        %v2515 = vpop.f32.mrb[0].mxu0
        %v2516 = vadd.f32 %v1677, %v2515
        %v2517 = vpop.f32.mrb[0].mxu0
        %v2518 = vadd.f32 %v1679, %v2517
        %v2519 = vpop.f32.mrb[0].mxu0
        %v2520 = vadd.f32 %v1681, %v2519
        %2521 = vdwg.mxu0
        %2522 = vmatprep.subr.bf16.mxu0 %v2278
        %2523 = vmatpush1.bf16.msra.mxu0 %v2277
        %2524 = vmatprep.subr.bf16.mxu0 %v2282
        %2525 = vmatpush1.bf16.msra.mxu0 %v2281
        %2526 = vmatprep.subr.bf16.mxu0 %v2286
        %2527 = vmatpush1.bf16.msra.mxu0 %v2285
        %2528 = vmatprep.subr.bf16.mxu0 %v2290
        %2529 = vmatpush1.bf16.msra.mxu0 %v2289
        %2530 = vmatprep.subr.bf16.mxu0 %v2294
        %2531 = vmatpush1.bf16.msra.mxu0 %v2293
        %2532 = vmatprep.subr.bf16.mxu0 %v2298
        %2533 = vmatpush1.bf16.msra.mxu0 %v2297
        %2534 = vmatprep.subr.bf16.mxu0 %v2302
        %2535 = vmatpush1.bf16.msra.mxu0 %v2301
        %2536 = vmatprep.subr.bf16.mxu0 %v2306
        %2537 = vmatpush1.bf16.msra.mxu0 %v2305
        %2538 = vmatprep.subr.bf16.mxu0 %v2310
        %2539 = vmatpush1.bf16.msra.mxu0 %v2309
        %2540 = vmatprep.subr.bf16.mxu0 %v2314
        %2541 = vmatpush1.bf16.msra.mxu0 %v2313
        %2542 = vmatprep.subr.bf16.mxu0 %v2318
        %2543 = vmatpush1.bf16.msra.mxu0 %v2317
        %2544 = vmatprep.subr.bf16.mxu0 %v2322
        %2545 = vmatpush1.bf16.msra.mxu0 %v2321
        %2546 = vmatprep.subr.bf16.mxu0 %v2326
        %2547 = vmatpush1.bf16.msra.mxu0 %v2325
        %2548 = vmatprep.subr.bf16.mxu0 %v2330
        %2549 = vmatpush1.bf16.msra.mxu0 %v2329
        %2550 = vmatprep.subr.bf16.mxu0 %v2334
        %2551 = vmatpush1.bf16.msra.mxu0 %v2333
        %2552 = vmatprep.subr.bf16.mxu0 %v2338
        %2553 = vmatpush1.bf16.msra.mxu0 %v2337
        %2554 = vmatprep.mubr.bf16.mxu0 %v1816
        %2555 = vmatmul.mubr.bf16.gmra.mrb[0].mxu0 %v1815
        %v2556 = vpop.f32.mrb[0].mxu0
        %v2557 = vadd.f32 %v2504, %v2556
        %v2558 = vpop.f32.mrb[0].mxu0
        %v2559 = vadd.f32 %v2506, %v2558
        %v2560 = vpop.f32.mrb[0].mxu0
        %v2561 = vadd.f32 %v2508, %v2560
        %v2562 = vpop.f32.mrb[0].mxu0
        %v2563 = vadd.f32 %v2510, %v2562
        %2564 = vmatprep.mubr.bf16.mxu0 %v1820
        %2565 = vmatmul.mubr.bf16.gmra.mrb[0].mxu0 %v1819
        %v2566 = vpop.f32.mrb[0].mxu0
        %v2567 = vadd.f32 %v2514, %v2566
        %v2568 = vpop.f32.mrb[0].mxu0
        %v2569 = vadd.f32 %v2516, %v2568
        %v2570 = vpop.f32.mrb[0].mxu0
        %v2571 = vadd.f32 %v2518, %v2570
        %v2572 = vpop.f32.mrb[0].mxu0
        %v2573 = vadd.f32 %v2520, %v2572
        %2574 = vdwg.mxu0
        %2575 = vmatprep.subr.bf16.mxu0 %v2216
        %2576 = vmatpush1.bf16.msra.mxu0 %v2215
        %2577 = vmatprep.subr.bf16.mxu0 %v2220
        %2578 = vmatpush1.bf16.msra.mxu0 %v2219
        %2579 = vmatprep.subr.bf16.mxu0 %v2224
        %2580 = vmatpush1.bf16.msra.mxu0 %v2223
        %2581 = vmatprep.subr.bf16.mxu0 %v2228
        %2582 = vmatpush1.bf16.msra.mxu0 %v2227
        %2583 = vmatprep.subr.bf16.mxu0 %v2232
        %2584 = vmatpush1.bf16.msra.mxu0 %v2231
        %2585 = vmatprep.subr.bf16.mxu0 %v2236
        %2586 = vmatpush1.bf16.msra.mxu0 %v2235
        %2587 = vmatprep.subr.bf16.mxu0 %v2240
        %2588 = vmatpush1.bf16.msra.mxu0 %v2239
        %2589 = vmatprep.subr.bf16.mxu0 %v2244
        %2590 = vmatpush1.bf16.msra.mxu0 %v2243
        %2591 = vmatprep.subr.bf16.mxu0 %v2248
        %2592 = vmatpush1.bf16.msra.mxu0 %v2247
        %2593 = vmatprep.subr.bf16.mxu0 %v2252
        %2594 = vmatpush1.bf16.msra.mxu0 %v2251
        %2595 = vmatprep.subr.bf16.mxu0 %v2256
        %2596 = vmatpush1.bf16.msra.mxu0 %v2255
        %2597 = vmatprep.subr.bf16.mxu0 %v2260
        %2598 = vmatpush1.bf16.msra.mxu0 %v2259
        %2599 = vmatprep.subr.bf16.mxu0 %v2264
        %2600 = vmatpush1.bf16.msra.mxu0 %v2263
        %2601 = vmatprep.subr.bf16.mxu0 %v2268
        %2602 = vmatpush1.bf16.msra.mxu0 %v2267
        %2603 = vmatprep.subr.bf16.mxu0 %v2272
        %2604 = vmatpush1.bf16.msra.mxu0 %v2271
        %2605 = vmatprep.subr.bf16.mxu0 %v2276
        %2606 = vmatpush1.bf16.msra.mxu0 %v2275
        %2607 = vmatprep.mubr.bf16.mxu0 %v1814
        %2608 = vmatmul.mubr.bf16.gmra.mrb[0].mxu0 %v1813
        %v2609 = vpop.f32.mrb[0].mxu0
        %v2610 = vadd.f32 %v1771, %v2609
        %v2611 = vpop.f32.mrb[0].mxu0
        %v2612 = vadd.f32 %v1773, %v2611
        %v2613 = vpop.f32.mrb[0].mxu0
        %v2614 = vadd.f32 %v1775, %v2613
        %v2615 = vpop.f32.mrb[0].mxu0
        %v2616 = vadd.f32 %v1777, %v2615
        %2617 = vmatprep.mubr.bf16.mxu0 %v1818
        %2618 = vmatmul.mubr.bf16.gmra.mrb[0].mxu0 %v1817
        %v2619 = vpop.f32.mrb[0].mxu0
        %v2620 = vadd.f32 %v1781, %v2619
        %v2621 = vpop.f32.mrb[0].mxu0
        %v2622 = vadd.f32 %v1783, %v2621
        %v2623 = vpop.f32.mrb[0].mxu0
        %v2624 = vadd.f32 %v1785, %v2623
        %v2625 = vpop.f32.mrb[0].mxu0
        %v2626 = vadd.f32 %v1787, %v2625
        %2627 = vdwg.mxu0
        %2628 = vmatprep.subr.bf16.mxu0 %v2280
        %2629 = vmatpush1.bf16.msra.mxu0 %v2279
        %2630 = vmatprep.subr.bf16.mxu0 %v2284
        %2631 = vmatpush1.bf16.msra.mxu0 %v2283
        %2632 = vmatprep.subr.bf16.mxu0 %v2288
        %2633 = vmatpush1.bf16.msra.mxu0 %v2287
        %2634 = vmatprep.subr.bf16.mxu0 %v2292
        %2635 = vmatpush1.bf16.msra.mxu0 %v2291
        %2636 = vmatprep.subr.bf16.mxu0 %v2296
        %2637 = vmatpush1.bf16.msra.mxu0 %v2295
        %2638 = vmatprep.subr.bf16.mxu0 %v2300
        %2639 = vmatpush1.bf16.msra.mxu0 %v2299
        %2640 = vmatprep.subr.bf16.mxu0 %v2304
        %2641 = vmatpush1.bf16.msra.mxu0 %v2303
        %2642 = vmatprep.subr.bf16.mxu0 %v2308
        %2643 = vmatpush1.bf16.msra.mxu0 %v2307
        %2644 = vmatprep.subr.bf16.mxu0 %v2312
        %2645 = vmatpush1.bf16.msra.mxu0 %v2311
        %2646 = vmatprep.subr.bf16.mxu0 %v2316
        %2647 = vmatpush1.bf16.msra.mxu0 %v2315
        %2648 = vmatprep.subr.bf16.mxu0 %v2320
        %2649 = vmatpush1.bf16.msra.mxu0 %v2319
        %2650 = vmatprep.subr.bf16.mxu0 %v2324
        %2651 = vmatpush1.bf16.msra.mxu0 %v2323
        %2652 = vmatprep.subr.bf16.mxu0 %v2328
        %2653 = vmatpush1.bf16.msra.mxu0 %v2327
        %2654 = vmatprep.subr.bf16.mxu0 %v2332
        %2655 = vmatpush1.bf16.msra.mxu0 %v2331
        %2656 = vmatprep.subr.bf16.mxu0 %v2336
        %2657 = vmatpush1.bf16.msra.mxu0 %v2335
        %2658 = vmatprep.subr.bf16.mxu0 %v2340
        %2659 = vmatpush1.bf16.msra.mxu0 %v2339
        %2660 = vmatprep.mubr.bf16.mxu0 %v1816
        %2661 = vmatmul.mubr.bf16.gmra.mrb[0].mxu0 %v1815
        %v2662 = vpop.f32.mrb[0].mxu0
        %v2663 = vadd.f32 %v2610, %v2662
        %v2664 = vpop.f32.mrb[0].mxu0
        %v2665 = vadd.f32 %v2612, %v2664
        %v2666 = vpop.f32.mrb[0].mxu0
        %v2667 = vadd.f32 %v2614, %v2666
        %v2668 = vpop.f32.mrb[0].mxu0
        %v2669 = vadd.f32 %v2616, %v2668
        %2670 = vmatprep.mubr.bf16.mxu0 %v1820
        %2671 = vmatmul.mubr.bf16.gmra.mrb[0].mxu0 %v1819
        %v2672 = vpop.f32.mrb[0].mxu0
        %v2673 = vadd.f32 %v2620, %v2672
        %v2674 = vpop.f32.mrb[0].mxu0
        %v2675 = vadd.f32 %v2622, %v2674
        %v2676 = vpop.f32.mrb[0].mxu0
        %v2677 = vadd.f32 %v2624, %v2676
        %v2678 = vpop.f32.mrb[0].mxu0
        %v2679 = vadd.f32 %v2626, %v2678
        %2680 = vdwg.mxu0
        %v2681 = vld [vmem:[#allocation2] sm:$0xee]
        %v2682 = vld [vmem:[#allocation2 + $0x8] sm:$0xee]
        %v2683 = vld [vmem:[#allocation2 + $0x30] sm:$0xee]
        %v2684 = vld [vmem:[#allocation2 + $0x38] sm:$0xee]
        %vm2693 = vcmask 1042432
        %vm2694 = vcmask 1046532
        %vm2695 = vmor %vm2693, %vm2694
        %v2696 = vrot.slane %v2681, 5
        %v2697 = vrot.slane %v2696, 4
        %v2698 = vrot.slane %v539, 5
        %v2699 = vsel %vm2695, %v2697, %v2698
        %v2700 = vrot.slane %v2682, 5
        %v2701 = vrot.slane %v2700, 4
        %v2702 = vrot.slane %v540, 5
        %v2703 = vsel %vm2695, %v2701, %v2702
        %v2704 = vrot.slane %v2698, 4
        %v2705 = vrot.slane %v673, 5
        %v2706 = vsel %vm2695, %v2704, %v2705
        %v2707 = vrot.slane %v2702, 4
        %v2708 = vrot.slane %v674, 5
        %v2709 = vsel %vm2695, %v2707, %v2708
        %v2710 = vrot.slane %v2683, 5
        %v2711 = vrot.slane %v2710, 4
        %v2712 = vrot.slane %v543, 5
        %v2713 = vsel %vm2695, %v2711, %v2712
        %v2714 = vrot.slane %v2684, 5
        %v2715 = vrot.slane %v2714, 4
        %v2716 = vrot.slane %v544, 5
        %v2717 = vsel %vm2695, %v2715, %v2716
        %v2718 = vrot.slane %v2712, 4
        %v2719 = vrot.slane %v675, 5
        %v2720 = vsel %vm2695, %v2718, %v2719
        %v2721 = vrot.slane %v2716, 4
        %v2722 = vrot.slane %v676, 5
        %v2723 = vsel %vm2695, %v2721, %v2722
        %s2724 = scalar_lea.vmem [#allocation6], 2048
        %v2725 = vld [vmem:[%s2724] sm:$0xff]
        %v2726 = vld [vmem:[%s2724 + $0x8] sm:$0xff]
        %v2727 = vld [vmem:[%s2724 + $0x10] sm:$0xff]
        %v2728 = vld [vmem:[%s2724 + $0x18] sm:$0xff]
        %v2729 = vld [vmem:[%s2724 + $0x20] sm:$0xff]
        %v2730 = vld [vmem:[%s2724 + $0x28] sm:$0xff]
        %v2731 = vld [vmem:[%s2724 + $0x30] sm:$0xff]
        %v2732 = vld [vmem:[%s2724 + $0x38] sm:$0xff]
        %v2733 = vld [vmem:[%s2724 + $0x40] sm:$0xff]
        %v2734 = vld [vmem:[%s2724 + $0x48] sm:$0xff]
        %v2735 = vld [vmem:[%s2724 + $0x50] sm:$0xff]
        %v2736 = vld [vmem:[%s2724 + $0x58] sm:$0xff]
        %v2737 = vld [vmem:[%s2724 + $0x60] sm:$0xff]
        %v2738 = vld [vmem:[%s2724 + $0x68] sm:$0xff]
        %v2739 = vld [vmem:[%s2724 + $0x70] sm:$0xff]
        %v2740 = vld [vmem:[%s2724 + $0x78] sm:$0xff]
        %v2741 = vld [vmem:[%s2724 + $0x80] sm:$0xff]
        %v2742 = vld [vmem:[%s2724 + $0x88] sm:$0xff]
        %v2743 = vld [vmem:[%s2724 + $0x90] sm:$0xff]
        %v2744 = vld [vmem:[%s2724 + $0x98] sm:$0xff]
        %v2745 = vld [vmem:[%s2724 + $0xa0] sm:$0xff]
        %v2746 = vld [vmem:[%s2724 + $0xa8] sm:$0xff]
        %v2747 = vld [vmem:[%s2724 + $0xb0] sm:$0xff]
        %v2748 = vld [vmem:[%s2724 + $0xb8] sm:$0xff]
        %v2749 = vld [vmem:[%s2724 + $0xc0] sm:$0xff]
        %v2750 = vld [vmem:[%s2724 + $0xc8] sm:$0xff]
        %v2751 = vld [vmem:[%s2724 + $0xd0] sm:$0xff]
        %v2752 = vld [vmem:[%s2724 + $0xd8] sm:$0xff]
        %v2753 = vld [vmem:[%s2724 + $0xe0] sm:$0xff]
        %v2754 = vld [vmem:[%s2724 + $0xe8] sm:$0xff]
        %v2755 = vld [vmem:[%s2724 + $0xf0] sm:$0xff]
        %v2756 = vld [vmem:[%s2724 + $0xf8] sm:$0xff]
        %v2757 = vld [vmem:[%s2724 + $0x100] sm:$0xff]
        %v2758 = vld [vmem:[%s2724 + $0x108] sm:$0xff]
        %v2759 = vld [vmem:[%s2724 + $0x110] sm:$0xff]
        %v2760 = vld [vmem:[%s2724 + $0x118] sm:$0xff]
        %v2761 = vld [vmem:[%s2724 + $0x120] sm:$0xff]
        %v2762 = vld [vmem:[%s2724 + $0x128] sm:$0xff]
        %v2763 = vld [vmem:[%s2724 + $0x130] sm:$0xff]
        %v2764 = vld [vmem:[%s2724 + $0x138] sm:$0xff]
        %v2765 = vld [vmem:[%s2724 + $0x140] sm:$0xff]
        %v2766 = vld [vmem:[%s2724 + $0x148] sm:$0xff]
        %v2767 = vld [vmem:[%s2724 + $0x150] sm:$0xff]
        %v2768 = vld [vmem:[%s2724 + $0x158] sm:$0xff]
        %v2769 = vld [vmem:[%s2724 + $0x160] sm:$0xff]
        %v2770 = vld [vmem:[%s2724 + $0x168] sm:$0xff]
        %v2771 = vld [vmem:[%s2724 + $0x170] sm:$0xff]
        %v2772 = vld [vmem:[%s2724 + $0x178] sm:$0xff]
        %v2773 = vld [vmem:[%s2724 + $0x180] sm:$0xff]
        %v2774 = vld [vmem:[%s2724 + $0x188] sm:$0xff]
        %v2775 = vld [vmem:[%s2724 + $0x190] sm:$0xff]
        %v2776 = vld [vmem:[%s2724 + $0x198] sm:$0xff]
        %v2777 = vld [vmem:[%s2724 + $0x1a0] sm:$0xff]
        %v2778 = vld [vmem:[%s2724 + $0x1a8] sm:$0xff]
        %v2779 = vld [vmem:[%s2724 + $0x1b0] sm:$0xff]
        %v2780 = vld [vmem:[%s2724 + $0x1b8] sm:$0xff]
        %v2781 = vld [vmem:[%s2724 + $0x1c0] sm:$0xff]
        %v2782 = vld [vmem:[%s2724 + $0x1c8] sm:$0xff]
        %v2783 = vld [vmem:[%s2724 + $0x1d0] sm:$0xff]
        %v2784 = vld [vmem:[%s2724 + $0x1d8] sm:$0xff]
        %v2785 = vld [vmem:[%s2724 + $0x1e0] sm:$0xff]
        %v2786 = vld [vmem:[%s2724 + $0x1e8] sm:$0xff]
        %v2787 = vld [vmem:[%s2724 + $0x1f0] sm:$0xff]
        %v2788 = vld [vmem:[%s2724 + $0x1f8] sm:$0xff]
        %v2789 = vld [vmem:[%s2724 + $0x200] sm:$0xff]
        %v2790 = vld [vmem:[%s2724 + $0x208] sm:$0xff]
        %v2791 = vld [vmem:[%s2724 + $0x210] sm:$0xff]
        %v2792 = vld [vmem:[%s2724 + $0x218] sm:$0xff]
        %v2793 = vld [vmem:[%s2724 + $0x220] sm:$0xff]
        %v2794 = vld [vmem:[%s2724 + $0x228] sm:$0xff]
        %v2795 = vld [vmem:[%s2724 + $0x230] sm:$0xff]
        %v2796 = vld [vmem:[%s2724 + $0x238] sm:$0xff]
        %v2797 = vld [vmem:[%s2724 + $0x240] sm:$0xff]
        %v2798 = vld [vmem:[%s2724 + $0x248] sm:$0xff]
        %v2799 = vld [vmem:[%s2724 + $0x250] sm:$0xff]
        %v2800 = vld [vmem:[%s2724 + $0x258] sm:$0xff]
        %v2801 = vld [vmem:[%s2724 + $0x260] sm:$0xff]
        %v2802 = vld [vmem:[%s2724 + $0x268] sm:$0xff]
        %v2803 = vld [vmem:[%s2724 + $0x270] sm:$0xff]
        %v2804 = vld [vmem:[%s2724 + $0x278] sm:$0xff]
        %v2805 = vld [vmem:[%s2724 + $0x280] sm:$0xff]
        %v2806 = vld [vmem:[%s2724 + $0x288] sm:$0xff]
        %v2807 = vld [vmem:[%s2724 + $0x290] sm:$0xff]
        %v2808 = vld [vmem:[%s2724 + $0x298] sm:$0xff]
        %v2809 = vld [vmem:[%s2724 + $0x2a0] sm:$0xff]
        %v2810 = vld [vmem:[%s2724 + $0x2a8] sm:$0xff]
        %v2811 = vld [vmem:[%s2724 + $0x2b0] sm:$0xff]
        %v2812 = vld [vmem:[%s2724 + $0x2b8] sm:$0xff]
        %v2813 = vld [vmem:[%s2724 + $0x2c0] sm:$0xff]
        %v2814 = vld [vmem:[%s2724 + $0x2c8] sm:$0xff]
        %v2815 = vld [vmem:[%s2724 + $0x2d0] sm:$0xff]
        %v2816 = vld [vmem:[%s2724 + $0x2d8] sm:$0xff]
        %v2817 = vld [vmem:[%s2724 + $0x2e0] sm:$0xff]
        %v2818 = vld [vmem:[%s2724 + $0x2e8] sm:$0xff]
        %v2819 = vld [vmem:[%s2724 + $0x2f0] sm:$0xff]
        %v2820 = vld [vmem:[%s2724 + $0x2f8] sm:$0xff]
        %v2821 = vld [vmem:[%s2724 + $0x300] sm:$0xff]
        %v2822 = vld [vmem:[%s2724 + $0x308] sm:$0xff]
        %v2823 = vld [vmem:[%s2724 + $0x310] sm:$0xff]
        %v2824 = vld [vmem:[%s2724 + $0x318] sm:$0xff]
        %v2825 = vld [vmem:[%s2724 + $0x320] sm:$0xff]
        %v2826 = vld [vmem:[%s2724 + $0x328] sm:$0xff]
        %v2827 = vld [vmem:[%s2724 + $0x330] sm:$0xff]
        %v2828 = vld [vmem:[%s2724 + $0x338] sm:$0xff]
        %v2829 = vld [vmem:[%s2724 + $0x340] sm:$0xff]
        %v2830 = vld [vmem:[%s2724 + $0x348] sm:$0xff]
        %v2831 = vld [vmem:[%s2724 + $0x350] sm:$0xff]
        %v2832 = vld [vmem:[%s2724 + $0x358] sm:$0xff]
        %v2833 = vld [vmem:[%s2724 + $0x360] sm:$0xff]
        %v2834 = vld [vmem:[%s2724 + $0x368] sm:$0xff]
        %v2835 = vld [vmem:[%s2724 + $0x370] sm:$0xff]
        %v2836 = vld [vmem:[%s2724 + $0x378] sm:$0xff]
        %v2837 = vld [vmem:[%s2724 + $0x380] sm:$0xff]
        %v2838 = vld [vmem:[%s2724 + $0x388] sm:$0xff]
        %v2839 = vld [vmem:[%s2724 + $0x390] sm:$0xff]
        %v2840 = vld [vmem:[%s2724 + $0x398] sm:$0xff]
        %v2841 = vld [vmem:[%s2724 + $0x3a0] sm:$0xff]
        %v2842 = vld [vmem:[%s2724 + $0x3a8] sm:$0xff]
        %v2843 = vld [vmem:[%s2724 + $0x3b0] sm:$0xff]
        %v2844 = vld [vmem:[%s2724 + $0x3b8] sm:$0xff]
        %v2845 = vld [vmem:[%s2724 + $0x3c0] sm:$0xff]
        %v2846 = vld [vmem:[%s2724 + $0x3c8] sm:$0xff]
        %v2847 = vld [vmem:[%s2724 + $0x3d0] sm:$0xff]
        %v2848 = vld [vmem:[%s2724 + $0x3d8] sm:$0xff]
        %v2849 = vld [vmem:[%s2724 + $0x3e0] sm:$0xff]
        %v2850 = vld [vmem:[%s2724 + $0x3e8] sm:$0xff]
        %v2851 = vld [vmem:[%s2724 + $0x3f0] sm:$0xff]
        %v2852 = vld [vmem:[%s2724 + $0x3f8] sm:$0xff]
        %v2853 = vunpack.c.l.b16 %v2699
        %v2854 = vunpack.c.h.b16 %v2699
        %v2855 = vunpack.c.l.b16 %v2703
        %v2856 = vunpack.c.h.b16 %v2703
        %v2857 = vunpack.c.l.b16 %v2706
        %v2858 = vunpack.c.h.b16 %v2706
        %v2859 = vunpack.c.l.b16 %v2709
        %v2860 = vunpack.c.h.b16 %v2709
        %v2861 = vunpack.c.l.b16 %v2713
        %v2862 = vunpack.c.h.b16 %v2713
        %v2863 = vunpack.c.l.b16 %v2717
        %v2864 = vunpack.c.h.b16 %v2717
        %v2865 = vunpack.c.l.b16 %v2720
        %v2866 = vunpack.c.h.b16 %v2720
        %v2867 = vunpack.c.l.b16 %v2723
        %v2868 = vunpack.c.h.b16 %v2723
        %v2869 = vpack.c.b16 %v2857, %v2853
        %v2870 = vpack.c.b16 %v2858, %v2854
        %v2871 = vpack.c.b16 %v2859, %v2855
        %v2872 = vpack.c.b16 %v2860, %v2856
        %v2873 = vpack.c.b16 %v2865, %v2861
        %v2874 = vpack.c.b16 %v2866, %v2862
        %v2875 = vpack.c.b16 %v2867, %v2863
        %v2876 = vpack.c.b16 %v2868, %v2864
        %v3013 = vunpack.c.l.b16 %v2725
        %v3014 = vunpack.c.h.b16 %v2725
        %v3015 = vunpack.c.l.b16 %v2726
        %v3016 = vunpack.c.h.b16 %v2726
        %v3017 = vunpack.c.l.b16 %v2727
        %v3018 = vunpack.c.h.b16 %v2727
        %v3019 = vunpack.c.l.b16 %v2728
        %v3020 = vunpack.c.h.b16 %v2728
        %v3021 = vunpack.c.l.b16 %v2729
        %v3022 = vunpack.c.h.b16 %v2729
        %v3023 = vunpack.c.l.b16 %v2730
        %v3024 = vunpack.c.h.b16 %v2730
        %v3025 = vunpack.c.l.b16 %v2731
        %v3026 = vunpack.c.h.b16 %v2731
        %v3027 = vunpack.c.l.b16 %v2732
        %v3028 = vunpack.c.h.b16 %v2732
        %v3029 = vunpack.c.l.b16 %v2733
        %v3030 = vunpack.c.h.b16 %v2733
        %v3031 = vunpack.c.l.b16 %v2734
        %v3032 = vunpack.c.h.b16 %v2734
        %v3033 = vunpack.c.l.b16 %v2735
        %v3034 = vunpack.c.h.b16 %v2735
        %v3035 = vunpack.c.l.b16 %v2736
        %v3036 = vunpack.c.h.b16 %v2736
        %v3037 = vunpack.c.l.b16 %v2737
        %v3038 = vunpack.c.h.b16 %v2737
        %v3039 = vunpack.c.l.b16 %v2738
        %v3040 = vunpack.c.h.b16 %v2738
        %v3041 = vunpack.c.l.b16 %v2739
        %v3042 = vunpack.c.h.b16 %v2739
        %v3043 = vunpack.c.l.b16 %v2740
        %v3044 = vunpack.c.h.b16 %v2740
        %v3045 = vunpack.c.l.b16 %v2741
        %v3046 = vunpack.c.h.b16 %v2741
        %v3047 = vunpack.c.l.b16 %v2742
        %v3048 = vunpack.c.h.b16 %v2742
        %v3049 = vunpack.c.l.b16 %v2743
        %v3050 = vunpack.c.h.b16 %v2743
        %v3051 = vunpack.c.l.b16 %v2744
        %v3052 = vunpack.c.h.b16 %v2744
        %v3053 = vunpack.c.l.b16 %v2745
        %v3054 = vunpack.c.h.b16 %v2745
        %v3055 = vunpack.c.l.b16 %v2746
        %v3056 = vunpack.c.h.b16 %v2746
        %v3057 = vunpack.c.l.b16 %v2747
        %v3058 = vunpack.c.h.b16 %v2747
        %v3059 = vunpack.c.l.b16 %v2748
        %v3060 = vunpack.c.h.b16 %v2748
        %v3061 = vunpack.c.l.b16 %v2749
        %v3062 = vunpack.c.h.b16 %v2749
        %v3063 = vunpack.c.l.b16 %v2750
        %v3064 = vunpack.c.h.b16 %v2750
        %v3065 = vunpack.c.l.b16 %v2751
        %v3066 = vunpack.c.h.b16 %v2751
        %v3067 = vunpack.c.l.b16 %v2752
        %v3068 = vunpack.c.h.b16 %v2752
        %v3069 = vunpack.c.l.b16 %v2753
        %v3070 = vunpack.c.h.b16 %v2753
        %v3071 = vunpack.c.l.b16 %v2754
        %v3072 = vunpack.c.h.b16 %v2754
        %v3073 = vunpack.c.l.b16 %v2755
        %v3074 = vunpack.c.h.b16 %v2755
        %v3075 = vunpack.c.l.b16 %v2756
        %v3076 = vunpack.c.h.b16 %v2756
        %v3077 = vunpack.c.l.b16 %v2757
        %v3078 = vunpack.c.h.b16 %v2757
        %v3079 = vunpack.c.l.b16 %v2758
        %v3080 = vunpack.c.h.b16 %v2758
        %v3081 = vunpack.c.l.b16 %v2759
        %v3082 = vunpack.c.h.b16 %v2759
        %v3083 = vunpack.c.l.b16 %v2760
        %v3084 = vunpack.c.h.b16 %v2760
        %v3085 = vunpack.c.l.b16 %v2761
        %v3086 = vunpack.c.h.b16 %v2761
        %v3087 = vunpack.c.l.b16 %v2762
        %v3088 = vunpack.c.h.b16 %v2762
        %v3089 = vunpack.c.l.b16 %v2763
        %v3090 = vunpack.c.h.b16 %v2763
        %v3091 = vunpack.c.l.b16 %v2764
        %v3092 = vunpack.c.h.b16 %v2764
        %v3093 = vunpack.c.l.b16 %v2765
        %v3094 = vunpack.c.h.b16 %v2765
        %v3095 = vunpack.c.l.b16 %v2766
        %v3096 = vunpack.c.h.b16 %v2766
        %v3097 = vunpack.c.l.b16 %v2767
        %v3098 = vunpack.c.h.b16 %v2767
        %v3099 = vunpack.c.l.b16 %v2768
        %v3100 = vunpack.c.h.b16 %v2768
        %v3101 = vunpack.c.l.b16 %v2769
        %v3102 = vunpack.c.h.b16 %v2769
        %v3103 = vunpack.c.l.b16 %v2770
        %v3104 = vunpack.c.h.b16 %v2770
        %v3105 = vunpack.c.l.b16 %v2771
        %v3106 = vunpack.c.h.b16 %v2771
        %v3107 = vunpack.c.l.b16 %v2772
        %v3108 = vunpack.c.h.b16 %v2772
        %v3109 = vunpack.c.l.b16 %v2773
        %v3110 = vunpack.c.h.b16 %v2773
        %v3111 = vunpack.c.l.b16 %v2774
        %v3112 = vunpack.c.h.b16 %v2774
        %v3113 = vunpack.c.l.b16 %v2775
        %v3114 = vunpack.c.h.b16 %v2775
        %v3115 = vunpack.c.l.b16 %v2776
        %v3116 = vunpack.c.h.b16 %v2776
        %v3117 = vunpack.c.l.b16 %v2777
        %v3118 = vunpack.c.h.b16 %v2777
        %v3119 = vunpack.c.l.b16 %v2778
        %v3120 = vunpack.c.h.b16 %v2778
        %v3121 = vunpack.c.l.b16 %v2779
        %v3122 = vunpack.c.h.b16 %v2779
        %v3123 = vunpack.c.l.b16 %v2780
        %v3124 = vunpack.c.h.b16 %v2780
        %v3125 = vunpack.c.l.b16 %v2781
        %v3126 = vunpack.c.h.b16 %v2781
        %v3127 = vunpack.c.l.b16 %v2782
        %v3128 = vunpack.c.h.b16 %v2782
        %v3129 = vunpack.c.l.b16 %v2783
        %v3130 = vunpack.c.h.b16 %v2783
        %v3131 = vunpack.c.l.b16 %v2784
        %v3132 = vunpack.c.h.b16 %v2784
        %v3133 = vunpack.c.l.b16 %v2785
        %v3134 = vunpack.c.h.b16 %v2785
        %v3135 = vunpack.c.l.b16 %v2786
        %v3136 = vunpack.c.h.b16 %v2786
        %v3137 = vunpack.c.l.b16 %v2787
        %v3138 = vunpack.c.h.b16 %v2787
        %v3139 = vunpack.c.l.b16 %v2788
        %v3140 = vunpack.c.h.b16 %v2788
        %v3141 = vunpack.c.l.b16 %v2789
        %v3142 = vunpack.c.h.b16 %v2789
        %v3143 = vunpack.c.l.b16 %v2790
        %v3144 = vunpack.c.h.b16 %v2790
        %v3145 = vunpack.c.l.b16 %v2791
        %v3146 = vunpack.c.h.b16 %v2791
        %v3147 = vunpack.c.l.b16 %v2792
        %v3148 = vunpack.c.h.b16 %v2792
        %v3149 = vunpack.c.l.b16 %v2793
        %v3150 = vunpack.c.h.b16 %v2793
        %v3151 = vunpack.c.l.b16 %v2794
        %v3152 = vunpack.c.h.b16 %v2794
        %v3153 = vunpack.c.l.b16 %v2795
        %v3154 = vunpack.c.h.b16 %v2795
        %v3155 = vunpack.c.l.b16 %v2796
        %v3156 = vunpack.c.h.b16 %v2796
        %v3157 = vunpack.c.l.b16 %v2797
        %v3158 = vunpack.c.h.b16 %v2797
        %v3159 = vunpack.c.l.b16 %v2798
        %v3160 = vunpack.c.h.b16 %v2798
        %v3161 = vunpack.c.l.b16 %v2799
        %v3162 = vunpack.c.h.b16 %v2799
        %v3163 = vunpack.c.l.b16 %v2800
        %v3164 = vunpack.c.h.b16 %v2800
        %v3165 = vunpack.c.l.b16 %v2801
        %v3166 = vunpack.c.h.b16 %v2801
        %v3167 = vunpack.c.l.b16 %v2802
        %v3168 = vunpack.c.h.b16 %v2802
        %v3169 = vunpack.c.l.b16 %v2803
        %v3170 = vunpack.c.h.b16 %v2803
        %v3171 = vunpack.c.l.b16 %v2804
        %v3172 = vunpack.c.h.b16 %v2804
        %v3173 = vunpack.c.l.b16 %v2805
        %v3174 = vunpack.c.h.b16 %v2805
        %v3175 = vunpack.c.l.b16 %v2806
        %v3176 = vunpack.c.h.b16 %v2806
        %v3177 = vunpack.c.l.b16 %v2807
        %v3178 = vunpack.c.h.b16 %v2807
        %v3179 = vunpack.c.l.b16 %v2808
        %v3180 = vunpack.c.h.b16 %v2808
        %v3181 = vunpack.c.l.b16 %v2809
        %v3182 = vunpack.c.h.b16 %v2809
        %v3183 = vunpack.c.l.b16 %v2810
        %v3184 = vunpack.c.h.b16 %v2810
        %v3185 = vunpack.c.l.b16 %v2811
        %v3186 = vunpack.c.h.b16 %v2811
        %v3187 = vunpack.c.l.b16 %v2812
        %v3188 = vunpack.c.h.b16 %v2812
        %v3189 = vunpack.c.l.b16 %v2813
        %v3190 = vunpack.c.h.b16 %v2813
        %v3191 = vunpack.c.l.b16 %v2814
        %v3192 = vunpack.c.h.b16 %v2814
        %v3193 = vunpack.c.l.b16 %v2815
        %v3194 = vunpack.c.h.b16 %v2815
        %v3195 = vunpack.c.l.b16 %v2816
        %v3196 = vunpack.c.h.b16 %v2816
        %v3197 = vunpack.c.l.b16 %v2817
        %v3198 = vunpack.c.h.b16 %v2817
        %v3199 = vunpack.c.l.b16 %v2818
        %v3200 = vunpack.c.h.b16 %v2818
        %v3201 = vunpack.c.l.b16 %v2819
        %v3202 = vunpack.c.h.b16 %v2819
        %v3203 = vunpack.c.l.b16 %v2820
        %v3204 = vunpack.c.h.b16 %v2820
        %v3205 = vunpack.c.l.b16 %v2821
        %v3206 = vunpack.c.h.b16 %v2821
        %v3207 = vunpack.c.l.b16 %v2822
        %v3208 = vunpack.c.h.b16 %v2822
        %v3209 = vunpack.c.l.b16 %v2823
        %v3210 = vunpack.c.h.b16 %v2823
        %v3211 = vunpack.c.l.b16 %v2824
        %v3212 = vunpack.c.h.b16 %v2824
        %v3213 = vunpack.c.l.b16 %v2825
        %v3214 = vunpack.c.h.b16 %v2825
        %v3215 = vunpack.c.l.b16 %v2826
        %v3216 = vunpack.c.h.b16 %v2826
        %v3217 = vunpack.c.l.b16 %v2827
        %v3218 = vunpack.c.h.b16 %v2827
        %v3219 = vunpack.c.l.b16 %v2828
        %v3220 = vunpack.c.h.b16 %v2828
        %v3221 = vunpack.c.l.b16 %v2829
        %v3222 = vunpack.c.h.b16 %v2829
        %v3223 = vunpack.c.l.b16 %v2830
        %v3224 = vunpack.c.h.b16 %v2830
        %v3225 = vunpack.c.l.b16 %v2831
        %v3226 = vunpack.c.h.b16 %v2831
        %v3227 = vunpack.c.l.b16 %v2832
        %v3228 = vunpack.c.h.b16 %v2832
        %v3229 = vunpack.c.l.b16 %v2833
        %v3230 = vunpack.c.h.b16 %v2833
        %v3231 = vunpack.c.l.b16 %v2834
        %v3232 = vunpack.c.h.b16 %v2834
        %v3233 = vunpack.c.l.b16 %v2835
        %v3234 = vunpack.c.h.b16 %v2835
        %v3235 = vunpack.c.l.b16 %v2836
        %v3236 = vunpack.c.h.b16 %v2836
        %v3237 = vunpack.c.l.b16 %v2837
        %v3238 = vunpack.c.h.b16 %v2837
        %v3239 = vunpack.c.l.b16 %v2838
        %v3240 = vunpack.c.h.b16 %v2838
        %v3241 = vunpack.c.l.b16 %v2839
        %v3242 = vunpack.c.h.b16 %v2839
        %v3243 = vunpack.c.l.b16 %v2840
        %v3244 = vunpack.c.h.b16 %v2840
        %v3245 = vunpack.c.l.b16 %v2841
        %v3246 = vunpack.c.h.b16 %v2841
        %v3247 = vunpack.c.l.b16 %v2842
        %v3248 = vunpack.c.h.b16 %v2842
        %v3249 = vunpack.c.l.b16 %v2843
        %v3250 = vunpack.c.h.b16 %v2843
        %v3251 = vunpack.c.l.b16 %v2844
        %v3252 = vunpack.c.h.b16 %v2844
        %v3253 = vunpack.c.l.b16 %v2845
        %v3254 = vunpack.c.h.b16 %v2845
        %v3255 = vunpack.c.l.b16 %v2846
        %v3256 = vunpack.c.h.b16 %v2846
        %v3257 = vunpack.c.l.b16 %v2847
        %v3258 = vunpack.c.h.b16 %v2847
        %v3259 = vunpack.c.l.b16 %v2848
        %v3260 = vunpack.c.h.b16 %v2848
        %v3261 = vunpack.c.l.b16 %v2849
        %v3262 = vunpack.c.h.b16 %v2849
        %v3263 = vunpack.c.l.b16 %v2850
        %v3264 = vunpack.c.h.b16 %v2850
        %v3265 = vunpack.c.l.b16 %v2851
        %v3266 = vunpack.c.h.b16 %v2851
        %v3267 = vunpack.c.l.b16 %v2852
        %v3268 = vunpack.c.h.b16 %v2852
        %v3269 = vpack.c.b16 %v3017, %v3013
        %v3270 = vpack.c.b16 %v3018, %v3014
        %v3271 = vpack.c.b16 %v3019, %v3015
        %v3272 = vpack.c.b16 %v3020, %v3016
        %v3273 = vpack.c.b16 %v3025, %v3021
        %v3274 = vpack.c.b16 %v3026, %v3022
        %v3275 = vpack.c.b16 %v3027, %v3023
        %v3276 = vpack.c.b16 %v3028, %v3024
        %v3277 = vpack.c.b16 %v3033, %v3029
        %v3278 = vpack.c.b16 %v3034, %v3030
        %v3279 = vpack.c.b16 %v3035, %v3031
        %v3280 = vpack.c.b16 %v3036, %v3032
        %v3281 = vpack.c.b16 %v3041, %v3037
        %v3282 = vpack.c.b16 %v3042, %v3038
        %v3283 = vpack.c.b16 %v3043, %v3039
        %v3284 = vpack.c.b16 %v3044, %v3040
        %v3285 = vpack.c.b16 %v3049, %v3045
        %v3286 = vpack.c.b16 %v3050, %v3046
        %v3287 = vpack.c.b16 %v3051, %v3047
        %v3288 = vpack.c.b16 %v3052, %v3048
        %v3289 = vpack.c.b16 %v3057, %v3053
        %v3290 = vpack.c.b16 %v3058, %v3054
        %v3291 = vpack.c.b16 %v3059, %v3055
        %v3292 = vpack.c.b16 %v3060, %v3056
        %v3293 = vpack.c.b16 %v3065, %v3061
        %v3294 = vpack.c.b16 %v3066, %v3062
        %v3295 = vpack.c.b16 %v3067, %v3063
        %v3296 = vpack.c.b16 %v3068, %v3064
        %v3297 = vpack.c.b16 %v3073, %v3069
        %v3298 = vpack.c.b16 %v3074, %v3070
        %v3299 = vpack.c.b16 %v3075, %v3071
        %v3300 = vpack.c.b16 %v3076, %v3072
        %v3301 = vpack.c.b16 %v3081, %v3077
        %v3302 = vpack.c.b16 %v3082, %v3078
        %v3303 = vpack.c.b16 %v3083, %v3079
        %v3304 = vpack.c.b16 %v3084, %v3080
        %v3305 = vpack.c.b16 %v3089, %v3085
        %v3306 = vpack.c.b16 %v3090, %v3086
        %v3307 = vpack.c.b16 %v3091, %v3087
        %v3308 = vpack.c.b16 %v3092, %v3088
        %v3309 = vpack.c.b16 %v3097, %v3093
        %v3310 = vpack.c.b16 %v3098, %v3094
        %v3311 = vpack.c.b16 %v3099, %v3095
        %v3312 = vpack.c.b16 %v3100, %v3096
        %v3313 = vpack.c.b16 %v3105, %v3101
        %v3314 = vpack.c.b16 %v3106, %v3102
        %v3315 = vpack.c.b16 %v3107, %v3103
        %v3316 = vpack.c.b16 %v3108, %v3104
        %v3317 = vpack.c.b16 %v3113, %v3109
        %v3318 = vpack.c.b16 %v3114, %v3110
        %v3319 = vpack.c.b16 %v3115, %v3111
        %v3320 = vpack.c.b16 %v3116, %v3112
        %v3321 = vpack.c.b16 %v3121, %v3117
        %v3322 = vpack.c.b16 %v3122, %v3118
        %v3323 = vpack.c.b16 %v3123, %v3119
        %v3324 = vpack.c.b16 %v3124, %v3120
        %v3325 = vpack.c.b16 %v3129, %v3125
        %v3326 = vpack.c.b16 %v3130, %v3126
        %v3327 = vpack.c.b16 %v3131, %v3127
        %v3328 = vpack.c.b16 %v3132, %v3128
        %v3329 = vpack.c.b16 %v3137, %v3133
        %v3330 = vpack.c.b16 %v3138, %v3134
        %v3331 = vpack.c.b16 %v3139, %v3135
        %v3332 = vpack.c.b16 %v3140, %v3136
        %v3333 = vpack.c.b16 %v3145, %v3141
        %v3334 = vpack.c.b16 %v3146, %v3142
        %v3335 = vpack.c.b16 %v3147, %v3143
        %v3336 = vpack.c.b16 %v3148, %v3144
        %v3337 = vpack.c.b16 %v3153, %v3149
        %v3338 = vpack.c.b16 %v3154, %v3150
        %v3339 = vpack.c.b16 %v3155, %v3151
        %v3340 = vpack.c.b16 %v3156, %v3152
        %v3341 = vpack.c.b16 %v3161, %v3157
        %v3342 = vpack.c.b16 %v3162, %v3158
        %v3343 = vpack.c.b16 %v3163, %v3159
        %v3344 = vpack.c.b16 %v3164, %v3160
        %v3345 = vpack.c.b16 %v3169, %v3165
        %v3346 = vpack.c.b16 %v3170, %v3166
        %v3347 = vpack.c.b16 %v3171, %v3167
        %v3348 = vpack.c.b16 %v3172, %v3168
        %v3349 = vpack.c.b16 %v3177, %v3173
        %v3350 = vpack.c.b16 %v3178, %v3174
        %v3351 = vpack.c.b16 %v3179, %v3175
        %v3352 = vpack.c.b16 %v3180, %v3176
        %v3353 = vpack.c.b16 %v3185, %v3181
        %v3354 = vpack.c.b16 %v3186, %v3182
        %v3355 = vpack.c.b16 %v3187, %v3183
        %v3356 = vpack.c.b16 %v3188, %v3184
        %v3357 = vpack.c.b16 %v3193, %v3189
        %v3358 = vpack.c.b16 %v3194, %v3190
        %v3359 = vpack.c.b16 %v3195, %v3191
        %v3360 = vpack.c.b16 %v3196, %v3192
        %v3361 = vpack.c.b16 %v3201, %v3197
        %v3362 = vpack.c.b16 %v3202, %v3198
        %v3363 = vpack.c.b16 %v3203, %v3199
        %v3364 = vpack.c.b16 %v3204, %v3200
        %v3365 = vpack.c.b16 %v3209, %v3205
        %v3366 = vpack.c.b16 %v3210, %v3206
        %v3367 = vpack.c.b16 %v3211, %v3207
        %v3368 = vpack.c.b16 %v3212, %v3208
        %v3369 = vpack.c.b16 %v3217, %v3213
        %v3370 = vpack.c.b16 %v3218, %v3214
        %v3371 = vpack.c.b16 %v3219, %v3215
        %v3372 = vpack.c.b16 %v3220, %v3216
        %v3373 = vpack.c.b16 %v3225, %v3221
        %v3374 = vpack.c.b16 %v3226, %v3222
        %v3375 = vpack.c.b16 %v3227, %v3223
        %v3376 = vpack.c.b16 %v3228, %v3224
        %v3377 = vpack.c.b16 %v3233, %v3229
        %v3378 = vpack.c.b16 %v3234, %v3230
        %v3379 = vpack.c.b16 %v3235, %v3231
        %v3380 = vpack.c.b16 %v3236, %v3232
        %v3381 = vpack.c.b16 %v3241, %v3237
        %v3382 = vpack.c.b16 %v3242, %v3238
        %v3383 = vpack.c.b16 %v3243, %v3239
        %v3384 = vpack.c.b16 %v3244, %v3240
        %v3385 = vpack.c.b16 %v3249, %v3245
        %v3386 = vpack.c.b16 %v3250, %v3246
        %v3387 = vpack.c.b16 %v3251, %v3247
        %v3388 = vpack.c.b16 %v3252, %v3248
        %v3389 = vpack.c.b16 %v3257, %v3253
        %v3390 = vpack.c.b16 %v3258, %v3254
        %v3391 = vpack.c.b16 %v3259, %v3255
        %v3392 = vpack.c.b16 %v3260, %v3256
        %v3393 = vpack.c.b16 %v3265, %v3261
        %v3394 = vpack.c.b16 %v3266, %v3262
        %v3395 = vpack.c.b16 %v3267, %v3263
        %v3396 = vpack.c.b16 %v3268, %v3264
        %3525 = vmatprep.subr.bf16.mxu0 %v3270
        %3526 = vmatpush1.bf16.msra.mxu0 %v3269
        %3527 = vmatprep.subr.bf16.mxu0 %v3274
        %3528 = vmatpush1.bf16.msra.mxu0 %v3273
        %3529 = vmatprep.subr.bf16.mxu0 %v3278
        %3530 = vmatpush1.bf16.msra.mxu0 %v3277
        %3531 = vmatprep.subr.bf16.mxu0 %v3282
        %3532 = vmatpush1.bf16.msra.mxu0 %v3281
        %3533 = vmatprep.subr.bf16.mxu0 %v3286
        %3534 = vmatpush1.bf16.msra.mxu0 %v3285
        %3535 = vmatprep.subr.bf16.mxu0 %v3290
        %3536 = vmatpush1.bf16.msra.mxu0 %v3289
        %3537 = vmatprep.subr.bf16.mxu0 %v3294
        %3538 = vmatpush1.bf16.msra.mxu0 %v3293
        %3539 = vmatprep.subr.bf16.mxu0 %v3298
        %3540 = vmatpush1.bf16.msra.mxu0 %v3297
        %3541 = vmatprep.subr.bf16.mxu0 %v3302
        %3542 = vmatpush1.bf16.msra.mxu0 %v3301
        %3543 = vmatprep.subr.bf16.mxu0 %v3306
        %3544 = vmatpush1.bf16.msra.mxu0 %v3305
        %3545 = vmatprep.subr.bf16.mxu0 %v3310
        %3546 = vmatpush1.bf16.msra.mxu0 %v3309
        %3547 = vmatprep.subr.bf16.mxu0 %v3314
        %3548 = vmatpush1.bf16.msra.mxu0 %v3313
        %3549 = vmatprep.subr.bf16.mxu0 %v3318
        %3550 = vmatpush1.bf16.msra.mxu0 %v3317
        %3551 = vmatprep.subr.bf16.mxu0 %v3322
        %3552 = vmatpush1.bf16.msra.mxu0 %v3321
        %3553 = vmatprep.subr.bf16.mxu0 %v3326
        %3554 = vmatpush1.bf16.msra.mxu0 %v3325
        %3555 = vmatprep.subr.bf16.mxu0 %v3330
        %3556 = vmatpush1.bf16.msra.mxu0 %v3329
        %3557 = vmatprep.mubr.bf16.mxu0 %v2870
        %3558 = vmatmul.mubr.bf16.gmra.mrb[0].mxu0 %v2869
        %v3559 = vpop.f32.mrb[0].mxu0
        %v3560 = vadd.f32 0.0, %v3559
        %v3561 = vpop.f32.mrb[0].mxu0
        %v3562 = vadd.f32 0.0, %v3561
        %v3563 = vpop.f32.mrb[0].mxu0
        %v3564 = vadd.f32 0.0, %v3563
        %v3565 = vpop.f32.mrb[0].mxu0
        %v3566 = vadd.f32 0.0, %v3565
        %3567 = vmatprep.mubr.bf16.mxu0 %v2874
        %3568 = vmatmul.mubr.bf16.gmra.mrb[0].mxu0 %v2873
        %v3569 = vpop.f32.mrb[0].mxu0
        %v3570 = vadd.f32 0.0, %v3569
        %v3571 = vpop.f32.mrb[0].mxu0
        %v3572 = vadd.f32 0.0, %v3571
        %v3573 = vpop.f32.mrb[0].mxu0
        %v3574 = vadd.f32 0.0, %v3573
        %v3575 = vpop.f32.mrb[0].mxu0
        %v3576 = vadd.f32 0.0, %v3575
        %3577 = vdwg.mxu0
        %3578 = vmatprep.subr.bf16.mxu0 %v3334
        %3579 = vmatpush1.bf16.msra.mxu0 %v3333
        %3580 = vmatprep.subr.bf16.mxu0 %v3338
        %3581 = vmatpush1.bf16.msra.mxu0 %v3337
        %3582 = vmatprep.subr.bf16.mxu0 %v3342
        %3583 = vmatpush1.bf16.msra.mxu0 %v3341
        %3584 = vmatprep.subr.bf16.mxu0 %v3346
        %3585 = vmatpush1.bf16.msra.mxu0 %v3345
        %3586 = vmatprep.subr.bf16.mxu0 %v3350
        %3587 = vmatpush1.bf16.msra.mxu0 %v3349
        %3588 = vmatprep.subr.bf16.mxu0 %v3354
        %3589 = vmatpush1.bf16.msra.mxu0 %v3353
        %3590 = vmatprep.subr.bf16.mxu0 %v3358
        %3591 = vmatpush1.bf16.msra.mxu0 %v3357
        %3592 = vmatprep.subr.bf16.mxu0 %v3362
        %3593 = vmatpush1.bf16.msra.mxu0 %v3361
        %3594 = vmatprep.subr.bf16.mxu0 %v3366
        %3595 = vmatpush1.bf16.msra.mxu0 %v3365
        %3596 = vmatprep.subr.bf16.mxu0 %v3370
        %3597 = vmatpush1.bf16.msra.mxu0 %v3369
        %3598 = vmatprep.subr.bf16.mxu0 %v3374
        %3599 = vmatpush1.bf16.msra.mxu0 %v3373
        %3600 = vmatprep.subr.bf16.mxu0 %v3378
        %3601 = vmatpush1.bf16.msra.mxu0 %v3377
        %3602 = vmatprep.subr.bf16.mxu0 %v3382
        %3603 = vmatpush1.bf16.msra.mxu0 %v3381
        %3604 = vmatprep.subr.bf16.mxu0 %v3386
        %3605 = vmatpush1.bf16.msra.mxu0 %v3385
        %3606 = vmatprep.subr.bf16.mxu0 %v3390
        %3607 = vmatpush1.bf16.msra.mxu0 %v3389
        %3608 = vmatprep.subr.bf16.mxu0 %v3394
        %3609 = vmatpush1.bf16.msra.mxu0 %v3393
        %3610 = vmatprep.mubr.bf16.mxu0 %v2872
        %3611 = vmatmul.mubr.bf16.gmra.mrb[0].mxu0 %v2871
        %v3612 = vpop.f32.mrb[0].mxu0
        %v3613 = vadd.f32 %v3560, %v3612
        %v3614 = vpop.f32.mrb[0].mxu0
        %v3615 = vadd.f32 %v3562, %v3614
        %v3616 = vpop.f32.mrb[0].mxu0
        %v3617 = vadd.f32 %v3564, %v3616
        %v3618 = vpop.f32.mrb[0].mxu0
        %v3619 = vadd.f32 %v3566, %v3618
        %3620 = vmatprep.mubr.bf16.mxu0 %v2876
        %3621 = vmatmul.mubr.bf16.gmra.mrb[0].mxu0 %v2875
        %v3622 = vpop.f32.mrb[0].mxu0
        %v3623 = vadd.f32 %v3570, %v3622
        %v3624 = vpop.f32.mrb[0].mxu0
        %v3625 = vadd.f32 %v3572, %v3624
        %v3626 = vpop.f32.mrb[0].mxu0
        %v3627 = vadd.f32 %v3574, %v3626
        %v3628 = vpop.f32.mrb[0].mxu0
        %v3629 = vadd.f32 %v3576, %v3628
        %3630 = vdwg.mxu0
        %3631 = vmatprep.subr.bf16.mxu0 %v3272
        %3632 = vmatpush1.bf16.msra.mxu0 %v3271
        %3633 = vmatprep.subr.bf16.mxu0 %v3276
        %3634 = vmatpush1.bf16.msra.mxu0 %v3275
        %3635 = vmatprep.subr.bf16.mxu0 %v3280
        %3636 = vmatpush1.bf16.msra.mxu0 %v3279
        %3637 = vmatprep.subr.bf16.mxu0 %v3284
        %3638 = vmatpush1.bf16.msra.mxu0 %v3283
        %3639 = vmatprep.subr.bf16.mxu0 %v3288
        %3640 = vmatpush1.bf16.msra.mxu0 %v3287
        %3641 = vmatprep.subr.bf16.mxu0 %v3292
        %3642 = vmatpush1.bf16.msra.mxu0 %v3291
        %3643 = vmatprep.subr.bf16.mxu0 %v3296
        %3644 = vmatpush1.bf16.msra.mxu0 %v3295
        %3645 = vmatprep.subr.bf16.mxu0 %v3300
        %3646 = vmatpush1.bf16.msra.mxu0 %v3299
        %3647 = vmatprep.subr.bf16.mxu0 %v3304
        %3648 = vmatpush1.bf16.msra.mxu0 %v3303
        %3649 = vmatprep.subr.bf16.mxu0 %v3308
        %3650 = vmatpush1.bf16.msra.mxu0 %v3307
        %3651 = vmatprep.subr.bf16.mxu0 %v3312
        %3652 = vmatpush1.bf16.msra.mxu0 %v3311
        %3653 = vmatprep.subr.bf16.mxu0 %v3316
        %3654 = vmatpush1.bf16.msra.mxu0 %v3315
        %3655 = vmatprep.subr.bf16.mxu0 %v3320
        %3656 = vmatpush1.bf16.msra.mxu0 %v3319
        %3657 = vmatprep.subr.bf16.mxu0 %v3324
        %3658 = vmatpush1.bf16.msra.mxu0 %v3323
        %3659 = vmatprep.subr.bf16.mxu0 %v3328
        %3660 = vmatpush1.bf16.msra.mxu0 %v3327
        %3661 = vmatprep.subr.bf16.mxu0 %v3332
        %3662 = vmatpush1.bf16.msra.mxu0 %v3331
        %3663 = vmatprep.mubr.bf16.mxu0 %v2870
        %3664 = vmatmul.mubr.bf16.gmra.mrb[0].mxu0 %v2869
        %v3665 = vpop.f32.mrb[0].mxu0
        %v3666 = vadd.f32 0.0, %v3665
        %v3667 = vpop.f32.mrb[0].mxu0
        %v3668 = vadd.f32 0.0, %v3667
        %v3669 = vpop.f32.mrb[0].mxu0
        %v3670 = vadd.f32 0.0, %v3669
        %v3671 = vpop.f32.mrb[0].mxu0
        %v3672 = vadd.f32 0.0, %v3671
        %3673 = vmatprep.mubr.bf16.mxu0 %v2874
        %3674 = vmatmul.mubr.bf16.gmra.mrb[0].mxu0 %v2873
        %v3675 = vpop.f32.mrb[0].mxu0
        %v3676 = vadd.f32 0.0, %v3675
        %v3677 = vpop.f32.mrb[0].mxu0
        %v3678 = vadd.f32 0.0, %v3677
        %v3679 = vpop.f32.mrb[0].mxu0
        %v3680 = vadd.f32 0.0, %v3679
        %v3681 = vpop.f32.mrb[0].mxu0
        %v3682 = vadd.f32 0.0, %v3681
        %3683 = vdwg.mxu0
        %3684 = vmatprep.subr.bf16.mxu0 %v3336
        %3685 = vmatpush1.bf16.msra.mxu0 %v3335
        %3686 = vmatprep.subr.bf16.mxu0 %v3340
        %3687 = vmatpush1.bf16.msra.mxu0 %v3339
        %3688 = vmatprep.subr.bf16.mxu0 %v3344
        %3689 = vmatpush1.bf16.msra.mxu0 %v3343
        %3690 = vmatprep.subr.bf16.mxu0 %v3348
        %3691 = vmatpush1.bf16.msra.mxu0 %v3347
        %3692 = vmatprep.subr.bf16.mxu0 %v3352
        %3693 = vmatpush1.bf16.msra.mxu0 %v3351
        %3694 = vmatprep.subr.bf16.mxu0 %v3356
        %3695 = vmatpush1.bf16.msra.mxu0 %v3355
        %3696 = vmatprep.subr.bf16.mxu0 %v3360
        %3697 = vmatpush1.bf16.msra.mxu0 %v3359
        %3698 = vmatprep.subr.bf16.mxu0 %v3364
        %3699 = vmatpush1.bf16.msra.mxu0 %v3363
        %3700 = vmatprep.subr.bf16.mxu0 %v3368
        %3701 = vmatpush1.bf16.msra.mxu0 %v3367
        %3702 = vmatprep.subr.bf16.mxu0 %v3372
        %3703 = vmatpush1.bf16.msra.mxu0 %v3371
        %3704 = vmatprep.subr.bf16.mxu0 %v3376
        %3705 = vmatpush1.bf16.msra.mxu0 %v3375
        %3706 = vmatprep.subr.bf16.mxu0 %v3380
        %3707 = vmatpush1.bf16.msra.mxu0 %v3379
        %3708 = vmatprep.subr.bf16.mxu0 %v3384
        %3709 = vmatpush1.bf16.msra.mxu0 %v3383
        %3710 = vmatprep.subr.bf16.mxu0 %v3388
        %3711 = vmatpush1.bf16.msra.mxu0 %v3387
        %3712 = vmatprep.subr.bf16.mxu0 %v3392
        %3713 = vmatpush1.bf16.msra.mxu0 %v3391
        %3714 = vmatprep.subr.bf16.mxu0 %v3396
        %3715 = vmatpush1.bf16.msra.mxu0 %v3395
        %3716 = vmatprep.mubr.bf16.mxu0 %v2872
        %3717 = vmatmul.mubr.bf16.gmra.mrb[0].mxu0 %v2871
        %v3718 = vpop.f32.mrb[0].mxu0
        %v3719 = vadd.f32 %v3666, %v3718
        %v3720 = vpop.f32.mrb[0].mxu0
        %v3721 = vadd.f32 %v3668, %v3720
        %v3722 = vpop.f32.mrb[0].mxu0
        %v3723 = vadd.f32 %v3670, %v3722
        %v3724 = vpop.f32.mrb[0].mxu0
        %v3725 = vadd.f32 %v3672, %v3724
        %3726 = vmatprep.mubr.bf16.mxu0 %v2876
        %3727 = vmatmul.mubr.bf16.gmra.mrb[0].mxu0 %v2875
        %v3728 = vpop.f32.mrb[0].mxu0
        %v3729 = vadd.f32 %v3676, %v3728
        %v3730 = vpop.f32.mrb[0].mxu0
        %v3731 = vadd.f32 %v3678, %v3730
        %v3732 = vpop.f32.mrb[0].mxu0
        %v3733 = vadd.f32 %v3680, %v3732
        %v3734 = vpop.f32.mrb[0].mxu0
        %v3735 = vadd.f32 %v3682, %v3734
        %3736 = vdwg.mxu0
        %v3737 = vadd.f32 %v2557, %v3613
        %v3738 = vadd.f32 %v2559, %v3615
        %v3739 = vadd.f32 %v2663, %v3719
        %v3740 = vadd.f32 %v2665, %v3721
        %v3741 = vadd.f32 %v2561, %v3617
        %v3742 = vadd.f32 %v2563, %v3619
        %v3743 = vadd.f32 %v2667, %v3723
        %v3744 = vadd.f32 %v2669, %v3725
        %v3745 = vadd.f32 %v2567, %v3623
        %v3746 = vadd.f32 %v2569, %v3625
        %v3747 = vadd.f32 %v2673, %v3729
        %v3748 = vadd.f32 %v2675, %v3731
        %v3749 = vadd.f32 %v2571, %v3627
        %v3750 = vadd.f32 %v2573, %v3629
        %v3751 = vadd.f32 %v2677, %v3733
        %v3752 = vadd.f32 %v2679, %v3735
        %v3753 = vld [vmem:[#allocation9] ss:$8 sm:$0xf]
        %v3755 = vlaneseq
        %v3756 = vshrl.u32 %v3755, 7
        %v3757 = vsub.s32 0, %v3756
        %v3758 = vrot.slane %v3753, %v3757
        %v3759 = vlaneseq
        %v3760 = vshrl.u32 %v3759, 7
        %v3761 = vsub.s32 1, %v3760
        %v3762 = vrot.slane %v3753, %v3761
        %v3763 = vlaneseq
        %v3764 = vshrl.u32 %v3763, 7
        %v3765 = vsub.s32 2, %v3764
        %v3766 = vrot.slane %v3753, %v3765
        %v3767 = vlaneseq
        %v3768 = vshrl.u32 %v3767, 7
        %v3769 = vsub.s32 3, %v3768
        %v3770 = vrot.slane %v3753, %v3769
        %v3775 = vmul.f32 %v3737, %v3758
        %v3776 = vmul.f32 %v3738, %v3762
        %v3777 = vmul.f32 %v3739, %v3766
        %v3778 = vmul.f32 %v3740, %v3770
        %v3779 = vmul.f32 %v3741, %v3758
        %v3780 = vmul.f32 %v3742, %v3762
        %v3781 = vmul.f32 %v3743, %v3766
        %v3782 = vmul.f32 %v3744, %v3770
        %v3783 = vmul.f32 %v3745, %v3758
        %v3784 = vmul.f32 %v3746, %v3762
        %v3785 = vmul.f32 %v3747, %v3766
        %v3786 = vmul.f32 %v3748, %v3770
        %v3787 = vmul.f32 %v3749, %v3758
        %v3788 = vmul.f32 %v3750, %v3762
        %v3789 = vmul.f32 %v3751, %v3766
        %v3790 = vmul.f32 %v3752, %v3770
        %s3791 = scalar_lea.vmem [#allocation9], 1
        %v3792 = vld [vmem:[%s3791] ss:$8 sm:$0xf]
        %v3794 = vlaneseq
        %v3795 = vshrl.u32 %v3794, 7
        %v3796 = vsub.s32 0, %v3795
        %v3797 = vrot.slane %v3792, %v3796
        %v3798 = vlaneseq
        %v3799 = vshrl.u32 %v3798, 7
        %v3800 = vsub.s32 1, %v3799
        %v3801 = vrot.slane %v3792, %v3800
        %v3802 = vlaneseq
        %v3803 = vshrl.u32 %v3802, 7
        %v3804 = vsub.s32 2, %v3803
        %v3805 = vrot.slane %v3792, %v3804
        %v3806 = vlaneseq
        %v3807 = vshrl.u32 %v3806, 7
        %v3808 = vsub.s32 3, %v3807
        %v3809 = vrot.slane %v3792, %v3808
        %v3814 = vadd.f32 %v3775, %v3797
        %v3815 = vadd.f32 %v3776, %v3801
        %v3816 = vadd.f32 %v3777, %v3805
        %v3817 = vadd.f32 %v3778, %v3809
        %v3818 = vadd.f32 %v3779, %v3797
        %v3819 = vadd.f32 %v3780, %v3801
        %v3820 = vadd.f32 %v3781, %v3805
        %v3821 = vadd.f32 %v3782, %v3809
        %v3822 = vadd.f32 %v3783, %v3797
        %v3823 = vadd.f32 %v3784, %v3801
        %v3824 = vadd.f32 %v3785, %v3805
        %v3825 = vadd.f32 %v3786, %v3809
        %v3826 = vadd.f32 %v3787, %v3797
        %v3827 = vadd.f32 %v3788, %v3801
        %v3828 = vadd.f32 %v3789, %v3805
        %v3829 = vadd.f32 %v3790, %v3809
        %vm3830 = vcmp.gt.f32.partialorder %v3814, 0.0
        %vm3831 = vcmp.gt.f32.partialorder %v3815, 0.0
        %vm3832 = vcmp.gt.f32.partialorder %v3816, 0.0
        %vm3833 = vcmp.gt.f32.partialorder %v3817, 0.0
        %vm3834 = vcmp.gt.f32.partialorder %v3818, 0.0
        %vm3835 = vcmp.gt.f32.partialorder %v3819, 0.0
        %vm3836 = vcmp.gt.f32.partialorder %v3820, 0.0
        %vm3837 = vcmp.gt.f32.partialorder %v3821, 0.0
        %vm3838 = vcmp.gt.f32.partialorder %v3822, 0.0
        %vm3839 = vcmp.gt.f32.partialorder %v3823, 0.0
        %vm3840 = vcmp.gt.f32.partialorder %v3824, 0.0
        %vm3841 = vcmp.gt.f32.partialorder %v3825, 0.0
        %vm3842 = vcmp.gt.f32.partialorder %v3826, 0.0
        %vm3843 = vcmp.gt.f32.partialorder %v3827, 0.0
        %vm3844 = vcmp.gt.f32.partialorder %v3828, 0.0
        %vm3845 = vcmp.gt.f32.partialorder %v3829, 0.0
        %v3846 = vmul.f32 %v3814, 0.001
        %v3847 = vmul.f32 %v3815, 0.001
        %v3848 = vmul.f32 %v3816, 0.001
        %v3849 = vmul.f32 %v3817, 0.001
        %v3850 = vmul.f32 %v3818, 0.001
        %v3851 = vmul.f32 %v3819, 0.001
        %v3852 = vmul.f32 %v3820, 0.001
        %v3853 = vmul.f32 %v3821, 0.001
        %v3854 = vmul.f32 %v3822, 0.001
        %v3855 = vmul.f32 %v3823, 0.001
        %v3856 = vmul.f32 %v3824, 0.001
        %v3857 = vmul.f32 %v3825, 0.001
        %v3858 = vmul.f32 %v3826, 0.001
        %v3859 = vmul.f32 %v3827, 0.001
        %v3860 = vmul.f32 %v3828, 0.001
        %v3861 = vmul.f32 %v3829, 0.001
        %v3862 = vsel %vm3830, %v3814, %v3846
        %v3863 = vsel %vm3831, %v3815, %v3847
        %v3864 = vsel %vm3832, %v3816, %v3848
        %v3865 = vsel %vm3833, %v3817, %v3849
        %v3866 = vsel %vm3834, %v3818, %v3850
        %v3867 = vsel %vm3835, %v3819, %v3851
        %v3868 = vsel %vm3836, %v3820, %v3852
        %v3869 = vsel %vm3837, %v3821, %v3853
        %v3870 = vsel %vm3838, %v3822, %v3854
        %v3871 = vsel %vm3839, %v3823, %v3855
        %v3872 = vsel %vm3840, %v3824, %v3856
        %v3873 = vsel %vm3841, %v3825, %v3857
        %v3874 = vsel %vm3842, %v3826, %v3858
        %v3875 = vsel %vm3843, %v3827, %v3859
        %v3876 = vsel %vm3844, %v3828, %v3860
        %v3877 = vsel %vm3845, %v3829, %v3861
        %v3878 = vpack.c.bf16 %v3866, %v3862
        %v3879 = vpack.c.bf16 %v3867, %v3863
        %v3880 = vpack.c.bf16 %v3868, %v3864
        %v3881 = vpack.c.bf16 %v3869, %v3865
        %v3882 = vpack.c.bf16 %v3874, %v3870
        %v3883 = vpack.c.bf16 %v3875, %v3871
        %v3884 = vpack.c.bf16 %v3876, %v3872
        %v3885 = vpack.c.bf16 %v3877, %v3873
        %v3894 = vunpack.c.l.b16 %v3878
        %v3895 = vunpack.c.l.b16 %v3879
        %v3896 = vunpack.c.l.b16 %v3880
        %v3897 = vunpack.c.l.b16 %v3881
        %v3898 = vunpack.c.h.b16 %v3878
        %v3899 = vunpack.c.h.b16 %v3879
        %v3900 = vunpack.c.h.b16 %v3880
        %v3901 = vunpack.c.h.b16 %v3881
        %v3902 = vunpack.c.l.b16 %v3882
        %v3903 = vunpack.c.l.b16 %v3883
        %v3904 = vunpack.c.l.b16 %v3884
        %v3905 = vunpack.c.l.b16 %v3885
        %v3906 = vunpack.c.h.b16 %v3882
        %v3907 = vunpack.c.h.b16 %v3883
        %v3908 = vunpack.c.h.b16 %v3884
        %v3909 = vunpack.c.h.b16 %v3885
        %v3910 = vpack.c.b16 %v3895, %v3894
        %v3911 = vpack.c.b16 %v3897, %v3896
        %v3912 = vpack.c.b16 %v3899, %v3898
        %v3913 = vpack.c.b16 %v3901, %v3900
        %v3914 = vpack.c.b16 %v3903, %v3902
        %v3915 = vpack.c.b16 %v3905, %v3904
        %v3916 = vpack.c.b16 %v3907, %v3906
        %v3917 = vpack.c.b16 %v3909, %v3908
        %v3919 = vshrl.u32 %v3910, 16
        %v3921 = vrot.slane %v3919, 7
        %v3922 = vshll.u32 %v3910, 16
        %v3924 = vor.u32 %v3921, %v3922
        %v3926 = vshrl.u32 %v3911, 16
        %v3928 = vrot.slane %v3926, 7
        %v3929 = vshll.u32 %v3911, 16
        %v3931 = vor.u32 %v3928, %v3929
        %v3932 = vrot.slane %v3921, 4
        %v3934 = vshrl.u32 %v3912, 16
        %v3936 = vrot.slane %v3934, 7
        %v3937 = vshll.u32 %v3912, 16
        %v3939 = vor.u32 %v3936, %v3937
        %v3940 = vsel %vm423, %v3932, %v3939
        %v3941 = vrot.slane %v3928, 4
        %v3943 = vshrl.u32 %v3913, 16
        %v3945 = vrot.slane %v3943, 7
        %v3946 = vshll.u32 %v3913, 16
        %v3948 = vor.u32 %v3945, %v3946
        %v3949 = vsel %vm423, %v3941, %v3948
        %v3950 = vrot.slane %v3936, 4
        %v3951 = vrot.slane %v3945, 4
        %v3953 = vshrl.u32 %v3914, 16
        %v3955 = vrot.slane %v3953, 7
        %v3956 = vshll.u32 %v3914, 16
        %v3958 = vor.u32 %v3955, %v3956
        %v3960 = vshrl.u32 %v3915, 16
        %v3962 = vrot.slane %v3960, 7
        %v3963 = vshll.u32 %v3915, 16
        %v3965 = vor.u32 %v3962, %v3963
        %v3966 = vrot.slane %v3955, 4
        %v3968 = vshrl.u32 %v3916, 16
        %v3970 = vrot.slane %v3968, 7
        %v3971 = vshll.u32 %v3916, 16
        %v3973 = vor.u32 %v3970, %v3971
        %v3974 = vsel %vm423, %v3966, %v3973
        %v3975 = vrot.slane %v3962, 4
        %v3977 = vshrl.u32 %v3917, 16
        %v3979 = vrot.slane %v3977, 7
        %v3980 = vshll.u32 %v3917, 16
        %v3982 = vor.u32 %v3979, %v3980
        %v3983 = vsel %vm423, %v3975, %v3982
        %v3984 = vrot.slane %v3970, 4
        %v3985 = vrot.slane %v3979, 4
        %v3998 = vsel %vm508, %v3924, %v537
        %3999 = vst [vmem:[#allocation2] sm:$0xff] %v3998
        %v4000 = vld [vmem:[#allocation2 + $0x8] sm:$0xff]
        %v4001 = vsel %vm508, %v3931, %v4000
        %4002 = vst [vmem:[#allocation2 + $0x8] sm:$0xff] %v4001
        %4003 = vst [vmem:[#allocation2 + $0x10] sm:$0xff] %v3940
        %4004 = vst [vmem:[#allocation2 + $0x18] sm:$0xff] %v3949
        %v4005 = vld [vmem:[#allocation2 + $0x20] sm:$0x11]
        %v4006 = vsel %vm336, %v3950, %v4005
        %4007 = vst [vmem:[#allocation2 + $0x20] sm:$0x11] %v4006
        %v4008 = vld [vmem:[#allocation2 + $0x28] sm:$0x11]
        %v4009 = vsel %vm336, %v3951, %v4008
        %4010 = vst [vmem:[#allocation2 + $0x28] sm:$0x11] %v4009
        %v4011 = vld [vmem:[#allocation2 + $0x30] sm:$0xff]
        %v4012 = vsel %vm508, %v3958, %v4011
        %4013 = vst [vmem:[#allocation2 + $0x30] sm:$0xff] %v4012
        %v4014 = vld [vmem:[#allocation2 + $0x38] sm:$0xff]
        %v4015 = vsel %vm508, %v3965, %v4014
        %4016 = vst [vmem:[#allocation2 + $0x38] sm:$0xff] %v4015
        %4017 = vst [vmem:[#allocation2 + $0x40] sm:$0xff] %v3974
        %4018 = vst [vmem:[#allocation2 + $0x48] sm:$0xff] %v3983
        %v4019 = vld [vmem:[#allocation2 + $0x50] sm:$0x11]
        %v4020 = vsel %vm336, %v3984, %v4019
        %4021 = vst [vmem:[#allocation2 + $0x50] sm:$0x11] %v4020
        %v4022 = vld [vmem:[#allocation2 + $0x58] sm:$0x11]
        %v4023 = vsel %vm336, %v3985, %v4022
        %4024 = vst [vmem:[#allocation2 + $0x58] sm:$0x11] %v4023
        %v4025 = vld [vmem:[#allocation2] sm:$0xff]
        %v4026 = vld [vmem:[#allocation2 + $0x8] sm:$0xff]
        %v4027 = vld [vmem:[#allocation2 + $0x10] sm:$0xff]
        %v4028 = vld [vmem:[#allocation2 + $0x18] sm:$0xff]
        %v4029 = vld [vmem:[#allocation2 + $0x30] sm:$0xff]
        %v4030 = vld [vmem:[#allocation2 + $0x38] sm:$0xff]
        %v4031 = vld [vmem:[#allocation2 + $0x40] sm:$0xff]
        %v4032 = vld [vmem:[#allocation2 + $0x48] sm:$0xff]
        %v4033 = vld [vmem:[#allocation8] sm:$0xff]
        %v4034 = vld [vmem:[#allocation8 + $0x8] sm:$0xff]
        %v4035 = vld [vmem:[#allocation8 + $0x10] sm:$0xff]
        %v4036 = vld [vmem:[#allocation8 + $0x18] sm:$0xff]
        %v4037 = vld [vmem:[#allocation8 + $0x20] sm:$0xff]
        %v4038 = vld [vmem:[#allocation8 + $0x28] sm:$0xff]
        %v4039 = vld [vmem:[#allocation8 + $0x30] sm:$0xff]
        %v4040 = vld [vmem:[#allocation8 + $0x38] sm:$0xff]
        %v4041 = vld [vmem:[#allocation8 + $0x40] sm:$0xff]
        %v4042 = vld [vmem:[#allocation8 + $0x48] sm:$0xff]
        %v4043 = vld [vmem:[#allocation8 + $0x50] sm:$0xff]
        %v4044 = vld [vmem:[#allocation8 + $0x58] sm:$0xff]
        %v4045 = vld [vmem:[#allocation8 + $0x60] sm:$0xff]
        %v4046 = vld [vmem:[#allocation8 + $0x68] sm:$0xff]
        %v4047 = vld [vmem:[#allocation8 + $0x70] sm:$0xff]
        %v4048 = vld [vmem:[#allocation8 + $0x78] sm:$0xff]
        %v4049 = vld [vmem:[#allocation8 + $0x80] sm:$0xff]
        %v4050 = vld [vmem:[#allocation8 + $0x88] sm:$0xff]
        %v4051 = vld [vmem:[#allocation8 + $0x90] sm:$0xff]
        %v4052 = vld [vmem:[#allocation8 + $0x98] sm:$0xff]
        %v4053 = vld [vmem:[#allocation8 + $0xa0] sm:$0xff]
        %v4054 = vld [vmem:[#allocation8 + $0xa8] sm:$0xff]
        %v4055 = vld [vmem:[#allocation8 + $0xb0] sm:$0xff]
        %v4056 = vld [vmem:[#allocation8 + $0xb8] sm:$0xff]
        %v4057 = vld [vmem:[#allocation8 + $0xc0] sm:$0xff]
        %v4058 = vld [vmem:[#allocation8 + $0xc8] sm:$0xff]
        %v4059 = vld [vmem:[#allocation8 + $0xd0] sm:$0xff]
        %v4060 = vld [vmem:[#allocation8 + $0xd8] sm:$0xff]
        %v4061 = vld [vmem:[#allocation8 + $0xe0] sm:$0xff]
        %v4062 = vld [vmem:[#allocation8 + $0xe8] sm:$0xff]
        %v4063 = vld [vmem:[#allocation8 + $0xf0] sm:$0xff]
        %v4064 = vld [vmem:[#allocation8 + $0xf8] sm:$0xff]
        %v4065 = vld [vmem:[#allocation8 + $0x100] sm:$0xff]
        %v4066 = vld [vmem:[#allocation8 + $0x108] sm:$0xff]
        %v4067 = vld [vmem:[#allocation8 + $0x110] sm:$0xff]
        %v4068 = vld [vmem:[#allocation8 + $0x118] sm:$0xff]
        %v4069 = vld [vmem:[#allocation8 + $0x120] sm:$0xff]
        %v4070 = vld [vmem:[#allocation8 + $0x128] sm:$0xff]
        %v4071 = vld [vmem:[#allocation8 + $0x130] sm:$0xff]
        %v4072 = vld [vmem:[#allocation8 + $0x138] sm:$0xff]
        %v4073 = vld [vmem:[#allocation8 + $0x140] sm:$0xff]
        %v4074 = vld [vmem:[#allocation8 + $0x148] sm:$0xff]
        %v4075 = vld [vmem:[#allocation8 + $0x150] sm:$0xff]
        %v4076 = vld [vmem:[#allocation8 + $0x158] sm:$0xff]
        %v4077 = vld [vmem:[#allocation8 + $0x160] sm:$0xff]
        %v4078 = vld [vmem:[#allocation8 + $0x168] sm:$0xff]
        %v4079 = vld [vmem:[#allocation8 + $0x170] sm:$0xff]
        %v4080 = vld [vmem:[#allocation8 + $0x178] sm:$0xff]
        %v4081 = vld [vmem:[#allocation8 + $0x180] sm:$0xff]
        %v4082 = vld [vmem:[#allocation8 + $0x188] sm:$0xff]
        %v4083 = vld [vmem:[#allocation8 + $0x190] sm:$0xff]
        %v4084 = vld [vmem:[#allocation8 + $0x198] sm:$0xff]
        %v4085 = vld [vmem:[#allocation8 + $0x1a0] sm:$0xff]
        %v4086 = vld [vmem:[#allocation8 + $0x1a8] sm:$0xff]
        %v4087 = vld [vmem:[#allocation8 + $0x1b0] sm:$0xff]
        %v4088 = vld [vmem:[#allocation8 + $0x1b8] sm:$0xff]
        %v4089 = vld [vmem:[#allocation8 + $0x1c0] sm:$0xff]
        %v4090 = vld [vmem:[#allocation8 + $0x1c8] sm:$0xff]
        %v4091 = vld [vmem:[#allocation8 + $0x1d0] sm:$0xff]
        %v4092 = vld [vmem:[#allocation8 + $0x1d8] sm:$0xff]
        %v4093 = vld [vmem:[#allocation8 + $0x1e0] sm:$0xff]
        %v4094 = vld [vmem:[#allocation8 + $0x1e8] sm:$0xff]
        %v4095 = vld [vmem:[#allocation8 + $0x1f0] sm:$0xff]
        %v4096 = vld [vmem:[#allocation8 + $0x1f8] sm:$0xff]
        %v4097 = vld [vmem:[#allocation8 + $0x200] sm:$0xff]
        %v4098 = vld [vmem:[#allocation8 + $0x208] sm:$0xff]
        %v4099 = vld [vmem:[#allocation8 + $0x210] sm:$0xff]
        %v4100 = vld [vmem:[#allocation8 + $0x218] sm:$0xff]
        %v4101 = vld [vmem:[#allocation8 + $0x220] sm:$0xff]
        %v4102 = vld [vmem:[#allocation8 + $0x228] sm:$0xff]
        %v4103 = vld [vmem:[#allocation8 + $0x230] sm:$0xff]
        %v4104 = vld [vmem:[#allocation8 + $0x238] sm:$0xff]
        %v4105 = vld [vmem:[#allocation8 + $0x240] sm:$0xff]
        %v4106 = vld [vmem:[#allocation8 + $0x248] sm:$0xff]
        %v4107 = vld [vmem:[#allocation8 + $0x250] sm:$0xff]
        %v4108 = vld [vmem:[#allocation8 + $0x258] sm:$0xff]
        %v4109 = vld [vmem:[#allocation8 + $0x260] sm:$0xff]
        %v4110 = vld [vmem:[#allocation8 + $0x268] sm:$0xff]
        %v4111 = vld [vmem:[#allocation8 + $0x270] sm:$0xff]
        %v4112 = vld [vmem:[#allocation8 + $0x278] sm:$0xff]
        %v4113 = vld [vmem:[#allocation8 + $0x280] sm:$0xff]
        %v4114 = vld [vmem:[#allocation8 + $0x288] sm:$0xff]
        %v4115 = vld [vmem:[#allocation8 + $0x290] sm:$0xff]
        %v4116 = vld [vmem:[#allocation8 + $0x298] sm:$0xff]
        %v4117 = vld [vmem:[#allocation8 + $0x2a0] sm:$0xff]
        %v4118 = vld [vmem:[#allocation8 + $0x2a8] sm:$0xff]
        %v4119 = vld [vmem:[#allocation8 + $0x2b0] sm:$0xff]
        %v4120 = vld [vmem:[#allocation8 + $0x2b8] sm:$0xff]
        %v4121 = vld [vmem:[#allocation8 + $0x2c0] sm:$0xff]
        %v4122 = vld [vmem:[#allocation8 + $0x2c8] sm:$0xff]
        %v4123 = vld [vmem:[#allocation8 + $0x2d0] sm:$0xff]
        %v4124 = vld [vmem:[#allocation8 + $0x2d8] sm:$0xff]
        %v4125 = vld [vmem:[#allocation8 + $0x2e0] sm:$0xff]
        %v4126 = vld [vmem:[#allocation8 + $0x2e8] sm:$0xff]
        %v4127 = vld [vmem:[#allocation8 + $0x2f0] sm:$0xff]
        %v4128 = vld [vmem:[#allocation8 + $0x2f8] sm:$0xff]
        %v4129 = vld [vmem:[#allocation8 + $0x300] sm:$0xff]
        %v4130 = vld [vmem:[#allocation8 + $0x308] sm:$0xff]
        %v4131 = vld [vmem:[#allocation8 + $0x310] sm:$0xff]
        %v4132 = vld [vmem:[#allocation8 + $0x318] sm:$0xff]
        %v4133 = vld [vmem:[#allocation8 + $0x320] sm:$0xff]
        %v4134 = vld [vmem:[#allocation8 + $0x328] sm:$0xff]
        %v4135 = vld [vmem:[#allocation8 + $0x330] sm:$0xff]
        %v4136 = vld [vmem:[#allocation8 + $0x338] sm:$0xff]
        %v4137 = vld [vmem:[#allocation8 + $0x340] sm:$0xff]
        %v4138 = vld [vmem:[#allocation8 + $0x348] sm:$0xff]
        %v4139 = vld [vmem:[#allocation8 + $0x350] sm:$0xff]
        %v4140 = vld [vmem:[#allocation8 + $0x358] sm:$0xff]
        %v4141 = vld [vmem:[#allocation8 + $0x360] sm:$0xff]
        %v4142 = vld [vmem:[#allocation8 + $0x368] sm:$0xff]
        %v4143 = vld [vmem:[#allocation8 + $0x370] sm:$0xff]
        %v4144 = vld [vmem:[#allocation8 + $0x378] sm:$0xff]
        %v4145 = vld [vmem:[#allocation8 + $0x380] sm:$0xff]
        %v4146 = vld [vmem:[#allocation8 + $0x388] sm:$0xff]
        %v4147 = vld [vmem:[#allocation8 + $0x390] sm:$0xff]
        %v4148 = vld [vmem:[#allocation8 + $0x398] sm:$0xff]
        %v4149 = vld [vmem:[#allocation8 + $0x3a0] sm:$0xff]
        %v4150 = vld [vmem:[#allocation8 + $0x3a8] sm:$0xff]
        %v4151 = vld [vmem:[#allocation8 + $0x3b0] sm:$0xff]
        %v4152 = vld [vmem:[#allocation8 + $0x3b8] sm:$0xff]
        %v4153 = vld [vmem:[#allocation8 + $0x3c0] sm:$0xff]
        %v4154 = vld [vmem:[#allocation8 + $0x3c8] sm:$0xff]
        %v4155 = vld [vmem:[#allocation8 + $0x3d0] sm:$0xff]
        %v4156 = vld [vmem:[#allocation8 + $0x3d8] sm:$0xff]
        %v4157 = vld [vmem:[#allocation8 + $0x3e0] sm:$0xff]
        %v4158 = vld [vmem:[#allocation8 + $0x3e8] sm:$0xff]
        %v4159 = vld [vmem:[#allocation8 + $0x3f0] sm:$0xff]
        %v4160 = vld [vmem:[#allocation8 + $0x3f8] sm:$0xff]
        %v4161 = vld [vmem:[#allocation2 + $0x20] sm:$0x11]
        %v4162 = vld [vmem:[#allocation2 + $0x28] sm:$0x11]
        %v4163 = vld [vmem:[#allocation2 + $0x50] sm:$0x11]
        %v4164 = vld [vmem:[#allocation2 + $0x58] sm:$0x11]
        %v4166 = vshrl.u32 %v4025, 16
        %v4168 = vrot.slane %v4166, 4
        %v4169 = vshll.u32 %v4025, 16
        %v4171 = vrot.slane %v4169, 5
        %v4172 = vor.u32 %v4168, %v4171
        %v4173 = vrot.slane %v4172, 4
        %v4175 = vshll.u32 %v4027, 16
        %v4177 = vrot.slane %v4175, 5
        %v4178 = vsel %vm679, %v4173, %v4177
        %v4180 = vshrl.u32 %v4026, 16
        %v4182 = vrot.slane %v4180, 4
        %v4183 = vshll.u32 %v4026, 16
        %v4185 = vrot.slane %v4183, 5
        %v4186 = vor.u32 %v4182, %v4185
        %v4187 = vrot.slane %v4186, 4
        %v4189 = vshll.u32 %v4028, 16
        %v4191 = vrot.slane %v4189, 5
        %v4192 = vsel %vm679, %v4187, %v4191
        %v4193 = vshrl.u32 %v4027, 16
        %v4195 = vrot.slane %v4193, 4
        %v4196 = vor.u32 %v4195, %v4177
        %v4197 = vrot.slane %v4196, 4
        %v4199 = vshll.u32 %v4161, 16
        %v4201 = vrot.slane %v4199, 5
        %v4202 = vsel %vm679, %v4197, %v4201
        %v4203 = vshrl.u32 %v4028, 16
        %v4205 = vrot.slane %v4203, 4
        %v4206 = vor.u32 %v4205, %v4191
        %v4207 = vrot.slane %v4206, 4
        %v4209 = vshll.u32 %v4162, 16
        %v4211 = vrot.slane %v4209, 5
        %v4212 = vsel %vm679, %v4207, %v4211
        %v4214 = vshrl.u32 %v4029, 16
        %v4216 = vrot.slane %v4214, 4
        %v4217 = vshll.u32 %v4029, 16
        %v4219 = vrot.slane %v4217, 5
        %v4220 = vor.u32 %v4216, %v4219
        %v4221 = vrot.slane %v4220, 4
        %v4223 = vshll.u32 %v4031, 16
        %v4225 = vrot.slane %v4223, 5
        %v4226 = vsel %vm679, %v4221, %v4225
        %v4228 = vshrl.u32 %v4030, 16
        %v4230 = vrot.slane %v4228, 4
        %v4231 = vshll.u32 %v4030, 16
        %v4233 = vrot.slane %v4231, 5
        %v4234 = vor.u32 %v4230, %v4233
        %v4235 = vrot.slane %v4234, 4
        %v4237 = vshll.u32 %v4032, 16
        %v4239 = vrot.slane %v4237, 5
        %v4240 = vsel %vm679, %v4235, %v4239
        %v4241 = vshrl.u32 %v4031, 16
        %v4243 = vrot.slane %v4241, 4
        %v4244 = vor.u32 %v4243, %v4225
        %v4245 = vrot.slane %v4244, 4
        %v4247 = vshll.u32 %v4163, 16
        %v4249 = vrot.slane %v4247, 5
        %v4250 = vsel %vm679, %v4245, %v4249
        %v4251 = vshrl.u32 %v4032, 16
        %v4253 = vrot.slane %v4251, 4
        %v4254 = vor.u32 %v4253, %v4239
        %v4255 = vrot.slane %v4254, 4
        %v4257 = vshll.u32 %v4164, 16
        %v4259 = vrot.slane %v4257, 5
        %v4260 = vsel %vm679, %v4255, %v4259
        %s4261 = scalar_lea.vmem [#allocation8], 1024
        %v4262 = vld [vmem:[%s4261] sm:$0xff]
        %v4263 = vld [vmem:[%s4261 + $0x8] sm:$0xff]
        %v4264 = vld [vmem:[%s4261 + $0x10] sm:$0xff]
        %v4265 = vld [vmem:[%s4261 + $0x18] sm:$0xff]
        %v4266 = vld [vmem:[%s4261 + $0x20] sm:$0xff]
        %v4267 = vld [vmem:[%s4261 + $0x28] sm:$0xff]
        %v4268 = vld [vmem:[%s4261 + $0x30] sm:$0xff]
        %v4269 = vld [vmem:[%s4261 + $0x38] sm:$0xff]
        %v4270 = vld [vmem:[%s4261 + $0x40] sm:$0xff]
        %v4271 = vld [vmem:[%s4261 + $0x48] sm:$0xff]
        %v4272 = vld [vmem:[%s4261 + $0x50] sm:$0xff]
        %v4273 = vld [vmem:[%s4261 + $0x58] sm:$0xff]
        %v4274 = vld [vmem:[%s4261 + $0x60] sm:$0xff]
        %v4275 = vld [vmem:[%s4261 + $0x68] sm:$0xff]
        %v4276 = vld [vmem:[%s4261 + $0x70] sm:$0xff]
        %v4277 = vld [vmem:[%s4261 + $0x78] sm:$0xff]
        %v4278 = vld [vmem:[%s4261 + $0x80] sm:$0xff]
        %v4279 = vld [vmem:[%s4261 + $0x88] sm:$0xff]
        %v4280 = vld [vmem:[%s4261 + $0x90] sm:$0xff]
        %v4281 = vld [vmem:[%s4261 + $0x98] sm:$0xff]
        %v4282 = vld [vmem:[%s4261 + $0xa0] sm:$0xff]
        %v4283 = vld [vmem:[%s4261 + $0xa8] sm:$0xff]
        %v4284 = vld [vmem:[%s4261 + $0xb0] sm:$0xff]
        %v4285 = vld [vmem:[%s4261 + $0xb8] sm:$0xff]
        %v4286 = vld [vmem:[%s4261 + $0xc0] sm:$0xff]
        %v4287 = vld [vmem:[%s4261 + $0xc8] sm:$0xff]
        %v4288 = vld [vmem:[%s4261 + $0xd0] sm:$0xff]
        %v4289 = vld [vmem:[%s4261 + $0xd8] sm:$0xff]
        %v4290 = vld [vmem:[%s4261 + $0xe0] sm:$0xff]
        %v4291 = vld [vmem:[%s4261 + $0xe8] sm:$0xff]
        %v4292 = vld [vmem:[%s4261 + $0xf0] sm:$0xff]
        %v4293 = vld [vmem:[%s4261 + $0xf8] sm:$0xff]
        %v4294 = vld [vmem:[%s4261 + $0x100] sm:$0xff]
        %v4295 = vld [vmem:[%s4261 + $0x108] sm:$0xff]
        %v4296 = vld [vmem:[%s4261 + $0x110] sm:$0xff]
        %v4297 = vld [vmem:[%s4261 + $0x118] sm:$0xff]
        %v4298 = vld [vmem:[%s4261 + $0x120] sm:$0xff]
        %v4299 = vld [vmem:[%s4261 + $0x128] sm:$0xff]
        %v4300 = vld [vmem:[%s4261 + $0x130] sm:$0xff]
        %v4301 = vld [vmem:[%s4261 + $0x138] sm:$0xff]
        %v4302 = vld [vmem:[%s4261 + $0x140] sm:$0xff]
        %v4303 = vld [vmem:[%s4261 + $0x148] sm:$0xff]
        %v4304 = vld [vmem:[%s4261 + $0x150] sm:$0xff]
        %v4305 = vld [vmem:[%s4261 + $0x158] sm:$0xff]
        %v4306 = vld [vmem:[%s4261 + $0x160] sm:$0xff]
        %v4307 = vld [vmem:[%s4261 + $0x168] sm:$0xff]
        %v4308 = vld [vmem:[%s4261 + $0x170] sm:$0xff]
        %v4309 = vld [vmem:[%s4261 + $0x178] sm:$0xff]
        %v4310 = vld [vmem:[%s4261 + $0x180] sm:$0xff]
        %v4311 = vld [vmem:[%s4261 + $0x188] sm:$0xff]
        %v4312 = vld [vmem:[%s4261 + $0x190] sm:$0xff]
        %v4313 = vld [vmem:[%s4261 + $0x198] sm:$0xff]
        %v4314 = vld [vmem:[%s4261 + $0x1a0] sm:$0xff]
        %v4315 = vld [vmem:[%s4261 + $0x1a8] sm:$0xff]
        %v4316 = vld [vmem:[%s4261 + $0x1b0] sm:$0xff]
        %v4317 = vld [vmem:[%s4261 + $0x1b8] sm:$0xff]
        %v4318 = vld [vmem:[%s4261 + $0x1c0] sm:$0xff]
        %v4319 = vld [vmem:[%s4261 + $0x1c8] sm:$0xff]
        %v4320 = vld [vmem:[%s4261 + $0x1d0] sm:$0xff]
        %v4321 = vld [vmem:[%s4261 + $0x1d8] sm:$0xff]
        %v4322 = vld [vmem:[%s4261 + $0x1e0] sm:$0xff]
        %v4323 = vld [vmem:[%s4261 + $0x1e8] sm:$0xff]
        %v4324 = vld [vmem:[%s4261 + $0x1f0] sm:$0xff]
        %v4325 = vld [vmem:[%s4261 + $0x1f8] sm:$0xff]
        %v4326 = vld [vmem:[%s4261 + $0x200] sm:$0xff]
        %v4327 = vld [vmem:[%s4261 + $0x208] sm:$0xff]
        %v4328 = vld [vmem:[%s4261 + $0x210] sm:$0xff]
        %v4329 = vld [vmem:[%s4261 + $0x218] sm:$0xff]
        %v4330 = vld [vmem:[%s4261 + $0x220] sm:$0xff]
        %v4331 = vld [vmem:[%s4261 + $0x228] sm:$0xff]
        %v4332 = vld [vmem:[%s4261 + $0x230] sm:$0xff]
        %v4333 = vld [vmem:[%s4261 + $0x238] sm:$0xff]
        %v4334 = vld [vmem:[%s4261 + $0x240] sm:$0xff]
        %v4335 = vld [vmem:[%s4261 + $0x248] sm:$0xff]
        %v4336 = vld [vmem:[%s4261 + $0x250] sm:$0xff]
        %v4337 = vld [vmem:[%s4261 + $0x258] sm:$0xff]
        %v4338 = vld [vmem:[%s4261 + $0x260] sm:$0xff]
        %v4339 = vld [vmem:[%s4261 + $0x268] sm:$0xff]
        %v4340 = vld [vmem:[%s4261 + $0x270] sm:$0xff]
        %v4341 = vld [vmem:[%s4261 + $0x278] sm:$0xff]
        %v4342 = vld [vmem:[%s4261 + $0x280] sm:$0xff]
        %v4343 = vld [vmem:[%s4261 + $0x288] sm:$0xff]
        %v4344 = vld [vmem:[%s4261 + $0x290] sm:$0xff]
        %v4345 = vld [vmem:[%s4261 + $0x298] sm:$0xff]
        %v4346 = vld [vmem:[%s4261 + $0x2a0] sm:$0xff]
        %v4347 = vld [vmem:[%s4261 + $0x2a8] sm:$0xff]
        %v4348 = vld [vmem:[%s4261 + $0x2b0] sm:$0xff]
        %v4349 = vld [vmem:[%s4261 + $0x2b8] sm:$0xff]
        %v4350 = vld [vmem:[%s4261 + $0x2c0] sm:$0xff]
        %v4351 = vld [vmem:[%s4261 + $0x2c8] sm:$0xff]
        %v4352 = vld [vmem:[%s4261 + $0x2d0] sm:$0xff]
        %v4353 = vld [vmem:[%s4261 + $0x2d8] sm:$0xff]
        %v4354 = vld [vmem:[%s4261 + $0x2e0] sm:$0xff]
        %v4355 = vld [vmem:[%s4261 + $0x2e8] sm:$0xff]
        %v4356 = vld [vmem:[%s4261 + $0x2f0] sm:$0xff]
        %v4357 = vld [vmem:[%s4261 + $0x2f8] sm:$0xff]
        %v4358 = vld [vmem:[%s4261 + $0x300] sm:$0xff]
        %v4359 = vld [vmem:[%s4261 + $0x308] sm:$0xff]
        %v4360 = vld [vmem:[%s4261 + $0x310] sm:$0xff]
        %v4361 = vld [vmem:[%s4261 + $0x318] sm:$0xff]
        %v4362 = vld [vmem:[%s4261 + $0x320] sm:$0xff]
        %v4363 = vld [vmem:[%s4261 + $0x328] sm:$0xff]
        %v4364 = vld [vmem:[%s4261 + $0x330] sm:$0xff]
        %v4365 = vld [vmem:[%s4261 + $0x338] sm:$0xff]
        %v4366 = vld [vmem:[%s4261 + $0x340] sm:$0xff]
        %v4367 = vld [vmem:[%s4261 + $0x348] sm:$0xff]
        %v4368 = vld [vmem:[%s4261 + $0x350] sm:$0xff]
        %v4369 = vld [vmem:[%s4261 + $0x358] sm:$0xff]
        %v4370 = vld [vmem:[%s4261 + $0x360] sm:$0xff]
        %v4371 = vld [vmem:[%s4261 + $0x368] sm:$0xff]
        %v4372 = vld [vmem:[%s4261 + $0x370] sm:$0xff]
        %v4373 = vld [vmem:[%s4261 + $0x378] sm:$0xff]
        %v4374 = vld [vmem:[%s4261 + $0x380] sm:$0xff]
        %v4375 = vld [vmem:[%s4261 + $0x388] sm:$0xff]
        %v4376 = vld [vmem:[%s4261 + $0x390] sm:$0xff]
        %v4377 = vld [vmem:[%s4261 + $0x398] sm:$0xff]
        %v4378 = vld [vmem:[%s4261 + $0x3a0] sm:$0xff]
        %v4379 = vld [vmem:[%s4261 + $0x3a8] sm:$0xff]
        %v4380 = vld [vmem:[%s4261 + $0x3b0] sm:$0xff]
        %v4381 = vld [vmem:[%s4261 + $0x3b8] sm:$0xff]
        %v4382 = vld [vmem:[%s4261 + $0x3c0] sm:$0xff]
        %v4383 = vld [vmem:[%s4261 + $0x3c8] sm:$0xff]
        %v4384 = vld [vmem:[%s4261 + $0x3d0] sm:$0xff]
        %v4385 = vld [vmem:[%s4261 + $0x3d8] sm:$0xff]
        %v4386 = vld [vmem:[%s4261 + $0x3e0] sm:$0xff]
        %v4387 = vld [vmem:[%s4261 + $0x3e8] sm:$0xff]
        %v4388 = vld [vmem:[%s4261 + $0x3f0] sm:$0xff]
        %v4389 = vld [vmem:[%s4261 + $0x3f8] sm:$0xff]
        %v4390 = vunpack.c.l.b16 %v4178
        %v4391 = vunpack.c.h.b16 %v4178
        %v4392 = vunpack.c.l.b16 %v4192
        %v4393 = vunpack.c.h.b16 %v4192
        %v4394 = vunpack.c.l.b16 %v4202
        %v4395 = vunpack.c.h.b16 %v4202
        %v4396 = vunpack.c.l.b16 %v4212
        %v4397 = vunpack.c.h.b16 %v4212
        %v4398 = vunpack.c.l.b16 %v4226
        %v4399 = vunpack.c.h.b16 %v4226
        %v4400 = vunpack.c.l.b16 %v4240
        %v4401 = vunpack.c.h.b16 %v4240
        %v4402 = vunpack.c.l.b16 %v4250
        %v4403 = vunpack.c.h.b16 %v4250
        %v4404 = vunpack.c.l.b16 %v4260
        %v4405 = vunpack.c.h.b16 %v4260
        %v4406 = vpack.c.b16 %v4394, %v4390
        %v4407 = vpack.c.b16 %v4395, %v4391
        %v4408 = vpack.c.b16 %v4396, %v4392
        %v4409 = vpack.c.b16 %v4397, %v4393
        %v4410 = vpack.c.b16 %v4402, %v4398
        %v4411 = vpack.c.b16 %v4403, %v4399
        %v4412 = vpack.c.b16 %v4404, %v4400
        %v4413 = vpack.c.b16 %v4405, %v4401
        %v4550 = vunpack.c.l.b16 %v4262
        %v4551 = vunpack.c.h.b16 %v4262
        %v4552 = vunpack.c.l.b16 %v4263
        %v4553 = vunpack.c.h.b16 %v4263
        %v4554 = vunpack.c.l.b16 %v4264
        %v4555 = vunpack.c.h.b16 %v4264
        %v4556 = vunpack.c.l.b16 %v4265
        %v4557 = vunpack.c.h.b16 %v4265
        %v4558 = vunpack.c.l.b16 %v4266
        %v4559 = vunpack.c.h.b16 %v4266
        %v4560 = vunpack.c.l.b16 %v4267
        %v4561 = vunpack.c.h.b16 %v4267
        %v4562 = vunpack.c.l.b16 %v4268
        %v4563 = vunpack.c.h.b16 %v4268
        %v4564 = vunpack.c.l.b16 %v4269
        %v4565 = vunpack.c.h.b16 %v4269
        %v4566 = vunpack.c.l.b16 %v4270
        %v4567 = vunpack.c.h.b16 %v4270
        %v4568 = vunpack.c.l.b16 %v4271
        %v4569 = vunpack.c.h.b16 %v4271
        %v4570 = vunpack.c.l.b16 %v4272
        %v4571 = vunpack.c.h.b16 %v4272
        %v4572 = vunpack.c.l.b16 %v4273
        %v4573 = vunpack.c.h.b16 %v4273
        %v4574 = vunpack.c.l.b16 %v4274
        %v4575 = vunpack.c.h.b16 %v4274
        %v4576 = vunpack.c.l.b16 %v4275
        %v4577 = vunpack.c.h.b16 %v4275
        %v4578 = vunpack.c.l.b16 %v4276
        %v4579 = vunpack.c.h.b16 %v4276
        %v4580 = vunpack.c.l.b16 %v4277
        %v4581 = vunpack.c.h.b16 %v4277
        %v4582 = vunpack.c.l.b16 %v4278
        %v4583 = vunpack.c.h.b16 %v4278
        %v4584 = vunpack.c.l.b16 %v4279
        %v4585 = vunpack.c.h.b16 %v4279
        %v4586 = vunpack.c.l.b16 %v4280
        %v4587 = vunpack.c.h.b16 %v4280
        %v4588 = vunpack.c.l.b16 %v4281
        %v4589 = vunpack.c.h.b16 %v4281
        %v4590 = vunpack.c.l.b16 %v4282
        %v4591 = vunpack.c.h.b16 %v4282
        %v4592 = vunpack.c.l.b16 %v4283
        %v4593 = vunpack.c.h.b16 %v4283
        %v4594 = vunpack.c.l.b16 %v4284
        %v4595 = vunpack.c.h.b16 %v4284
        %v4596 = vunpack.c.l.b16 %v4285
        %v4597 = vunpack.c.h.b16 %v4285
        %v4598 = vunpack.c.l.b16 %v4286
        %v4599 = vunpack.c.h.b16 %v4286
        %v4600 = vunpack.c.l.b16 %v4287
        %v4601 = vunpack.c.h.b16 %v4287
        %v4602 = vunpack.c.l.b16 %v4288
        %v4603 = vunpack.c.h.b16 %v4288
        %v4604 = vunpack.c.l.b16 %v4289
        %v4605 = vunpack.c.h.b16 %v4289
        %v4606 = vunpack.c.l.b16 %v4290
        %v4607 = vunpack.c.h.b16 %v4290
        %v4608 = vunpack.c.l.b16 %v4291
        %v4609 = vunpack.c.h.b16 %v4291
        %v4610 = vunpack.c.l.b16 %v4292
        %v4611 = vunpack.c.h.b16 %v4292
        %v4612 = vunpack.c.l.b16 %v4293
        %v4613 = vunpack.c.h.b16 %v4293
        %v4614 = vunpack.c.l.b16 %v4294
        %v4615 = vunpack.c.h.b16 %v4294
        %v4616 = vunpack.c.l.b16 %v4295
        %v4617 = vunpack.c.h.b16 %v4295
        %v4618 = vunpack.c.l.b16 %v4296
        %v4619 = vunpack.c.h.b16 %v4296
        %v4620 = vunpack.c.l.b16 %v4297
        %v4621 = vunpack.c.h.b16 %v4297
        %v4622 = vunpack.c.l.b16 %v4298
        %v4623 = vunpack.c.h.b16 %v4298
        %v4624 = vunpack.c.l.b16 %v4299
        %v4625 = vunpack.c.h.b16 %v4299
        %v4626 = vunpack.c.l.b16 %v4300
        %v4627 = vunpack.c.h.b16 %v4300
        %v4628 = vunpack.c.l.b16 %v4301
        %v4629 = vunpack.c.h.b16 %v4301
        %v4630 = vunpack.c.l.b16 %v4302
        %v4631 = vunpack.c.h.b16 %v4302
        %v4632 = vunpack.c.l.b16 %v4303
        %v4633 = vunpack.c.h.b16 %v4303
        %v4634 = vunpack.c.l.b16 %v4304
        %v4635 = vunpack.c.h.b16 %v4304
        %v4636 = vunpack.c.l.b16 %v4305
        %v4637 = vunpack.c.h.b16 %v4305
        %v4638 = vunpack.c.l.b16 %v4306
        %v4639 = vunpack.c.h.b16 %v4306
        %v4640 = vunpack.c.l.b16 %v4307
        %v4641 = vunpack.c.h.b16 %v4307
        %v4642 = vunpack.c.l.b16 %v4308
        %v4643 = vunpack.c.h.b16 %v4308
        %v4644 = vunpack.c.l.b16 %v4309
        %v4645 = vunpack.c.h.b16 %v4309
        %v4646 = vunpack.c.l.b16 %v4310
        %v4647 = vunpack.c.h.b16 %v4310
        %v4648 = vunpack.c.l.b16 %v4311
        %v4649 = vunpack.c.h.b16 %v4311
        %v4650 = vunpack.c.l.b16 %v4312
        %v4651 = vunpack.c.h.b16 %v4312
        %v4652 = vunpack.c.l.b16 %v4313
        %v4653 = vunpack.c.h.b16 %v4313
        %v4654 = vunpack.c.l.b16 %v4314
        %v4655 = vunpack.c.h.b16 %v4314
        %v4656 = vunpack.c.l.b16 %v4315
        %v4657 = vunpack.c.h.b16 %v4315
        %v4658 = vunpack.c.l.b16 %v4316
        %v4659 = vunpack.c.h.b16 %v4316
        %v4660 = vunpack.c.l.b16 %v4317
        %v4661 = vunpack.c.h.b16 %v4317
        %v4662 = vunpack.c.l.b16 %v4318
        %v4663 = vunpack.c.h.b16 %v4318
        %v4664 = vunpack.c.l.b16 %v4319
        %v4665 = vunpack.c.h.b16 %v4319
        %v4666 = vunpack.c.l.b16 %v4320
        %v4667 = vunpack.c.h.b16 %v4320
        %v4668 = vunpack.c.l.b16 %v4321
        %v4669 = vunpack.c.h.b16 %v4321
        %v4670 = vunpack.c.l.b16 %v4322
        %v4671 = vunpack.c.h.b16 %v4322
        %v4672 = vunpack.c.l.b16 %v4323
        %v4673 = vunpack.c.h.b16 %v4323
        %v4674 = vunpack.c.l.b16 %v4324
        %v4675 = vunpack.c.h.b16 %v4324
        %v4676 = vunpack.c.l.b16 %v4325
        %v4677 = vunpack.c.h.b16 %v4325
        %v4678 = vunpack.c.l.b16 %v4326
        %v4679 = vunpack.c.h.b16 %v4326
        %v4680 = vunpack.c.l.b16 %v4327
        %v4681 = vunpack.c.h.b16 %v4327
        %v4682 = vunpack.c.l.b16 %v4328
        %v4683 = vunpack.c.h.b16 %v4328
        %v4684 = vunpack.c.l.b16 %v4329
        %v4685 = vunpack.c.h.b16 %v4329
        %v4686 = vunpack.c.l.b16 %v4330
        %v4687 = vunpack.c.h.b16 %v4330
        %v4688 = vunpack.c.l.b16 %v4331
        %v4689 = vunpack.c.h.b16 %v4331
        %v4690 = vunpack.c.l.b16 %v4332
        %v4691 = vunpack.c.h.b16 %v4332
        %v4692 = vunpack.c.l.b16 %v4333
        %v4693 = vunpack.c.h.b16 %v4333
        %v4694 = vunpack.c.l.b16 %v4334
        %v4695 = vunpack.c.h.b16 %v4334
        %v4696 = vunpack.c.l.b16 %v4335
        %v4697 = vunpack.c.h.b16 %v4335
        %v4698 = vunpack.c.l.b16 %v4336
        %v4699 = vunpack.c.h.b16 %v4336
        %v4700 = vunpack.c.l.b16 %v4337
        %v4701 = vunpack.c.h.b16 %v4337
        %v4702 = vunpack.c.l.b16 %v4338
        %v4703 = vunpack.c.h.b16 %v4338
        %v4704 = vunpack.c.l.b16 %v4339
        %v4705 = vunpack.c.h.b16 %v4339
        %v4706 = vunpack.c.l.b16 %v4340
        %v4707 = vunpack.c.h.b16 %v4340
        %v4708 = vunpack.c.l.b16 %v4341
        %v4709 = vunpack.c.h.b16 %v4341
        %v4710 = vunpack.c.l.b16 %v4342
        %v4711 = vunpack.c.h.b16 %v4342
        %v4712 = vunpack.c.l.b16 %v4343
        %v4713 = vunpack.c.h.b16 %v4343
        %v4714 = vunpack.c.l.b16 %v4344
        %v4715 = vunpack.c.h.b16 %v4344
        %v4716 = vunpack.c.l.b16 %v4345
        %v4717 = vunpack.c.h.b16 %v4345
        %v4718 = vunpack.c.l.b16 %v4346
        %v4719 = vunpack.c.h.b16 %v4346
        %v4720 = vunpack.c.l.b16 %v4347
        %v4721 = vunpack.c.h.b16 %v4347
        %v4722 = vunpack.c.l.b16 %v4348
        %v4723 = vunpack.c.h.b16 %v4348
        %v4724 = vunpack.c.l.b16 %v4349
        %v4725 = vunpack.c.h.b16 %v4349
        %v4726 = vunpack.c.l.b16 %v4350
        %v4727 = vunpack.c.h.b16 %v4350
        %v4728 = vunpack.c.l.b16 %v4351
        %v4729 = vunpack.c.h.b16 %v4351
        %v4730 = vunpack.c.l.b16 %v4352
        %v4731 = vunpack.c.h.b16 %v4352
        %v4732 = vunpack.c.l.b16 %v4353
        %v4733 = vunpack.c.h.b16 %v4353
        %v4734 = vunpack.c.l.b16 %v4354
        %v4735 = vunpack.c.h.b16 %v4354
        %v4736 = vunpack.c.l.b16 %v4355
        %v4737 = vunpack.c.h.b16 %v4355
        %v4738 = vunpack.c.l.b16 %v4356
        %v4739 = vunpack.c.h.b16 %v4356
        %v4740 = vunpack.c.l.b16 %v4357
        %v4741 = vunpack.c.h.b16 %v4357
        %v4742 = vunpack.c.l.b16 %v4358
        %v4743 = vunpack.c.h.b16 %v4358
        %v4744 = vunpack.c.l.b16 %v4359
        %v4745 = vunpack.c.h.b16 %v4359
        %v4746 = vunpack.c.l.b16 %v4360
        %v4747 = vunpack.c.h.b16 %v4360
        %v4748 = vunpack.c.l.b16 %v4361
        %v4749 = vunpack.c.h.b16 %v4361
        %v4750 = vunpack.c.l.b16 %v4362
        %v4751 = vunpack.c.h.b16 %v4362
        %v4752 = vunpack.c.l.b16 %v4363
        %v4753 = vunpack.c.h.b16 %v4363
        %v4754 = vunpack.c.l.b16 %v4364
        %v4755 = vunpack.c.h.b16 %v4364
        %v4756 = vunpack.c.l.b16 %v4365
        %v4757 = vunpack.c.h.b16 %v4365
        %v4758 = vunpack.c.l.b16 %v4366
        %v4759 = vunpack.c.h.b16 %v4366
        %v4760 = vunpack.c.l.b16 %v4367
        %v4761 = vunpack.c.h.b16 %v4367
        %v4762 = vunpack.c.l.b16 %v4368
        %v4763 = vunpack.c.h.b16 %v4368
        %v4764 = vunpack.c.l.b16 %v4369
        %v4765 = vunpack.c.h.b16 %v4369
        %v4766 = vunpack.c.l.b16 %v4370
        %v4767 = vunpack.c.h.b16 %v4370
        %v4768 = vunpack.c.l.b16 %v4371
        %v4769 = vunpack.c.h.b16 %v4371
        %v4770 = vunpack.c.l.b16 %v4372
        %v4771 = vunpack.c.h.b16 %v4372
        %v4772 = vunpack.c.l.b16 %v4373
        %v4773 = vunpack.c.h.b16 %v4373
        %v4774 = vunpack.c.l.b16 %v4374
        %v4775 = vunpack.c.h.b16 %v4374
        %v4776 = vunpack.c.l.b16 %v4375
        %v4777 = vunpack.c.h.b16 %v4375
        %v4778 = vunpack.c.l.b16 %v4376
        %v4779 = vunpack.c.h.b16 %v4376
        %v4780 = vunpack.c.l.b16 %v4377
        %v4781 = vunpack.c.h.b16 %v4377
        %v4782 = vunpack.c.l.b16 %v4378
        %v4783 = vunpack.c.h.b16 %v4378
        %v4784 = vunpack.c.l.b16 %v4379
        %v4785 = vunpack.c.h.b16 %v4379
        %v4786 = vunpack.c.l.b16 %v4380
        %v4787 = vunpack.c.h.b16 %v4380
        %v4788 = vunpack.c.l.b16 %v4381
        %v4789 = vunpack.c.h.b16 %v4381
        %v4790 = vunpack.c.l.b16 %v4382
        %v4791 = vunpack.c.h.b16 %v4382
        %v4792 = vunpack.c.l.b16 %v4383
        %v4793 = vunpack.c.h.b16 %v4383
        %v4794 = vunpack.c.l.b16 %v4384
        %v4795 = vunpack.c.h.b16 %v4384
        %v4796 = vunpack.c.l.b16 %v4385
        %v4797 = vunpack.c.h.b16 %v4385
        %v4798 = vunpack.c.l.b16 %v4386
        %v4799 = vunpack.c.h.b16 %v4386
        %v4800 = vunpack.c.l.b16 %v4387
        %v4801 = vunpack.c.h.b16 %v4387
        %v4802 = vunpack.c.l.b16 %v4388
        %v4803 = vunpack.c.h.b16 %v4388
        %v4804 = vunpack.c.l.b16 %v4389
        %v4805 = vunpack.c.h.b16 %v4389
        %v4806 = vpack.c.b16 %v4554, %v4550
        %v4807 = vpack.c.b16 %v4555, %v4551
        %v4808 = vpack.c.b16 %v4556, %v4552
        %v4809 = vpack.c.b16 %v4557, %v4553
        %v4810 = vpack.c.b16 %v4562, %v4558
        %v4811 = vpack.c.b16 %v4563, %v4559
        %v4812 = vpack.c.b16 %v4564, %v4560
        %v4813 = vpack.c.b16 %v4565, %v4561
        %v4814 = vpack.c.b16 %v4570, %v4566
        %v4815 = vpack.c.b16 %v4571, %v4567
        %v4816 = vpack.c.b16 %v4572, %v4568
        %v4817 = vpack.c.b16 %v4573, %v4569
        %v4818 = vpack.c.b16 %v4578, %v4574
        %v4819 = vpack.c.b16 %v4579, %v4575
        %v4820 = vpack.c.b16 %v4580, %v4576
        %v4821 = vpack.c.b16 %v4581, %v4577
        %v4822 = vpack.c.b16 %v4586, %v4582
        %v4823 = vpack.c.b16 %v4587, %v4583
        %v4824 = vpack.c.b16 %v4588, %v4584
        %v4825 = vpack.c.b16 %v4589, %v4585
        %v4826 = vpack.c.b16 %v4594, %v4590
        %v4827 = vpack.c.b16 %v4595, %v4591
        %v4828 = vpack.c.b16 %v4596, %v4592
        %v4829 = vpack.c.b16 %v4597, %v4593
        %v4830 = vpack.c.b16 %v4602, %v4598
        %v4831 = vpack.c.b16 %v4603, %v4599
        %v4832 = vpack.c.b16 %v4604, %v4600
        %v4833 = vpack.c.b16 %v4605, %v4601
        %v4834 = vpack.c.b16 %v4610, %v4606
        %v4835 = vpack.c.b16 %v4611, %v4607
        %v4836 = vpack.c.b16 %v4612, %v4608
        %v4837 = vpack.c.b16 %v4613, %v4609
        %v4838 = vpack.c.b16 %v4618, %v4614
        %v4839 = vpack.c.b16 %v4619, %v4615
        %v4840 = vpack.c.b16 %v4620, %v4616
        %v4841 = vpack.c.b16 %v4621, %v4617
        %v4842 = vpack.c.b16 %v4626, %v4622
        %v4843 = vpack.c.b16 %v4627, %v4623
        %v4844 = vpack.c.b16 %v4628, %v4624
        %v4845 = vpack.c.b16 %v4629, %v4625
        %v4846 = vpack.c.b16 %v4634, %v4630
        %v4847 = vpack.c.b16 %v4635, %v4631
        %v4848 = vpack.c.b16 %v4636, %v4632
        %v4849 = vpack.c.b16 %v4637, %v4633
        %v4850 = vpack.c.b16 %v4642, %v4638
        %v4851 = vpack.c.b16 %v4643, %v4639
        %v4852 = vpack.c.b16 %v4644, %v4640
        %v4853 = vpack.c.b16 %v4645, %v4641
        %v4854 = vpack.c.b16 %v4650, %v4646
        %v4855 = vpack.c.b16 %v4651, %v4647
        %v4856 = vpack.c.b16 %v4652, %v4648
        %v4857 = vpack.c.b16 %v4653, %v4649
        %v4858 = vpack.c.b16 %v4658, %v4654
        %v4859 = vpack.c.b16 %v4659, %v4655
        %v4860 = vpack.c.b16 %v4660, %v4656
        %v4861 = vpack.c.b16 %v4661, %v4657
        %v4862 = vpack.c.b16 %v4666, %v4662
        %v4863 = vpack.c.b16 %v4667, %v4663
        %v4864 = vpack.c.b16 %v4668, %v4664
        %v4865 = vpack.c.b16 %v4669, %v4665
        %v4866 = vpack.c.b16 %v4674, %v4670
        %v4867 = vpack.c.b16 %v4675, %v4671
        %v4868 = vpack.c.b16 %v4676, %v4672
        %v4869 = vpack.c.b16 %v4677, %v4673
        %v4870 = vpack.c.b16 %v4682, %v4678
        %v4871 = vpack.c.b16 %v4683, %v4679
        %v4872 = vpack.c.b16 %v4684, %v4680
        %v4873 = vpack.c.b16 %v4685, %v4681
        %v4874 = vpack.c.b16 %v4690, %v4686
        %v4875 = vpack.c.b16 %v4691, %v4687
        %v4876 = vpack.c.b16 %v4692, %v4688
        %v4877 = vpack.c.b16 %v4693, %v4689
        %v4878 = vpack.c.b16 %v4698, %v4694
        %v4879 = vpack.c.b16 %v4699, %v4695
        %v4880 = vpack.c.b16 %v4700, %v4696
        %v4881 = vpack.c.b16 %v4701, %v4697
        %v4882 = vpack.c.b16 %v4706, %v4702
        %v4883 = vpack.c.b16 %v4707, %v4703
        %v4884 = vpack.c.b16 %v4708, %v4704
        %v4885 = vpack.c.b16 %v4709, %v4705
        %v4886 = vpack.c.b16 %v4714, %v4710
        %v4887 = vpack.c.b16 %v4715, %v4711
        %v4888 = vpack.c.b16 %v4716, %v4712
        %v4889 = vpack.c.b16 %v4717, %v4713
        %v4890 = vpack.c.b16 %v4722, %v4718
        %v4891 = vpack.c.b16 %v4723, %v4719
        %v4892 = vpack.c.b16 %v4724, %v4720
        %v4893 = vpack.c.b16 %v4725, %v4721
        %v4894 = vpack.c.b16 %v4730, %v4726
        %v4895 = vpack.c.b16 %v4731, %v4727
        %v4896 = vpack.c.b16 %v4732, %v4728
        %v4897 = vpack.c.b16 %v4733, %v4729
        %v4898 = vpack.c.b16 %v4738, %v4734
        %v4899 = vpack.c.b16 %v4739, %v4735
        %v4900 = vpack.c.b16 %v4740, %v4736
        %v4901 = vpack.c.b16 %v4741, %v4737
        %v4902 = vpack.c.b16 %v4746, %v4742
        %v4903 = vpack.c.b16 %v4747, %v4743
        %v4904 = vpack.c.b16 %v4748, %v4744
        %v4905 = vpack.c.b16 %v4749, %v4745
        %v4906 = vpack.c.b16 %v4754, %v4750
        %v4907 = vpack.c.b16 %v4755, %v4751
        %v4908 = vpack.c.b16 %v4756, %v4752
        %v4909 = vpack.c.b16 %v4757, %v4753
        %v4910 = vpack.c.b16 %v4762, %v4758
        %v4911 = vpack.c.b16 %v4763, %v4759
        %v4912 = vpack.c.b16 %v4764, %v4760
        %v4913 = vpack.c.b16 %v4765, %v4761
        %v4914 = vpack.c.b16 %v4770, %v4766
        %v4915 = vpack.c.b16 %v4771, %v4767
        %v4916 = vpack.c.b16 %v4772, %v4768
        %v4917 = vpack.c.b16 %v4773, %v4769
        %v4918 = vpack.c.b16 %v4778, %v4774
        %v4919 = vpack.c.b16 %v4779, %v4775
        %v4920 = vpack.c.b16 %v4780, %v4776
        %v4921 = vpack.c.b16 %v4781, %v4777
        %v4922 = vpack.c.b16 %v4786, %v4782
        %v4923 = vpack.c.b16 %v4787, %v4783
        %v4924 = vpack.c.b16 %v4788, %v4784
        %v4925 = vpack.c.b16 %v4789, %v4785
        %v4926 = vpack.c.b16 %v4794, %v4790
        %v4927 = vpack.c.b16 %v4795, %v4791
        %v4928 = vpack.c.b16 %v4796, %v4792
        %v4929 = vpack.c.b16 %v4797, %v4793
        %v4930 = vpack.c.b16 %v4802, %v4798
        %v4931 = vpack.c.b16 %v4803, %v4799
        %v4932 = vpack.c.b16 %v4804, %v4800
        %v4933 = vpack.c.b16 %v4805, %v4801
        %5062 = vmatprep.subr.bf16.mxu0 %v4807
        %5063 = vmatpush1.bf16.msra.mxu0 %v4806
        %5064 = vmatprep.subr.bf16.mxu0 %v4811
        %5065 = vmatpush1.bf16.msra.mxu0 %v4810
        %5066 = vmatprep.subr.bf16.mxu0 %v4815
        %5067 = vmatpush1.bf16.msra.mxu0 %v4814
        %5068 = vmatprep.subr.bf16.mxu0 %v4819
        %5069 = vmatpush1.bf16.msra.mxu0 %v4818
        %5070 = vmatprep.subr.bf16.mxu0 %v4823
        %5071 = vmatpush1.bf16.msra.mxu0 %v4822
        %5072 = vmatprep.subr.bf16.mxu0 %v4827
        %5073 = vmatpush1.bf16.msra.mxu0 %v4826
        %5074 = vmatprep.subr.bf16.mxu0 %v4831
        %5075 = vmatpush1.bf16.msra.mxu0 %v4830
        %5076 = vmatprep.subr.bf16.mxu0 %v4835
        %5077 = vmatpush1.bf16.msra.mxu0 %v4834
        %5078 = vmatprep.subr.bf16.mxu0 %v4839
        %5079 = vmatpush1.bf16.msra.mxu0 %v4838
        %5080 = vmatprep.subr.bf16.mxu0 %v4843
        %5081 = vmatpush1.bf16.msra.mxu0 %v4842
        %5082 = vmatprep.subr.bf16.mxu0 %v4847
        %5083 = vmatpush1.bf16.msra.mxu0 %v4846
        %5084 = vmatprep.subr.bf16.mxu0 %v4851
        %5085 = vmatpush1.bf16.msra.mxu0 %v4850
        %5086 = vmatprep.subr.bf16.mxu0 %v4855
        %5087 = vmatpush1.bf16.msra.mxu0 %v4854
        %5088 = vmatprep.subr.bf16.mxu0 %v4859
        %5089 = vmatpush1.bf16.msra.mxu0 %v4858
        %5090 = vmatprep.subr.bf16.mxu0 %v4863
        %5091 = vmatpush1.bf16.msra.mxu0 %v4862
        %5092 = vmatprep.subr.bf16.mxu0 %v4867
        %5093 = vmatpush1.bf16.msra.mxu0 %v4866
        %5094 = vmatprep.mubr.bf16.mxu0 %v4407
        %5095 = vmatmul.mubr.bf16.gmra.mrb[0].mxu0 %v4406
        %v5096 = vpop.f32.mrb[0].mxu0
        %v5097 = vadd.f32 0.0, %v5096
        %v5098 = vpop.f32.mrb[0].mxu0
        %v5099 = vadd.f32 0.0, %v5098
        %v5100 = vpop.f32.mrb[0].mxu0
        %v5101 = vadd.f32 0.0, %v5100
        %v5102 = vpop.f32.mrb[0].mxu0
        %v5103 = vadd.f32 0.0, %v5102
        %5104 = vmatprep.mubr.bf16.mxu0 %v4411
        %5105 = vmatmul.mubr.bf16.gmra.mrb[0].mxu0 %v4410
        %v5106 = vpop.f32.mrb[0].mxu0
        %v5107 = vadd.f32 0.0, %v5106
        %v5108 = vpop.f32.mrb[0].mxu0
        %v5109 = vadd.f32 0.0, %v5108
        %v5110 = vpop.f32.mrb[0].mxu0
        %v5111 = vadd.f32 0.0, %v5110
        %v5112 = vpop.f32.mrb[0].mxu0
        %v5113 = vadd.f32 0.0, %v5112
        %5114 = vdwg.mxu0
        %5115 = vmatprep.subr.bf16.mxu0 %v4871
        %5116 = vmatpush1.bf16.msra.mxu0 %v4870
        %5117 = vmatprep.subr.bf16.mxu0 %v4875
        %5118 = vmatpush1.bf16.msra.mxu0 %v4874
        %5119 = vmatprep.subr.bf16.mxu0 %v4879
        %5120 = vmatpush1.bf16.msra.mxu0 %v4878
        %5121 = vmatprep.subr.bf16.mxu0 %v4883
        %5122 = vmatpush1.bf16.msra.mxu0 %v4882
        %5123 = vmatprep.subr.bf16.mxu0 %v4887
        %5124 = vmatpush1.bf16.msra.mxu0 %v4886
        %5125 = vmatprep.subr.bf16.mxu0 %v4891
        %5126 = vmatpush1.bf16.msra.mxu0 %v4890
        %5127 = vmatprep.subr.bf16.mxu0 %v4895
        %5128 = vmatpush1.bf16.msra.mxu0 %v4894
        %5129 = vmatprep.subr.bf16.mxu0 %v4899
        %5130 = vmatpush1.bf16.msra.mxu0 %v4898
        %5131 = vmatprep.subr.bf16.mxu0 %v4903
        %5132 = vmatpush1.bf16.msra.mxu0 %v4902
        %5133 = vmatprep.subr.bf16.mxu0 %v4907
        %5134 = vmatpush1.bf16.msra.mxu0 %v4906
        %5135 = vmatprep.subr.bf16.mxu0 %v4911
        %5136 = vmatpush1.bf16.msra.mxu0 %v4910
        %5137 = vmatprep.subr.bf16.mxu0 %v4915
        %5138 = vmatpush1.bf16.msra.mxu0 %v4914
        %5139 = vmatprep.subr.bf16.mxu0 %v4919
        %5140 = vmatpush1.bf16.msra.mxu0 %v4918
        %5141 = vmatprep.subr.bf16.mxu0 %v4923
        %5142 = vmatpush1.bf16.msra.mxu0 %v4922
        %5143 = vmatprep.subr.bf16.mxu0 %v4927
        %5144 = vmatpush1.bf16.msra.mxu0 %v4926
        %5145 = vmatprep.subr.bf16.mxu0 %v4931
        %5146 = vmatpush1.bf16.msra.mxu0 %v4930
        %5147 = vmatprep.mubr.bf16.mxu0 %v4409
        %5148 = vmatmul.mubr.bf16.gmra.mrb[0].mxu0 %v4408
        %v5149 = vpop.f32.mrb[0].mxu0
        %v5150 = vadd.f32 %v5097, %v5149
        %v5151 = vpop.f32.mrb[0].mxu0
        %v5152 = vadd.f32 %v5099, %v5151
        %v5153 = vpop.f32.mrb[0].mxu0
        %v5154 = vadd.f32 %v5101, %v5153
        %v5155 = vpop.f32.mrb[0].mxu0
        %v5156 = vadd.f32 %v5103, %v5155
        %5157 = vmatprep.mubr.bf16.mxu0 %v4413
        %5158 = vmatmul.mubr.bf16.gmra.mrb[0].mxu0 %v4412
        %v5159 = vpop.f32.mrb[0].mxu0
        %v5160 = vadd.f32 %v5107, %v5159
        %v5161 = vpop.f32.mrb[0].mxu0
        %v5162 = vadd.f32 %v5109, %v5161
        %v5163 = vpop.f32.mrb[0].mxu0
        %v5164 = vadd.f32 %v5111, %v5163
        %v5165 = vpop.f32.mrb[0].mxu0
        %v5166 = vadd.f32 %v5113, %v5165
        %5167 = vdwg.mxu0
        %5168 = vmatprep.subr.bf16.mxu0 %v4809
        %5169 = vmatpush1.bf16.msra.mxu0 %v4808
        %5170 = vmatprep.subr.bf16.mxu0 %v4813
        %5171 = vmatpush1.bf16.msra.mxu0 %v4812
        %5172 = vmatprep.subr.bf16.mxu0 %v4817
        %5173 = vmatpush1.bf16.msra.mxu0 %v4816
        %5174 = vmatprep.subr.bf16.mxu0 %v4821
        %5175 = vmatpush1.bf16.msra.mxu0 %v4820
        %5176 = vmatprep.subr.bf16.mxu0 %v4825
        %5177 = vmatpush1.bf16.msra.mxu0 %v4824
        %5178 = vmatprep.subr.bf16.mxu0 %v4829
        %5179 = vmatpush1.bf16.msra.mxu0 %v4828
        %5180 = vmatprep.subr.bf16.mxu0 %v4833
        %5181 = vmatpush1.bf16.msra.mxu0 %v4832
        %5182 = vmatprep.subr.bf16.mxu0 %v4837
        %5183 = vmatpush1.bf16.msra.mxu0 %v4836
        %5184 = vmatprep.subr.bf16.mxu0 %v4841
        %5185 = vmatpush1.bf16.msra.mxu0 %v4840
        %5186 = vmatprep.subr.bf16.mxu0 %v4845
        %5187 = vmatpush1.bf16.msra.mxu0 %v4844
        %5188 = vmatprep.subr.bf16.mxu0 %v4849
        %5189 = vmatpush1.bf16.msra.mxu0 %v4848
        %5190 = vmatprep.subr.bf16.mxu0 %v4853
        %5191 = vmatpush1.bf16.msra.mxu0 %v4852
        %5192 = vmatprep.subr.bf16.mxu0 %v4857
        %5193 = vmatpush1.bf16.msra.mxu0 %v4856
        %5194 = vmatprep.subr.bf16.mxu0 %v4861
        %5195 = vmatpush1.bf16.msra.mxu0 %v4860
        %5196 = vmatprep.subr.bf16.mxu0 %v4865
        %5197 = vmatpush1.bf16.msra.mxu0 %v4864
        %5198 = vmatprep.subr.bf16.mxu0 %v4869
        %5199 = vmatpush1.bf16.msra.mxu0 %v4868
        %5200 = vmatprep.mubr.bf16.mxu0 %v4407
        %5201 = vmatmul.mubr.bf16.gmra.mrb[0].mxu0 %v4406
        %v5202 = vpop.f32.mrb[0].mxu0
        %v5203 = vadd.f32 0.0, %v5202
        %v5204 = vpop.f32.mrb[0].mxu0
        %v5205 = vadd.f32 0.0, %v5204
        %v5206 = vpop.f32.mrb[0].mxu0
        %v5207 = vadd.f32 0.0, %v5206
        %v5208 = vpop.f32.mrb[0].mxu0
        %v5209 = vadd.f32 0.0, %v5208
        %5210 = vmatprep.mubr.bf16.mxu0 %v4411
        %5211 = vmatmul.mubr.bf16.gmra.mrb[0].mxu0 %v4410
        %v5212 = vpop.f32.mrb[0].mxu0
        %v5213 = vadd.f32 0.0, %v5212
        %v5214 = vpop.f32.mrb[0].mxu0
        %v5215 = vadd.f32 0.0, %v5214
        %v5216 = vpop.f32.mrb[0].mxu0
        %v5217 = vadd.f32 0.0, %v5216
        %v5218 = vpop.f32.mrb[0].mxu0
        %v5219 = vadd.f32 0.0, %v5218
        %5220 = vdwg.mxu0
        %5221 = vmatprep.subr.bf16.mxu0 %v4873
        %5222 = vmatpush1.bf16.msra.mxu0 %v4872
        %5223 = vmatprep.subr.bf16.mxu0 %v4877
        %5224 = vmatpush1.bf16.msra.mxu0 %v4876
        %5225 = vmatprep.subr.bf16.mxu0 %v4881
        %5226 = vmatpush1.bf16.msra.mxu0 %v4880
        %5227 = vmatprep.subr.bf16.mxu0 %v4885
        %5228 = vmatpush1.bf16.msra.mxu0 %v4884
        %5229 = vmatprep.subr.bf16.mxu0 %v4889
        %5230 = vmatpush1.bf16.msra.mxu0 %v4888
        %5231 = vmatprep.subr.bf16.mxu0 %v4893
        %5232 = vmatpush1.bf16.msra.mxu0 %v4892
        %5233 = vmatprep.subr.bf16.mxu0 %v4897
        %5234 = vmatpush1.bf16.msra.mxu0 %v4896
        %5235 = vmatprep.subr.bf16.mxu0 %v4901
        %5236 = vmatpush1.bf16.msra.mxu0 %v4900
        %5237 = vmatprep.subr.bf16.mxu0 %v4905
        %5238 = vmatpush1.bf16.msra.mxu0 %v4904
        %5239 = vmatprep.subr.bf16.mxu0 %v4909
        %5240 = vmatpush1.bf16.msra.mxu0 %v4908
        %5241 = vmatprep.subr.bf16.mxu0 %v4913
        %5242 = vmatpush1.bf16.msra.mxu0 %v4912
        %5243 = vmatprep.subr.bf16.mxu0 %v4917
        %5244 = vmatpush1.bf16.msra.mxu0 %v4916
        %5245 = vmatprep.subr.bf16.mxu0 %v4921
        %5246 = vmatpush1.bf16.msra.mxu0 %v4920
        %5247 = vmatprep.subr.bf16.mxu0 %v4925
        %5248 = vmatpush1.bf16.msra.mxu0 %v4924
        %5249 = vmatprep.subr.bf16.mxu0 %v4929
        %5250 = vmatpush1.bf16.msra.mxu0 %v4928
        %5251 = vmatprep.subr.bf16.mxu0 %v4933
        %5252 = vmatpush1.bf16.msra.mxu0 %v4932
        %5253 = vmatprep.mubr.bf16.mxu0 %v4409
        %5254 = vmatmul.mubr.bf16.gmra.mrb[0].mxu0 %v4408
        %v5255 = vpop.f32.mrb[0].mxu0
        %v5256 = vadd.f32 %v5203, %v5255
        %v5257 = vpop.f32.mrb[0].mxu0
        %v5258 = vadd.f32 %v5205, %v5257
        %v5259 = vpop.f32.mrb[0].mxu0
        %v5260 = vadd.f32 %v5207, %v5259
        %v5261 = vpop.f32.mrb[0].mxu0
        %v5262 = vadd.f32 %v5209, %v5261
        %5263 = vmatprep.mubr.bf16.mxu0 %v4413
        %5264 = vmatmul.mubr.bf16.gmra.mrb[0].mxu0 %v4412
        %v5265 = vpop.f32.mrb[0].mxu0
        %v5266 = vadd.f32 %v5213, %v5265
        %v5267 = vpop.f32.mrb[0].mxu0
        %v5268 = vadd.f32 %v5215, %v5267
        %v5269 = vpop.f32.mrb[0].mxu0
        %v5270 = vadd.f32 %v5217, %v5269
        %v5271 = vpop.f32.mrb[0].mxu0
        %v5272 = vadd.f32 %v5219, %v5271
        %5273 = vdwg.mxu0
        %v5282 = vunpack.c.l.b16 %v4025
        %v5283 = vunpack.c.h.b16 %v4025
        %v5284 = vunpack.c.l.b16 %v4026
        %v5285 = vunpack.c.h.b16 %v4026
        %v5286 = vunpack.c.l.b16 %v4027
        %v5287 = vunpack.c.h.b16 %v4027
        %v5288 = vunpack.c.l.b16 %v4028
        %v5289 = vunpack.c.h.b16 %v4028
        %v5290 = vunpack.c.l.b16 %v4029
        %v5291 = vunpack.c.h.b16 %v4029
        %v5292 = vunpack.c.l.b16 %v4030
        %v5293 = vunpack.c.h.b16 %v4030
        %v5294 = vunpack.c.l.b16 %v4031
        %v5295 = vunpack.c.h.b16 %v4031
        %v5296 = vunpack.c.l.b16 %v4032
        %v5297 = vunpack.c.h.b16 %v4032
        %v5298 = vpack.c.b16 %v5286, %v5282
        %v5299 = vpack.c.b16 %v5287, %v5283
        %v5300 = vpack.c.b16 %v5288, %v5284
        %v5301 = vpack.c.b16 %v5289, %v5285
        %v5302 = vpack.c.b16 %v5294, %v5290
        %v5303 = vpack.c.b16 %v5295, %v5291
        %v5304 = vpack.c.b16 %v5296, %v5292
        %v5305 = vpack.c.b16 %v5297, %v5293
        %v5442 = vunpack.c.l.b16 %v4033
        %v5443 = vunpack.c.h.b16 %v4033
        %v5444 = vunpack.c.l.b16 %v4034
        %v5445 = vunpack.c.h.b16 %v4034
        %v5446 = vunpack.c.l.b16 %v4035
        %v5447 = vunpack.c.h.b16 %v4035
        %v5448 = vunpack.c.l.b16 %v4036
        %v5449 = vunpack.c.h.b16 %v4036
        %v5450 = vunpack.c.l.b16 %v4037
        %v5451 = vunpack.c.h.b16 %v4037
        %v5452 = vunpack.c.l.b16 %v4038
        %v5453 = vunpack.c.h.b16 %v4038
        %v5454 = vunpack.c.l.b16 %v4039
        %v5455 = vunpack.c.h.b16 %v4039
        %v5456 = vunpack.c.l.b16 %v4040
        %v5457 = vunpack.c.h.b16 %v4040
        %v5458 = vunpack.c.l.b16 %v4041
        %v5459 = vunpack.c.h.b16 %v4041
        %v5460 = vunpack.c.l.b16 %v4042
        %v5461 = vunpack.c.h.b16 %v4042
        %v5462 = vunpack.c.l.b16 %v4043
        %v5463 = vunpack.c.h.b16 %v4043
        %v5464 = vunpack.c.l.b16 %v4044
        %v5465 = vunpack.c.h.b16 %v4044
        %v5466 = vunpack.c.l.b16 %v4045
        %v5467 = vunpack.c.h.b16 %v4045
        %v5468 = vunpack.c.l.b16 %v4046
        %v5469 = vunpack.c.h.b16 %v4046
        %v5470 = vunpack.c.l.b16 %v4047
        %v5471 = vunpack.c.h.b16 %v4047
        %v5472 = vunpack.c.l.b16 %v4048
        %v5473 = vunpack.c.h.b16 %v4048
        %v5474 = vunpack.c.l.b16 %v4049
        %v5475 = vunpack.c.h.b16 %v4049
        %v5476 = vunpack.c.l.b16 %v4050
        %v5477 = vunpack.c.h.b16 %v4050
        %v5478 = vunpack.c.l.b16 %v4051
        %v5479 = vunpack.c.h.b16 %v4051
        %v5480 = vunpack.c.l.b16 %v4052
        %v5481 = vunpack.c.h.b16 %v4052
        %v5482 = vunpack.c.l.b16 %v4053
        %v5483 = vunpack.c.h.b16 %v4053
        %v5484 = vunpack.c.l.b16 %v4054
        %v5485 = vunpack.c.h.b16 %v4054
        %v5486 = vunpack.c.l.b16 %v4055
        %v5487 = vunpack.c.h.b16 %v4055
        %v5488 = vunpack.c.l.b16 %v4056
        %v5489 = vunpack.c.h.b16 %v4056
        %v5490 = vunpack.c.l.b16 %v4057
        %v5491 = vunpack.c.h.b16 %v4057
        %v5492 = vunpack.c.l.b16 %v4058
        %v5493 = vunpack.c.h.b16 %v4058
        %v5494 = vunpack.c.l.b16 %v4059
        %v5495 = vunpack.c.h.b16 %v4059
        %v5496 = vunpack.c.l.b16 %v4060
        %v5497 = vunpack.c.h.b16 %v4060
        %v5498 = vunpack.c.l.b16 %v4061
        %v5499 = vunpack.c.h.b16 %v4061
        %v5500 = vunpack.c.l.b16 %v4062
        %v5501 = vunpack.c.h.b16 %v4062
        %v5502 = vunpack.c.l.b16 %v4063
        %v5503 = vunpack.c.h.b16 %v4063
        %v5504 = vunpack.c.l.b16 %v4064
        %v5505 = vunpack.c.h.b16 %v4064
        %v5506 = vunpack.c.l.b16 %v4065
        %v5507 = vunpack.c.h.b16 %v4065
        %v5508 = vunpack.c.l.b16 %v4066
        %v5509 = vunpack.c.h.b16 %v4066
        %v5510 = vunpack.c.l.b16 %v4067
        %v5511 = vunpack.c.h.b16 %v4067
        %v5512 = vunpack.c.l.b16 %v4068
        %v5513 = vunpack.c.h.b16 %v4068
        %v5514 = vunpack.c.l.b16 %v4069
        %v5515 = vunpack.c.h.b16 %v4069
        %v5516 = vunpack.c.l.b16 %v4070
        %v5517 = vunpack.c.h.b16 %v4070
        %v5518 = vunpack.c.l.b16 %v4071
        %v5519 = vunpack.c.h.b16 %v4071
        %v5520 = vunpack.c.l.b16 %v4072
        %v5521 = vunpack.c.h.b16 %v4072
        %v5522 = vunpack.c.l.b16 %v4073
        %v5523 = vunpack.c.h.b16 %v4073
        %v5524 = vunpack.c.l.b16 %v4074
        %v5525 = vunpack.c.h.b16 %v4074
        %v5526 = vunpack.c.l.b16 %v4075
        %v5527 = vunpack.c.h.b16 %v4075
        %v5528 = vunpack.c.l.b16 %v4076
        %v5529 = vunpack.c.h.b16 %v4076
        %v5530 = vunpack.c.l.b16 %v4077
        %v5531 = vunpack.c.h.b16 %v4077
        %v5532 = vunpack.c.l.b16 %v4078
        %v5533 = vunpack.c.h.b16 %v4078
        %v5534 = vunpack.c.l.b16 %v4079
        %v5535 = vunpack.c.h.b16 %v4079
        %v5536 = vunpack.c.l.b16 %v4080
        %v5537 = vunpack.c.h.b16 %v4080
        %v5538 = vunpack.c.l.b16 %v4081
        %v5539 = vunpack.c.h.b16 %v4081
        %v5540 = vunpack.c.l.b16 %v4082
        %v5541 = vunpack.c.h.b16 %v4082
        %v5542 = vunpack.c.l.b16 %v4083
        %v5543 = vunpack.c.h.b16 %v4083
        %v5544 = vunpack.c.l.b16 %v4084
        %v5545 = vunpack.c.h.b16 %v4084
        %v5546 = vunpack.c.l.b16 %v4085
        %v5547 = vunpack.c.h.b16 %v4085
        %v5548 = vunpack.c.l.b16 %v4086
        %v5549 = vunpack.c.h.b16 %v4086
        %v5550 = vunpack.c.l.b16 %v4087
        %v5551 = vunpack.c.h.b16 %v4087
        %v5552 = vunpack.c.l.b16 %v4088
        %v5553 = vunpack.c.h.b16 %v4088
        %v5554 = vunpack.c.l.b16 %v4089
        %v5555 = vunpack.c.h.b16 %v4089
        %v5556 = vunpack.c.l.b16 %v4090
        %v5557 = vunpack.c.h.b16 %v4090
        %v5558 = vunpack.c.l.b16 %v4091
        %v5559 = vunpack.c.h.b16 %v4091
        %v5560 = vunpack.c.l.b16 %v4092
        %v5561 = vunpack.c.h.b16 %v4092
        %v5562 = vunpack.c.l.b16 %v4093
        %v5563 = vunpack.c.h.b16 %v4093
        %v5564 = vunpack.c.l.b16 %v4094
        %v5565 = vunpack.c.h.b16 %v4094
        %v5566 = vunpack.c.l.b16 %v4095
        %v5567 = vunpack.c.h.b16 %v4095
        %v5568 = vunpack.c.l.b16 %v4096
        %v5569 = vunpack.c.h.b16 %v4096
        %v5570 = vunpack.c.l.b16 %v4097
        %v5571 = vunpack.c.h.b16 %v4097
        %v5572 = vunpack.c.l.b16 %v4098
        %v5573 = vunpack.c.h.b16 %v4098
        %v5574 = vunpack.c.l.b16 %v4099
        %v5575 = vunpack.c.h.b16 %v4099
        %v5576 = vunpack.c.l.b16 %v4100
        %v5577 = vunpack.c.h.b16 %v4100
        %v5578 = vunpack.c.l.b16 %v4101
        %v5579 = vunpack.c.h.b16 %v4101
        %v5580 = vunpack.c.l.b16 %v4102
        %v5581 = vunpack.c.h.b16 %v4102
        %v5582 = vunpack.c.l.b16 %v4103
        %v5583 = vunpack.c.h.b16 %v4103
        %v5584 = vunpack.c.l.b16 %v4104
        %v5585 = vunpack.c.h.b16 %v4104
        %v5586 = vunpack.c.l.b16 %v4105
        %v5587 = vunpack.c.h.b16 %v4105
        %v5588 = vunpack.c.l.b16 %v4106
        %v5589 = vunpack.c.h.b16 %v4106
        %v5590 = vunpack.c.l.b16 %v4107
        %v5591 = vunpack.c.h.b16 %v4107
        %v5592 = vunpack.c.l.b16 %v4108
        %v5593 = vunpack.c.h.b16 %v4108
        %v5594 = vunpack.c.l.b16 %v4109
        %v5595 = vunpack.c.h.b16 %v4109
        %v5596 = vunpack.c.l.b16 %v4110
        %v5597 = vunpack.c.h.b16 %v4110
        %v5598 = vunpack.c.l.b16 %v4111
        %v5599 = vunpack.c.h.b16 %v4111
        %v5600 = vunpack.c.l.b16 %v4112
        %v5601 = vunpack.c.h.b16 %v4112
        %v5602 = vunpack.c.l.b16 %v4113
        %v5603 = vunpack.c.h.b16 %v4113
        %v5604 = vunpack.c.l.b16 %v4114
        %v5605 = vunpack.c.h.b16 %v4114
        %v5606 = vunpack.c.l.b16 %v4115
        %v5607 = vunpack.c.h.b16 %v4115
        %v5608 = vunpack.c.l.b16 %v4116
        %v5609 = vunpack.c.h.b16 %v4116
        %v5610 = vunpack.c.l.b16 %v4117
        %v5611 = vunpack.c.h.b16 %v4117
        %v5612 = vunpack.c.l.b16 %v4118
        %v5613 = vunpack.c.h.b16 %v4118
        %v5614 = vunpack.c.l.b16 %v4119
        %v5615 = vunpack.c.h.b16 %v4119
        %v5616 = vunpack.c.l.b16 %v4120
        %v5617 = vunpack.c.h.b16 %v4120
        %v5618 = vunpack.c.l.b16 %v4121
        %v5619 = vunpack.c.h.b16 %v4121
        %v5620 = vunpack.c.l.b16 %v4122
        %v5621 = vunpack.c.h.b16 %v4122
        %v5622 = vunpack.c.l.b16 %v4123
        %v5623 = vunpack.c.h.b16 %v4123
        %v5624 = vunpack.c.l.b16 %v4124
        %v5625 = vunpack.c.h.b16 %v4124
        %v5626 = vunpack.c.l.b16 %v4125
        %v5627 = vunpack.c.h.b16 %v4125
        %v5628 = vunpack.c.l.b16 %v4126
        %v5629 = vunpack.c.h.b16 %v4126
        %v5630 = vunpack.c.l.b16 %v4127
        %v5631 = vunpack.c.h.b16 %v4127
        %v5632 = vunpack.c.l.b16 %v4128
        %v5633 = vunpack.c.h.b16 %v4128
        %v5634 = vunpack.c.l.b16 %v4129
        %v5635 = vunpack.c.h.b16 %v4129
        %v5636 = vunpack.c.l.b16 %v4130
        %v5637 = vunpack.c.h.b16 %v4130
        %v5638 = vunpack.c.l.b16 %v4131
        %v5639 = vunpack.c.h.b16 %v4131
        %v5640 = vunpack.c.l.b16 %v4132
        %v5641 = vunpack.c.h.b16 %v4132
        %v5642 = vunpack.c.l.b16 %v4133
        %v5643 = vunpack.c.h.b16 %v4133
        %v5644 = vunpack.c.l.b16 %v4134
        %v5645 = vunpack.c.h.b16 %v4134
        %v5646 = vunpack.c.l.b16 %v4135
        %v5647 = vunpack.c.h.b16 %v4135
        %v5648 = vunpack.c.l.b16 %v4136
        %v5649 = vunpack.c.h.b16 %v4136
        %v5650 = vunpack.c.l.b16 %v4137
        %v5651 = vunpack.c.h.b16 %v4137
        %v5652 = vunpack.c.l.b16 %v4138
        %v5653 = vunpack.c.h.b16 %v4138
        %v5654 = vunpack.c.l.b16 %v4139
        %v5655 = vunpack.c.h.b16 %v4139
        %v5656 = vunpack.c.l.b16 %v4140
        %v5657 = vunpack.c.h.b16 %v4140
        %v5658 = vunpack.c.l.b16 %v4141
        %v5659 = vunpack.c.h.b16 %v4141
        %v5660 = vunpack.c.l.b16 %v4142
        %v5661 = vunpack.c.h.b16 %v4142
        %v5662 = vunpack.c.l.b16 %v4143
        %v5663 = vunpack.c.h.b16 %v4143
        %v5664 = vunpack.c.l.b16 %v4144
        %v5665 = vunpack.c.h.b16 %v4144
        %v5666 = vunpack.c.l.b16 %v4145
        %v5667 = vunpack.c.h.b16 %v4145
        %v5668 = vunpack.c.l.b16 %v4146
        %v5669 = vunpack.c.h.b16 %v4146
        %v5670 = vunpack.c.l.b16 %v4147
        %v5671 = vunpack.c.h.b16 %v4147
        %v5672 = vunpack.c.l.b16 %v4148
        %v5673 = vunpack.c.h.b16 %v4148
        %v5674 = vunpack.c.l.b16 %v4149
        %v5675 = vunpack.c.h.b16 %v4149
        %v5676 = vunpack.c.l.b16 %v4150
        %v5677 = vunpack.c.h.b16 %v4150
        %v5678 = vunpack.c.l.b16 %v4151
        %v5679 = vunpack.c.h.b16 %v4151
        %v5680 = vunpack.c.l.b16 %v4152
        %v5681 = vunpack.c.h.b16 %v4152
        %v5682 = vunpack.c.l.b16 %v4153
        %v5683 = vunpack.c.h.b16 %v4153
        %v5684 = vunpack.c.l.b16 %v4154
        %v5685 = vunpack.c.h.b16 %v4154
        %v5686 = vunpack.c.l.b16 %v4155
        %v5687 = vunpack.c.h.b16 %v4155
        %v5688 = vunpack.c.l.b16 %v4156
        %v5689 = vunpack.c.h.b16 %v4156
        %v5690 = vunpack.c.l.b16 %v4157
        %v5691 = vunpack.c.h.b16 %v4157
        %v5692 = vunpack.c.l.b16 %v4158
        %v5693 = vunpack.c.h.b16 %v4158
        %v5694 = vunpack.c.l.b16 %v4159
        %v5695 = vunpack.c.h.b16 %v4159
        %v5696 = vunpack.c.l.b16 %v4160
        %v5697 = vunpack.c.h.b16 %v4160
        %v5698 = vpack.c.b16 %v5446, %v5442
        %v5699 = vpack.c.b16 %v5447, %v5443
        %v5700 = vpack.c.b16 %v5448, %v5444
        %v5701 = vpack.c.b16 %v5449, %v5445
        %v5702 = vpack.c.b16 %v5454, %v5450
        %v5703 = vpack.c.b16 %v5455, %v5451
        %v5704 = vpack.c.b16 %v5456, %v5452
        %v5705 = vpack.c.b16 %v5457, %v5453
        %v5706 = vpack.c.b16 %v5462, %v5458
        %v5707 = vpack.c.b16 %v5463, %v5459
        %v5708 = vpack.c.b16 %v5464, %v5460
        %v5709 = vpack.c.b16 %v5465, %v5461
        %v5710 = vpack.c.b16 %v5470, %v5466
        %v5711 = vpack.c.b16 %v5471, %v5467
        %v5712 = vpack.c.b16 %v5472, %v5468
        %v5713 = vpack.c.b16 %v5473, %v5469
        %v5714 = vpack.c.b16 %v5478, %v5474
        %v5715 = vpack.c.b16 %v5479, %v5475
        %v5716 = vpack.c.b16 %v5480, %v5476
        %v5717 = vpack.c.b16 %v5481, %v5477
        %v5718 = vpack.c.b16 %v5486, %v5482
        %v5719 = vpack.c.b16 %v5487, %v5483
        %v5720 = vpack.c.b16 %v5488, %v5484
        %v5721 = vpack.c.b16 %v5489, %v5485
        %v5722 = vpack.c.b16 %v5494, %v5490
        %v5723 = vpack.c.b16 %v5495, %v5491
        %v5724 = vpack.c.b16 %v5496, %v5492
        %v5725 = vpack.c.b16 %v5497, %v5493
        %v5726 = vpack.c.b16 %v5502, %v5498
        %v5727 = vpack.c.b16 %v5503, %v5499
        %v5728 = vpack.c.b16 %v5504, %v5500
        %v5729 = vpack.c.b16 %v5505, %v5501
        %v5730 = vpack.c.b16 %v5510, %v5506
        %v5731 = vpack.c.b16 %v5511, %v5507
        %v5732 = vpack.c.b16 %v5512, %v5508
        %v5733 = vpack.c.b16 %v5513, %v5509
        %v5734 = vpack.c.b16 %v5518, %v5514
        %v5735 = vpack.c.b16 %v5519, %v5515
        %v5736 = vpack.c.b16 %v5520, %v5516
        %v5737 = vpack.c.b16 %v5521, %v5517
        %v5738 = vpack.c.b16 %v5526, %v5522
        %v5739 = vpack.c.b16 %v5527, %v5523
        %v5740 = vpack.c.b16 %v5528, %v5524
        %v5741 = vpack.c.b16 %v5529, %v5525
        %v5742 = vpack.c.b16 %v5534, %v5530
        %v5743 = vpack.c.b16 %v5535, %v5531
        %v5744 = vpack.c.b16 %v5536, %v5532
        %v5745 = vpack.c.b16 %v5537, %v5533
        %v5746 = vpack.c.b16 %v5542, %v5538
        %v5747 = vpack.c.b16 %v5543, %v5539
        %v5748 = vpack.c.b16 %v5544, %v5540
        %v5749 = vpack.c.b16 %v5545, %v5541
        %v5750 = vpack.c.b16 %v5550, %v5546
        %v5751 = vpack.c.b16 %v5551, %v5547
        %v5752 = vpack.c.b16 %v5552, %v5548
        %v5753 = vpack.c.b16 %v5553, %v5549
        %v5754 = vpack.c.b16 %v5558, %v5554
        %v5755 = vpack.c.b16 %v5559, %v5555
        %v5756 = vpack.c.b16 %v5560, %v5556
        %v5757 = vpack.c.b16 %v5561, %v5557
        %v5758 = vpack.c.b16 %v5566, %v5562
        %v5759 = vpack.c.b16 %v5567, %v5563
        %v5760 = vpack.c.b16 %v5568, %v5564
        %v5761 = vpack.c.b16 %v5569, %v5565
        %v5762 = vpack.c.b16 %v5574, %v5570
        %v5763 = vpack.c.b16 %v5575, %v5571
        %v5764 = vpack.c.b16 %v5576, %v5572
        %v5765 = vpack.c.b16 %v5577, %v5573
        %v5766 = vpack.c.b16 %v5582, %v5578
        %v5767 = vpack.c.b16 %v5583, %v5579
        %v5768 = vpack.c.b16 %v5584, %v5580
        %v5769 = vpack.c.b16 %v5585, %v5581
        %v5770 = vpack.c.b16 %v5590, %v5586
        %v5771 = vpack.c.b16 %v5591, %v5587
        %v5772 = vpack.c.b16 %v5592, %v5588
        %v5773 = vpack.c.b16 %v5593, %v5589
        %v5774 = vpack.c.b16 %v5598, %v5594
        %v5775 = vpack.c.b16 %v5599, %v5595
        %v5776 = vpack.c.b16 %v5600, %v5596
        %v5777 = vpack.c.b16 %v5601, %v5597
        %v5778 = vpack.c.b16 %v5606, %v5602
        %v5779 = vpack.c.b16 %v5607, %v5603
        %v5780 = vpack.c.b16 %v5608, %v5604
        %v5781 = vpack.c.b16 %v5609, %v5605
        %v5782 = vpack.c.b16 %v5614, %v5610
        %v5783 = vpack.c.b16 %v5615, %v5611
        %v5784 = vpack.c.b16 %v5616, %v5612
        %v5785 = vpack.c.b16 %v5617, %v5613
        %v5786 = vpack.c.b16 %v5622, %v5618
        %v5787 = vpack.c.b16 %v5623, %v5619
        %v5788 = vpack.c.b16 %v5624, %v5620
        %v5789 = vpack.c.b16 %v5625, %v5621
        %v5790 = vpack.c.b16 %v5630, %v5626
        %v5791 = vpack.c.b16 %v5631, %v5627
        %v5792 = vpack.c.b16 %v5632, %v5628
        %v5793 = vpack.c.b16 %v5633, %v5629
        %v5794 = vpack.c.b16 %v5638, %v5634
        %v5795 = vpack.c.b16 %v5639, %v5635
        %v5796 = vpack.c.b16 %v5640, %v5636
        %v5797 = vpack.c.b16 %v5641, %v5637
        %v5798 = vpack.c.b16 %v5646, %v5642
        %v5799 = vpack.c.b16 %v5647, %v5643
        %v5800 = vpack.c.b16 %v5648, %v5644
        %v5801 = vpack.c.b16 %v5649, %v5645
        %v5802 = vpack.c.b16 %v5654, %v5650
        %v5803 = vpack.c.b16 %v5655, %v5651
        %v5804 = vpack.c.b16 %v5656, %v5652
        %v5805 = vpack.c.b16 %v5657, %v5653
        %v5806 = vpack.c.b16 %v5662, %v5658
        %v5807 = vpack.c.b16 %v5663, %v5659
        %v5808 = vpack.c.b16 %v5664, %v5660
        %v5809 = vpack.c.b16 %v5665, %v5661
        %v5810 = vpack.c.b16 %v5670, %v5666
        %v5811 = vpack.c.b16 %v5671, %v5667
        %v5812 = vpack.c.b16 %v5672, %v5668
        %v5813 = vpack.c.b16 %v5673, %v5669
        %v5814 = vpack.c.b16 %v5678, %v5674
        %v5815 = vpack.c.b16 %v5679, %v5675
        %v5816 = vpack.c.b16 %v5680, %v5676
        %v5817 = vpack.c.b16 %v5681, %v5677
        %v5818 = vpack.c.b16 %v5686, %v5682
        %v5819 = vpack.c.b16 %v5687, %v5683
        %v5820 = vpack.c.b16 %v5688, %v5684
        %v5821 = vpack.c.b16 %v5689, %v5685
        %v5822 = vpack.c.b16 %v5694, %v5690
        %v5823 = vpack.c.b16 %v5695, %v5691
        %v5824 = vpack.c.b16 %v5696, %v5692
        %v5825 = vpack.c.b16 %v5697, %v5693
        %5954 = vmatprep.subr.bf16.mxu0 %v5699
        %5955 = vmatpush1.bf16.msra.mxu0 %v5698
        %5956 = vmatprep.subr.bf16.mxu0 %v5703
        %5957 = vmatpush1.bf16.msra.mxu0 %v5702
        %5958 = vmatprep.subr.bf16.mxu0 %v5707
        %5959 = vmatpush1.bf16.msra.mxu0 %v5706
        %5960 = vmatprep.subr.bf16.mxu0 %v5711
        %5961 = vmatpush1.bf16.msra.mxu0 %v5710
        %5962 = vmatprep.subr.bf16.mxu0 %v5715
        %5963 = vmatpush1.bf16.msra.mxu0 %v5714
        %5964 = vmatprep.subr.bf16.mxu0 %v5719
        %5965 = vmatpush1.bf16.msra.mxu0 %v5718
        %5966 = vmatprep.subr.bf16.mxu0 %v5723
        %5967 = vmatpush1.bf16.msra.mxu0 %v5722
        %5968 = vmatprep.subr.bf16.mxu0 %v5727
        %5969 = vmatpush1.bf16.msra.mxu0 %v5726
        %5970 = vmatprep.subr.bf16.mxu0 %v5731
        %5971 = vmatpush1.bf16.msra.mxu0 %v5730
        %5972 = vmatprep.subr.bf16.mxu0 %v5735
        %5973 = vmatpush1.bf16.msra.mxu0 %v5734
        %5974 = vmatprep.subr.bf16.mxu0 %v5739
        %5975 = vmatpush1.bf16.msra.mxu0 %v5738
        %5976 = vmatprep.subr.bf16.mxu0 %v5743
        %5977 = vmatpush1.bf16.msra.mxu0 %v5742
        %5978 = vmatprep.subr.bf16.mxu0 %v5747
        %5979 = vmatpush1.bf16.msra.mxu0 %v5746
        %5980 = vmatprep.subr.bf16.mxu0 %v5751
        %5981 = vmatpush1.bf16.msra.mxu0 %v5750
        %5982 = vmatprep.subr.bf16.mxu0 %v5755
        %5983 = vmatpush1.bf16.msra.mxu0 %v5754
        %5984 = vmatprep.subr.bf16.mxu0 %v5759
        %5985 = vmatpush1.bf16.msra.mxu0 %v5758
        %5986 = vmatprep.mubr.bf16.mxu0 %v5299
        %5987 = vmatmul.mubr.bf16.gmra.mrb[0].mxu0 %v5298
        %v5988 = vpop.f32.mrb[0].mxu0
        %v5989 = vadd.f32 %v5150, %v5988
        %v5990 = vpop.f32.mrb[0].mxu0
        %v5991 = vadd.f32 %v5152, %v5990
        %v5992 = vpop.f32.mrb[0].mxu0
        %v5993 = vadd.f32 %v5154, %v5992
        %v5994 = vpop.f32.mrb[0].mxu0
        %v5995 = vadd.f32 %v5156, %v5994
        %5996 = vmatprep.mubr.bf16.mxu0 %v5303
        %5997 = vmatmul.mubr.bf16.gmra.mrb[0].mxu0 %v5302
        %v5998 = vpop.f32.mrb[0].mxu0
        %v5999 = vadd.f32 %v5160, %v5998
        %v6000 = vpop.f32.mrb[0].mxu0
        %v6001 = vadd.f32 %v5162, %v6000
        %v6002 = vpop.f32.mrb[0].mxu0
        %v6003 = vadd.f32 %v5164, %v6002
        %v6004 = vpop.f32.mrb[0].mxu0
        %v6005 = vadd.f32 %v5166, %v6004
        %6006 = vdwg.mxu0
        %6007 = vmatprep.subr.bf16.mxu0 %v5763
        %6008 = vmatpush1.bf16.msra.mxu0 %v5762
        %6009 = vmatprep.subr.bf16.mxu0 %v5767
        %6010 = vmatpush1.bf16.msra.mxu0 %v5766
        %6011 = vmatprep.subr.bf16.mxu0 %v5771
        %6012 = vmatpush1.bf16.msra.mxu0 %v5770
        %6013 = vmatprep.subr.bf16.mxu0 %v5775
        %6014 = vmatpush1.bf16.msra.mxu0 %v5774
        %6015 = vmatprep.subr.bf16.mxu0 %v5779
        %6016 = vmatpush1.bf16.msra.mxu0 %v5778
        %6017 = vmatprep.subr.bf16.mxu0 %v5783
        %6018 = vmatpush1.bf16.msra.mxu0 %v5782
        %6019 = vmatprep.subr.bf16.mxu0 %v5787
        %6020 = vmatpush1.bf16.msra.mxu0 %v5786
        %6021 = vmatprep.subr.bf16.mxu0 %v5791
        %6022 = vmatpush1.bf16.msra.mxu0 %v5790
        %6023 = vmatprep.subr.bf16.mxu0 %v5795
        %6024 = vmatpush1.bf16.msra.mxu0 %v5794
        %6025 = vmatprep.subr.bf16.mxu0 %v5799
        %6026 = vmatpush1.bf16.msra.mxu0 %v5798
        %6027 = vmatprep.subr.bf16.mxu0 %v5803
        %6028 = vmatpush1.bf16.msra.mxu0 %v5802
        %6029 = vmatprep.subr.bf16.mxu0 %v5807
        %6030 = vmatpush1.bf16.msra.mxu0 %v5806
        %6031 = vmatprep.subr.bf16.mxu0 %v5811
        %6032 = vmatpush1.bf16.msra.mxu0 %v5810
        %6033 = vmatprep.subr.bf16.mxu0 %v5815
        %6034 = vmatpush1.bf16.msra.mxu0 %v5814
        %6035 = vmatprep.subr.bf16.mxu0 %v5819
        %6036 = vmatpush1.bf16.msra.mxu0 %v5818
        %6037 = vmatprep.subr.bf16.mxu0 %v5823
        %6038 = vmatpush1.bf16.msra.mxu0 %v5822
        %6039 = vmatprep.mubr.bf16.mxu0 %v5301
        %6040 = vmatmul.mubr.bf16.gmra.mrb[0].mxu0 %v5300
        %v6041 = vpop.f32.mrb[0].mxu0
        %v6042 = vadd.f32 %v5989, %v6041
        %v6043 = vpop.f32.mrb[0].mxu0
        %v6044 = vadd.f32 %v5991, %v6043
        %v6045 = vpop.f32.mrb[0].mxu0
        %v6046 = vadd.f32 %v5993, %v6045
        %v6047 = vpop.f32.mrb[0].mxu0
        %v6048 = vadd.f32 %v5995, %v6047
        %6049 = vmatprep.mubr.bf16.mxu0 %v5305
        %6050 = vmatmul.mubr.bf16.gmra.mrb[0].mxu0 %v5304
        %v6051 = vpop.f32.mrb[0].mxu0
        %v6052 = vadd.f32 %v5999, %v6051
        %v6053 = vpop.f32.mrb[0].mxu0
        %v6054 = vadd.f32 %v6001, %v6053
        %v6055 = vpop.f32.mrb[0].mxu0
        %v6056 = vadd.f32 %v6003, %v6055
        %v6057 = vpop.f32.mrb[0].mxu0
        %v6058 = vadd.f32 %v6005, %v6057
        %6059 = vdwg.mxu0
        %6060 = vmatprep.subr.bf16.mxu0 %v5701
        %6061 = vmatpush1.bf16.msra.mxu0 %v5700
        %6062 = vmatprep.subr.bf16.mxu0 %v5705
        %6063 = vmatpush1.bf16.msra.mxu0 %v5704
        %6064 = vmatprep.subr.bf16.mxu0 %v5709
        %6065 = vmatpush1.bf16.msra.mxu0 %v5708
        %6066 = vmatprep.subr.bf16.mxu0 %v5713
        %6067 = vmatpush1.bf16.msra.mxu0 %v5712
        %6068 = vmatprep.subr.bf16.mxu0 %v5717
        %6069 = vmatpush1.bf16.msra.mxu0 %v5716
        %6070 = vmatprep.subr.bf16.mxu0 %v5721
        %6071 = vmatpush1.bf16.msra.mxu0 %v5720
        %6072 = vmatprep.subr.bf16.mxu0 %v5725
        %6073 = vmatpush1.bf16.msra.mxu0 %v5724
        %6074 = vmatprep.subr.bf16.mxu0 %v5729
        %6075 = vmatpush1.bf16.msra.mxu0 %v5728
        %6076 = vmatprep.subr.bf16.mxu0 %v5733
        %6077 = vmatpush1.bf16.msra.mxu0 %v5732
        %6078 = vmatprep.subr.bf16.mxu0 %v5737
        %6079 = vmatpush1.bf16.msra.mxu0 %v5736
        %6080 = vmatprep.subr.bf16.mxu0 %v5741
        %6081 = vmatpush1.bf16.msra.mxu0 %v5740
        %6082 = vmatprep.subr.bf16.mxu0 %v5745
        %6083 = vmatpush1.bf16.msra.mxu0 %v5744
        %6084 = vmatprep.subr.bf16.mxu0 %v5749
        %6085 = vmatpush1.bf16.msra.mxu0 %v5748
        %6086 = vmatprep.subr.bf16.mxu0 %v5753
        %6087 = vmatpush1.bf16.msra.mxu0 %v5752
        %6088 = vmatprep.subr.bf16.mxu0 %v5757
        %6089 = vmatpush1.bf16.msra.mxu0 %v5756
        %6090 = vmatprep.subr.bf16.mxu0 %v5761
        %6091 = vmatpush1.bf16.msra.mxu0 %v5760
        %6092 = vmatprep.mubr.bf16.mxu0 %v5299
        %6093 = vmatmul.mubr.bf16.gmra.mrb[0].mxu0 %v5298
        %v6094 = vpop.f32.mrb[0].mxu0
        %v6095 = vadd.f32 %v5256, %v6094
        %v6096 = vpop.f32.mrb[0].mxu0
        %v6097 = vadd.f32 %v5258, %v6096
        %v6098 = vpop.f32.mrb[0].mxu0
        %v6099 = vadd.f32 %v5260, %v6098
        %v6100 = vpop.f32.mrb[0].mxu0
        %v6101 = vadd.f32 %v5262, %v6100
        %6102 = vmatprep.mubr.bf16.mxu0 %v5303
        %6103 = vmatmul.mubr.bf16.gmra.mrb[0].mxu0 %v5302
        %v6104 = vpop.f32.mrb[0].mxu0
        %v6105 = vadd.f32 %v5266, %v6104
        %v6106 = vpop.f32.mrb[0].mxu0
        %v6107 = vadd.f32 %v5268, %v6106
        %v6108 = vpop.f32.mrb[0].mxu0
        %v6109 = vadd.f32 %v5270, %v6108
        %v6110 = vpop.f32.mrb[0].mxu0
        %v6111 = vadd.f32 %v5272, %v6110
        %6112 = vdwg.mxu0
        %6113 = vmatprep.subr.bf16.mxu0 %v5765
        %6114 = vmatpush1.bf16.msra.mxu0 %v5764
        %6115 = vmatprep.subr.bf16.mxu0 %v5769
        %6116 = vmatpush1.bf16.msra.mxu0 %v5768
        %6117 = vmatprep.subr.bf16.mxu0 %v5773
        %6118 = vmatpush1.bf16.msra.mxu0 %v5772
        %6119 = vmatprep.subr.bf16.mxu0 %v5777
        %6120 = vmatpush1.bf16.msra.mxu0 %v5776
        %6121 = vmatprep.subr.bf16.mxu0 %v5781
        %6122 = vmatpush1.bf16.msra.mxu0 %v5780
        %6123 = vmatprep.subr.bf16.mxu0 %v5785
        %6124 = vmatpush1.bf16.msra.mxu0 %v5784
        %6125 = vmatprep.subr.bf16.mxu0 %v5789
        %6126 = vmatpush1.bf16.msra.mxu0 %v5788
        %6127 = vmatprep.subr.bf16.mxu0 %v5793
        %6128 = vmatpush1.bf16.msra.mxu0 %v5792
        %6129 = vmatprep.subr.bf16.mxu0 %v5797
        %6130 = vmatpush1.bf16.msra.mxu0 %v5796
        %6131 = vmatprep.subr.bf16.mxu0 %v5801
        %6132 = vmatpush1.bf16.msra.mxu0 %v5800
        %6133 = vmatprep.subr.bf16.mxu0 %v5805
        %6134 = vmatpush1.bf16.msra.mxu0 %v5804
        %6135 = vmatprep.subr.bf16.mxu0 %v5809
        %6136 = vmatpush1.bf16.msra.mxu0 %v5808
        %6137 = vmatprep.subr.bf16.mxu0 %v5813
        %6138 = vmatpush1.bf16.msra.mxu0 %v5812
        %6139 = vmatprep.subr.bf16.mxu0 %v5817
        %6140 = vmatpush1.bf16.msra.mxu0 %v5816
        %6141 = vmatprep.subr.bf16.mxu0 %v5821
        %6142 = vmatpush1.bf16.msra.mxu0 %v5820
        %6143 = vmatprep.subr.bf16.mxu0 %v5825
        %6144 = vmatpush1.bf16.msra.mxu0 %v5824
        %6145 = vmatprep.mubr.bf16.mxu0 %v5301
        %6146 = vmatmul.mubr.bf16.gmra.mrb[0].mxu0 %v5300
        %v6147 = vpop.f32.mrb[0].mxu0
        %v6148 = vadd.f32 %v6095, %v6147
        %v6149 = vpop.f32.mrb[0].mxu0
        %v6150 = vadd.f32 %v6097, %v6149
        %v6151 = vpop.f32.mrb[0].mxu0
        %v6152 = vadd.f32 %v6099, %v6151
        %v6153 = vpop.f32.mrb[0].mxu0
        %v6154 = vadd.f32 %v6101, %v6153
        %6155 = vmatprep.mubr.bf16.mxu0 %v5305
        %6156 = vmatmul.mubr.bf16.gmra.mrb[0].mxu0 %v5304
        %v6157 = vpop.f32.mrb[0].mxu0
        %v6158 = vadd.f32 %v6105, %v6157
        %v6159 = vpop.f32.mrb[0].mxu0
        %v6160 = vadd.f32 %v6107, %v6159
        %v6161 = vpop.f32.mrb[0].mxu0
        %v6162 = vadd.f32 %v6109, %v6161
        %v6163 = vpop.f32.mrb[0].mxu0
        %v6164 = vadd.f32 %v6111, %v6163
        %6165 = vdwg.mxu0
        %v6166 = vld [vmem:[#allocation2] sm:$0xee]
        %v6167 = vld [vmem:[#allocation2 + $0x8] sm:$0xee]
        %v6168 = vld [vmem:[#allocation2 + $0x30] sm:$0xee]
        %v6169 = vld [vmem:[#allocation2 + $0x38] sm:$0xee]
        %v6178 = vrot.slane %v6166, 5
        %v6179 = vrot.slane %v6178, 4
        %v6180 = vrot.slane %v4027, 5
        %v6181 = vsel %vm2695, %v6179, %v6180
        %v6182 = vrot.slane %v6167, 5
        %v6183 = vrot.slane %v6182, 4
        %v6184 = vrot.slane %v4028, 5
        %v6185 = vsel %vm2695, %v6183, %v6184
        %v6186 = vrot.slane %v6180, 4
        %v6187 = vrot.slane %v4161, 5
        %v6188 = vsel %vm2695, %v6186, %v6187
        %v6189 = vrot.slane %v6184, 4
        %v6190 = vrot.slane %v4162, 5
        %v6191 = vsel %vm2695, %v6189, %v6190
        %v6192 = vrot.slane %v6168, 5
        %v6193 = vrot.slane %v6192, 4
        %v6194 = vrot.slane %v4031, 5
        %v6195 = vsel %vm2695, %v6193, %v6194
        %v6196 = vrot.slane %v6169, 5
        %v6197 = vrot.slane %v6196, 4
        %v6198 = vrot.slane %v4032, 5
        %v6199 = vsel %vm2695, %v6197, %v6198
        %v6200 = vrot.slane %v6194, 4
        %v6201 = vrot.slane %v4163, 5
        %v6202 = vsel %vm2695, %v6200, %v6201
        %v6203 = vrot.slane %v6198, 4
        %v6204 = vrot.slane %v4164, 5
        %v6205 = vsel %vm2695, %v6203, %v6204
        %s6206 = scalar_lea.vmem [#allocation8], 2048
        %v6207 = vld [vmem:[%s6206] sm:$0xff]
        %v6208 = vld [vmem:[%s6206 + $0x8] sm:$0xff]
        %v6209 = vld [vmem:[%s6206 + $0x10] sm:$0xff]
        %v6210 = vld [vmem:[%s6206 + $0x18] sm:$0xff]
        %v6211 = vld [vmem:[%s6206 + $0x20] sm:$0xff]
        %v6212 = vld [vmem:[%s6206 + $0x28] sm:$0xff]
        %v6213 = vld [vmem:[%s6206 + $0x30] sm:$0xff]
        %v6214 = vld [vmem:[%s6206 + $0x38] sm:$0xff]
        %v6215 = vld [vmem:[%s6206 + $0x40] sm:$0xff]
        %v6216 = vld [vmem:[%s6206 + $0x48] sm:$0xff]
        %v6217 = vld [vmem:[%s6206 + $0x50] sm:$0xff]
        %v6218 = vld [vmem:[%s6206 + $0x58] sm:$0xff]
        %v6219 = vld [vmem:[%s6206 + $0x60] sm:$0xff]
        %v6220 = vld [vmem:[%s6206 + $0x68] sm:$0xff]
        %v6221 = vld [vmem:[%s6206 + $0x70] sm:$0xff]
        %v6222 = vld [vmem:[%s6206 + $0x78] sm:$0xff]
        %v6223 = vld [vmem:[%s6206 + $0x80] sm:$0xff]
        %v6224 = vld [vmem:[%s6206 + $0x88] sm:$0xff]
        %v6225 = vld [vmem:[%s6206 + $0x90] sm:$0xff]
        %v6226 = vld [vmem:[%s6206 + $0x98] sm:$0xff]
        %v6227 = vld [vmem:[%s6206 + $0xa0] sm:$0xff]
        %v6228 = vld [vmem:[%s6206 + $0xa8] sm:$0xff]
        %v6229 = vld [vmem:[%s6206 + $0xb0] sm:$0xff]
        %v6230 = vld [vmem:[%s6206 + $0xb8] sm:$0xff]
        %v6231 = vld [vmem:[%s6206 + $0xc0] sm:$0xff]
        %v6232 = vld [vmem:[%s6206 + $0xc8] sm:$0xff]
        %v6233 = vld [vmem:[%s6206 + $0xd0] sm:$0xff]
        %v6234 = vld [vmem:[%s6206 + $0xd8] sm:$0xff]
        %v6235 = vld [vmem:[%s6206 + $0xe0] sm:$0xff]
        %v6236 = vld [vmem:[%s6206 + $0xe8] sm:$0xff]
        %v6237 = vld [vmem:[%s6206 + $0xf0] sm:$0xff]
        %v6238 = vld [vmem:[%s6206 + $0xf8] sm:$0xff]
        %v6239 = vld [vmem:[%s6206 + $0x100] sm:$0xff]
        %v6240 = vld [vmem:[%s6206 + $0x108] sm:$0xff]
        %v6241 = vld [vmem:[%s6206 + $0x110] sm:$0xff]
        %v6242 = vld [vmem:[%s6206 + $0x118] sm:$0xff]
        %v6243 = vld [vmem:[%s6206 + $0x120] sm:$0xff]
        %v6244 = vld [vmem:[%s6206 + $0x128] sm:$0xff]
        %v6245 = vld [vmem:[%s6206 + $0x130] sm:$0xff]
        %v6246 = vld [vmem:[%s6206 + $0x138] sm:$0xff]
        %v6247 = vld [vmem:[%s6206 + $0x140] sm:$0xff]
        %v6248 = vld [vmem:[%s6206 + $0x148] sm:$0xff]
        %v6249 = vld [vmem:[%s6206 + $0x150] sm:$0xff]
        %v6250 = vld [vmem:[%s6206 + $0x158] sm:$0xff]
        %v6251 = vld [vmem:[%s6206 + $0x160] sm:$0xff]
        %v6252 = vld [vmem:[%s6206 + $0x168] sm:$0xff]
        %v6253 = vld [vmem:[%s6206 + $0x170] sm:$0xff]
        %v6254 = vld [vmem:[%s6206 + $0x178] sm:$0xff]
        %v6255 = vld [vmem:[%s6206 + $0x180] sm:$0xff]
        %v6256 = vld [vmem:[%s6206 + $0x188] sm:$0xff]
        %v6257 = vld [vmem:[%s6206 + $0x190] sm:$0xff]
        %v6258 = vld [vmem:[%s6206 + $0x198] sm:$0xff]
        %v6259 = vld [vmem:[%s6206 + $0x1a0] sm:$0xff]
        %v6260 = vld [vmem:[%s6206 + $0x1a8] sm:$0xff]
        %v6261 = vld [vmem:[%s6206 + $0x1b0] sm:$0xff]
        %v6262 = vld [vmem:[%s6206 + $0x1b8] sm:$0xff]
        %v6263 = vld [vmem:[%s6206 + $0x1c0] sm:$0xff]
        %v6264 = vld [vmem:[%s6206 + $0x1c8] sm:$0xff]
        %v6265 = vld [vmem:[%s6206 + $0x1d0] sm:$0xff]
        %v6266 = vld [vmem:[%s6206 + $0x1d8] sm:$0xff]
        %v6267 = vld [vmem:[%s6206 + $0x1e0] sm:$0xff]
        %v6268 = vld [vmem:[%s6206 + $0x1e8] sm:$0xff]
        %v6269 = vld [vmem:[%s6206 + $0x1f0] sm:$0xff]
        %v6270 = vld [vmem:[%s6206 + $0x1f8] sm:$0xff]
        %v6271 = vld [vmem:[%s6206 + $0x200] sm:$0xff]
        %v6272 = vld [vmem:[%s6206 + $0x208] sm:$0xff]
        %v6273 = vld [vmem:[%s6206 + $0x210] sm:$0xff]
        %v6274 = vld [vmem:[%s6206 + $0x218] sm:$0xff]
        %v6275 = vld [vmem:[%s6206 + $0x220] sm:$0xff]
        %v6276 = vld [vmem:[%s6206 + $0x228] sm:$0xff]
        %v6277 = vld [vmem:[%s6206 + $0x230] sm:$0xff]
        %v6278 = vld [vmem:[%s6206 + $0x238] sm:$0xff]
        %v6279 = vld [vmem:[%s6206 + $0x240] sm:$0xff]
        %v6280 = vld [vmem:[%s6206 + $0x248] sm:$0xff]
        %v6281 = vld [vmem:[%s6206 + $0x250] sm:$0xff]
        %v6282 = vld [vmem:[%s6206 + $0x258] sm:$0xff]
        %v6283 = vld [vmem:[%s6206 + $0x260] sm:$0xff]
        %v6284 = vld [vmem:[%s6206 + $0x268] sm:$0xff]
        %v6285 = vld [vmem:[%s6206 + $0x270] sm:$0xff]
        %v6286 = vld [vmem:[%s6206 + $0x278] sm:$0xff]
        %v6287 = vld [vmem:[%s6206 + $0x280] sm:$0xff]
        %v6288 = vld [vmem:[%s6206 + $0x288] sm:$0xff]
        %v6289 = vld [vmem:[%s6206 + $0x290] sm:$0xff]
        %v6290 = vld [vmem:[%s6206 + $0x298] sm:$0xff]
        %v6291 = vld [vmem:[%s6206 + $0x2a0] sm:$0xff]
        %v6292 = vld [vmem:[%s6206 + $0x2a8] sm:$0xff]
        %v6293 = vld [vmem:[%s6206 + $0x2b0] sm:$0xff]
        %v6294 = vld [vmem:[%s6206 + $0x2b8] sm:$0xff]
        %v6295 = vld [vmem:[%s6206 + $0x2c0] sm:$0xff]
        %v6296 = vld [vmem:[%s6206 + $0x2c8] sm:$0xff]
        %v6297 = vld [vmem:[%s6206 + $0x2d0] sm:$0xff]
        %v6298 = vld [vmem:[%s6206 + $0x2d8] sm:$0xff]
        %v6299 = vld [vmem:[%s6206 + $0x2e0] sm:$0xff]
        %v6300 = vld [vmem:[%s6206 + $0x2e8] sm:$0xff]
        %v6301 = vld [vmem:[%s6206 + $0x2f0] sm:$0xff]
        %v6302 = vld [vmem:[%s6206 + $0x2f8] sm:$0xff]
        %v6303 = vld [vmem:[%s6206 + $0x300] sm:$0xff]
        %v6304 = vld [vmem:[%s6206 + $0x308] sm:$0xff]
        %v6305 = vld [vmem:[%s6206 + $0x310] sm:$0xff]
        %v6306 = vld [vmem:[%s6206 + $0x318] sm:$0xff]
        %v6307 = vld [vmem:[%s6206 + $0x320] sm:$0xff]
        %v6308 = vld [vmem:[%s6206 + $0x328] sm:$0xff]
        %v6309 = vld [vmem:[%s6206 + $0x330] sm:$0xff]
        %v6310 = vld [vmem:[%s6206 + $0x338] sm:$0xff]
        %v6311 = vld [vmem:[%s6206 + $0x340] sm:$0xff]
        %v6312 = vld [vmem:[%s6206 + $0x348] sm:$0xff]
        %v6313 = vld [vmem:[%s6206 + $0x350] sm:$0xff]
        %v6314 = vld [vmem:[%s6206 + $0x358] sm:$0xff]
        %v6315 = vld [vmem:[%s6206 + $0x360] sm:$0xff]
        %v6316 = vld [vmem:[%s6206 + $0x368] sm:$0xff]
        %v6317 = vld [vmem:[%s6206 + $0x370] sm:$0xff]
        %v6318 = vld [vmem:[%s6206 + $0x378] sm:$0xff]
        %v6319 = vld [vmem:[%s6206 + $0x380] sm:$0xff]
        %v6320 = vld [vmem:[%s6206 + $0x388] sm:$0xff]
        %v6321 = vld [vmem:[%s6206 + $0x390] sm:$0xff]
        %v6322 = vld [vmem:[%s6206 + $0x398] sm:$0xff]
        %v6323 = vld [vmem:[%s6206 + $0x3a0] sm:$0xff]
        %v6324 = vld [vmem:[%s6206 + $0x3a8] sm:$0xff]
        %v6325 = vld [vmem:[%s6206 + $0x3b0] sm:$0xff]
        %v6326 = vld [vmem:[%s6206 + $0x3b8] sm:$0xff]
        %v6327 = vld [vmem:[%s6206 + $0x3c0] sm:$0xff]
        %v6328 = vld [vmem:[%s6206 + $0x3c8] sm:$0xff]
        %v6329 = vld [vmem:[%s6206 + $0x3d0] sm:$0xff]
        %v6330 = vld [vmem:[%s6206 + $0x3d8] sm:$0xff]
        %v6331 = vld [vmem:[%s6206 + $0x3e0] sm:$0xff]
        %v6332 = vld [vmem:[%s6206 + $0x3e8] sm:$0xff]
        %v6333 = vld [vmem:[%s6206 + $0x3f0] sm:$0xff]
        %v6334 = vld [vmem:[%s6206 + $0x3f8] sm:$0xff]
        %v6335 = vunpack.c.l.b16 %v6181
        %v6336 = vunpack.c.h.b16 %v6181
        %v6337 = vunpack.c.l.b16 %v6185
        %v6338 = vunpack.c.h.b16 %v6185
        %v6339 = vunpack.c.l.b16 %v6188
        %v6340 = vunpack.c.h.b16 %v6188
        %v6341 = vunpack.c.l.b16 %v6191
        %v6342 = vunpack.c.h.b16 %v6191
        %v6343 = vunpack.c.l.b16 %v6195
        %v6344 = vunpack.c.h.b16 %v6195
        %v6345 = vunpack.c.l.b16 %v6199
        %v6346 = vunpack.c.h.b16 %v6199
        %v6347 = vunpack.c.l.b16 %v6202
        %v6348 = vunpack.c.h.b16 %v6202
        %v6349 = vunpack.c.l.b16 %v6205
        %v6350 = vunpack.c.h.b16 %v6205
        %v6351 = vpack.c.b16 %v6339, %v6335
        %v6352 = vpack.c.b16 %v6340, %v6336
        %v6353 = vpack.c.b16 %v6341, %v6337
        %v6354 = vpack.c.b16 %v6342, %v6338
        %v6355 = vpack.c.b16 %v6347, %v6343
        %v6356 = vpack.c.b16 %v6348, %v6344
        %v6357 = vpack.c.b16 %v6349, %v6345
        %v6358 = vpack.c.b16 %v6350, %v6346
        %v6495 = vunpack.c.l.b16 %v6207
        %v6496 = vunpack.c.h.b16 %v6207
        %v6497 = vunpack.c.l.b16 %v6208
        %v6498 = vunpack.c.h.b16 %v6208
        %v6499 = vunpack.c.l.b16 %v6209
        %v6500 = vunpack.c.h.b16 %v6209
        %v6501 = vunpack.c.l.b16 %v6210
        %v6502 = vunpack.c.h.b16 %v6210
        %v6503 = vunpack.c.l.b16 %v6211
        %v6504 = vunpack.c.h.b16 %v6211
        %v6505 = vunpack.c.l.b16 %v6212
        %v6506 = vunpack.c.h.b16 %v6212
        %v6507 = vunpack.c.l.b16 %v6213
        %v6508 = vunpack.c.h.b16 %v6213
        %v6509 = vunpack.c.l.b16 %v6214
        %v6510 = vunpack.c.h.b16 %v6214
        %v6511 = vunpack.c.l.b16 %v6215
        %v6512 = vunpack.c.h.b16 %v6215
        %v6513 = vunpack.c.l.b16 %v6216
        %v6514 = vunpack.c.h.b16 %v6216
        %v6515 = vunpack.c.l.b16 %v6217
        %v6516 = vunpack.c.h.b16 %v6217
        %v6517 = vunpack.c.l.b16 %v6218
        %v6518 = vunpack.c.h.b16 %v6218
        %v6519 = vunpack.c.l.b16 %v6219
        %v6520 = vunpack.c.h.b16 %v6219
        %v6521 = vunpack.c.l.b16 %v6220
        %v6522 = vunpack.c.h.b16 %v6220
        %v6523 = vunpack.c.l.b16 %v6221
        %v6524 = vunpack.c.h.b16 %v6221
        %v6525 = vunpack.c.l.b16 %v6222
        %v6526 = vunpack.c.h.b16 %v6222
        %v6527 = vunpack.c.l.b16 %v6223
        %v6528 = vunpack.c.h.b16 %v6223
        %v6529 = vunpack.c.l.b16 %v6224
        %v6530 = vunpack.c.h.b16 %v6224
        %v6531 = vunpack.c.l.b16 %v6225
        %v6532 = vunpack.c.h.b16 %v6225
        %v6533 = vunpack.c.l.b16 %v6226
        %v6534 = vunpack.c.h.b16 %v6226
        %v6535 = vunpack.c.l.b16 %v6227
        %v6536 = vunpack.c.h.b16 %v6227
        %v6537 = vunpack.c.l.b16 %v6228
        %v6538 = vunpack.c.h.b16 %v6228
        %v6539 = vunpack.c.l.b16 %v6229
        %v6540 = vunpack.c.h.b16 %v6229
        %v6541 = vunpack.c.l.b16 %v6230
        %v6542 = vunpack.c.h.b16 %v6230
        %v6543 = vunpack.c.l.b16 %v6231
        %v6544 = vunpack.c.h.b16 %v6231
        %v6545 = vunpack.c.l.b16 %v6232
        %v6546 = vunpack.c.h.b16 %v6232
        %v6547 = vunpack.c.l.b16 %v6233
        %v6548 = vunpack.c.h.b16 %v6233
        %v6549 = vunpack.c.l.b16 %v6234
        %v6550 = vunpack.c.h.b16 %v6234
        %v6551 = vunpack.c.l.b16 %v6235
        %v6552 = vunpack.c.h.b16 %v6235
        %v6553 = vunpack.c.l.b16 %v6236
        %v6554 = vunpack.c.h.b16 %v6236
        %v6555 = vunpack.c.l.b16 %v6237
        %v6556 = vunpack.c.h.b16 %v6237
        %v6557 = vunpack.c.l.b16 %v6238
        %v6558 = vunpack.c.h.b16 %v6238
        %v6559 = vunpack.c.l.b16 %v6239
        %v6560 = vunpack.c.h.b16 %v6239
        %v6561 = vunpack.c.l.b16 %v6240
        %v6562 = vunpack.c.h.b16 %v6240
        %v6563 = vunpack.c.l.b16 %v6241
        %v6564 = vunpack.c.h.b16 %v6241
        %v6565 = vunpack.c.l.b16 %v6242
        %v6566 = vunpack.c.h.b16 %v6242
        %v6567 = vunpack.c.l.b16 %v6243
        %v6568 = vunpack.c.h.b16 %v6243
        %v6569 = vunpack.c.l.b16 %v6244
        %v6570 = vunpack.c.h.b16 %v6244
        %v6571 = vunpack.c.l.b16 %v6245
        %v6572 = vunpack.c.h.b16 %v6245
        %v6573 = vunpack.c.l.b16 %v6246
        %v6574 = vunpack.c.h.b16 %v6246
        %v6575 = vunpack.c.l.b16 %v6247
        %v6576 = vunpack.c.h.b16 %v6247
        %v6577 = vunpack.c.l.b16 %v6248
        %v6578 = vunpack.c.h.b16 %v6248
        %v6579 = vunpack.c.l.b16 %v6249
        %v6580 = vunpack.c.h.b16 %v6249
        %v6581 = vunpack.c.l.b16 %v6250
        %v6582 = vunpack.c.h.b16 %v6250
        %v6583 = vunpack.c.l.b16 %v6251
        %v6584 = vunpack.c.h.b16 %v6251
        %v6585 = vunpack.c.l.b16 %v6252
        %v6586 = vunpack.c.h.b16 %v6252
        %v6587 = vunpack.c.l.b16 %v6253
        %v6588 = vunpack.c.h.b16 %v6253
        %v6589 = vunpack.c.l.b16 %v6254
        %v6590 = vunpack.c.h.b16 %v6254
        %v6591 = vunpack.c.l.b16 %v6255
        %v6592 = vunpack.c.h.b16 %v6255
        %v6593 = vunpack.c.l.b16 %v6256
        %v6594 = vunpack.c.h.b16 %v6256
        %v6595 = vunpack.c.l.b16 %v6257
        %v6596 = vunpack.c.h.b16 %v6257
        %v6597 = vunpack.c.l.b16 %v6258
        %v6598 = vunpack.c.h.b16 %v6258
        %v6599 = vunpack.c.l.b16 %v6259
        %v6600 = vunpack.c.h.b16 %v6259
        %v6601 = vunpack.c.l.b16 %v6260
        %v6602 = vunpack.c.h.b16 %v6260
        %v6603 = vunpack.c.l.b16 %v6261
        %v6604 = vunpack.c.h.b16 %v6261
        %v6605 = vunpack.c.l.b16 %v6262
        %v6606 = vunpack.c.h.b16 %v6262
        %v6607 = vunpack.c.l.b16 %v6263
        %v6608 = vunpack.c.h.b16 %v6263
        %v6609 = vunpack.c.l.b16 %v6264
        %v6610 = vunpack.c.h.b16 %v6264
        %v6611 = vunpack.c.l.b16 %v6265
        %v6612 = vunpack.c.h.b16 %v6265
        %v6613 = vunpack.c.l.b16 %v6266
        %v6614 = vunpack.c.h.b16 %v6266
        %v6615 = vunpack.c.l.b16 %v6267
        %v6616 = vunpack.c.h.b16 %v6267
        %v6617 = vunpack.c.l.b16 %v6268
        %v6618 = vunpack.c.h.b16 %v6268
        %v6619 = vunpack.c.l.b16 %v6269
        %v6620 = vunpack.c.h.b16 %v6269
        %v6621 = vunpack.c.l.b16 %v6270
        %v6622 = vunpack.c.h.b16 %v6270
        %v6623 = vunpack.c.l.b16 %v6271
        %v6624 = vunpack.c.h.b16 %v6271
        %v6625 = vunpack.c.l.b16 %v6272
        %v6626 = vunpack.c.h.b16 %v6272
        %v6627 = vunpack.c.l.b16 %v6273
        %v6628 = vunpack.c.h.b16 %v6273
        %v6629 = vunpack.c.l.b16 %v6274
        %v6630 = vunpack.c.h.b16 %v6274
        %v6631 = vunpack.c.l.b16 %v6275
        %v6632 = vunpack.c.h.b16 %v6275
        %v6633 = vunpack.c.l.b16 %v6276
        %v6634 = vunpack.c.h.b16 %v6276
        %v6635 = vunpack.c.l.b16 %v6277
        %v6636 = vunpack.c.h.b16 %v6277
        %v6637 = vunpack.c.l.b16 %v6278
        %v6638 = vunpack.c.h.b16 %v6278
        %v6639 = vunpack.c.l.b16 %v6279
        %v6640 = vunpack.c.h.b16 %v6279
        %v6641 = vunpack.c.l.b16 %v6280
        %v6642 = vunpack.c.h.b16 %v6280
        %v6643 = vunpack.c.l.b16 %v6281
        %v6644 = vunpack.c.h.b16 %v6281
        %v6645 = vunpack.c.l.b16 %v6282
        %v6646 = vunpack.c.h.b16 %v6282
        %v6647 = vunpack.c.l.b16 %v6283
        %v6648 = vunpack.c.h.b16 %v6283
        %v6649 = vunpack.c.l.b16 %v6284
        %v6650 = vunpack.c.h.b16 %v6284
        %v6651 = vunpack.c.l.b16 %v6285
        %v6652 = vunpack.c.h.b16 %v6285
        %v6653 = vunpack.c.l.b16 %v6286
        %v6654 = vunpack.c.h.b16 %v6286
        %v6655 = vunpack.c.l.b16 %v6287
        %v6656 = vunpack.c.h.b16 %v6287
        %v6657 = vunpack.c.l.b16 %v6288
        %v6658 = vunpack.c.h.b16 %v6288
        %v6659 = vunpack.c.l.b16 %v6289
        %v6660 = vunpack.c.h.b16 %v6289
        %v6661 = vunpack.c.l.b16 %v6290
        %v6662 = vunpack.c.h.b16 %v6290
        %v6663 = vunpack.c.l.b16 %v6291
        %v6664 = vunpack.c.h.b16 %v6291
        %v6665 = vunpack.c.l.b16 %v6292
        %v6666 = vunpack.c.h.b16 %v6292
        %v6667 = vunpack.c.l.b16 %v6293
        %v6668 = vunpack.c.h.b16 %v6293
        %v6669 = vunpack.c.l.b16 %v6294
        %v6670 = vunpack.c.h.b16 %v6294
        %v6671 = vunpack.c.l.b16 %v6295
        %v6672 = vunpack.c.h.b16 %v6295
        %v6673 = vunpack.c.l.b16 %v6296
        %v6674 = vunpack.c.h.b16 %v6296
        %v6675 = vunpack.c.l.b16 %v6297
        %v6676 = vunpack.c.h.b16 %v6297
        %v6677 = vunpack.c.l.b16 %v6298
        %v6678 = vunpack.c.h.b16 %v6298
        %v6679 = vunpack.c.l.b16 %v6299
        %v6680 = vunpack.c.h.b16 %v6299
        %v6681 = vunpack.c.l.b16 %v6300
        %v6682 = vunpack.c.h.b16 %v6300
        %v6683 = vunpack.c.l.b16 %v6301
        %v6684 = vunpack.c.h.b16 %v6301
        %v6685 = vunpack.c.l.b16 %v6302
        %v6686 = vunpack.c.h.b16 %v6302
        %v6687 = vunpack.c.l.b16 %v6303
        %v6688 = vunpack.c.h.b16 %v6303
        %v6689 = vunpack.c.l.b16 %v6304
        %v6690 = vunpack.c.h.b16 %v6304
        %v6691 = vunpack.c.l.b16 %v6305
        %v6692 = vunpack.c.h.b16 %v6305
        %v6693 = vunpack.c.l.b16 %v6306
        %v6694 = vunpack.c.h.b16 %v6306
        %v6695 = vunpack.c.l.b16 %v6307
        %v6696 = vunpack.c.h.b16 %v6307
        %v6697 = vunpack.c.l.b16 %v6308
        %v6698 = vunpack.c.h.b16 %v6308
        %v6699 = vunpack.c.l.b16 %v6309
        %v6700 = vunpack.c.h.b16 %v6309
        %v6701 = vunpack.c.l.b16 %v6310
        %v6702 = vunpack.c.h.b16 %v6310
        %v6703 = vunpack.c.l.b16 %v6311
        %v6704 = vunpack.c.h.b16 %v6311
        %v6705 = vunpack.c.l.b16 %v6312
        %v6706 = vunpack.c.h.b16 %v6312
        %v6707 = vunpack.c.l.b16 %v6313
        %v6708 = vunpack.c.h.b16 %v6313
        %v6709 = vunpack.c.l.b16 %v6314
        %v6710 = vunpack.c.h.b16 %v6314
        %v6711 = vunpack.c.l.b16 %v6315
        %v6712 = vunpack.c.h.b16 %v6315
        %v6713 = vunpack.c.l.b16 %v6316
        %v6714 = vunpack.c.h.b16 %v6316
        %v6715 = vunpack.c.l.b16 %v6317
        %v6716 = vunpack.c.h.b16 %v6317
        %v6717 = vunpack.c.l.b16 %v6318
        %v6718 = vunpack.c.h.b16 %v6318
        %v6719 = vunpack.c.l.b16 %v6319
        %v6720 = vunpack.c.h.b16 %v6319
        %v6721 = vunpack.c.l.b16 %v6320
        %v6722 = vunpack.c.h.b16 %v6320
        %v6723 = vunpack.c.l.b16 %v6321
        %v6724 = vunpack.c.h.b16 %v6321
        %v6725 = vunpack.c.l.b16 %v6322
        %v6726 = vunpack.c.h.b16 %v6322
        %v6727 = vunpack.c.l.b16 %v6323
        %v6728 = vunpack.c.h.b16 %v6323
        %v6729 = vunpack.c.l.b16 %v6324
        %v6730 = vunpack.c.h.b16 %v6324
        %v6731 = vunpack.c.l.b16 %v6325
        %v6732 = vunpack.c.h.b16 %v6325
        %v6733 = vunpack.c.l.b16 %v6326
        %v6734 = vunpack.c.h.b16 %v6326
        %v6735 = vunpack.c.l.b16 %v6327
        %v6736 = vunpack.c.h.b16 %v6327
        %v6737 = vunpack.c.l.b16 %v6328
        %v6738 = vunpack.c.h.b16 %v6328
        %v6739 = vunpack.c.l.b16 %v6329
        %v6740 = vunpack.c.h.b16 %v6329
        %v6741 = vunpack.c.l.b16 %v6330
        %v6742 = vunpack.c.h.b16 %v6330
        %v6743 = vunpack.c.l.b16 %v6331
        %v6744 = vunpack.c.h.b16 %v6331
        %v6745 = vunpack.c.l.b16 %v6332
        %v6746 = vunpack.c.h.b16 %v6332
        %v6747 = vunpack.c.l.b16 %v6333
        %v6748 = vunpack.c.h.b16 %v6333
        %v6749 = vunpack.c.l.b16 %v6334
        %v6750 = vunpack.c.h.b16 %v6334
        %v6751 = vpack.c.b16 %v6499, %v6495
        %v6752 = vpack.c.b16 %v6500, %v6496
        %v6753 = vpack.c.b16 %v6501, %v6497
        %v6754 = vpack.c.b16 %v6502, %v6498
        %v6755 = vpack.c.b16 %v6507, %v6503
        %v6756 = vpack.c.b16 %v6508, %v6504
        %v6757 = vpack.c.b16 %v6509, %v6505
        %v6758 = vpack.c.b16 %v6510, %v6506
        %v6759 = vpack.c.b16 %v6515, %v6511
        %v6760 = vpack.c.b16 %v6516, %v6512
        %v6761 = vpack.c.b16 %v6517, %v6513
        %v6762 = vpack.c.b16 %v6518, %v6514
        %v6763 = vpack.c.b16 %v6523, %v6519
        %v6764 = vpack.c.b16 %v6524, %v6520
        %v6765 = vpack.c.b16 %v6525, %v6521
        %v6766 = vpack.c.b16 %v6526, %v6522
        %v6767 = vpack.c.b16 %v6531, %v6527
        %v6768 = vpack.c.b16 %v6532, %v6528
        %v6769 = vpack.c.b16 %v6533, %v6529
        %v6770 = vpack.c.b16 %v6534, %v6530
        %v6771 = vpack.c.b16 %v6539, %v6535
        %v6772 = vpack.c.b16 %v6540, %v6536
        %v6773 = vpack.c.b16 %v6541, %v6537
        %v6774 = vpack.c.b16 %v6542, %v6538
        %v6775 = vpack.c.b16 %v6547, %v6543
        %v6776 = vpack.c.b16 %v6548, %v6544
        %v6777 = vpack.c.b16 %v6549, %v6545
        %v6778 = vpack.c.b16 %v6550, %v6546
        %v6779 = vpack.c.b16 %v6555, %v6551
        %v6780 = vpack.c.b16 %v6556, %v6552
        %v6781 = vpack.c.b16 %v6557, %v6553
        %v6782 = vpack.c.b16 %v6558, %v6554
        %v6783 = vpack.c.b16 %v6563, %v6559
        %v6784 = vpack.c.b16 %v6564, %v6560
        %v6785 = vpack.c.b16 %v6565, %v6561
        %v6786 = vpack.c.b16 %v6566, %v6562
        %v6787 = vpack.c.b16 %v6571, %v6567
        %v6788 = vpack.c.b16 %v6572, %v6568
        %v6789 = vpack.c.b16 %v6573, %v6569
        %v6790 = vpack.c.b16 %v6574, %v6570
        %v6791 = vpack.c.b16 %v6579, %v6575
        %v6792 = vpack.c.b16 %v6580, %v6576
        %v6793 = vpack.c.b16 %v6581, %v6577
        %v6794 = vpack.c.b16 %v6582, %v6578
        %v6795 = vpack.c.b16 %v6587, %v6583
        %v6796 = vpack.c.b16 %v6588, %v6584
        %v6797 = vpack.c.b16 %v6589, %v6585
        %v6798 = vpack.c.b16 %v6590, %v6586
        %v6799 = vpack.c.b16 %v6595, %v6591
        %v6800 = vpack.c.b16 %v6596, %v6592
        %v6801 = vpack.c.b16 %v6597, %v6593
        %v6802 = vpack.c.b16 %v6598, %v6594
        %v6803 = vpack.c.b16 %v6603, %v6599
        %v6804 = vpack.c.b16 %v6604, %v6600
        %v6805 = vpack.c.b16 %v6605, %v6601
        %v6806 = vpack.c.b16 %v6606, %v6602
        %v6807 = vpack.c.b16 %v6611, %v6607
        %v6808 = vpack.c.b16 %v6612, %v6608
        %v6809 = vpack.c.b16 %v6613, %v6609
        %v6810 = vpack.c.b16 %v6614, %v6610
        %v6811 = vpack.c.b16 %v6619, %v6615
        %v6812 = vpack.c.b16 %v6620, %v6616
        %v6813 = vpack.c.b16 %v6621, %v6617
        %v6814 = vpack.c.b16 %v6622, %v6618
        %v6815 = vpack.c.b16 %v6627, %v6623
        %v6816 = vpack.c.b16 %v6628, %v6624
        %v6817 = vpack.c.b16 %v6629, %v6625
        %v6818 = vpack.c.b16 %v6630, %v6626
        %v6819 = vpack.c.b16 %v6635, %v6631
        %v6820 = vpack.c.b16 %v6636, %v6632
        %v6821 = vpack.c.b16 %v6637, %v6633
        %v6822 = vpack.c.b16 %v6638, %v6634
        %v6823 = vpack.c.b16 %v6643, %v6639
        %v6824 = vpack.c.b16 %v6644, %v6640
        %v6825 = vpack.c.b16 %v6645, %v6641
        %v6826 = vpack.c.b16 %v6646, %v6642
        %v6827 = vpack.c.b16 %v6651, %v6647
        %v6828 = vpack.c.b16 %v6652, %v6648
        %v6829 = vpack.c.b16 %v6653, %v6649
        %v6830 = vpack.c.b16 %v6654, %v6650
        %v6831 = vpack.c.b16 %v6659, %v6655
        %v6832 = vpack.c.b16 %v6660, %v6656
        %v6833 = vpack.c.b16 %v6661, %v6657
        %v6834 = vpack.c.b16 %v6662, %v6658
        %v6835 = vpack.c.b16 %v6667, %v6663
        %v6836 = vpack.c.b16 %v6668, %v6664
        %v6837 = vpack.c.b16 %v6669, %v6665
        %v6838 = vpack.c.b16 %v6670, %v6666
        %v6839 = vpack.c.b16 %v6675, %v6671
        %v6840 = vpack.c.b16 %v6676, %v6672
        %v6841 = vpack.c.b16 %v6677, %v6673
        %v6842 = vpack.c.b16 %v6678, %v6674
        %v6843 = vpack.c.b16 %v6683, %v6679
        %v6844 = vpack.c.b16 %v6684, %v6680
        %v6845 = vpack.c.b16 %v6685, %v6681
        %v6846 = vpack.c.b16 %v6686, %v6682
        %v6847 = vpack.c.b16 %v6691, %v6687
        %v6848 = vpack.c.b16 %v6692, %v6688
        %v6849 = vpack.c.b16 %v6693, %v6689
        %v6850 = vpack.c.b16 %v6694, %v6690
        %v6851 = vpack.c.b16 %v6699, %v6695
        %v6852 = vpack.c.b16 %v6700, %v6696
        %v6853 = vpack.c.b16 %v6701, %v6697
        %v6854 = vpack.c.b16 %v6702, %v6698
        %v6855 = vpack.c.b16 %v6707, %v6703
        %v6856 = vpack.c.b16 %v6708, %v6704
        %v6857 = vpack.c.b16 %v6709, %v6705
        %v6858 = vpack.c.b16 %v6710, %v6706
        %v6859 = vpack.c.b16 %v6715, %v6711
        %v6860 = vpack.c.b16 %v6716, %v6712
        %v6861 = vpack.c.b16 %v6717, %v6713
        %v6862 = vpack.c.b16 %v6718, %v6714
        %v6863 = vpack.c.b16 %v6723, %v6719
        %v6864 = vpack.c.b16 %v6724, %v6720
        %v6865 = vpack.c.b16 %v6725, %v6721
        %v6866 = vpack.c.b16 %v6726, %v6722
        %v6867 = vpack.c.b16 %v6731, %v6727
        %v6868 = vpack.c.b16 %v6732, %v6728
        %v6869 = vpack.c.b16 %v6733, %v6729
        %v6870 = vpack.c.b16 %v6734, %v6730
        %v6871 = vpack.c.b16 %v6739, %v6735
        %v6872 = vpack.c.b16 %v6740, %v6736
        %v6873 = vpack.c.b16 %v6741, %v6737
        %v6874 = vpack.c.b16 %v6742, %v6738
        %v6875 = vpack.c.b16 %v6747, %v6743
        %v6876 = vpack.c.b16 %v6748, %v6744
        %v6877 = vpack.c.b16 %v6749, %v6745
        %v6878 = vpack.c.b16 %v6750, %v6746
        %7007 = vmatprep.subr.bf16.mxu0 %v6752
        %7008 = vmatpush1.bf16.msra.mxu0 %v6751
        %7009 = vmatprep.subr.bf16.mxu0 %v6756
        %7010 = vmatpush1.bf16.msra.mxu0 %v6755
        %7011 = vmatprep.subr.bf16.mxu0 %v6760
        %7012 = vmatpush1.bf16.msra.mxu0 %v6759
        %7013 = vmatprep.subr.bf16.mxu0 %v6764
        %7014 = vmatpush1.bf16.msra.mxu0 %v6763
        %7015 = vmatprep.subr.bf16.mxu0 %v6768
        %7016 = vmatpush1.bf16.msra.mxu0 %v6767
        %7017 = vmatprep.subr.bf16.mxu0 %v6772
        %7018 = vmatpush1.bf16.msra.mxu0 %v6771
        %7019 = vmatprep.subr.bf16.mxu0 %v6776
        %7020 = vmatpush1.bf16.msra.mxu0 %v6775
        %7021 = vmatprep.subr.bf16.mxu0 %v6780
        %7022 = vmatpush1.bf16.msra.mxu0 %v6779
        %7023 = vmatprep.subr.bf16.mxu0 %v6784
        %7024 = vmatpush1.bf16.msra.mxu0 %v6783
        %7025 = vmatprep.subr.bf16.mxu0 %v6788
        %7026 = vmatpush1.bf16.msra.mxu0 %v6787
        %7027 = vmatprep.subr.bf16.mxu0 %v6792
        %7028 = vmatpush1.bf16.msra.mxu0 %v6791
        %7029 = vmatprep.subr.bf16.mxu0 %v6796
        %7030 = vmatpush1.bf16.msra.mxu0 %v6795
        %7031 = vmatprep.subr.bf16.mxu0 %v6800
        %7032 = vmatpush1.bf16.msra.mxu0 %v6799
        %7033 = vmatprep.subr.bf16.mxu0 %v6804
        %7034 = vmatpush1.bf16.msra.mxu0 %v6803
        %7035 = vmatprep.subr.bf16.mxu0 %v6808
        %7036 = vmatpush1.bf16.msra.mxu0 %v6807
        %7037 = vmatprep.subr.bf16.mxu0 %v6812
        %7038 = vmatpush1.bf16.msra.mxu0 %v6811
        %7039 = vmatprep.mubr.bf16.mxu0 %v6352
        %7040 = vmatmul.mubr.bf16.gmra.mrb[0].mxu0 %v6351
        %v7041 = vpop.f32.mrb[0].mxu0
        %v7042 = vadd.f32 0.0, %v7041
        %v7043 = vpop.f32.mrb[0].mxu0
        %v7044 = vadd.f32 0.0, %v7043
        %v7045 = vpop.f32.mrb[0].mxu0
        %v7046 = vadd.f32 0.0, %v7045
        %v7047 = vpop.f32.mrb[0].mxu0
        %v7048 = vadd.f32 0.0, %v7047
        %7049 = vmatprep.mubr.bf16.mxu0 %v6356
        %7050 = vmatmul.mubr.bf16.gmra.mrb[0].mxu0 %v6355
        %v7051 = vpop.f32.mrb[0].mxu0
        %v7052 = vadd.f32 0.0, %v7051
        %v7053 = vpop.f32.mrb[0].mxu0
        %v7054 = vadd.f32 0.0, %v7053
        %v7055 = vpop.f32.mrb[0].mxu0
        %v7056 = vadd.f32 0.0, %v7055
        %v7057 = vpop.f32.mrb[0].mxu0
        %v7058 = vadd.f32 0.0, %v7057
        %7059 = vdwg.mxu0
        %7060 = vmatprep.subr.bf16.mxu0 %v6816
        %7061 = vmatpush1.bf16.msra.mxu0 %v6815
        %7062 = vmatprep.subr.bf16.mxu0 %v6820
        %7063 = vmatpush1.bf16.msra.mxu0 %v6819
        %7064 = vmatprep.subr.bf16.mxu0 %v6824
        %7065 = vmatpush1.bf16.msra.mxu0 %v6823
        %7066 = vmatprep.subr.bf16.mxu0 %v6828
        %7067 = vmatpush1.bf16.msra.mxu0 %v6827
        %7068 = vmatprep.subr.bf16.mxu0 %v6832
        %7069 = vmatpush1.bf16.msra.mxu0 %v6831
        %7070 = vmatprep.subr.bf16.mxu0 %v6836
        %7071 = vmatpush1.bf16.msra.mxu0 %v6835
        %7072 = vmatprep.subr.bf16.mxu0 %v6840
        %7073 = vmatpush1.bf16.msra.mxu0 %v6839
        %7074 = vmatprep.subr.bf16.mxu0 %v6844
        %7075 = vmatpush1.bf16.msra.mxu0 %v6843
        %7076 = vmatprep.subr.bf16.mxu0 %v6848
        %7077 = vmatpush1.bf16.msra.mxu0 %v6847
        %7078 = vmatprep.subr.bf16.mxu0 %v6852
        %7079 = vmatpush1.bf16.msra.mxu0 %v6851
        %7080 = vmatprep.subr.bf16.mxu0 %v6856
        %7081 = vmatpush1.bf16.msra.mxu0 %v6855
        %7082 = vmatprep.subr.bf16.mxu0 %v6860
        %7083 = vmatpush1.bf16.msra.mxu0 %v6859
        %7084 = vmatprep.subr.bf16.mxu0 %v6864
        %7085 = vmatpush1.bf16.msra.mxu0 %v6863
        %7086 = vmatprep.subr.bf16.mxu0 %v6868
        %7087 = vmatpush1.bf16.msra.mxu0 %v6867
        %7088 = vmatprep.subr.bf16.mxu0 %v6872
        %7089 = vmatpush1.bf16.msra.mxu0 %v6871
        %7090 = vmatprep.subr.bf16.mxu0 %v6876
        %7091 = vmatpush1.bf16.msra.mxu0 %v6875
        %7092 = vmatprep.mubr.bf16.mxu0 %v6354
        %7093 = vmatmul.mubr.bf16.gmra.mrb[0].mxu0 %v6353
        %v7094 = vpop.f32.mrb[0].mxu0
        %v7095 = vadd.f32 %v7042, %v7094
        %v7096 = vpop.f32.mrb[0].mxu0
        %v7097 = vadd.f32 %v7044, %v7096
        %v7098 = vpop.f32.mrb[0].mxu0
        %v7099 = vadd.f32 %v7046, %v7098
        %v7100 = vpop.f32.mrb[0].mxu0
        %v7101 = vadd.f32 %v7048, %v7100
        %7102 = vmatprep.mubr.bf16.mxu0 %v6358
        %7103 = vmatmul.mubr.bf16.gmra.mrb[0].mxu0 %v6357
        %v7104 = vpop.f32.mrb[0].mxu0
        %v7105 = vadd.f32 %v7052, %v7104
        %v7106 = vpop.f32.mrb[0].mxu0
        %v7107 = vadd.f32 %v7054, %v7106
        %v7108 = vpop.f32.mrb[0].mxu0
        %v7109 = vadd.f32 %v7056, %v7108
        %v7110 = vpop.f32.mrb[0].mxu0
        %v7111 = vadd.f32 %v7058, %v7110
        %7112 = vdwg.mxu0
        %7113 = vmatprep.subr.bf16.mxu0 %v6754
        %7114 = vmatpush1.bf16.msra.mxu0 %v6753
        %7115 = vmatprep.subr.bf16.mxu0 %v6758
        %7116 = vmatpush1.bf16.msra.mxu0 %v6757
        %7117 = vmatprep.subr.bf16.mxu0 %v6762
        %7118 = vmatpush1.bf16.msra.mxu0 %v6761
        %7119 = vmatprep.subr.bf16.mxu0 %v6766
        %7120 = vmatpush1.bf16.msra.mxu0 %v6765
        %7121 = vmatprep.subr.bf16.mxu0 %v6770
        %7122 = vmatpush1.bf16.msra.mxu0 %v6769
        %7123 = vmatprep.subr.bf16.mxu0 %v6774
        %7124 = vmatpush1.bf16.msra.mxu0 %v6773
        %7125 = vmatprep.subr.bf16.mxu0 %v6778
        %7126 = vmatpush1.bf16.msra.mxu0 %v6777
        %7127 = vmatprep.subr.bf16.mxu0 %v6782
        %7128 = vmatpush1.bf16.msra.mxu0 %v6781
        %7129 = vmatprep.subr.bf16.mxu0 %v6786
        %7130 = vmatpush1.bf16.msra.mxu0 %v6785
        %7131 = vmatprep.subr.bf16.mxu0 %v6790
        %7132 = vmatpush1.bf16.msra.mxu0 %v6789
        %7133 = vmatprep.subr.bf16.mxu0 %v6794
        %7134 = vmatpush1.bf16.msra.mxu0 %v6793
        %7135 = vmatprep.subr.bf16.mxu0 %v6798
        %7136 = vmatpush1.bf16.msra.mxu0 %v6797
        %7137 = vmatprep.subr.bf16.mxu0 %v6802
        %7138 = vmatpush1.bf16.msra.mxu0 %v6801
        %7139 = vmatprep.subr.bf16.mxu0 %v6806
        %7140 = vmatpush1.bf16.msra.mxu0 %v6805
        %7141 = vmatprep.subr.bf16.mxu0 %v6810
        %7142 = vmatpush1.bf16.msra.mxu0 %v6809
        %7143 = vmatprep.subr.bf16.mxu0 %v6814
        %7144 = vmatpush1.bf16.msra.mxu0 %v6813
        %7145 = vmatprep.mubr.bf16.mxu0 %v6352
        %7146 = vmatmul.mubr.bf16.gmra.mrb[0].mxu0 %v6351
        %v7147 = vpop.f32.mrb[0].mxu0
        %v7148 = vadd.f32 0.0, %v7147
        %v7149 = vpop.f32.mrb[0].mxu0
        %v7150 = vadd.f32 0.0, %v7149
        %v7151 = vpop.f32.mrb[0].mxu0
        %v7152 = vadd.f32 0.0, %v7151
        %v7153 = vpop.f32.mrb[0].mxu0
        %v7154 = vadd.f32 0.0, %v7153
        %7155 = vmatprep.mubr.bf16.mxu0 %v6356
        %7156 = vmatmul.mubr.bf16.gmra.mrb[0].mxu0 %v6355
        %v7157 = vpop.f32.mrb[0].mxu0
        %v7158 = vadd.f32 0.0, %v7157
        %v7159 = vpop.f32.mrb[0].mxu0
        %v7160 = vadd.f32 0.0, %v7159
        %v7161 = vpop.f32.mrb[0].mxu0
        %v7162 = vadd.f32 0.0, %v7161
        %v7163 = vpop.f32.mrb[0].mxu0
        %v7164 = vadd.f32 0.0, %v7163
        %7165 = vdwg.mxu0
        %7166 = vmatprep.subr.bf16.mxu0 %v6818
        %7167 = vmatpush1.bf16.msra.mxu0 %v6817
        %7168 = vmatprep.subr.bf16.mxu0 %v6822
        %7169 = vmatpush1.bf16.msra.mxu0 %v6821
        %7170 = vmatprep.subr.bf16.mxu0 %v6826
        %7171 = vmatpush1.bf16.msra.mxu0 %v6825
        %7172 = vmatprep.subr.bf16.mxu0 %v6830
        %7173 = vmatpush1.bf16.msra.mxu0 %v6829
        %7174 = vmatprep.subr.bf16.mxu0 %v6834
        %7175 = vmatpush1.bf16.msra.mxu0 %v6833
        %7176 = vmatprep.subr.bf16.mxu0 %v6838
        %7177 = vmatpush1.bf16.msra.mxu0 %v6837
        %7178 = vmatprep.subr.bf16.mxu0 %v6842
        %7179 = vmatpush1.bf16.msra.mxu0 %v6841
        %7180 = vmatprep.subr.bf16.mxu0 %v6846
        %7181 = vmatpush1.bf16.msra.mxu0 %v6845
        %7182 = vmatprep.subr.bf16.mxu0 %v6850
        %7183 = vmatpush1.bf16.msra.mxu0 %v6849
        %7184 = vmatprep.subr.bf16.mxu0 %v6854
        %7185 = vmatpush1.bf16.msra.mxu0 %v6853
        %7186 = vmatprep.subr.bf16.mxu0 %v6858
        %7187 = vmatpush1.bf16.msra.mxu0 %v6857
        %7188 = vmatprep.subr.bf16.mxu0 %v6862
        %7189 = vmatpush1.bf16.msra.mxu0 %v6861
        %7190 = vmatprep.subr.bf16.mxu0 %v6866
        %7191 = vmatpush1.bf16.msra.mxu0 %v6865
        %7192 = vmatprep.subr.bf16.mxu0 %v6870
        %7193 = vmatpush1.bf16.msra.mxu0 %v6869
        %7194 = vmatprep.subr.bf16.mxu0 %v6874
        %7195 = vmatpush1.bf16.msra.mxu0 %v6873
        %7196 = vmatprep.subr.bf16.mxu0 %v6878
        %7197 = vmatpush1.bf16.msra.mxu0 %v6877
        %7198 = vmatprep.mubr.bf16.mxu0 %v6354
        %7199 = vmatmul.mubr.bf16.gmra.mrb[0].mxu0 %v6353
        %v7200 = vpop.f32.mrb[0].mxu0
        %v7201 = vadd.f32 %v7148, %v7200
        %v7202 = vpop.f32.mrb[0].mxu0
        %v7203 = vadd.f32 %v7150, %v7202
        %v7204 = vpop.f32.mrb[0].mxu0
        %v7205 = vadd.f32 %v7152, %v7204
        %v7206 = vpop.f32.mrb[0].mxu0
        %v7207 = vadd.f32 %v7154, %v7206
        %7208 = vmatprep.mubr.bf16.mxu0 %v6358
        %7209 = vmatmul.mubr.bf16.gmra.mrb[0].mxu0 %v6357
        %v7210 = vpop.f32.mrb[0].mxu0
        %v7211 = vadd.f32 %v7158, %v7210
        %v7212 = vpop.f32.mrb[0].mxu0
        %v7213 = vadd.f32 %v7160, %v7212
        %v7214 = vpop.f32.mrb[0].mxu0
        %v7215 = vadd.f32 %v7162, %v7214
        %v7216 = vpop.f32.mrb[0].mxu0
        %v7217 = vadd.f32 %v7164, %v7216
        %7218 = vdwg.mxu0
        %v7219 = vadd.f32 %v6042, %v7095
        %v7220 = vadd.f32 %v6044, %v7097
        %v7221 = vadd.f32 %v6148, %v7201
        %v7222 = vadd.f32 %v6150, %v7203
        %v7223 = vadd.f32 %v6046, %v7099
        %v7224 = vadd.f32 %v6048, %v7101
        %v7225 = vadd.f32 %v6152, %v7205
        %v7226 = vadd.f32 %v6154, %v7207
        %v7227 = vadd.f32 %v6052, %v7105
        %v7228 = vadd.f32 %v6054, %v7107
        %v7229 = vadd.f32 %v6158, %v7211
        %v7230 = vadd.f32 %v6160, %v7213
        %v7231 = vadd.f32 %v6056, %v7109
        %v7232 = vadd.f32 %v6058, %v7111
        %v7233 = vadd.f32 %v6162, %v7215
        %v7234 = vadd.f32 %v6164, %v7217
        %s7235 = scalar_lea.vmem [#allocation9], 2
        %v7236 = vld [vmem:[%s7235] ss:$8 sm:$0xf]
        %v7238 = vlaneseq
        %v7239 = vshrl.u32 %v7238, 7
        %v7240 = vsub.s32 0, %v7239
        %v7241 = vrot.slane %v7236, %v7240
        %v7242 = vlaneseq
        %v7243 = vshrl.u32 %v7242, 7
        %v7244 = vsub.s32 1, %v7243
        %v7245 = vrot.slane %v7236, %v7244
        %v7246 = vlaneseq
        %v7247 = vshrl.u32 %v7246, 7
        %v7248 = vsub.s32 2, %v7247
        %v7249 = vrot.slane %v7236, %v7248
        %v7250 = vlaneseq
        %v7251 = vshrl.u32 %v7250, 7
        %v7252 = vsub.s32 3, %v7251
        %v7253 = vrot.slane %v7236, %v7252
        %v7258 = vmul.f32 %v7219, %v7241
        %v7259 = vmul.f32 %v7220, %v7245
        %v7260 = vmul.f32 %v7221, %v7249
        %v7261 = vmul.f32 %v7222, %v7253
        %v7262 = vmul.f32 %v7223, %v7241
        %v7263 = vmul.f32 %v7224, %v7245
        %v7264 = vmul.f32 %v7225, %v7249
        %v7265 = vmul.f32 %v7226, %v7253
        %v7266 = vmul.f32 %v7227, %v7241
        %v7267 = vmul.f32 %v7228, %v7245
        %v7268 = vmul.f32 %v7229, %v7249
        %v7269 = vmul.f32 %v7230, %v7253
        %v7270 = vmul.f32 %v7231, %v7241
        %v7271 = vmul.f32 %v7232, %v7245
        %v7272 = vmul.f32 %v7233, %v7249
        %v7273 = vmul.f32 %v7234, %v7253
        %s7274 = scalar_lea.vmem [#allocation9], 3
        %v7275 = vld [vmem:[%s7274] ss:$8 sm:$0xf]
        %v7277 = vlaneseq
        %v7278 = vshrl.u32 %v7277, 7
        %v7279 = vsub.s32 0, %v7278
        %v7280 = vrot.slane %v7275, %v7279
        %v7281 = vlaneseq
        %v7282 = vshrl.u32 %v7281, 7
        %v7283 = vsub.s32 1, %v7282
        %v7284 = vrot.slane %v7275, %v7283
        %v7285 = vlaneseq
        %v7286 = vshrl.u32 %v7285, 7
        %v7287 = vsub.s32 2, %v7286
        %v7288 = vrot.slane %v7275, %v7287
        %v7289 = vlaneseq
        %v7290 = vshrl.u32 %v7289, 7
        %v7291 = vsub.s32 3, %v7290
        %v7292 = vrot.slane %v7275, %v7291
        %v7297 = vadd.f32 %v7258, %v7280
        %v7298 = vadd.f32 %v7259, %v7284
        %v7299 = vadd.f32 %v7260, %v7288
        %v7300 = vadd.f32 %v7261, %v7292
        %v7301 = vadd.f32 %v7262, %v7280
        %v7302 = vadd.f32 %v7263, %v7284
        %v7303 = vadd.f32 %v7264, %v7288
        %v7304 = vadd.f32 %v7265, %v7292
        %v7305 = vadd.f32 %v7266, %v7280
        %v7306 = vadd.f32 %v7267, %v7284
        %v7307 = vadd.f32 %v7268, %v7288
        %v7308 = vadd.f32 %v7269, %v7292
        %v7309 = vadd.f32 %v7270, %v7280
        %v7310 = vadd.f32 %v7271, %v7284
        %v7311 = vadd.f32 %v7272, %v7288
        %v7312 = vadd.f32 %v7273, %v7292
        %v7313 = vadd.f32 %v7297, %v7301
        %v7314 = vrot.slane %v7313, 4
        %v7315 = vadd.f32 %v7313, %v7314
        %v7316 = vrot.slane %v7315, 2
        %v7317 = vadd.f32 %v7315, %v7316
        %v7318 = vrot.slane %v7317, 1
        %v7319 = vadd.f32 %v7317, %v7318
        %v7320 = vadd.f32 %v7298, %v7302
        %v7321 = vrot.slane %v7320, 4
        %v7322 = vadd.f32 %v7320, %v7321
        %v7323 = vrot.slane %v7322, 2
        %v7324 = vadd.f32 %v7322, %v7323
        %v7325 = vrot.slane %v7324, 1
        %v7326 = vadd.f32 %v7324, %v7325
        %v7327 = vadd.f32 %v7299, %v7303
        %v7328 = vrot.slane %v7327, 4
        %v7329 = vadd.f32 %v7327, %v7328
        %v7330 = vrot.slane %v7329, 2
        %v7331 = vadd.f32 %v7329, %v7330
        %v7332 = vrot.slane %v7331, 1
        %v7333 = vadd.f32 %v7331, %v7332
        %v7334 = vadd.f32 %v7300, %v7304
        %v7335 = vrot.slane %v7334, 4
        %v7336 = vadd.f32 %v7334, %v7335
        %v7337 = vrot.slane %v7336, 2
        %v7338 = vadd.f32 %v7336, %v7337
        %v7339 = vrot.slane %v7338, 1
        %v7340 = vadd.f32 %v7338, %v7339
        %v7341 = vadd.f32 %v7305, %v7309
        %v7342 = vrot.slane %v7341, 4
        %v7343 = vadd.f32 %v7341, %v7342
        %v7344 = vrot.slane %v7343, 2
        %v7345 = vadd.f32 %v7343, %v7344
        %v7346 = vrot.slane %v7345, 1
        %v7347 = vadd.f32 %v7345, %v7346
        %v7348 = vadd.f32 %v7306, %v7310
        %v7349 = vrot.slane %v7348, 4
        %v7350 = vadd.f32 %v7348, %v7349
        %v7351 = vrot.slane %v7350, 2
        %v7352 = vadd.f32 %v7350, %v7351
        %v7353 = vrot.slane %v7352, 1
        %v7354 = vadd.f32 %v7352, %v7353
        %v7355 = vadd.f32 %v7307, %v7311
        %v7356 = vrot.slane %v7355, 4
        %v7357 = vadd.f32 %v7355, %v7356
        %v7358 = vrot.slane %v7357, 2
        %v7359 = vadd.f32 %v7357, %v7358
        %v7360 = vrot.slane %v7359, 1
        %v7361 = vadd.f32 %v7359, %v7360
        %v7362 = vadd.f32 %v7308, %v7312
        %v7363 = vrot.slane %v7362, 4
        %v7364 = vadd.f32 %v7362, %v7363
        %v7365 = vrot.slane %v7364, 2
        %v7366 = vadd.f32 %v7364, %v7365
        %v7367 = vrot.slane %v7366, 1
        %v7368 = vadd.f32 %v7366, %v7367
        %7371 = vrot.lane.b32.xlu0 %v7319, 96
        %v7372 = vpop.permute.xlu0 %7371
        %7373 = vrot.lane.b32.xlu0 %v7347, 96
        %v7374 = vpop.permute.xlu0 %7373
        %v7377 = vadd.f32 %v7319, %v7372
        %v7378 = vadd.f32 %v7347, %v7374
        %7379 = vrot.lane.b32.xlu0 %v7319, 64
        %v7380 = vpop.permute.xlu0 %7379
        %7381 = vrot.lane.b32.xlu0 %v7347, 64
        %v7382 = vpop.permute.xlu0 %7381
        %v7385 = vadd.f32 %v7377, %v7380
        %v7386 = vadd.f32 %v7378, %v7382
        %7387 = vrot.lane.b32.xlu0 %v7319, 32
        %v7388 = vpop.permute.xlu0 %7387
        %7389 = vrot.lane.b32.xlu0 %v7347, 32
        %v7390 = vpop.permute.xlu0 %7389
        %v7393 = vadd.f32 %v7385, %v7388
        %v7394 = vadd.f32 %v7386, %v7390
        %v7395 = vadd.f32 %v7393, %v7326
        %v7396 = vadd.f32 %v7394, %v7354
        %7399 = vrot.lane.b32.xlu0 %v7326, 96
        %v7400 = vpop.permute.xlu0 %7399
        %7401 = vrot.lane.b32.xlu0 %v7354, 96
        %v7402 = vpop.permute.xlu0 %7401
        %v7405 = vadd.f32 %v7395, %v7400
        %v7406 = vadd.f32 %v7396, %v7402
        %7407 = vrot.lane.b32.xlu0 %v7326, 64
        %v7408 = vpop.permute.xlu0 %7407
        %7409 = vrot.lane.b32.xlu0 %v7354, 64
        %v7410 = vpop.permute.xlu0 %7409
        %v7413 = vadd.f32 %v7405, %v7408
        %v7414 = vadd.f32 %v7406, %v7410
        %7415 = vrot.lane.b32.xlu0 %v7326, 32
        %v7416 = vpop.permute.xlu0 %7415
        %7417 = vrot.lane.b32.xlu0 %v7354, 32
        %v7418 = vpop.permute.xlu0 %7417
        %v7421 = vadd.f32 %v7413, %v7416
        %v7422 = vadd.f32 %v7414, %v7418
        %v7423 = vadd.f32 %v7421, %v7333
        %v7424 = vadd.f32 %v7422, %v7361
        %7427 = vrot.lane.b32.xlu0 %v7333, 96
        %v7428 = vpop.permute.xlu0 %7427
        %7429 = vrot.lane.b32.xlu0 %v7361, 96
        %v7430 = vpop.permute.xlu0 %7429
        %v7433 = vadd.f32 %v7423, %v7428
        %v7434 = vadd.f32 %v7424, %v7430
        %7435 = vrot.lane.b32.xlu0 %v7333, 64
        %v7436 = vpop.permute.xlu0 %7435
        %7437 = vrot.lane.b32.xlu0 %v7361, 64
        %v7438 = vpop.permute.xlu0 %7437
        %v7441 = vadd.f32 %v7433, %v7436
        %v7442 = vadd.f32 %v7434, %v7438
        %7443 = vrot.lane.b32.xlu0 %v7333, 32
        %v7444 = vpop.permute.xlu0 %7443
        %7445 = vrot.lane.b32.xlu0 %v7361, 32
        %v7446 = vpop.permute.xlu0 %7445
        %v7449 = vadd.f32 %v7441, %v7444
        %v7450 = vadd.f32 %v7442, %v7446
        %v7451 = vadd.f32 %v7449, %v7340
        %v7452 = vadd.f32 %v7450, %v7368
        %7455 = vrot.lane.b32.xlu0 %v7340, 96
        %v7456 = vpop.permute.xlu0 %7455
        %7457 = vrot.lane.b32.xlu0 %v7368, 96
        %v7458 = vpop.permute.xlu0 %7457
        %v7461 = vadd.f32 %v7451, %v7456
        %v7462 = vadd.f32 %v7452, %v7458
        %7463 = vrot.lane.b32.xlu0 %v7340, 64
        %v7464 = vpop.permute.xlu0 %7463
        %7465 = vrot.lane.b32.xlu0 %v7368, 64
        %v7466 = vpop.permute.xlu0 %7465
        %v7469 = vadd.f32 %v7461, %v7464
        %v7470 = vadd.f32 %v7462, %v7466
        %7471 = vrot.lane.b32.xlu0 %v7340, 32
        %v7472 = vpop.permute.xlu0 %7471
        %7473 = vrot.lane.b32.xlu0 %v7368, 32
        %v7474 = vpop.permute.xlu0 %7473
        %v7477 = vadd.f32 %v7469, %v7472
        %v7478 = vadd.f32 %v7470, %v7474
        %v7479 = vmul.f32 %v7477, 0.00390625
        %v7480 = vmul.f32 %v7478, 0.00390625
        %v7481 = vld [vmem:[#allocation9 + $0x4] ss:$0 sm:$0xff]
        %v7482 = vld [vmem:[#allocation9 + $0x5] ss:$0 sm:$0xff]
        %v7483 = vld [vmem:[#allocation11] sm:$0xff]
        %v7484 = vld [vmem:[#allocation11 + $0x8] sm:$0xff]
        %v7485 = vld [vmem:[#allocation11 + $0x10] sm:$0xff]
        %v7486 = vld [vmem:[#allocation11 + $0x18] sm:$0xff]
        %v7489 = vrot.slane %v7480, 7
        %vm7490 = vcmask 1041409
        %v7491 = vsel %vm7490, %v7489, %v7479
        %vm7492 = vcmask 261120
        %v7493 = vsel %vm7492, %v7491, 0
        %7495 = vmatprep.subr.mxu0 0.0
        %7496 = vmatpush1.msra.mxu0 %v7483
        %7497 = vmatprep.subr.mxu0 0.0
        %7498 = vmatpush1.msra.mxu0 %v7484
        %7499 = vmatprep.subr.mxu0 0.0
        %7500 = vmatpush1.msra.mxu0 %v7485
        %7501 = vmatprep.subr.mxu0 0.0
        %7502 = vmatpush1.msra.mxu0 %v7486
        %7503 = vmatprep.subr.mxu0 0.0
        %7504 = vmatpush1.msra.mxu0 0.0
        %7505 = vmatprep.subr.mxu0 0.0
        %7506 = vmatpush1.msra.mxu0 0.0
        %7507 = vmatprep.subr.mxu0 0.0
        %7508 = vmatpush1.msra.mxu0 0.0
        %7509 = vmatprep.subr.mxu0 0.0
        %7510 = vmatpush1.msra.mxu0 0.0
        %7511 = vmatprep.subr.mxu0 0.0
        %7512 = vmatpush1.msra.mxu0 0.0
        %7513 = vmatprep.subr.mxu0 0.0
        %7514 = vmatpush1.msra.mxu0 0.0
        %7515 = vmatprep.subr.mxu0 0.0
        %7516 = vmatpush1.msra.mxu0 0.0
        %7517 = vmatprep.subr.mxu0 0.0
        %7518 = vmatpush1.msra.mxu0 0.0
        %7519 = vmatprep.subr.mxu0 0.0
        %7520 = vmatpush1.msra.mxu0 0.0
        %7521 = vmatprep.subr.mxu0 0.0
        %7522 = vmatpush1.msra.mxu0 0.0
        %7523 = vmatprep.subr.mxu0 0.0
        %7524 = vmatpush1.msra.mxu0 0.0
        %7525 = vmatprep.subr.mxu0 0.0
        %7526 = vmatpush1.msra.mxu0 0.0
        %7527 = vmatprep.subr.mxu0 0.0
        %7528 = vmatpush1.msra.mxu0 0.0
        %7529 = vmatprep.subr.mxu0 0.0
        %7530 = vmatpush1.msra.mxu0 0.0
        %7531 = vmatprep.subr.mxu0 0.0
        %7532 = vmatpush1.msra.mxu0 0.0
        %7533 = vmatprep.subr.mxu0 0.0
        %7534 = vmatpush1.msra.mxu0 0.0
        %7535 = vmatprep.subr.mxu0 0.0
        %7536 = vmatpush1.msra.mxu0 0.0
        %7537 = vmatprep.subr.mxu0 0.0
        %7538 = vmatpush1.msra.mxu0 0.0
        %7539 = vmatprep.subr.mxu0 0.0
        %7540 = vmatpush1.msra.mxu0 0.0
        %7541 = vmatprep.subr.mxu0 0.0
        %7542 = vmatpush1.msra.mxu0 0.0
        %7543 = vmatprep.subr.mxu0 0.0
        %7544 = vmatpush1.msra.mxu0 0.0
        %7545 = vmatprep.subr.mxu0 0.0
        %7546 = vmatpush1.msra.mxu0 0.0
        %7547 = vmatprep.subr.mxu0 0.0
        %7548 = vmatpush1.msra.mxu0 0.0
        %7549 = vmatprep.subr.mxu0 0.0
        %7550 = vmatpush1.msra.mxu0 0.0
        %7551 = vmatprep.subr.mxu0 0.0
        %7552 = vmatpush1.msra.mxu0 0.0
        %7553 = vmatprep.subr.mxu0 0.0
        %7554 = vmatpush1.msra.mxu0 0.0
        %7555 = vmatprep.subr.mxu0 0.0
        %7556 = vmatpush1.msra.mxu0 0.0
        %7557 = vmatprep.subr.mxu0 0.0
        %7558 = vmatpush1.msra.mxu0 0.0
        %7559 = vmatprep.mubr.f32.mxu0 0.0
        %7560 = vmatmul.mubr.f32.gmra.mrb[0].mxu0 %v7493
        %v7561 = vpop.f32.mrb[0].mxu0
        %v7562 = vadd.f32 %v7481, %v7561
        %v7563 = vpop.f32.mrb[0].mxu0
        %7564 = vdwg.mxu0
        %v7565 = vmax.f32 %v7562, 0.0
        %v7566 = vld [vmem:[%s5] sm:$0xff]
        %v7567 = vld [vmem:[%s5 + $0x8] sm:$0xff]
        %v7568 = vld [vmem:[%s5 + $0x10] sm:$0xff]
        %v7569 = vld [vmem:[%s5 + $0x18] sm:$0xff]
        %v7570 = vld [vmem:[%s5 + $0x20] sm:$0xff]
        %v7571 = vld [vmem:[%s5 + $0x28] sm:$0xff]
        %v7572 = vld [vmem:[%s5 + $0x30] sm:$0xff]
        %v7573 = vld [vmem:[%s5 + $0x38] sm:$0xff]
        %vm7574 = vcmask 523264
        %v7576 = vsel %vm7574, %v7565, 0
        %7578 = vmatprep.subr.mxu0 0.0
        %7579 = vmatpush1.msra.mxu0 %v7566
        %7580 = vmatprep.subr.mxu0 0.0
        %7581 = vmatpush1.msra.mxu0 %v7567
        %7582 = vmatprep.subr.mxu0 0.0
        %7583 = vmatpush1.msra.mxu0 %v7568
        %7584 = vmatprep.subr.mxu0 0.0
        %7585 = vmatpush1.msra.mxu0 %v7569
        %7586 = vmatprep.subr.mxu0 0.0
        %7587 = vmatpush1.msra.mxu0 %v7570
        %7588 = vmatprep.subr.mxu0 0.0
        %7589 = vmatpush1.msra.mxu0 %v7571
        %7590 = vmatprep.subr.mxu0 0.0
        %7591 = vmatpush1.msra.mxu0 %v7572
        %7592 = vmatprep.subr.mxu0 0.0
        %7593 = vmatpush1.msra.mxu0 %v7573
        %7594 = vmatprep.subr.mxu0 0.0
        %7595 = vmatpush1.msra.mxu0 0.0
        %7596 = vmatprep.subr.mxu0 0.0
        %7597 = vmatpush1.msra.mxu0 0.0
        %7598 = vmatprep.subr.mxu0 0.0
        %7599 = vmatpush1.msra.mxu0 0.0
        %7600 = vmatprep.subr.mxu0 0.0
        %7601 = vmatpush1.msra.mxu0 0.0
        %7602 = vmatprep.subr.mxu0 0.0
        %7603 = vmatpush1.msra.mxu0 0.0
        %7604 = vmatprep.subr.mxu0 0.0
        %7605 = vmatpush1.msra.mxu0 0.0
        %7606 = vmatprep.subr.mxu0 0.0
        %7607 = vmatpush1.msra.mxu0 0.0
        %7608 = vmatprep.subr.mxu0 0.0
        %7609 = vmatpush1.msra.mxu0 0.0
        %7610 = vmatprep.subr.mxu0 0.0
        %7611 = vmatpush1.msra.mxu0 0.0
        %7612 = vmatprep.subr.mxu0 0.0
        %7613 = vmatpush1.msra.mxu0 0.0
        %7614 = vmatprep.subr.mxu0 0.0
        %7615 = vmatpush1.msra.mxu0 0.0
        %7616 = vmatprep.subr.mxu0 0.0
        %7617 = vmatpush1.msra.mxu0 0.0
        %7618 = vmatprep.subr.mxu0 0.0
        %7619 = vmatpush1.msra.mxu0 0.0
        %7620 = vmatprep.subr.mxu0 0.0
        %7621 = vmatpush1.msra.mxu0 0.0
        %7622 = vmatprep.subr.mxu0 0.0
        %7623 = vmatpush1.msra.mxu0 0.0
        %7624 = vmatprep.subr.mxu0 0.0
        %7625 = vmatpush1.msra.mxu0 0.0
        %7626 = vmatprep.subr.mxu0 0.0
        %7627 = vmatpush1.msra.mxu0 0.0
        %7628 = vmatprep.subr.mxu0 0.0
        %7629 = vmatpush1.msra.mxu0 0.0
        %7630 = vmatprep.subr.mxu0 0.0
        %7631 = vmatpush1.msra.mxu0 0.0
        %7632 = vmatprep.subr.mxu0 0.0
        %7633 = vmatpush1.msra.mxu0 0.0
        %7634 = vmatprep.subr.mxu0 0.0
        %7635 = vmatpush1.msra.mxu0 0.0
        %7636 = vmatprep.subr.mxu0 0.0
        %7637 = vmatpush1.msra.mxu0 0.0
        %7638 = vmatprep.subr.mxu0 0.0
        %7639 = vmatpush1.msra.mxu0 0.0
        %7640 = vmatprep.subr.mxu0 0.0
        %7641 = vmatpush1.msra.mxu0 0.0
        %7642 = vmatprep.mubr.f32.mxu0 0.0
        %7643 = vmatmul.mubr.f32.gmra.mrb[0].mxu0 %v7576
        %v7644 = vpop.f32.mrb[0].mxu0
        %v7645 = vadd.f32 %v7482, %v7644
        %v7646 = vpop.f32.mrb[0].mxu0
        %7647 = vdwg.mxu0
        %v7648 = vxor.u32 %v7645, 2147483648
        %v7649 = vmul.f32 %v7648, 1.442695
        %v7650 = vpow.pop %v7649
        %v7651 = vadd.f32 %v7650, 1.0
        %v7652 = vrcp.pop %v7651
        %v7653 = vmul.f32 1.0, %v7652
        %7655 = vrot.lane.b32.xlu0 %v7653, 32
        %v7656 = vpop.permute.xlu0 %7655
        %7658 = vrot.lane.b32.xlu0 %v7653, 64
        %v7659 = vpop.permute.xlu0 %7658
        %7661 = vrot.lane.b32.xlu0 %v7653, 96
        %v7662 = vpop.permute.xlu0 %7661
        %v7664 = vsel %vm7492, %v7653, %v7656
        %v7665 = vsel %vm7574, %v7664, %v7659
        %vm7666 = vcmask 785408
        %v7667 = vsel %vm7666, %v7665, %v7662
        %v7669 = vcombine.low %v7667, %v7667
        %v7671 = vunpack.c.l.s4 1966171168
        %v7672 = vunpack.c.0.s8 %v7671
        %v7673 = vlaneseq
        %v7674 = vshrl.u32 %v7673, 7
        %v7675 = vsub.s32 %v7672, %v7674
        %v7676 = vrot.slane %v7669, %v7675
        %v7677 = vcombine.low %v7676, %v7676
        %v7678 = vcombine.high %v7676, %v7676
        %v7680 = vunpack.c.l.s4 1966171168
        %v7681 = vunpack.c.0.s8 %v7680
        %v7682 = vlaneseq
        %v7683 = vshrl.u32 %v7682, 7
        %v7684 = vsub.s32 %v7681, %v7683
        %v7685 = vrot.slane %v7677, %v7684
        %v7687 = vunpack.c.l.s4 1966171168
        %v7688 = vunpack.c.0.s8 %v7687
        %v7689 = vlaneseq
        %v7690 = vshrl.u32 %v7689, 7
        %v7691 = vsub.s32 %v7688, %v7690
        %v7692 = vrot.slane %v7678, %v7691
        %v7693 = vlaneseq
        %v7694 = vshrl.u32 %v7693, 7
        %v7695 = vsub.s32 0, %v7694
        %v7696 = vrot.slane %v7685, %v7695
        %v7697 = vlaneseq
        %v7698 = vshrl.u32 %v7697, 7
        %v7699 = vsub.s32 1, %v7698
        %v7700 = vrot.slane %v7685, %v7699
        %v7701 = vlaneseq
        %v7702 = vshrl.u32 %v7701, 7
        %v7703 = vsub.s32 2, %v7702
        %v7704 = vrot.slane %v7685, %v7703
        %v7705 = vlaneseq
        %v7706 = vshrl.u32 %v7705, 7
        %v7707 = vsub.s32 3, %v7706
        %v7708 = vrot.slane %v7685, %v7707
        %v7709 = vlaneseq
        %v7710 = vshrl.u32 %v7709, 7
        %v7711 = vsub.s32 0, %v7710
        %v7712 = vrot.slane %v7692, %v7711
        %v7713 = vlaneseq
        %v7714 = vshrl.u32 %v7713, 7
        %v7715 = vsub.s32 1, %v7714
        %v7716 = vrot.slane %v7692, %v7715
        %v7717 = vlaneseq
        %v7718 = vshrl.u32 %v7717, 7
        %v7719 = vsub.s32 2, %v7718
        %v7720 = vrot.slane %v7692, %v7719
        %v7721 = vlaneseq
        %v7722 = vshrl.u32 %v7721, 7
        %v7723 = vsub.s32 3, %v7722
        %v7724 = vrot.slane %v7692, %v7723
        %v7733 = vmul.f32 %v7297, %v7696
        %v7734 = vmul.f32 %v7298, %v7700
        %v7735 = vmul.f32 %v7299, %v7704
        %v7736 = vmul.f32 %v7300, %v7708
        %v7737 = vmul.f32 %v7301, %v7696
        %v7738 = vmul.f32 %v7302, %v7700
        %v7739 = vmul.f32 %v7303, %v7704
        %v7740 = vmul.f32 %v7304, %v7708
        %v7741 = vmul.f32 %v7305, %v7712
        %v7742 = vmul.f32 %v7306, %v7716
        %v7743 = vmul.f32 %v7307, %v7720
        %v7744 = vmul.f32 %v7308, %v7724
        %v7745 = vmul.f32 %v7309, %v7712
        %v7746 = vmul.f32 %v7310, %v7716
        %v7747 = vmul.f32 %v7311, %v7720
        %v7748 = vmul.f32 %v7312, %v7724
        %v7749 = vld [vmem:[%s282] sm:$0xff]
        %v7750 = vld [vmem:[%s282 + $0x8] sm:$0xff]
        %v7751 = vld [vmem:[%s282 + $0x10] sm:$0xff]
        %v7752 = vld [vmem:[%s282 + $0x18] sm:$0xff]
        %v7753 = vld [vmem:[%s282 + $0x20] sm:$0xff]
        %v7754 = vld [vmem:[%s282 + $0x28] sm:$0xff]
        %v7755 = vld [vmem:[%s282 + $0x30] sm:$0xff]
        %v7756 = vld [vmem:[%s282 + $0x38] sm:$0xff]
        %v7757 = vld [vmem:[%s282 + $0x40] sm:$0xff]
        %v7758 = vld [vmem:[%s282 + $0x48] sm:$0xff]
        %v7759 = vld [vmem:[%s282 + $0x50] sm:$0xff]
        %v7760 = vld [vmem:[%s282 + $0x58] sm:$0xff]
        %v7761 = vld [vmem:[%s282 + $0x60] sm:$0xff]
        %v7762 = vld [vmem:[%s282 + $0x68] sm:$0xff]
        %v7763 = vld [vmem:[%s282 + $0x70] sm:$0xff]
        %v7764 = vld [vmem:[%s282 + $0x78] sm:$0xff]
        %v7765 = vadd.f32 %v7733, %v7749
        %v7766 = vadd.f32 %v7734, %v7750
        %v7767 = vadd.f32 %v7735, %v7751
        %v7768 = vadd.f32 %v7736, %v7752
        %v7769 = vadd.f32 %v7737, %v7753
        %v7770 = vadd.f32 %v7738, %v7754
        %v7771 = vadd.f32 %v7739, %v7755
        %v7772 = vadd.f32 %v7740, %v7756
        %v7773 = vadd.f32 %v7741, %v7757
        %v7774 = vadd.f32 %v7742, %v7758
        %v7775 = vadd.f32 %v7743, %v7759
        %v7776 = vadd.f32 %v7744, %v7760
        %v7777 = vadd.f32 %v7745, %v7761
        %v7778 = vadd.f32 %v7746, %v7762
        %v7779 = vadd.f32 %v7747, %v7763
        %v7780 = vadd.f32 %v7748, %v7764
        %v7781 = vmax.f32 %v7765, 0.0
        %v7782 = vmax.f32 %v7766, 0.0
        %v7783 = vmax.f32 %v7767, 0.0
        %v7784 = vmax.f32 %v7768, 0.0
        %v7785 = vmax.f32 %v7769, 0.0
        %v7786 = vmax.f32 %v7770, 0.0
        %v7787 = vmax.f32 %v7771, 0.0
        %v7788 = vmax.f32 %v7772, 0.0
        %v7789 = vmax.f32 %v7773, 0.0
        %v7790 = vmax.f32 %v7774, 0.0
        %v7791 = vmax.f32 %v7775, 0.0
        %v7792 = vmax.f32 %v7776, 0.0
        %v7793 = vmax.f32 %v7777, 0.0
        %v7794 = vmax.f32 %v7778, 0.0
        %v7795 = vmax.f32 %v7779, 0.0
        %v7796 = vmax.f32 %v7780, 0.0
        %7797 = vst [vmem:[%s326] sm:$0xff] %v7781
        %7798 = vst [vmem:[%s326 + $0x8] sm:$0xff] %v7782
        %7799 = vst [vmem:[%s326 + $0x10] sm:$0xff] %v7783
        %7800 = vst [vmem:[%s326 + $0x18] sm:$0xff] %v7784
        %7801 = vst [vmem:[%s326 + $0x20] sm:$0xff] %v7785
        %7802 = vst [vmem:[%s326 + $0x28] sm:$0xff] %v7786
        %7803 = vst [vmem:[%s326 + $0x30] sm:$0xff] %v7787
        %7804 = vst [vmem:[%s326 + $0x38] sm:$0xff] %v7788
        %7805 = vst [vmem:[%s326 + $0x40] sm:$0xff] %v7789
        %7806 = vst [vmem:[%s326 + $0x48] sm:$0xff] %v7790
        %7807 = vst [vmem:[%s326 + $0x50] sm:$0xff] %v7791
        %7808 = vst [vmem:[%s326 + $0x58] sm:$0xff] %v7792
        %7809 = vst [vmem:[%s326 + $0x60] sm:$0xff] %v7793
        %7810 = vst [vmem:[%s326 + $0x68] sm:$0xff] %v7794
        %7811 = vst [vmem:[%s326 + $0x70] sm:$0xff] %v7795
        %7812 = vst [vmem:[%s326 + $0x78] sm:$0xff] %v7796
        %s7813 = sand.u32 %s164, 1
        %s7814 = scalar_lea.sflag [#allocation5], %s7813
        %s7815 = sand.u32 %s164, 1
        %s7816 = smul.addr %s7815, 128
        %s7817 = scalar_lea.vmem [#allocation12], %s7816
        // Predicated region
        $region65: #{tpu_custom_call.1} parent=43 // pred_check
          %p7818 = pneg %p174
        $region66: #{tpu_custom_call.1} parent=43 // pred_check_branch
          %7820 = sbr.rel (%p7818) target = $region68
        $region67: #{tpu_custom_call.1} parent=43 // pred_region
          %s7821 = smul.u32 2, %s25
          %s7823 = ssub.s32 2048, 2048
          %7824 = vsyncadd %s7814, %s7823
          %s7825 = smul.addr %s7821, 8
          %s7826 = smul.addr %s7825, 128
          %s7827 = scalar_lea.hbm %s6, %s7826
          %s7828 = sshll.u32 %s7817, 4
          %s7829 = int_to_ptr.vmem [resolvable:$true] %s7828
          %7834 = dma.vmem_to_hbm [thread:$0]  %s7829, 2048, %s7827, %s7814, 512, 512, 32
        $region68: #{tpu_custom_call.1} parent=43 // pred_fallthru
          _
      $region44: #{tpu_custom_call.1} parent=5 // pred_fallthru
        _
      %p7835 = scmp.le.s32.totalorder 2, %s20
      // Predicated region
      $region69: #{tpu_custom_call.1} parent=5 // pred_check
        %p7836 = pneg %p7835
      $region70: #{tpu_custom_call.1} parent=5 // pred_check_branch
        %7838 = sbr.rel (%p7836) target = $region72
      $region71: #{tpu_custom_call.1} parent=5 // pred_region
        %s7839 = ssub.s32 %s20, 2
        // Predicated region
        $region73: #{tpu_custom_call.1} parent=71 // pred_check
          %p7840 = pneg %p180
        $region74: #{tpu_custom_call.1} parent=71 // pred_check_branch
          %7842 = sbr.rel (%p7840) target = $region76
        $region75: #{tpu_custom_call.1} parent=71 // pred_region
          %s7843 = sand.u32 %s165, 1
          %s7844 = scalar_lea.sflag [#allocation5], %s7843
          %s7845 = sand.u32 %s165, 1
          %s7846 = smul.addr %s7845, 128
          %s7847 = scalar_lea.vmem [#allocation12], %s7846
          %7848 = dma.done %s7844, 2048
        $region76: #{tpu_custom_call.1} parent=71 // pred_fallthru
          _
      $region72: #{tpu_custom_call.1} parent=5 // pred_fallthru
        _
    $region6: #{tpu_custom_call.1} parent=1 // loop_footer
      %s24 = sadd.s32 1, %s20
    $region7: #{tpu_custom_call.1} parent=1 // loop_footer_branch
      %19 = sbr.rel target = $region3
    $region8: #{tpu_custom_call.1} parent=1 // loop_exit
      _
    %7849 = vsyncpa [#allocation4], 1
    %s7850 = scalar_lea.sflag [#allocation4], 1
    %7851 = vsyncpa %s7850, 1
    %7852 = vsyncpa [#allocation7], 1
    %7853 = vsyncpa [#allocation10], 1
    %7854 = vsyncpa [#allocation5], 1
    %s7855 = scalar_lea.sflag [#allocation5], 1
    %7856 = vsyncpa %s7855, 1

</llo_original>
